<compile_context>
chip_gen: v5e
topology: v5e:2x2
jax: 0.10.0
libtpu: 0.0.40
codegen_flags: <defaults>
</compile_context>

<pallas_src>
from functools import partial

import jax
import jax.numpy as jnp
import numpy as np
from jax.experimental import pallas as pl
from jax.experimental.pallas import tpu as pltpu

LANE = 128

# Stage config: (name, cin, mid, cout, stride) -- one Bottleneck per stage.
_STAGES = [('layer1', 16, 8, 32, 1),
           ('layer2', 32, 16, 64, 2),
           ('layer3', 64, 32, 128, 2),
           ('layer4', 128, 64, 256, 2)]
_STEM_OUT = 16
_IN_CH = 4


def _round_up(x, m):
    return (x + m - 1) // m * m


# ----------------------------------------------------------------------------
# Tap-selector matrices (numpy, built once).  T[t] is a 0/1 matrix such that
# T[t] @ flat(x) gathers, for every output position of a k x k / stride / pad
# conv (or pool), the input row hit by tap t; out-of-bounds taps give a zero
# row (== zero padding for convs; exact for the max pool because inputs are
# >= 0 after ReLU).  Row gathering by matmul is exact under f32 accumulation.
# ----------------------------------------------------------------------------
def _tap_selectors(H, W, stride, k, pad):
    Ho = (H + 2 * pad - k) // stride + 1
    Wo = (W + 2 * pad - k) // stride + 1
    T = np.zeros((k * k, Ho * Wo, H * W), np.float32)
    for di in range(k):
        for dj in range(k):
            t = di * k + dj
            for r in range(Ho):
                hi = r * stride + di - pad
                if hi < 0 or hi >= H:
                    continue
                for c in range(Wo):
                    wi = c * stride + dj - pad
                    if 0 <= wi < W:
                        T[t, r * Wo + c, hi * W + wi] = 1.0
    return T


def _extract_patches(x, kh, kw, stride, pad):
    """NHWC -> (N, Ho*Wo, kh*kw*C) im2col patches (XLA, wrapper side)."""
    N, H, W, C = x.shape
    Ho = (H + 2 * pad - kh) // stride + 1
    Wo = (W + 2 * pad - kw) // stride + 1
    xp = jnp.pad(x, ((0, 0), (pad, pad), (pad, pad), (0, 0)))
    cols = []
    for i in range(kh):
        for j in range(kw):
            cols.append(xp[:, i:i + stride * Ho:stride, j:j + stride * Wo:stride, :])
    patches = jnp.stack(cols, axis=3)              # (N, Ho, Wo, kh*kw, C)
    return patches.reshape(N, Ho * Wo, kh * kw * C), Ho, Wo


# ----------------------------------------------------------------------------
# The fused kernel: one grid step == one image.  All activations live in
# VMEM / vregs; every conv is an MXU matmul on bf16 operands with f32
# accumulation and a fused bias / residual / ReLU epilogue.
# ----------------------------------------------------------------------------
def _resnet_kernel(*refs, has_down):
    f32, bf16 = jnp.float32, jnp.bfloat16
    patches_ref, stem_w_ref, stem_b_ref, tpool_ref = refs[:4]
    layer_refs, o_ref = refs[4:-1], refs[-1]

    # --- layer0: 7x7/s2 conv (pre-extracted patches) + folded BN + ReLU -----
    x = patches_ref[0]                                             # (Ms, Kp) bf16
    h = jnp.dot(x, stem_w_ref[...], preferred_element_type=f32) + stem_b_ref[...]
    h = jnp.maximum(h, 0.0).astype(bf16)                           # (Ms, 128)

    # --- layer0: 3x3/s2 max pool = elementwise max over 9 gathered taps -----
    pooled = jnp.dot(tpool_ref[0], h, preferred_element_type=f32)
    for t in range(1, 9):
        pooled = jnp.maximum(
            pooled, jnp.dot(tpool_ref[t], h, preferred_element_type=f32))
    act = pooled.astype(bf16)                                      # (M1, 128)

    # --- bottleneck stages, fully resident on-chip ---------------------------
    idx = 0
    out_f32 = None
    for hd in has_down:
        n_refs = 9 if hd else 7
        grp = layer_refs[idx:idx + n_refs]
        idx += n_refs
        if hd:
            w1, b1, t2, w2, b2, w3, b3, wd, bd = grp
        else:
            w1, b1, t2, w2, b2, w3, b3 = grp

        # conv1: 1x1 + BN + ReLU
        mid = jnp.dot(act, w1[...], preferred_element_type=f32) + b1[...]
        mid = jnp.maximum(mid, 0.0).astype(bf16)                   # (Mi, midp)

        # conv2: 3x3 (+stride) + BN + ReLU; taps gathered by selector matmuls,
        # accumulated in f32 (no im2col in HBM).
        acc = jnp.dot(jnp.dot(t2[0], mid, preferred_element_type=f32).astype(bf16),
                      w2[0], preferred_element_type=f32)
        for t in range(1, 9):
            g = jnp.dot(t2[t], mid, preferred_element_type=f32).astype(bf16)
            acc = acc + jnp.dot(g, w2[t], preferred_element_type=f32)
        h2 = jnp.maximum(acc + b2[...], 0.0).astype(bf16)          # (Mo, midp)

        # identity / downsample (1x1/stride conv + BN).  The centre tap t2[4]
        # is exactly the stride-subsampling selector (input (s*r, s*c)).
        if hd:
            xs = jnp.dot(t2[4], act, preferred_element_type=f32).astype(bf16)
            idty = jnp.dot(xs, wd[...], preferred_element_type=f32) + bd[...]
        else:
            idty = act.astype(f32)

        # conv3: 1x1 + BN, fused residual add + ReLU epilogue
        out_f32 = jnp.maximum(
            jnp.dot(h2, w3[...], preferred_element_type=f32) + b3[...] + idty, 0.0)
        act = out_f32.astype(bf16)

    # --- fused AdaptiveAvgPool2d(1) + flatten (f32) --------------------------
    o_ref[0] = jnp.mean(out_f32, axis=0, keepdims=True)


def _const_map(ndim):
    return lambda n: (0,) * ndim


def resnet_forward_pallas(x_nchw, prep):
    """layer0 -> layer1..4 -> global avg pool -> flatten, in one pallas_call."""
    N = x_nchw.shape[0]
    x = jnp.transpose(x_nchw, (0, 2, 3, 1)).astype(jnp.bfloat16)   # NCHW -> NHWC
    # TODO(synk): the 7x7 stem im2col stays in the XLA wrapper (selector
    #             matrices would be 49 x 256 x 1024); it is one tiny op.
    patches, _, _ = _extract_patches(x, 7, 7, 2, 3)
    kp = prep['stem_w'].shape[0]
    patches = jnp.pad(patches, ((0, 0), (0, 0), (0, kp - patches.shape[2])))

    operands = [patches, prep['stem_w'], prep['stem_b'], prep['tpool']]
    has_down = []
    for lp in prep['layers']:
        hd = 'wd' in lp
        has_down.append(hd)
        operands += [lp['w1'], lp['b1'], lp['t2'], lp['w2'], lp['b2'],
                     lp['w3'], lp['b3']]
        if hd:
            operands += [lp['wd'], lp['bd']]

    in_specs = [pl.BlockSpec((1,) + patches.shape[1:], lambda n: (n, 0, 0))]
    in_specs += [pl.BlockSpec(op.shape, _const_map(op.ndim)) for op in operands[1:]]

    coutp = prep['layers'][-1]['w3'].shape[1]
    out = pl.pallas_call(
        partial(_resnet_kernel, has_down=tuple(has_down)),
        out_shape=jax.ShapeDtypeStruct((N, 1, coutp), jnp.float32),
        grid=(N,),                          # batch-parallel: feeds both v7x cores
        in_specs=in_specs,
        out_specs=pl.BlockSpec((1, 1, coutp), lambda n: (n, 0, 0)),
        compiler_params=pltpu.CompilerParams(
            dimension_semantics=("parallel",),
            vmem_limit_bytes=32 * 1024 * 1024),
    )(*operands)
    return out[:, 0, :_STAGES[-1][3]]       # drop channel padding once, at the end


# ----------------------------------------------------------------------------
# One-time parameter preparation (hoisted out of the forward): BN folding,
# bf16 cast, 128-lane channel padding, per-tap weight stacks, selectors.
# ----------------------------------------------------------------------------
def _fold(w, scale):
    return (w * scale).astype(jnp.bfloat16)          # broadcast over out-channels


def _pad2(a, rows, cols):
    return jnp.pad(a, ((0, rows - a.shape[0]), (0, cols - a.shape[1])))


def _pad_bias(b, cols):
    return jnp.pad(b.astype(jnp.float32).reshape(1, -1),
                   ((0, 0), (0, cols - b.shape[0])))


def prepare_params(params, in_hw):
    H, W = in_hw
    st = params['stem']
    kh, kw, cin, cout = st['w'].shape
    kpad = _round_up(kh * kw * cin, LANE)
    c0p = _round_up(cout, LANE)
    prep = {
        'stem_w': _pad2(_fold(st['w'], st['s']).reshape(kh * kw * cin, cout),
                        kpad, c0p),
        'stem_b': _pad_bias(st['b'], c0p),
    }
    hs, ws = (H + 6 - 7) // 2 + 1, (W + 6 - 7) // 2 + 1        # stem conv out
    prep['tpool'] = jnp.asarray(_tap_selectors(hs, ws, 2, 3, 1), jnp.bfloat16)
    h_sp, w_sp = (hs + 2 - 3) // 2 + 1, (ws + 2 - 3) // 2 + 1  # maxpool out

    layers = []
    for name, cin, mid, cout, stride in _STAGES:
        p = params[name]
        cinp, midp, coutp = (_round_up(c, LANE) for c in (cin, mid, cout))
        lp = {
            'w1': _pad2(_fold(p['w1'], p['s1']).reshape(cin, mid), cinp, midp),
            'b1': _pad_bias(p['b1'], midp),
            'w2': jnp.pad(_fold(p['w2'], p['s2']).reshape(9, mid, mid),
                          ((0, 0), (0, midp - mid), (0, midp - mid))),
            'b2': _pad_bias(p['b2'], midp),
            'w3': _pad2(_fold(p['w3'], p['s3']).reshape(mid, cout), midp, coutp),
            'b3': _pad_bias(p['b3'], coutp),
            't2': jnp.asarray(_tap_selectors(h_sp, w_sp, stride, 3, 1),
                              jnp.bfloat16),
        }
        if 'wd' in p:
            lp['wd'] = _pad2(_fold(p['wd'], p['sd']).reshape(cin, cout),
                             cinp, coutp)
            lp['bd'] = _pad_bias(p['bd'], coutp)
        layers.append(lp)
        h_sp = (h_sp + 2 - 3) // stride + 1
        w_sp = (w_sp + 2 - 3) // stride + 1
    prep['layers'] = layers
    return prep


# ----------------------------------------------------------------------------
# Deterministic synthetic parameters (folded-BN form).
# ----------------------------------------------------------------------------
def _conv_bn_params(key, kh, kw, cin, cout):
    kw_, kg, kb, km, kv = jax.random.split(key, 5)
    fan_in = kh * kw * cin
    w = jax.random.normal(kw_, (kh, kw, cin, cout), jnp.float32) * (2.0 / fan_in) ** 0.5
    gamma = jax.random.uniform(kg, (cout,), jnp.float32, 0.5, 1.5)
    beta = 0.1 * jax.random.normal(kb, (cout,), jnp.float32)
    mean = 0.1 * jax.random.normal(km, (cout,), jnp.float32)
    var = jax.random.uniform(kv, (cout,), jnp.float32, 0.5, 1.5)
    scale = gamma / jnp.sqrt(var + 1e-5)
    bias = beta - mean * scale
    return w, scale, bias


def _bottleneck_params(key, cin, mid, cout, stride):
    k1, k2, k3, kd = jax.random.split(key, 4)
    p = {}
    p['w1'], p['s1'], p['b1'] = _conv_bn_params(k1, 1, 1, cin, mid)
    p['w2'], p['s2'], p['b2'] = _conv_bn_params(k2, 3, 3, mid, mid)
    p['w3'], p['s3'], p['b3'] = _conv_bn_params(k3, 1, 1, mid, cout)
    if stride != 1 or cin != cout:
        p['wd'], p['sd'], p['bd'] = _conv_bn_params(kd, 1, 1, cin, cout)
    return p


def init_params(key, in_ch=_IN_CH, stem_out=_STEM_OUT):
    keys = jax.random.split(key, 1 + len(_STAGES))
    params = {}
    w, s, b = _conv_bn_params(keys[0], 7, 7, in_ch, stem_out)
    params['stem'] = dict(w=w, s=s, b=b)
    for k, (name, cin, mid, cout, stride) in zip(keys[1:], _STAGES):
        params[name] = _bottleneck_params(k, cin, mid, cout, stride)
    return params


# ----------------------------------------------------------------------------
# Pure-JAX (XLA) reference with identical math / cast points, for validation.
# ----------------------------------------------------------------------------
def _maxpool2d_ref(x, k=3, stride=2, pad=1):
    N, H, W, C = x.shape
    Ho = (H + 2 * pad - k) // stride + 1
    Wo = (W + 2 * pad - k) // stride + 1
    xp = jnp.pad(x, ((0, 0), (pad, pad), (pad, pad), (0, 0)),
                 constant_values=-jnp.inf)
    out = jnp.full((N, Ho, Wo, C), -jnp.inf, x.dtype)
    for i in range(k):
        for j in range(k):
            out = jnp.maximum(
                out, xp[:, i:i + stride * Ho:stride, j:j + stride * Wo:stride, :])
    return out


def resnet_forward_ref(x_nchw, params):
    x = jnp.transpose(x_nchw, (0, 2, 3, 1)).astype(jnp.bfloat16)
    N = x.shape[0]
    st = params['stem']
    kh, kw, cin, cout = st['w'].shape
    patches, Ho, Wo = _extract_patches(x, kh, kw, 2, 3)
    wf = _fold(st['w'], st['s']).reshape(kh * kw * cin, cout)
    h = jnp.einsum('nmk,kc->nmc', patches, wf,
                   preferred_element_type=jnp.float32) + st['b']
    h = jnp.maximum(h, 0.0).astype(jnp.bfloat16).reshape(N, Ho, Wo, cout)
    h = _maxpool2d_ref(h)

    out_f32 = None
    for name, cin, mid, cout, stride in _STAGES:
        p = params[name]
        w1f = _fold(p['w1'], p['s1']).reshape(cin, mid)
        m = jnp.einsum('nhwc,cd->nhwd', h, w1f,
                       preferred_element_type=jnp.float32) + p['b1']
        m = jnp.maximum(m, 0.0).astype(jnp.bfloat16)
        pat, Ho, Wo = _extract_patches(m, 3, 3, stride, 1)
        w2f = _fold(p['w2'], p['s2']).reshape(9 * mid, mid)
        m2 = jnp.einsum('nmk,kd->nmd', pat, w2f,
                        preferred_element_type=jnp.float32) + p['b2']
        m2 = jnp.maximum(m2, 0.0).astype(jnp.bfloat16)
        if 'wd' in p:
            xs = h[:, ::stride, ::stride, :].reshape(N, Ho * Wo, cin)
            wdf = _fold(p['wd'], p['sd']).reshape(cin, cout)
            idty = jnp.einsum('nmc,cd->nmd', xs, wdf,
                              preferred_element_type=jnp.float32) + p['bd']
        else:
            idty = h.reshape(N, Ho * Wo, cin).astype(jnp.float32)
        w3f = _fold(p['w3'], p['s3']).reshape(mid, cout)
        out_f32 = jnp.maximum(
            jnp.einsum('nmd,dc->nmc', m2, w3f,
                       preferred_element_type=jnp.float32) + p['b3'] + idty, 0.0)
        h = out_f32.astype(jnp.bfloat16).reshape(N, Ho, Wo, cout)
    return jnp.mean(out_f32, axis=1)               # (N, cout) f32


# ----------------------------------------------------------------------------
if __name__ == "__main__":
    key = jax.random.PRNGKey(0)
    pkey, xkey = jax.random.split(key)
    params = init_params(pkey)
    x = jax.random.normal(xkey, (2, _IN_CH, 32, 32), jnp.float32)   # NCHW input

    # One-time prep (BN fold, bf16 cast, lane padding, selectors) -- hoisted
    # out of the jitted forward.
    prep = prepare_params(params, in_hw=(32, 32))

    fwd = jax.jit(resnet_forward_pallas)
    out = jax.block_until_ready(fwd(x, prep))

    ref = jax.block_until_ready(jax.jit(resnet_forward_ref)(x, params))

    assert out.shape == (2, _STAGES[-1][3]), out.shape
    np.testing.assert_allclose(np.asarray(out), np.asarray(ref),
                               rtol=2e-2, atol=2e-2)
    print("KERNEL_OK")
</pallas_src>

<mosaic_0001>
module attributes {stable_mosaic.version = 11 : i64} {
  func.func @_resnet_kernel(%arg0: i32, %arg1: memref<1x256x256xbf16, #tpu.memory_space<vmem>>, %arg2: memref<256x128xbf16, #tpu.memory_space<vmem>>, %arg3: memref<1x128xf32, #tpu.memory_space<vmem>>, %arg4: memref<9x64x256xbf16, #tpu.memory_space<vmem>>, %arg5: memref<128x128xbf16, #tpu.memory_space<vmem>>, %arg6: memref<1x128xf32, #tpu.memory_space<vmem>>, %arg7: memref<9x64x64xbf16, #tpu.memory_space<vmem>>, %arg8: memref<9x128x128xbf16, #tpu.memory_space<vmem>>, %arg9: memref<1x128xf32, #tpu.memory_space<vmem>>, %arg10: memref<128x128xbf16, #tpu.memory_space<vmem>>, %arg11: memref<1x128xf32, #tpu.memory_space<vmem>>, %arg12: memref<128x128xbf16, #tpu.memory_space<vmem>>, %arg13: memref<1x128xf32, #tpu.memory_space<vmem>>, %arg14: memref<128x128xbf16, #tpu.memory_space<vmem>>, %arg15: memref<1x128xf32, #tpu.memory_space<vmem>>, %arg16: memref<9x16x64xbf16, #tpu.memory_space<vmem>>, %arg17: memref<9x128x128xbf16, #tpu.memory_space<vmem>>, %arg18: memref<1x128xf32, #tpu.memory_space<vmem>>, %arg19: memref<128x128xbf16, #tpu.memory_space<vmem>>, %arg20: memref<1x128xf32, #tpu.memory_space<vmem>>, %arg21: memref<128x128xbf16, #tpu.memory_space<vmem>>, %arg22: memref<1x128xf32, #tpu.memory_space<vmem>>, %arg23: memref<128x128xbf16, #tpu.memory_space<vmem>>, %arg24: memref<1x128xf32, #tpu.memory_space<vmem>>, %arg25: memref<9x4x16xbf16, #tpu.memory_space<vmem>>, %arg26: memref<9x128x128xbf16, #tpu.memory_space<vmem>>, %arg27: memref<1x128xf32, #tpu.memory_space<vmem>>, %arg28: memref<128x128xbf16, #tpu.memory_space<vmem>>, %arg29: memref<1x128xf32, #tpu.memory_space<vmem>>, %arg30: memref<128x128xbf16, #tpu.memory_space<vmem>>, %arg31: memref<1x128xf32, #tpu.memory_space<vmem>>, %arg32: memref<128x128xbf16, #tpu.memory_space<vmem>>, %arg33: memref<1x128xf32, #tpu.memory_space<vmem>>, %arg34: memref<9x1x4xbf16, #tpu.memory_space<vmem>>, %arg35: memref<9x128x128xbf16, #tpu.memory_space<vmem>>, %arg36: memref<1x128xf32, #tpu.memory_space<vmem>>, %arg37: memref<128x256xbf16, #tpu.memory_space<vmem>>, %arg38: memref<1x256xf32, #tpu.memory_space<vmem>>, %arg39: memref<128x256xbf16, #tpu.memory_space<vmem>>, %arg40: memref<1x256xf32, #tpu.memory_space<vmem>>, %arg41: memref<1x1x256xf32, #tpu.memory_space<vmem>>) attributes {dimension_semantics = [#tpu.dimension_semantics<parallel>], iteration_bounds = array<i64: 2>, scalar_prefetch = 0 : i64, scratch_operands = 0 : i64, tpu.core_type = #tpu.core_type<tc>, window_params = [{transform_indices = @transform_0, window_bounds = array<i64: 1, 256, 256>}, {pipeline_mode = #tpu.pipeline_mode<synchronous>, transform_indices = @transform_1, window_bounds = array<i64: 256, 128>}, {pipeline_mode = #tpu.pipeline_mode<synchronous>, transform_indices = @transform_2, window_bounds = array<i64: 1, 128>}, {pipeline_mode = #tpu.pipeline_mode<synchronous>, transform_indices = @transform_3, window_bounds = array<i64: 9, 64, 256>}, {pipeline_mode = #tpu.pipeline_mode<synchronous>, transform_indices = @transform_4, window_bounds = array<i64: 128, 128>}, {pipeline_mode = #tpu.pipeline_mode<synchronous>, transform_indices = @transform_5, window_bounds = array<i64: 1, 128>}, {pipeline_mode = #tpu.pipeline_mode<synchronous>, transform_indices = @transform_6, window_bounds = array<i64: 9, 64, 64>}, {pipeline_mode = #tpu.pipeline_mode<synchronous>, transform_indices = @transform_7, window_bounds = array<i64: 9, 128, 128>}, {pipeline_mode = #tpu.pipeline_mode<synchronous>, transform_indices = @transform_8, window_bounds = array<i64: 1, 128>}, {pipeline_mode = #tpu.pipeline_mode<synchronous>, transform_indices = @transform_9, window_bounds = array<i64: 128, 128>}, {pipeline_mode = #tpu.pipeline_mode<synchronous>, transform_indices = @transform_10, window_bounds = array<i64: 1, 128>}, {pipeline_mode = #tpu.pipeline_mode<synchronous>, transform_indices = @transform_11, window_bounds = array<i64: 128, 128>}, {pipeline_mode = #tpu.pipeline_mode<synchronous>, transform_indices = @transform_12, window_bounds = array<i64: 1, 128>}, {pipeline_mode = #tpu.pipeline_mode<synchronous>, transform_indices = @transform_13, window_bounds = array<i64: 128, 128>}, {pipeline_mode = #tpu.pipeline_mode<synchronous>, transform_indices = @transform_14, window_bounds = array<i64: 1, 128>}, {pipeline_mode = #tpu.pipeline_mode<synchronous>, transform_indices = @transform_15, window_bounds = array<i64: 9, 16, 64>}, {pipeline_mode = #tpu.pipeline_mode<synchronous>, transform_indices = @transform_16, window_bounds = array<i64: 9, 128, 128>}, {pipeline_mode = #tpu.pipeline_mode<synchronous>, transform_indices = @transform_17, window_bounds = array<i64: 1, 128>}, {pipeline_mode = #tpu.pipeline_mode<synchronous>, transform_indices = @transform_18, window_bounds = array<i64: 128, 128>}, {pipeline_mode = #tpu.pipeline_mode<synchronous>, transform_indices = @transform_19, window_bounds = array<i64: 1, 128>}, {pipeline_mode = #tpu.pipeline_mode<synchronous>, transform_indices = @transform_20, window_bounds = array<i64: 128, 128>}, {pipeline_mode = #tpu.pipeline_mode<synchronous>, transform_indices = @transform_21, window_bounds = array<i64: 1, 128>}, {pipeline_mode = #tpu.pipeline_mode<synchronous>, transform_indices = @transform_22, window_bounds = array<i64: 128, 128>}, {pipeline_mode = #tpu.pipeline_mode<synchronous>, transform_indices = @transform_23, window_bounds = array<i64: 1, 128>}, {pipeline_mode = #tpu.pipeline_mode<synchronous>, transform_indices = @transform_24, window_bounds = array<i64: 9, 4, 16>}, {pipeline_mode = #tpu.pipeline_mode<synchronous>, transform_indices = @transform_25, window_bounds = array<i64: 9, 128, 128>}, {pipeline_mode = #tpu.pipeline_mode<synchronous>, transform_indices = @transform_26, window_bounds = array<i64: 1, 128>}, {pipeline_mode = #tpu.pipeline_mode<synchronous>, transform_indices = @transform_27, window_bounds = array<i64: 128, 128>}, {pipeline_mode = #tpu.pipeline_mode<synchronous>, transform_indices = @transform_28, window_bounds = array<i64: 1, 128>}, {pipeline_mode = #tpu.pipeline_mode<synchronous>, transform_indices = @transform_29, window_bounds = array<i64: 128, 128>}, {pipeline_mode = #tpu.pipeline_mode<synchronous>, transform_indices = @transform_30, window_bounds = array<i64: 1, 128>}, {pipeline_mode = #tpu.pipeline_mode<synchronous>, transform_indices = @transform_31, window_bounds = array<i64: 128, 128>}, {pipeline_mode = #tpu.pipeline_mode<synchronous>, transform_indices = @transform_32, window_bounds = array<i64: 1, 128>}, {pipeline_mode = #tpu.pipeline_mode<synchronous>, transform_indices = @transform_33, window_bounds = array<i64: 9, 1, 4>}, {pipeline_mode = #tpu.pipeline_mode<synchronous>, transform_indices = @transform_34, window_bounds = array<i64: 9, 128, 128>}, {pipeline_mode = #tpu.pipeline_mode<synchronous>, transform_indices = @transform_35, window_bounds = array<i64: 1, 128>}, {pipeline_mode = #tpu.pipeline_mode<synchronous>, transform_indices = @transform_36, window_bounds = array<i64: 128, 256>}, {pipeline_mode = #tpu.pipeline_mode<synchronous>, transform_indices = @transform_37, window_bounds = array<i64: 1, 256>}, {pipeline_mode = #tpu.pipeline_mode<synchronous>, transform_indices = @transform_38, window_bounds = array<i64: 128, 256>}, {pipeline_mode = #tpu.pipeline_mode<synchronous>, transform_indices = @transform_39, window_bounds = array<i64: 1, 256>}, {transform_indices = @transform_40, window_bounds = array<i64: 1, 1, 256>}]} {
    %c0 = arith.constant 0 : index
    %c0_0 = arith.constant 0 : index
    %c0_1 = arith.constant 0 : index
    %0 = vector.load %arg1[%c0, %c0_0, %c0_1] : memref<1x256x256xbf16, #tpu.memory_space<vmem>>, vector<1x256x256xbf16>
    %1 = vector.shape_cast %0 : vector<1x256x256xbf16> to vector<256x256xbf16>
    %c0_2 = arith.constant 0 : index
    %c0_3 = arith.constant 0 : index
    %2 = vector.load %arg2[%c0_2, %c0_3] : memref<256x128xbf16, #tpu.memory_space<vmem>>, vector<256x128xbf16>
    %cst = arith.constant dense<0.000000e+00> : vector<256x128xf32>
    %3 = tpu.matmul %1, %2, %cst {dimension_numbers = #tpu.dot_dimension_numbers<[1], [0], [0], [1], [0, 0, 1, 1], [], []>} : vector<256x256xbf16>, vector<256x128xbf16>, vector<256x128xf32> -> vector<256x128xf32>
    %c0_4 = arith.constant 0 : index
    %c0_5 = arith.constant 0 : index
    %4 = vector.load %arg3[%c0_4, %c0_5] : memref<1x128xf32, #tpu.memory_space<vmem>>, vector<1x128xf32>
    %5 = vector.broadcast %4 : vector<1x128xf32> to vector<256x128xf32>
    %6 = arith.addf %3, %5 : vector<256x128xf32>
    %cst_6 = arith.constant 0.000000e+00 : f32
    %7 = vector.broadcast %cst_6 : f32 to vector<256x128xf32>
    %8 = arith.maximumf %6, %7 : vector<256x128xf32>
    %9 = arith.truncf %8 : vector<256x128xf32> to vector<256x128xbf16>
    %c0_7 = arith.constant 0 : index
    %c0_8 = arith.constant 0 : index
    %c0_9 = arith.constant 0 : index
    %10 = vector.load %arg4[%c0_7, %c0_8, %c0_9] : memref<9x64x256xbf16, #tpu.memory_space<vmem>>, vector<1x64x256xbf16>
    %11 = vector.shape_cast %10 : vector<1x64x256xbf16> to vector<64x256xbf16>
    %cst_10 = arith.constant dense<0.000000e+00> : vector<64x128xf32>
    %12 = tpu.matmul %11, %9, %cst_10 {dimension_numbers = #tpu.dot_dimension_numbers<[1], [0], [0], [1], [0, 0, 1, 1], [], []>} : vector<64x256xbf16>, vector<256x128xbf16>, vector<64x128xf32> -> vector<64x128xf32>
    %c1 = arith.constant 1 : index
    %c0_11 = arith.constant 0 : index
    %c0_12 = arith.constant 0 : index
    %13 = vector.load %arg4[%c1, %c0_11, %c0_12] : memref<9x64x256xbf16, #tpu.memory_space<vmem>>, vector<1x64x256xbf16>
    %14 = vector.shape_cast %13 : vector<1x64x256xbf16> to vector<64x256xbf16>
    %cst_13 = arith.constant dense<0.000000e+00> : vector<64x128xf32>
    %15 = tpu.matmul %14, %9, %cst_13 {dimension_numbers = #tpu.dot_dimension_numbers<[1], [0], [0], [1], [0, 0, 1, 1], [], []>} : vector<64x256xbf16>, vector<256x128xbf16>, vector<64x128xf32> -> vector<64x128xf32>
    %16 = arith.maximumf %12, %15 : vector<64x128xf32>
    %c2 = arith.constant 2 : index
    %c0_14 = arith.constant 0 : index
    %c0_15 = arith.constant 0 : index
    %17 = vector.load %arg4[%c2, %c0_14, %c0_15] : memref<9x64x256xbf16, #tpu.memory_space<vmem>>, vector<1x64x256xbf16>
    %18 = vector.shape_cast %17 : vector<1x64x256xbf16> to vector<64x256xbf16>
    %cst_16 = arith.constant dense<0.000000e+00> : vector<64x128xf32>
    %19 = tpu.matmul %18, %9, %cst_16 {dimension_numbers = #tpu.dot_dimension_numbers<[1], [0], [0], [1], [0, 0, 1, 1], [], []>} : vector<64x256xbf16>, vector<256x128xbf16>, vector<64x128xf32> -> vector<64x128xf32>
    %20 = arith.maximumf %16, %19 : vector<64x128xf32>
    %c3 = arith.constant 3 : index
    %c0_17 = arith.constant 0 : index
    %c0_18 = arith.constant 0 : index
    %21 = vector.load %arg4[%c3, %c0_17, %c0_18] : memref<9x64x256xbf16, #tpu.memory_space<vmem>>, vector<1x64x256xbf16>
    %22 = vector.shape_cast %21 : vector<1x64x256xbf16> to vector<64x256xbf16>
    %cst_19 = arith.constant dense<0.000000e+00> : vector<64x128xf32>
    %23 = tpu.matmul %22, %9, %cst_19 {dimension_numbers = #tpu.dot_dimension_numbers<[1], [0], [0], [1], [0, 0, 1, 1], [], []>} : vector<64x256xbf16>, vector<256x128xbf16>, vector<64x128xf32> -> vector<64x128xf32>
    %24 = arith.maximumf %20, %23 : vector<64x128xf32>
    %c4 = arith.constant 4 : index
    %c0_20 = arith.constant 0 : index
    %c0_21 = arith.constant 0 : index
    %25 = vector.load %arg4[%c4, %c0_20, %c0_21] : memref<9x64x256xbf16, #tpu.memory_space<vmem>>, vector<1x64x256xbf16>
    %26 = vector.shape_cast %25 : vector<1x64x256xbf16> to vector<64x256xbf16>
    %cst_22 = arith.constant dense<0.000000e+00> : vector<64x128xf32>
    %27 = tpu.matmul %26, %9, %cst_22 {dimension_numbers = #tpu.dot_dimension_numbers<[1], [0], [0], [1], [0, 0, 1, 1], [], []>} : vector<64x256xbf16>, vector<256x128xbf16>, vector<64x128xf32> -> vector<64x128xf32>
    %28 = arith.maximumf %24, %27 : vector<64x128xf32>
    %c5 = arith.constant 5 : index
    %c0_23 = arith.constant 0 : index
    %c0_24 = arith.constant 0 : index
    %29 = vector.load %arg4[%c5, %c0_23, %c0_24] : memref<9x64x256xbf16, #tpu.memory_space<vmem>>, vector<1x64x256xbf16>
    %30 = vector.shape_cast %29 : vector<1x64x256xbf16> to vector<64x256xbf16>
    %cst_25 = arith.constant dense<0.000000e+00> : vector<64x128xf32>
    %31 = tpu.matmul %30, %9, %cst_25 {dimension_numbers = #tpu.dot_dimension_numbers<[1], [0], [0], [1], [0, 0, 1, 1], [], []>} : vector<64x256xbf16>, vector<256x128xbf16>, vector<64x128xf32> -> vector<64x128xf32>
    %32 = arith.maximumf %28, %31 : vector<64x128xf32>
    %c6 = arith.constant 6 : index
    %c0_26 = arith.constant 0 : index
    %c0_27 = arith.constant 0 : index
    %33 = vector.load %arg4[%c6, %c0_26, %c0_27] : memref<9x64x256xbf16, #tpu.memory_space<vmem>>, vector<1x64x256xbf16>
    %34 = vector.shape_cast %33 : vector<1x64x256xbf16> to vector<64x256xbf16>
    %cst_28 = arith.constant dense<0.000000e+00> : vector<64x128xf32>
    %35 = tpu.matmul %34, %9, %cst_28 {dimension_numbers = #tpu.dot_dimension_numbers<[1], [0], [0], [1], [0, 0, 1, 1], [], []>} : vector<64x256xbf16>, vector<256x128xbf16>, vector<64x128xf32> -> vector<64x128xf32>
    %36 = arith.maximumf %32, %35 : vector<64x128xf32>
    %c7 = arith.constant 7 : index
    %c0_29 = arith.constant 0 : index
    %c0_30 = arith.constant 0 : index
    %37 = vector.load %arg4[%c7, %c0_29, %c0_30] : memref<9x64x256xbf16, #tpu.memory_space<vmem>>, vector<1x64x256xbf16>
    %38 = vector.shape_cast %37 : vector<1x64x256xbf16> to vector<64x256xbf16>
    %cst_31 = arith.constant dense<0.000000e+00> : vector<64x128xf32>
    %39 = tpu.matmul %38, %9, %cst_31 {dimension_numbers = #tpu.dot_dimension_numbers<[1], [0], [0], [1], [0, 0, 1, 1], [], []>} : vector<64x256xbf16>, vector<256x128xbf16>, vector<64x128xf32> -> vector<64x128xf32>
    %40 = arith.maximumf %36, %39 : vector<64x128xf32>
    %c8 = arith.constant 8 : index
    %c0_32 = arith.constant 0 : index
    %c0_33 = arith.constant 0 : index
    %41 = vector.load %arg4[%c8, %c0_32, %c0_33] : memref<9x64x256xbf16, #tpu.memory_space<vmem>>, vector<1x64x256xbf16>
    %42 = vector.shape_cast %41 : vector<1x64x256xbf16> to vector<64x256xbf16>
    %cst_34 = arith.constant dense<0.000000e+00> : vector<64x128xf32>
    %43 = tpu.matmul %42, %9, %cst_34 {dimension_numbers = #tpu.dot_dimension_numbers<[1], [0], [0], [1], [0, 0, 1, 1], [], []>} : vector<64x256xbf16>, vector<256x128xbf16>, vector<64x128xf32> -> vector<64x128xf32>
    %44 = arith.maximumf %40, %43 : vector<64x128xf32>
    %45 = arith.truncf %44 : vector<64x128xf32> to vector<64x128xbf16>
    %c0_35 = arith.constant 0 : index
    %c0_36 = arith.constant 0 : index
    %46 = vector.load %arg5[%c0_35, %c0_36] : memref<128x128xbf16, #tpu.memory_space<vmem>>, vector<128x128xbf16>
    %cst_37 = arith.constant dense<0.000000e+00> : vector<64x128xf32>
    %47 = tpu.matmul %45, %46, %cst_37 {dimension_numbers = #tpu.dot_dimension_numbers<[1], [0], [0], [1], [0, 0, 1, 1], [], []>} : vector<64x128xbf16>, vector<128x128xbf16>, vector<64x128xf32> -> vector<64x128xf32>
    %c0_38 = arith.constant 0 : index
    %c0_39 = arith.constant 0 : index
    %48 = vector.load %arg6[%c0_38, %c0_39] : memref<1x128xf32, #tpu.memory_space<vmem>>, vector<1x128xf32>
    %49 = vector.broadcast %48 : vector<1x128xf32> to vector<64x128xf32>
    %50 = arith.addf %47, %49 : vector<64x128xf32>
    %cst_40 = arith.constant 0.000000e+00 : f32
    %51 = vector.broadcast %cst_40 : f32 to vector<64x128xf32>
    %52 = arith.maximumf %50, %51 : vector<64x128xf32>
    %53 = arith.truncf %52 : vector<64x128xf32> to vector<64x128xbf16>
    %c0_41 = arith.constant 0 : index
    %c0_42 = arith.constant 0 : index
    %c0_43 = arith.constant 0 : index
    %54 = vector.load %arg7[%c0_41, %c0_42, %c0_43] : memref<9x64x64xbf16, #tpu.memory_space<vmem>>, vector<1x64x64xbf16>
    %55 = vector.shape_cast %54 : vector<1x64x64xbf16> to vector<64x64xbf16>
    %cst_44 = arith.constant dense<0.000000e+00> : vector<64x128xf32>
    %56 = tpu.matmul %55, %53, %cst_44 {dimension_numbers = #tpu.dot_dimension_numbers<[1], [0], [0], [1], [0, 0, 1, 1], [], []>} : vector<64x64xbf16>, vector<64x128xbf16>, vector<64x128xf32> -> vector<64x128xf32>
    %57 = arith.truncf %56 : vector<64x128xf32> to vector<64x128xbf16>
    %c0_45 = arith.constant 0 : index
    %c0_46 = arith.constant 0 : index
    %c0_47 = arith.constant 0 : index
    %58 = vector.load %arg8[%c0_45, %c0_46, %c0_47] : memref<9x128x128xbf16, #tpu.memory_space<vmem>>, vector<1x128x128xbf16>
    %59 = vector.shape_cast %58 : vector<1x128x128xbf16> to vector<128x128xbf16>
    %cst_48 = arith.constant dense<0.000000e+00> : vector<64x128xf32>
    %60 = tpu.matmul %57, %59, %cst_48 {dimension_numbers = #tpu.dot_dimension_numbers<[1], [0], [0], [1], [0, 0, 1, 1], [], []>} : vector<64x128xbf16>, vector<128x128xbf16>, vector<64x128xf32> -> vector<64x128xf32>
    %c1_49 = arith.constant 1 : index
    %c0_50 = arith.constant 0 : index
    %c0_51 = arith.constant 0 : index
    %61 = vector.load %arg7[%c1_49, %c0_50, %c0_51] : memref<9x64x64xbf16, #tpu.memory_space<vmem>>, vector<1x64x64xbf16>
    %62 = vector.shape_cast %61 : vector<1x64x64xbf16> to vector<64x64xbf16>
    %cst_52 = arith.constant dense<0.000000e+00> : vector<64x128xf32>
    %63 = tpu.matmul %62, %53, %cst_52 {dimension_numbers = #tpu.dot_dimension_numbers<[1], [0], [0], [1], [0, 0, 1, 1], [], []>} : vector<64x64xbf16>, vector<64x128xbf16>, vector<64x128xf32> -> vector<64x128xf32>
    %64 = arith.truncf %63 : vector<64x128xf32> to vector<64x128xbf16>
    %c1_53 = arith.constant 1 : index
    %c0_54 = arith.constant 0 : index
    %c0_55 = arith.constant 0 : index
    %65 = vector.load %arg8[%c1_53, %c0_54, %c0_55] : memref<9x128x128xbf16, #tpu.memory_space<vmem>>, vector<1x128x128xbf16>
    %66 = vector.shape_cast %65 : vector<1x128x128xbf16> to vector<128x128xbf16>
    %cst_56 = arith.constant dense<0.000000e+00> : vector<64x128xf32>
    %67 = tpu.matmul %64, %66, %cst_56 {dimension_numbers = #tpu.dot_dimension_numbers<[1], [0], [0], [1], [0, 0, 1, 1], [], []>} : vector<64x128xbf16>, vector<128x128xbf16>, vector<64x128xf32> -> vector<64x128xf32>
    %68 = arith.addf %60, %67 : vector<64x128xf32>
    %c2_57 = arith.constant 2 : index
    %c0_58 = arith.constant 0 : index
    %c0_59 = arith.constant 0 : index
    %69 = vector.load %arg7[%c2_57, %c0_58, %c0_59] : memref<9x64x64xbf16, #tpu.memory_space<vmem>>, vector<1x64x64xbf16>
    %70 = vector.shape_cast %69 : vector<1x64x64xbf16> to vector<64x64xbf16>
    %cst_60 = arith.constant dense<0.000000e+00> : vector<64x128xf32>
    %71 = tpu.matmul %70, %53, %cst_60 {dimension_numbers = #tpu.dot_dimension_numbers<[1], [0], [0], [1], [0, 0, 1, 1], [], []>} : vector<64x64xbf16>, vector<64x128xbf16>, vector<64x128xf32> -> vector<64x128xf32>
    %72 = arith.truncf %71 : vector<64x128xf32> to vector<64x128xbf16>
    %c2_61 = arith.constant 2 : index
    %c0_62 = arith.constant 0 : index
    %c0_63 = arith.constant 0 : index
    %73 = vector.load %arg8[%c2_61, %c0_62, %c0_63] : memref<9x128x128xbf16, #tpu.memory_space<vmem>>, vector<1x128x128xbf16>
    %74 = vector.shape_cast %73 : vector<1x128x128xbf16> to vector<128x128xbf16>
    %cst_64 = arith.constant dense<0.000000e+00> : vector<64x128xf32>
    %75 = tpu.matmul %72, %74, %cst_64 {dimension_numbers = #tpu.dot_dimension_numbers<[1], [0], [0], [1], [0, 0, 1, 1], [], []>} : vector<64x128xbf16>, vector<128x128xbf16>, vector<64x128xf32> -> vector<64x128xf32>
    %76 = arith.addf %68, %75 : vector<64x128xf32>
    %c3_65 = arith.constant 3 : index
    %c0_66 = arith.constant 0 : index
    %c0_67 = arith.constant 0 : index
    %77 = vector.load %arg7[%c3_65, %c0_66, %c0_67] : memref<9x64x64xbf16, #tpu.memory_space<vmem>>, vector<1x64x64xbf16>
    %78 = vector.shape_cast %77 : vector<1x64x64xbf16> to vector<64x64xbf16>
    %cst_68 = arith.constant dense<0.000000e+00> : vector<64x128xf32>
    %79 = tpu.matmul %78, %53, %cst_68 {dimension_numbers = #tpu.dot_dimension_numbers<[1], [0], [0], [1], [0, 0, 1, 1], [], []>} : vector<64x64xbf16>, vector<64x128xbf16>, vector<64x128xf32> -> vector<64x128xf32>
    %80 = arith.truncf %79 : vector<64x128xf32> to vector<64x128xbf16>
    %c3_69 = arith.constant 3 : index
    %c0_70 = arith.constant 0 : index
    %c0_71 = arith.constant 0 : index
    %81 = vector.load %arg8[%c3_69, %c0_70, %c0_71] : memref<9x128x128xbf16, #tpu.memory_space<vmem>>, vector<1x128x128xbf16>
    %82 = vector.shape_cast %81 : vector<1x128x128xbf16> to vector<128x128xbf16>
    %cst_72 = arith.constant dense<0.000000e+00> : vector<64x128xf32>
    %83 = tpu.matmul %80, %82, %cst_72 {dimension_numbers = #tpu.dot_dimension_numbers<[1], [0], [0], [1], [0, 0, 1, 1], [], []>} : vector<64x128xbf16>, vector<128x128xbf16>, vector<64x128xf32> -> vector<64x128xf32>
    %84 = arith.addf %76, %83 : vector<64x128xf32>
    %c4_73 = arith.constant 4 : index
    %c0_74 = arith.constant 0 : index
    %c0_75 = arith.constant 0 : index
    %85 = vector.load %arg7[%c4_73, %c0_74, %c0_75] : memref<9x64x64xbf16, #tpu.memory_space<vmem>>, vector<1x64x64xbf16>
    %86 = vector.shape_cast %85 : vector<1x64x64xbf16> to vector<64x64xbf16>
    %cst_76 = arith.constant dense<0.000000e+00> : vector<64x128xf32>
    %87 = tpu.matmul %86, %53, %cst_76 {dimension_numbers = #tpu.dot_dimension_numbers<[1], [0], [0], [1], [0, 0, 1, 1], [], []>} : vector<64x64xbf16>, vector<64x128xbf16>, vector<64x128xf32> -> vector<64x128xf32>
    %88 = arith.truncf %87 : vector<64x128xf32> to vector<64x128xbf16>
    %c4_77 = arith.constant 4 : index
    %c0_78 = arith.constant 0 : index
    %c0_79 = arith.constant 0 : index
    %89 = vector.load %arg8[%c4_77, %c0_78, %c0_79] : memref<9x128x128xbf16, #tpu.memory_space<vmem>>, vector<1x128x128xbf16>
    %90 = vector.shape_cast %89 : vector<1x128x128xbf16> to vector<128x128xbf16>
    %cst_80 = arith.constant dense<0.000000e+00> : vector<64x128xf32>
    %91 = tpu.matmul %88, %90, %cst_80 {dimension_numbers = #tpu.dot_dimension_numbers<[1], [0], [0], [1], [0, 0, 1, 1], [], []>} : vector<64x128xbf16>, vector<128x128xbf16>, vector<64x128xf32> -> vector<64x128xf32>
    %92 = arith.addf %84, %91 : vector<64x128xf32>
    %c5_81 = arith.constant 5 : index
    %c0_82 = arith.constant 0 : index
    %c0_83 = arith.constant 0 : index
    %93 = vector.load %arg7[%c5_81, %c0_82, %c0_83] : memref<9x64x64xbf16, #tpu.memory_space<vmem>>, vector<1x64x64xbf16>
    %94 = vector.shape_cast %93 : vector<1x64x64xbf16> to vector<64x64xbf16>
    %cst_84 = arith.constant dense<0.000000e+00> : vector<64x128xf32>
    %95 = tpu.matmul %94, %53, %cst_84 {dimension_numbers = #tpu.dot_dimension_numbers<[1], [0], [0], [1], [0, 0, 1, 1], [], []>} : vector<64x64xbf16>, vector<64x128xbf16>, vector<64x128xf32> -> vector<64x128xf32>
    %96 = arith.truncf %95 : vector<64x128xf32> to vector<64x128xbf16>
    %c5_85 = arith.constant 5 : index
    %c0_86 = arith.constant 0 : index
    %c0_87 = arith.constant 0 : index
    %97 = vector.load %arg8[%c5_85, %c0_86, %c0_87] : memref<9x128x128xbf16, #tpu.memory_space<vmem>>, vector<1x128x128xbf16>
    %98 = vector.shape_cast %97 : vector<1x128x128xbf16> to vector<128x128xbf16>
    %cst_88 = arith.constant dense<0.000000e+00> : vector<64x128xf32>
    %99 = tpu.matmul %96, %98, %cst_88 {dimension_numbers = #tpu.dot_dimension_numbers<[1], [0], [0], [1], [0, 0, 1, 1], [], []>} : vector<64x128xbf16>, vector<128x128xbf16>, vector<64x128xf32> -> vector<64x128xf32>
    %100 = arith.addf %92, %99 : vector<64x128xf32>
    %c6_89 = arith.constant 6 : index
    %c0_90 = arith.constant 0 : index
    %c0_91 = arith.constant 0 : index
    %101 = vector.load %arg7[%c6_89, %c0_90, %c0_91] : memref<9x64x64xbf16, #tpu.memory_space<vmem>>, vector<1x64x64xbf16>
    %102 = vector.shape_cast %101 : vector<1x64x64xbf16> to vector<64x64xbf16>
    %cst_92 = arith.constant dense<0.000000e+00> : vector<64x128xf32>
    %103 = tpu.matmul %102, %53, %cst_92 {dimension_numbers = #tpu.dot_dimension_numbers<[1], [0], [0], [1], [0, 0, 1, 1], [], []>} : vector<64x64xbf16>, vector<64x128xbf16>, vector<64x128xf32> -> vector<64x128xf32>
    %104 = arith.truncf %103 : vector<64x128xf32> to vector<64x128xbf16>
    %c6_93 = arith.constant 6 : index
    %c0_94 = arith.constant 0 : index
    %c0_95 = arith.constant 0 : index
    %105 = vector.load %arg8[%c6_93, %c0_94, %c0_95] : memref<9x128x128xbf16, #tpu.memory_space<vmem>>, vector<1x128x128xbf16>
    %106 = vector.shape_cast %105 : vector<1x128x128xbf16> to vector<128x128xbf16>
    %cst_96 = arith.constant dense<0.000000e+00> : vector<64x128xf32>
    %107 = tpu.matmul %104, %106, %cst_96 {dimension_numbers = #tpu.dot_dimension_numbers<[1], [0], [0], [1], [0, 0, 1, 1], [], []>} : vector<64x128xbf16>, vector<128x128xbf16>, vector<64x128xf32> -> vector<64x128xf32>
    %108 = arith.addf %100, %107 : vector<64x128xf32>
    %c7_97 = arith.constant 7 : index
    %c0_98 = arith.constant 0 : index
    %c0_99 = arith.constant 0 : index
    %109 = vector.load %arg7[%c7_97, %c0_98, %c0_99] : memref<9x64x64xbf16, #tpu.memory_space<vmem>>, vector<1x64x64xbf16>
    %110 = vector.shape_cast %109 : vector<1x64x64xbf16> to vector<64x64xbf16>
    %cst_100 = arith.constant dense<0.000000e+00> : vector<64x128xf32>
    %111 = tpu.matmul %110, %53, %cst_100 {dimension_numbers = #tpu.dot_dimension_numbers<[1], [0], [0], [1], [0, 0, 1, 1], [], []>} : vector<64x64xbf16>, vector<64x128xbf16>, vector<64x128xf32> -> vector<64x128xf32>
    %112 = arith.truncf %111 : vector<64x128xf32> to vector<64x128xbf16>
    %c7_101 = arith.constant 7 : index
    %c0_102 = arith.constant 0 : index
    %c0_103 = arith.constant 0 : index
    %113 = vector.load %arg8[%c7_101, %c0_102, %c0_103] : memref<9x128x128xbf16, #tpu.memory_space<vmem>>, vector<1x128x128xbf16>
    %114 = vector.shape_cast %113 : vector<1x128x128xbf16> to vector<128x128xbf16>
    %cst_104 = arith.constant dense<0.000000e+00> : vector<64x128xf32>
    %115 = tpu.matmul %112, %114, %cst_104 {dimension_numbers = #tpu.dot_dimension_numbers<[1], [0], [0], [1], [0, 0, 1, 1], [], []>} : vector<64x128xbf16>, vector<128x128xbf16>, vector<64x128xf32> -> vector<64x128xf32>
    %116 = arith.addf %108, %115 : vector<64x128xf32>
    %c8_105 = arith.constant 8 : index
    %c0_106 = arith.constant 0 : index
    %c0_107 = arith.constant 0 : index
    %117 = vector.load %arg7[%c8_105, %c0_106, %c0_107] : memref<9x64x64xbf16, #tpu.memory_space<vmem>>, vector<1x64x64xbf16>
    %118 = vector.shape_cast %117 : vector<1x64x64xbf16> to vector<64x64xbf16>
    %cst_108 = arith.constant dense<0.000000e+00> : vector<64x128xf32>
    %119 = tpu.matmul %118, %53, %cst_108 {dimension_numbers = #tpu.dot_dimension_numbers<[1], [0], [0], [1], [0, 0, 1, 1], [], []>} : vector<64x64xbf16>, vector<64x128xbf16>, vector<64x128xf32> -> vector<64x128xf32>
    %120 = arith.truncf %119 : vector<64x128xf32> to vector<64x128xbf16>
    %c8_109 = arith.constant 8 : index
    %c0_110 = arith.constant 0 : index
    %c0_111 = arith.constant 0 : index
    %121 = vector.load %arg8[%c8_109, %c0_110, %c0_111] : memref<9x128x128xbf16, #tpu.memory_space<vmem>>, vector<1x128x128xbf16>
    %122 = vector.shape_cast %121 : vector<1x128x128xbf16> to vector<128x128xbf16>
    %cst_112 = arith.constant dense<0.000000e+00> : vector<64x128xf32>
    %123 = tpu.matmul %120, %122, %cst_112 {dimension_numbers = #tpu.dot_dimension_numbers<[1], [0], [0], [1], [0, 0, 1, 1], [], []>} : vector<64x128xbf16>, vector<128x128xbf16>, vector<64x128xf32> -> vector<64x128xf32>
    %124 = arith.addf %116, %123 : vector<64x128xf32>
    %c0_113 = arith.constant 0 : index
    %c0_114 = arith.constant 0 : index
    %125 = vector.load %arg9[%c0_113, %c0_114] : memref<1x128xf32, #tpu.memory_space<vmem>>, vector<1x128xf32>
    %126 = vector.broadcast %125 : vector<1x128xf32> to vector<64x128xf32>
    %127 = arith.addf %124, %126 : vector<64x128xf32>
    %cst_115 = arith.constant 0.000000e+00 : f32
    %128 = vector.broadcast %cst_115 : f32 to vector<64x128xf32>
    %129 = arith.maximumf %127, %128 : vector<64x128xf32>
    %130 = arith.truncf %129 : vector<64x128xf32> to vector<64x128xbf16>
    %c4_116 = arith.constant 4 : index
    %c0_117 = arith.constant 0 : index
    %c0_118 = arith.constant 0 : index
    %131 = vector.load %arg7[%c4_116, %c0_117, %c0_118] : memref<9x64x64xbf16, #tpu.memory_space<vmem>>, vector<1x64x64xbf16>
    %132 = vector.shape_cast %131 : vector<1x64x64xbf16> to vector<64x64xbf16>
    %cst_119 = arith.constant dense<0.000000e+00> : vector<64x128xf32>
    %133 = tpu.matmul %132, %45, %cst_119 {dimension_numbers = #tpu.dot_dimension_numbers<[1], [0], [0], [1], [0, 0, 1, 1], [], []>} : vector<64x64xbf16>, vector<64x128xbf16>, vector<64x128xf32> -> vector<64x128xf32>
    %134 = arith.truncf %133 : vector<64x128xf32> to vector<64x128xbf16>
    %c0_120 = arith.constant 0 : index
    %c0_121 = arith.constant 0 : index
    %135 = vector.load %arg12[%c0_120, %c0_121] : memref<128x128xbf16, #tpu.memory_space<vmem>>, vector<128x128xbf16>
    %cst_122 = arith.constant dense<0.000000e+00> : vector<64x128xf32>
    %136 = tpu.matmul %134, %135, %cst_122 {dimension_numbers = #tpu.dot_dimension_numbers<[1], [0], [0], [1], [0, 0, 1, 1], [], []>} : vector<64x128xbf16>, vector<128x128xbf16>, vector<64x128xf32> -> vector<64x128xf32>
    %c0_123 = arith.constant 0 : index
    %c0_124 = arith.constant 0 : index
    %137 = vector.load %arg13[%c0_123, %c0_124] : memref<1x128xf32, #tpu.memory_space<vmem>>, vector<1x128xf32>
    %138 = vector.broadcast %137 : vector<1x128xf32> to vector<64x128xf32>
    %139 = arith.addf %136, %138 : vector<64x128xf32>
    %c0_125 = arith.constant 0 : index
    %c0_126 = arith.constant 0 : index
    %140 = vector.load %arg10[%c0_125, %c0_126] : memref<128x128xbf16, #tpu.memory_space<vmem>>, vector<128x128xbf16>
    %cst_127 = arith.constant dense<0.000000e+00> : vector<64x128xf32>
    %141 = tpu.matmul %130, %140, %cst_127 {dimension_numbers = #tpu.dot_dimension_numbers<[1], [0], [0], [1], [0, 0, 1, 1], [], []>} : vector<64x128xbf16>, vector<128x128xbf16>, vector<64x128xf32> -> vector<64x128xf32>
    %c0_128 = arith.constant 0 : index
    %c0_129 = arith.constant 0 : index
    %142 = vector.load %arg11[%c0_128, %c0_129] : memref<1x128xf32, #tpu.memory_space<vmem>>, vector<1x128xf32>
    %143 = vector.broadcast %142 : vector<1x128xf32> to vector<64x128xf32>
    %144 = arith.addf %141, %143 : vector<64x128xf32>
    %145 = arith.addf %144, %139 : vector<64x128xf32>
    %cst_130 = arith.constant 0.000000e+00 : f32
    %146 = vector.broadcast %cst_130 : f32 to vector<64x128xf32>
    %147 = arith.maximumf %145, %146 : vector<64x128xf32>
    %148 = arith.truncf %147 : vector<64x128xf32> to vector<64x128xbf16>
    %c0_131 = arith.constant 0 : index
    %c0_132 = arith.constant 0 : index
    %149 = vector.load %arg14[%c0_131, %c0_132] : memref<128x128xbf16, #tpu.memory_space<vmem>>, vector<128x128xbf16>
    %cst_133 = arith.constant dense<0.000000e+00> : vector<64x128xf32>
    %150 = tpu.matmul %148, %149, %cst_133 {dimension_numbers = #tpu.dot_dimension_numbers<[1], [0], [0], [1], [0, 0, 1, 1], [], []>} : vector<64x128xbf16>, vector<128x128xbf16>, vector<64x128xf32> -> vector<64x128xf32>
    %c0_134 = arith.constant 0 : index
    %c0_135 = arith.constant 0 : index
    %151 = vector.load %arg15[%c0_134, %c0_135] : memref<1x128xf32, #tpu.memory_space<vmem>>, vector<1x128xf32>
    %152 = vector.broadcast %151 : vector<1x128xf32> to vector<64x128xf32>
    %153 = arith.addf %150, %152 : vector<64x128xf32>
    %cst_136 = arith.constant 0.000000e+00 : f32
    %154 = vector.broadcast %cst_136 : f32 to vector<64x128xf32>
    %155 = arith.maximumf %153, %154 : vector<64x128xf32>
    %156 = arith.truncf %155 : vector<64x128xf32> to vector<64x128xbf16>
    %c0_137 = arith.constant 0 : index
    %c0_138 = arith.constant 0 : index
    %c0_139 = arith.constant 0 : index
    %157 = vector.load %arg16[%c0_137, %c0_138, %c0_139] : memref<9x16x64xbf16, #tpu.memory_space<vmem>>, vector<1x16x64xbf16>
    %158 = vector.shape_cast %157 : vector<1x16x64xbf16> to vector<16x64xbf16>
    %cst_140 = arith.constant dense<0.000000e+00> : vector<16x128xf32>
    %159 = tpu.matmul %158, %156, %cst_140 {dimension_numbers = #tpu.dot_dimension_numbers<[1], [0], [0], [1], [0, 0, 1, 1], [], []>} : vector<16x64xbf16>, vector<64x128xbf16>, vector<16x128xf32> -> vector<16x128xf32>
    %160 = arith.truncf %159 : vector<16x128xf32> to vector<16x128xbf16>
    %c0_141 = arith.constant 0 : index
    %c0_142 = arith.constant 0 : index
    %c0_143 = arith.constant 0 : index
    %161 = vector.load %arg17[%c0_141, %c0_142, %c0_143] : memref<9x128x128xbf16, #tpu.memory_space<vmem>>, vector<1x128x128xbf16>
    %162 = vector.shape_cast %161 : vector<1x128x128xbf16> to vector<128x128xbf16>
    %cst_144 = arith.constant dense<0.000000e+00> : vector<16x128xf32>
    %163 = tpu.matmul %160, %162, %cst_144 {dimension_numbers = #tpu.dot_dimension_numbers<[1], [0], [0], [1], [0, 0, 1, 1], [], []>} : vector<16x128xbf16>, vector<128x128xbf16>, vector<16x128xf32> -> vector<16x128xf32>
    %c1_145 = arith.constant 1 : index
    %c0_146 = arith.constant 0 : index
    %c0_147 = arith.constant 0 : index
    %164 = vector.load %arg16[%c1_145, %c0_146, %c0_147] : memref<9x16x64xbf16, #tpu.memory_space<vmem>>, vector<1x16x64xbf16>
    %165 = vector.shape_cast %164 : vector<1x16x64xbf16> to vector<16x64xbf16>
    %cst_148 = arith.constant dense<0.000000e+00> : vector<16x128xf32>
    %166 = tpu.matmul %165, %156, %cst_148 {dimension_numbers = #tpu.dot_dimension_numbers<[1], [0], [0], [1], [0, 0, 1, 1], [], []>} : vector<16x64xbf16>, vector<64x128xbf16>, vector<16x128xf32> -> vector<16x128xf32>
    %167 = arith.truncf %166 : vector<16x128xf32> to vector<16x128xbf16>
    %c1_149 = arith.constant 1 : index
    %c0_150 = arith.constant 0 : index
    %c0_151 = arith.constant 0 : index
    %168 = vector.load %arg17[%c1_149, %c0_150, %c0_151] : memref<9x128x128xbf16, #tpu.memory_space<vmem>>, vector<1x128x128xbf16>
    %169 = vector.shape_cast %168 : vector<1x128x128xbf16> to vector<128x128xbf16>
    %cst_152 = arith.constant dense<0.000000e+00> : vector<16x128xf32>
    %170 = tpu.matmul %167, %169, %cst_152 {dimension_numbers = #tpu.dot_dimension_numbers<[1], [0], [0], [1], [0, 0, 1, 1], [], []>} : vector<16x128xbf16>, vector<128x128xbf16>, vector<16x128xf32> -> vector<16x128xf32>
    %171 = arith.addf %163, %170 : vector<16x128xf32>
    %c2_153 = arith.constant 2 : index
    %c0_154 = arith.constant 0 : index
    %c0_155 = arith.constant 0 : index
    %172 = vector.load %arg16[%c2_153, %c0_154, %c0_155] : memref<9x16x64xbf16, #tpu.memory_space<vmem>>, vector<1x16x64xbf16>
    %173 = vector.shape_cast %172 : vector<1x16x64xbf16> to vector<16x64xbf16>
    %cst_156 = arith.constant dense<0.000000e+00> : vector<16x128xf32>
    %174 = tpu.matmul %173, %156, %cst_156 {dimension_numbers = #tpu.dot_dimension_numbers<[1], [0], [0], [1], [0, 0, 1, 1], [], []>} : vector<16x64xbf16>, vector<64x128xbf16>, vector<16x128xf32> -> vector<16x128xf32>
    %175 = arith.truncf %174 : vector<16x128xf32> to vector<16x128xbf16>
    %c2_157 = arith.constant 2 : index
    %c0_158 = arith.constant 0 : index
    %c0_159 = arith.constant 0 : index
    %176 = vector.load %arg17[%c2_157, %c0_158, %c0_159] : memref<9x128x128xbf16, #tpu.memory_space<vmem>>, vector<1x128x128xbf16>
    %177 = vector.shape_cast %176 : vector<1x128x128xbf16> to vector<128x128xbf16>
    %cst_160 = arith.constant dense<0.000000e+00> : vector<16x128xf32>
    %178 = tpu.matmul %175, %177, %cst_160 {dimension_numbers = #tpu.dot_dimension_numbers<[1], [0], [0], [1], [0, 0, 1, 1], [], []>} : vector<16x128xbf16>, vector<128x128xbf16>, vector<16x128xf32> -> vector<16x128xf32>
    %179 = arith.addf %171, %178 : vector<16x128xf32>
    %c3_161 = arith.constant 3 : index
    %c0_162 = arith.constant 0 : index
    %c0_163 = arith.constant 0 : index
    %180 = vector.load %arg16[%c3_161, %c0_162, %c0_163] : memref<9x16x64xbf16, #tpu.memory_space<vmem>>, vector<1x16x64xbf16>
    %181 = vector.shape_cast %180 : vector<1x16x64xbf16> to vector<16x64xbf16>
    %cst_164 = arith.constant dense<0.000000e+00> : vector<16x128xf32>
    %182 = tpu.matmul %181, %156, %cst_164 {dimension_numbers = #tpu.dot_dimension_numbers<[1], [0], [0], [1], [0, 0, 1, 1], [], []>} : vector<16x64xbf16>, vector<64x128xbf16>, vector<16x128xf32> -> vector<16x128xf32>
    %183 = arith.truncf %182 : vector<16x128xf32> to vector<16x128xbf16>
    %c3_165 = arith.constant 3 : index
    %c0_166 = arith.constant 0 : index
    %c0_167 = arith.constant 0 : index
    %184 = vector.load %arg17[%c3_165, %c0_166, %c0_167] : memref<9x128x128xbf16, #tpu.memory_space<vmem>>, vector<1x128x128xbf16>
    %185 = vector.shape_cast %184 : vector<1x128x128xbf16> to vector<128x128xbf16>
    %cst_168 = arith.constant dense<0.000000e+00> : vector<16x128xf32>
    %186 = tpu.matmul %183, %185, %cst_168 {dimension_numbers = #tpu.dot_dimension_numbers<[1], [0], [0], [1], [0, 0, 1, 1], [], []>} : vector<16x128xbf16>, vector<128x128xbf16>, vector<16x128xf32> -> vector<16x128xf32>
    %187 = arith.addf %179, %186 : vector<16x128xf32>
    %c4_169 = arith.constant 4 : index
    %c0_170 = arith.constant 0 : index
    %c0_171 = arith.constant 0 : index
    %188 = vector.load %arg16[%c4_169, %c0_170, %c0_171] : memref<9x16x64xbf16, #tpu.memory_space<vmem>>, vector<1x16x64xbf16>
    %189 = vector.shape_cast %188 : vector<1x16x64xbf16> to vector<16x64xbf16>
    %cst_172 = arith.constant dense<0.000000e+00> : vector<16x128xf32>
    %190 = tpu.matmul %189, %156, %cst_172 {dimension_numbers = #tpu.dot_dimension_numbers<[1], [0], [0], [1], [0, 0, 1, 1], [], []>} : vector<16x64xbf16>, vector<64x128xbf16>, vector<16x128xf32> -> vector<16x128xf32>
    %191 = arith.truncf %190 : vector<16x128xf32> to vector<16x128xbf16>
    %c4_173 = arith.constant 4 : index
    %c0_174 = arith.constant 0 : index
    %c0_175 = arith.constant 0 : index
    %192 = vector.load %arg17[%c4_173, %c0_174, %c0_175] : memref<9x128x128xbf16, #tpu.memory_space<vmem>>, vector<1x128x128xbf16>
    %193 = vector.shape_cast %192 : vector<1x128x128xbf16> to vector<128x128xbf16>
    %cst_176 = arith.constant dense<0.000000e+00> : vector<16x128xf32>
    %194 = tpu.matmul %191, %193, %cst_176 {dimension_numbers = #tpu.dot_dimension_numbers<[1], [0], [0], [1], [0, 0, 1, 1], [], []>} : vector<16x128xbf16>, vector<128x128xbf16>, vector<16x128xf32> -> vector<16x128xf32>
    %195 = arith.addf %187, %194 : vector<16x128xf32>
    %c5_177 = arith.constant 5 : index
    %c0_178 = arith.constant 0 : index
    %c0_179 = arith.constant 0 : index
    %196 = vector.load %arg16[%c5_177, %c0_178, %c0_179] : memref<9x16x64xbf16, #tpu.memory_space<vmem>>, vector<1x16x64xbf16>
    %197 = vector.shape_cast %196 : vector<1x16x64xbf16> to vector<16x64xbf16>
    %cst_180 = arith.constant dense<0.000000e+00> : vector<16x128xf32>
    %198 = tpu.matmul %197, %156, %cst_180 {dimension_numbers = #tpu.dot_dimension_numbers<[1], [0], [0], [1], [0, 0, 1, 1], [], []>} : vector<16x64xbf16>, vector<64x128xbf16>, vector<16x128xf32> -> vector<16x128xf32>
    %199 = arith.truncf %198 : vector<16x128xf32> to vector<16x128xbf16>
    %c5_181 = arith.constant 5 : index
    %c0_182 = arith.constant 0 : index
    %c0_183 = arith.constant 0 : index
    %200 = vector.load %arg17[%c5_181, %c0_182, %c0_183] : memref<9x128x128xbf16, #tpu.memory_space<vmem>>, vector<1x128x128xbf16>
    %201 = vector.shape_cast %200 : vector<1x128x128xbf16> to vector<128x128xbf16>
    %cst_184 = arith.constant dense<0.000000e+00> : vector<16x128xf32>
    %202 = tpu.matmul %199, %201, %cst_184 {dimension_numbers = #tpu.dot_dimension_numbers<[1], [0], [0], [1], [0, 0, 1, 1], [], []>} : vector<16x128xbf16>, vector<128x128xbf16>, vector<16x128xf32> -> vector<16x128xf32>
    %203 = arith.addf %195, %202 : vector<16x128xf32>
    %c6_185 = arith.constant 6 : index
    %c0_186 = arith.constant 0 : index
    %c0_187 = arith.constant 0 : index
    %204 = vector.load %arg16[%c6_185, %c0_186, %c0_187] : memref<9x16x64xbf16, #tpu.memory_space<vmem>>, vector<1x16x64xbf16>
    %205 = vector.shape_cast %204 : vector<1x16x64xbf16> to vector<16x64xbf16>
    %cst_188 = arith.constant dense<0.000000e+00> : vector<16x128xf32>
    %206 = tpu.matmul %205, %156, %cst_188 {dimension_numbers = #tpu.dot_dimension_numbers<[1], [0], [0], [1], [0, 0, 1, 1], [], []>} : vector<16x64xbf16>, vector<64x128xbf16>, vector<16x128xf32> -> vector<16x128xf32>
    %207 = arith.truncf %206 : vector<16x128xf32> to vector<16x128xbf16>
    %c6_189 = arith.constant 6 : index
    %c0_190 = arith.constant 0 : index
    %c0_191 = arith.constant 0 : index
    %208 = vector.load %arg17[%c6_189, %c0_190, %c0_191] : memref<9x128x128xbf16, #tpu.memory_space<vmem>>, vector<1x128x128xbf16>
    %209 = vector.shape_cast %208 : vector<1x128x128xbf16> to vector<128x128xbf16>
    %cst_192 = arith.constant dense<0.000000e+00> : vector<16x128xf32>
    %210 = tpu.matmul %207, %209, %cst_192 {dimension_numbers = #tpu.dot_dimension_numbers<[1], [0], [0], [1], [0, 0, 1, 1], [], []>} : vector<16x128xbf16>, vector<128x128xbf16>, vector<16x128xf32> -> vector<16x128xf32>
    %211 = arith.addf %203, %210 : vector<16x128xf32>
    %c7_193 = arith.constant 7 : index
    %c0_194 = arith.constant 0 : index
    %c0_195 = arith.constant 0 : index
    %212 = vector.load %arg16[%c7_193, %c0_194, %c0_195] : memref<9x16x64xbf16, #tpu.memory_space<vmem>>, vector<1x16x64xbf16>
    %213 = vector.shape_cast %212 : vector<1x16x64xbf16> to vector<16x64xbf16>
    %cst_196 = arith.constant dense<0.000000e+00> : vector<16x128xf32>
    %214 = tpu.matmul %213, %156, %cst_196 {dimension_numbers = #tpu.dot_dimension_numbers<[1], [0], [0], [1], [0, 0, 1, 1], [], []>} : vector<16x64xbf16>, vector<64x128xbf16>, vector<16x128xf32> -> vector<16x128xf32>
    %215 = arith.truncf %214 : vector<16x128xf32> to vector<16x128xbf16>
    %c7_197 = arith.constant 7 : index
    %c0_198 = arith.constant 0 : index
    %c0_199 = arith.constant 0 : index
    %216 = vector.load %arg17[%c7_197, %c0_198, %c0_199] : memref<9x128x128xbf16, #tpu.memory_space<vmem>>, vector<1x128x128xbf16>
    %217 = vector.shape_cast %216 : vector<1x128x128xbf16> to vector<128x128xbf16>
    %cst_200 = arith.constant dense<0.000000e+00> : vector<16x128xf32>
    %218 = tpu.matmul %215, %217, %cst_200 {dimension_numbers = #tpu.dot_dimension_numbers<[1], [0], [0], [1], [0, 0, 1, 1], [], []>} : vector<16x128xbf16>, vector<128x128xbf16>, vector<16x128xf32> -> vector<16x128xf32>
    %219 = arith.addf %211, %218 : vector<16x128xf32>
    %c8_201 = arith.constant 8 : index
    %c0_202 = arith.constant 0 : index
    %c0_203 = arith.constant 0 : index
    %220 = vector.load %arg16[%c8_201, %c0_202, %c0_203] : memref<9x16x64xbf16, #tpu.memory_space<vmem>>, vector<1x16x64xbf16>
    %221 = vector.shape_cast %220 : vector<1x16x64xbf16> to vector<16x64xbf16>
    %cst_204 = arith.constant dense<0.000000e+00> : vector<16x128xf32>
    %222 = tpu.matmul %221, %156, %cst_204 {dimension_numbers = #tpu.dot_dimension_numbers<[1], [0], [0], [1], [0, 0, 1, 1], [], []>} : vector<16x64xbf16>, vector<64x128xbf16>, vector<16x128xf32> -> vector<16x128xf32>
    %223 = arith.truncf %222 : vector<16x128xf32> to vector<16x128xbf16>
    %c8_205 = arith.constant 8 : index
    %c0_206 = arith.constant 0 : index
    %c0_207 = arith.constant 0 : index
    %224 = vector.load %arg17[%c8_205, %c0_206, %c0_207] : memref<9x128x128xbf16, #tpu.memory_space<vmem>>, vector<1x128x128xbf16>
    %225 = vector.shape_cast %224 : vector<1x128x128xbf16> to vector<128x128xbf16>
    %cst_208 = arith.constant dense<0.000000e+00> : vector<16x128xf32>
    %226 = tpu.matmul %223, %225, %cst_208 {dimension_numbers = #tpu.dot_dimension_numbers<[1], [0], [0], [1], [0, 0, 1, 1], [], []>} : vector<16x128xbf16>, vector<128x128xbf16>, vector<16x128xf32> -> vector<16x128xf32>
    %227 = arith.addf %219, %226 : vector<16x128xf32>
    %c0_209 = arith.constant 0 : index
    %c0_210 = arith.constant 0 : index
    %228 = vector.load %arg18[%c0_209, %c0_210] : memref<1x128xf32, #tpu.memory_space<vmem>>, vector<1x128xf32>
    %229 = vector.broadcast %228 : vector<1x128xf32> to vector<16x128xf32>
    %230 = arith.addf %227, %229 : vector<16x128xf32>
    %cst_211 = arith.constant 0.000000e+00 : f32
    %231 = vector.broadcast %cst_211 : f32 to vector<16x128xf32>
    %232 = arith.maximumf %230, %231 : vector<16x128xf32>
    %233 = arith.truncf %232 : vector<16x128xf32> to vector<16x128xbf16>
    %c4_212 = arith.constant 4 : index
    %c0_213 = arith.constant 0 : index
    %c0_214 = arith.constant 0 : index
    %234 = vector.load %arg16[%c4_212, %c0_213, %c0_214] : memref<9x16x64xbf16, #tpu.memory_space<vmem>>, vector<1x16x64xbf16>
    %235 = vector.shape_cast %234 : vector<1x16x64xbf16> to vector<16x64xbf16>
    %cst_215 = arith.constant dense<0.000000e+00> : vector<16x128xf32>
    %236 = tpu.matmul %235, %148, %cst_215 {dimension_numbers = #tpu.dot_dimension_numbers<[1], [0], [0], [1], [0, 0, 1, 1], [], []>} : vector<16x64xbf16>, vector<64x128xbf16>, vector<16x128xf32> -> vector<16x128xf32>
    %237 = arith.truncf %236 : vector<16x128xf32> to vector<16x128xbf16>
    %c0_216 = arith.constant 0 : index
    %c0_217 = arith.constant 0 : index
    %238 = vector.load %arg21[%c0_216, %c0_217] : memref<128x128xbf16, #tpu.memory_space<vmem>>, vector<128x128xbf16>
    %cst_218 = arith.constant dense<0.000000e+00> : vector<16x128xf32>
    %239 = tpu.matmul %237, %238, %cst_218 {dimension_numbers = #tpu.dot_dimension_numbers<[1], [0], [0], [1], [0, 0, 1, 1], [], []>} : vector<16x128xbf16>, vector<128x128xbf16>, vector<16x128xf32> -> vector<16x128xf32>
    %c0_219 = arith.constant 0 : index
    %c0_220 = arith.constant 0 : index
    %240 = vector.load %arg22[%c0_219, %c0_220] : memref<1x128xf32, #tpu.memory_space<vmem>>, vector<1x128xf32>
    %241 = vector.broadcast %240 : vector<1x128xf32> to vector<16x128xf32>
    %242 = arith.addf %239, %241 : vector<16x128xf32>
    %c0_221 = arith.constant 0 : index
    %c0_222 = arith.constant 0 : index
    %243 = vector.load %arg19[%c0_221, %c0_222] : memref<128x128xbf16, #tpu.memory_space<vmem>>, vector<128x128xbf16>
    %cst_223 = arith.constant dense<0.000000e+00> : vector<16x128xf32>
    %244 = tpu.matmul %233, %243, %cst_223 {dimension_numbers = #tpu.dot_dimension_numbers<[1], [0], [0], [1], [0, 0, 1, 1], [], []>} : vector<16x128xbf16>, vector<128x128xbf16>, vector<16x128xf32> -> vector<16x128xf32>
    %c0_224 = arith.constant 0 : index
    %c0_225 = arith.constant 0 : index
    %245 = vector.load %arg20[%c0_224, %c0_225] : memref<1x128xf32, #tpu.memory_space<vmem>>, vector<1x128xf32>
    %246 = vector.broadcast %245 : vector<1x128xf32> to vector<16x128xf32>
    %247 = arith.addf %244, %246 : vector<16x128xf32>
    %248 = arith.addf %247, %242 : vector<16x128xf32>
    %cst_226 = arith.constant 0.000000e+00 : f32
    %249 = vector.broadcast %cst_226 : f32 to vector<16x128xf32>
    %250 = arith.maximumf %248, %249 : vector<16x128xf32>
    %251 = arith.truncf %250 : vector<16x128xf32> to vector<16x128xbf16>
    %c0_227 = arith.constant 0 : index
    %c0_228 = arith.constant 0 : index
    %252 = vector.load %arg23[%c0_227, %c0_228] : memref<128x128xbf16, #tpu.memory_space<vmem>>, vector<128x128xbf16>
    %cst_229 = arith.constant dense<0.000000e+00> : vector<16x128xf32>
    %253 = tpu.matmul %251, %252, %cst_229 {dimension_numbers = #tpu.dot_dimension_numbers<[1], [0], [0], [1], [0, 0, 1, 1], [], []>} : vector<16x128xbf16>, vector<128x128xbf16>, vector<16x128xf32> -> vector<16x128xf32>
    %c0_230 = arith.constant 0 : index
    %c0_231 = arith.constant 0 : index
    %254 = vector.load %arg24[%c0_230, %c0_231] : memref<1x128xf32, #tpu.memory_space<vmem>>, vector<1x128xf32>
    %255 = vector.broadcast %254 : vector<1x128xf32> to vector<16x128xf32>
    %256 = arith.addf %253, %255 : vector<16x128xf32>
    %cst_232 = arith.constant 0.000000e+00 : f32
    %257 = vector.broadcast %cst_232 : f32 to vector<16x128xf32>
    %258 = arith.maximumf %256, %257 : vector<16x128xf32>
    %259 = arith.truncf %258 : vector<16x128xf32> to vector<16x128xbf16>
    %c0_233 = arith.constant 0 : index
    %c0_234 = arith.constant 0 : index
    %c0_235 = arith.constant 0 : index
    %260 = vector.load %arg25[%c0_233, %c0_234, %c0_235] : memref<9x4x16xbf16, #tpu.memory_space<vmem>>, vector<1x4x16xbf16>
    %261 = vector.shape_cast %260 : vector<1x4x16xbf16> to vector<4x16xbf16>
    %cst_236 = arith.constant dense<0.000000e+00> : vector<4x128xf32>
    %262 = tpu.matmul %261, %259, %cst_236 {dimension_numbers = #tpu.dot_dimension_numbers<[1], [0], [0], [1], [0, 0, 1, 1], [], []>} : vector<4x16xbf16>, vector<16x128xbf16>, vector<4x128xf32> -> vector<4x128xf32>
    %263 = arith.truncf %262 : vector<4x128xf32> to vector<4x128xbf16>
    %c0_237 = arith.constant 0 : index
    %c0_238 = arith.constant 0 : index
    %c0_239 = arith.constant 0 : index
    %264 = vector.load %arg26[%c0_237, %c0_238, %c0_239] : memref<9x128x128xbf16, #tpu.memory_space<vmem>>, vector<1x128x128xbf16>
    %265 = vector.shape_cast %264 : vector<1x128x128xbf16> to vector<128x128xbf16>
    %cst_240 = arith.constant dense<0.000000e+00> : vector<4x128xf32>
    %266 = tpu.matmul %263, %265, %cst_240 {dimension_numbers = #tpu.dot_dimension_numbers<[1], [0], [0], [1], [0, 0, 1, 1], [], []>} : vector<4x128xbf16>, vector<128x128xbf16>, vector<4x128xf32> -> vector<4x128xf32>
    %c1_241 = arith.constant 1 : index
    %c0_242 = arith.constant 0 : index
    %c0_243 = arith.constant 0 : index
    %267 = vector.load %arg25[%c1_241, %c0_242, %c0_243] : memref<9x4x16xbf16, #tpu.memory_space<vmem>>, vector<1x4x16xbf16>
    %268 = vector.shape_cast %267 : vector<1x4x16xbf16> to vector<4x16xbf16>
    %cst_244 = arith.constant dense<0.000000e+00> : vector<4x128xf32>
    %269 = tpu.matmul %268, %259, %cst_244 {dimension_numbers = #tpu.dot_dimension_numbers<[1], [0], [0], [1], [0, 0, 1, 1], [], []>} : vector<4x16xbf16>, vector<16x128xbf16>, vector<4x128xf32> -> vector<4x128xf32>
    %270 = arith.truncf %269 : vector<4x128xf32> to vector<4x128xbf16>
    %c1_245 = arith.constant 1 : index
    %c0_246 = arith.constant 0 : index
    %c0_247 = arith.constant 0 : index
    %271 = vector.load %arg26[%c1_245, %c0_246, %c0_247] : memref<9x128x128xbf16, #tpu.memory_space<vmem>>, vector<1x128x128xbf16>
    %272 = vector.shape_cast %271 : vector<1x128x128xbf16> to vector<128x128xbf16>
    %cst_248 = arith.constant dense<0.000000e+00> : vector<4x128xf32>
    %273 = tpu.matmul %270, %272, %cst_248 {dimension_numbers = #tpu.dot_dimension_numbers<[1], [0], [0], [1], [0, 0, 1, 1], [], []>} : vector<4x128xbf16>, vector<128x128xbf16>, vector<4x128xf32> -> vector<4x128xf32>
    %274 = arith.addf %266, %273 : vector<4x128xf32>
    %c2_249 = arith.constant 2 : index
    %c0_250 = arith.constant 0 : index
    %c0_251 = arith.constant 0 : index
    %275 = vector.load %arg25[%c2_249, %c0_250, %c0_251] : memref<9x4x16xbf16, #tpu.memory_space<vmem>>, vector<1x4x16xbf16>
    %276 = vector.shape_cast %275 : vector<1x4x16xbf16> to vector<4x16xbf16>
    %cst_252 = arith.constant dense<0.000000e+00> : vector<4x128xf32>
    %277 = tpu.matmul %276, %259, %cst_252 {dimension_numbers = #tpu.dot_dimension_numbers<[1], [0], [0], [1], [0, 0, 1, 1], [], []>} : vector<4x16xbf16>, vector<16x128xbf16>, vector<4x128xf32> -> vector<4x128xf32>
    %278 = arith.truncf %277 : vector<4x128xf32> to vector<4x128xbf16>
    %c2_253 = arith.constant 2 : index
    %c0_254 = arith.constant 0 : index
    %c0_255 = arith.constant 0 : index
    %279 = vector.load %arg26[%c2_253, %c0_254, %c0_255] : memref<9x128x128xbf16, #tpu.memory_space<vmem>>, vector<1x128x128xbf16>
    %280 = vector.shape_cast %279 : vector<1x128x128xbf16> to vector<128x128xbf16>
    %cst_256 = arith.constant dense<0.000000e+00> : vector<4x128xf32>
    %281 = tpu.matmul %278, %280, %cst_256 {dimension_numbers = #tpu.dot_dimension_numbers<[1], [0], [0], [1], [0, 0, 1, 1], [], []>} : vector<4x128xbf16>, vector<128x128xbf16>, vector<4x128xf32> -> vector<4x128xf32>
    %282 = arith.addf %274, %281 : vector<4x128xf32>
    %c3_257 = arith.constant 3 : index
    %c0_258 = arith.constant 0 : index
    %c0_259 = arith.constant 0 : index
    %283 = vector.load %arg25[%c3_257, %c0_258, %c0_259] : memref<9x4x16xbf16, #tpu.memory_space<vmem>>, vector<1x4x16xbf16>
    %284 = vector.shape_cast %283 : vector<1x4x16xbf16> to vector<4x16xbf16>
    %cst_260 = arith.constant dense<0.000000e+00> : vector<4x128xf32>
    %285 = tpu.matmul %284, %259, %cst_260 {dimension_numbers = #tpu.dot_dimension_numbers<[1], [0], [0], [1], [0, 0, 1, 1], [], []>} : vector<4x16xbf16>, vector<16x128xbf16>, vector<4x128xf32> -> vector<4x128xf32>
    %286 = arith.truncf %285 : vector<4x128xf32> to vector<4x128xbf16>
    %c3_261 = arith.constant 3 : index
    %c0_262 = arith.constant 0 : index
    %c0_263 = arith.constant 0 : index
    %287 = vector.load %arg26[%c3_261, %c0_262, %c0_263] : memref<9x128x128xbf16, #tpu.memory_space<vmem>>, vector<1x128x128xbf16>
    %288 = vector.shape_cast %287 : vector<1x128x128xbf16> to vector<128x128xbf16>
    %cst_264 = arith.constant dense<0.000000e+00> : vector<4x128xf32>
    %289 = tpu.matmul %286, %288, %cst_264 {dimension_numbers = #tpu.dot_dimension_numbers<[1], [0], [0], [1], [0, 0, 1, 1], [], []>} : vector<4x128xbf16>, vector<128x128xbf16>, vector<4x128xf32> -> vector<4x128xf32>
    %290 = arith.addf %282, %289 : vector<4x128xf32>
    %c4_265 = arith.constant 4 : index
    %c0_266 = arith.constant 0 : index
    %c0_267 = arith.constant 0 : index
    %291 = vector.load %arg25[%c4_265, %c0_266, %c0_267] : memref<9x4x16xbf16, #tpu.memory_space<vmem>>, vector<1x4x16xbf16>
    %292 = vector.shape_cast %291 : vector<1x4x16xbf16> to vector<4x16xbf16>
    %cst_268 = arith.constant dense<0.000000e+00> : vector<4x128xf32>
    %293 = tpu.matmul %292, %259, %cst_268 {dimension_numbers = #tpu.dot_dimension_numbers<[1], [0], [0], [1], [0, 0, 1, 1], [], []>} : vector<4x16xbf16>, vector<16x128xbf16>, vector<4x128xf32> -> vector<4x128xf32>
    %294 = arith.truncf %293 : vector<4x128xf32> to vector<4x128xbf16>
    %c4_269 = arith.constant 4 : index
    %c0_270 = arith.constant 0 : index
    %c0_271 = arith.constant 0 : index
    %295 = vector.load %arg26[%c4_269, %c0_270, %c0_271] : memref<9x128x128xbf16, #tpu.memory_space<vmem>>, vector<1x128x128xbf16>
    %296 = vector.shape_cast %295 : vector<1x128x128xbf16> to vector<128x128xbf16>
    %cst_272 = arith.constant dense<0.000000e+00> : vector<4x128xf32>
    %297 = tpu.matmul %294, %296, %cst_272 {dimension_numbers = #tpu.dot_dimension_numbers<[1], [0], [0], [1], [0, 0, 1, 1], [], []>} : vector<4x128xbf16>, vector<128x128xbf16>, vector<4x128xf32> -> vector<4x128xf32>
    %298 = arith.addf %290, %297 : vector<4x128xf32>
    %c5_273 = arith.constant 5 : index
    %c0_274 = arith.constant 0 : index
    %c0_275 = arith.constant 0 : index
    %299 = vector.load %arg25[%c5_273, %c0_274, %c0_275] : memref<9x4x16xbf16, #tpu.memory_space<vmem>>, vector<1x4x16xbf16>
    %300 = vector.shape_cast %299 : vector<1x4x16xbf16> to vector<4x16xbf16>
    %cst_276 = arith.constant dense<0.000000e+00> : vector<4x128xf32>
    %301 = tpu.matmul %300, %259, %cst_276 {dimension_numbers = #tpu.dot_dimension_numbers<[1], [0], [0], [1], [0, 0, 1, 1], [], []>} : vector<4x16xbf16>, vector<16x128xbf16>, vector<4x128xf32> -> vector<4x128xf32>
    %302 = arith.truncf %301 : vector<4x128xf32> to vector<4x128xbf16>
    %c5_277 = arith.constant 5 : index
    %c0_278 = arith.constant 0 : index
    %c0_279 = arith.constant 0 : index
    %303 = vector.load %arg26[%c5_277, %c0_278, %c0_279] : memref<9x128x128xbf16, #tpu.memory_space<vmem>>, vector<1x128x128xbf16>
    %304 = vector.shape_cast %303 : vector<1x128x128xbf16> to vector<128x128xbf16>
    %cst_280 = arith.constant dense<0.000000e+00> : vector<4x128xf32>
    %305 = tpu.matmul %302, %304, %cst_280 {dimension_numbers = #tpu.dot_dimension_numbers<[1], [0], [0], [1], [0, 0, 1, 1], [], []>} : vector<4x128xbf16>, vector<128x128xbf16>, vector<4x128xf32> -> vector<4x128xf32>
    %306 = arith.addf %298, %305 : vector<4x128xf32>
    %c6_281 = arith.constant 6 : index
    %c0_282 = arith.constant 0 : index
    %c0_283 = arith.constant 0 : index
    %307 = vector.load %arg25[%c6_281, %c0_282, %c0_283] : memref<9x4x16xbf16, #tpu.memory_space<vmem>>, vector<1x4x16xbf16>
    %308 = vector.shape_cast %307 : vector<1x4x16xbf16> to vector<4x16xbf16>
    %cst_284 = arith.constant dense<0.000000e+00> : vector<4x128xf32>
    %309 = tpu.matmul %308, %259, %cst_284 {dimension_numbers = #tpu.dot_dimension_numbers<[1], [0], [0], [1], [0, 0, 1, 1], [], []>} : vector<4x16xbf16>, vector<16x128xbf16>, vector<4x128xf32> -> vector<4x128xf32>
    %310 = arith.truncf %309 : vector<4x128xf32> to vector<4x128xbf16>
    %c6_285 = arith.constant 6 : index
    %c0_286 = arith.constant 0 : index
    %c0_287 = arith.constant 0 : index
    %311 = vector.load %arg26[%c6_285, %c0_286, %c0_287] : memref<9x128x128xbf16, #tpu.memory_space<vmem>>, vector<1x128x128xbf16>
    %312 = vector.shape_cast %311 : vector<1x128x128xbf16> to vector<128x128xbf16>
    %cst_288 = arith.constant dense<0.000000e+00> : vector<4x128xf32>
    %313 = tpu.matmul %310, %312, %cst_288 {dimension_numbers = #tpu.dot_dimension_numbers<[1], [0], [0], [1], [0, 0, 1, 1], [], []>} : vector<4x128xbf16>, vector<128x128xbf16>, vector<4x128xf32> -> vector<4x128xf32>
    %314 = arith.addf %306, %313 : vector<4x128xf32>
    %c7_289 = arith.constant 7 : index
    %c0_290 = arith.constant 0 : index
    %c0_291 = arith.constant 0 : index
    %315 = vector.load %arg25[%c7_289, %c0_290, %c0_291] : memref<9x4x16xbf16, #tpu.memory_space<vmem>>, vector<1x4x16xbf16>
    %316 = vector.shape_cast %315 : vector<1x4x16xbf16> to vector<4x16xbf16>
    %cst_292 = arith.constant dense<0.000000e+00> : vector<4x128xf32>
    %317 = tpu.matmul %316, %259, %cst_292 {dimension_numbers = #tpu.dot_dimension_numbers<[1], [0], [0], [1], [0, 0, 1, 1], [], []>} : vector<4x16xbf16>, vector<16x128xbf16>, vector<4x128xf32> -> vector<4x128xf32>
    %318 = arith.truncf %317 : vector<4x128xf32> to vector<4x128xbf16>
    %c7_293 = arith.constant 7 : index
    %c0_294 = arith.constant 0 : index
    %c0_295 = arith.constant 0 : index
    %319 = vector.load %arg26[%c7_293, %c0_294, %c0_295] : memref<9x128x128xbf16, #tpu.memory_space<vmem>>, vector<1x128x128xbf16>
    %320 = vector.shape_cast %319 : vector<1x128x128xbf16> to vector<128x128xbf16>
    %cst_296 = arith.constant dense<0.000000e+00> : vector<4x128xf32>
    %321 = tpu.matmul %318, %320, %cst_296 {dimension_numbers = #tpu.dot_dimension_numbers<[1], [0], [0], [1], [0, 0, 1, 1], [], []>} : vector<4x128xbf16>, vector<128x128xbf16>, vector<4x128xf32> -> vector<4x128xf32>
    %322 = arith.addf %314, %321 : vector<4x128xf32>
    %c8_297 = arith.constant 8 : index
    %c0_298 = arith.constant 0 : index
    %c0_299 = arith.constant 0 : index
    %323 = vector.load %arg25[%c8_297, %c0_298, %c0_299] : memref<9x4x16xbf16, #tpu.memory_space<vmem>>, vector<1x4x16xbf16>
    %324 = vector.shape_cast %323 : vector<1x4x16xbf16> to vector<4x16xbf16>
    %cst_300 = arith.constant dense<0.000000e+00> : vector<4x128xf32>
    %325 = tpu.matmul %324, %259, %cst_300 {dimension_numbers = #tpu.dot_dimension_numbers<[1], [0], [0], [1], [0, 0, 1, 1], [], []>} : vector<4x16xbf16>, vector<16x128xbf16>, vector<4x128xf32> -> vector<4x128xf32>
    %326 = arith.truncf %325 : vector<4x128xf32> to vector<4x128xbf16>
    %c8_301 = arith.constant 8 : index
    %c0_302 = arith.constant 0 : index
    %c0_303 = arith.constant 0 : index
    %327 = vector.load %arg26[%c8_301, %c0_302, %c0_303] : memref<9x128x128xbf16, #tpu.memory_space<vmem>>, vector<1x128x128xbf16>
    %328 = vector.shape_cast %327 : vector<1x128x128xbf16> to vector<128x128xbf16>
    %cst_304 = arith.constant dense<0.000000e+00> : vector<4x128xf32>
    %329 = tpu.matmul %326, %328, %cst_304 {dimension_numbers = #tpu.dot_dimension_numbers<[1], [0], [0], [1], [0, 0, 1, 1], [], []>} : vector<4x128xbf16>, vector<128x128xbf16>, vector<4x128xf32> -> vector<4x128xf32>
    %330 = arith.addf %322, %329 : vector<4x128xf32>
    %c0_305 = arith.constant 0 : index
    %c0_306 = arith.constant 0 : index
    %331 = vector.load %arg27[%c0_305, %c0_306] : memref<1x128xf32, #tpu.memory_space<vmem>>, vector<1x128xf32>
    %332 = vector.broadcast %331 : vector<1x128xf32> to vector<4x128xf32>
    %333 = arith.addf %330, %332 : vector<4x128xf32>
    %cst_307 = arith.constant 0.000000e+00 : f32
    %334 = vector.broadcast %cst_307 : f32 to vector<4x128xf32>
    %335 = arith.maximumf %333, %334 : vector<4x128xf32>
    %336 = arith.truncf %335 : vector<4x128xf32> to vector<4x128xbf16>
    %c4_308 = arith.constant 4 : index
    %c0_309 = arith.constant 0 : index
    %c0_310 = arith.constant 0 : index
    %337 = vector.load %arg25[%c4_308, %c0_309, %c0_310] : memref<9x4x16xbf16, #tpu.memory_space<vmem>>, vector<1x4x16xbf16>
    %338 = vector.shape_cast %337 : vector<1x4x16xbf16> to vector<4x16xbf16>
    %cst_311 = arith.constant dense<0.000000e+00> : vector<4x128xf32>
    %339 = tpu.matmul %338, %251, %cst_311 {dimension_numbers = #tpu.dot_dimension_numbers<[1], [0], [0], [1], [0, 0, 1, 1], [], []>} : vector<4x16xbf16>, vector<16x128xbf16>, vector<4x128xf32> -> vector<4x128xf32>
    %340 = arith.truncf %339 : vector<4x128xf32> to vector<4x128xbf16>
    %c0_312 = arith.constant 0 : index
    %c0_313 = arith.constant 0 : index
    %341 = vector.load %arg30[%c0_312, %c0_313] : memref<128x128xbf16, #tpu.memory_space<vmem>>, vector<128x128xbf16>
    %cst_314 = arith.constant dense<0.000000e+00> : vector<4x128xf32>
    %342 = tpu.matmul %340, %341, %cst_314 {dimension_numbers = #tpu.dot_dimension_numbers<[1], [0], [0], [1], [0, 0, 1, 1], [], []>} : vector<4x128xbf16>, vector<128x128xbf16>, vector<4x128xf32> -> vector<4x128xf32>
    %c0_315 = arith.constant 0 : index
    %c0_316 = arith.constant 0 : index
    %343 = vector.load %arg31[%c0_315, %c0_316] : memref<1x128xf32, #tpu.memory_space<vmem>>, vector<1x128xf32>
    %344 = vector.broadcast %343 : vector<1x128xf32> to vector<4x128xf32>
    %345 = arith.addf %342, %344 : vector<4x128xf32>
    %c0_317 = arith.constant 0 : index
    %c0_318 = arith.constant 0 : index
    %346 = vector.load %arg28[%c0_317, %c0_318] : memref<128x128xbf16, #tpu.memory_space<vmem>>, vector<128x128xbf16>
    %cst_319 = arith.constant dense<0.000000e+00> : vector<4x128xf32>
    %347 = tpu.matmul %336, %346, %cst_319 {dimension_numbers = #tpu.dot_dimension_numbers<[1], [0], [0], [1], [0, 0, 1, 1], [], []>} : vector<4x128xbf16>, vector<128x128xbf16>, vector<4x128xf32> -> vector<4x128xf32>
    %c0_320 = arith.constant 0 : index
    %c0_321 = arith.constant 0 : index
    %348 = vector.load %arg29[%c0_320, %c0_321] : memref<1x128xf32, #tpu.memory_space<vmem>>, vector<1x128xf32>
    %349 = vector.broadcast %348 : vector<1x128xf32> to vector<4x128xf32>
    %350 = arith.addf %347, %349 : vector<4x128xf32>
    %351 = arith.addf %350, %345 : vector<4x128xf32>
    %cst_322 = arith.constant 0.000000e+00 : f32
    %352 = vector.broadcast %cst_322 : f32 to vector<4x128xf32>
    %353 = arith.maximumf %351, %352 : vector<4x128xf32>
    %354 = arith.truncf %353 : vector<4x128xf32> to vector<4x128xbf16>
    %c0_323 = arith.constant 0 : index
    %c0_324 = arith.constant 0 : index
    %355 = vector.load %arg32[%c0_323, %c0_324] : memref<128x128xbf16, #tpu.memory_space<vmem>>, vector<128x128xbf16>
    %cst_325 = arith.constant dense<0.000000e+00> : vector<4x128xf32>
    %356 = tpu.matmul %354, %355, %cst_325 {dimension_numbers = #tpu.dot_dimension_numbers<[1], [0], [0], [1], [0, 0, 1, 1], [], []>} : vector<4x128xbf16>, vector<128x128xbf16>, vector<4x128xf32> -> vector<4x128xf32>
    %c0_326 = arith.constant 0 : index
    %c0_327 = arith.constant 0 : index
    %357 = vector.load %arg33[%c0_326, %c0_327] : memref<1x128xf32, #tpu.memory_space<vmem>>, vector<1x128xf32>
    %358 = vector.broadcast %357 : vector<1x128xf32> to vector<4x128xf32>
    %359 = arith.addf %356, %358 : vector<4x128xf32>
    %cst_328 = arith.constant 0.000000e+00 : f32
    %360 = vector.broadcast %cst_328 : f32 to vector<4x128xf32>
    %361 = arith.maximumf %359, %360 : vector<4x128xf32>
    %362 = arith.truncf %361 : vector<4x128xf32> to vector<4x128xbf16>
    %c0_329 = arith.constant 0 : index
    %c0_330 = arith.constant 0 : index
    %c0_331 = arith.constant 0 : index
    %363 = vector.load %arg34[%c0_329, %c0_330, %c0_331] : memref<9x1x4xbf16, #tpu.memory_space<vmem>>, vector<1x1x4xbf16>
    %364 = vector.shape_cast %363 : vector<1x1x4xbf16> to vector<1x4xbf16>
    %cst_332 = arith.constant dense<0.000000e+00> : vector<1x128xf32>
    %365 = tpu.matmul %364, %362, %cst_332 {dimension_numbers = #tpu.dot_dimension_numbers<[1], [0], [0], [1], [0, 0, 1, 1], [], []>} : vector<1x4xbf16>, vector<4x128xbf16>, vector<1x128xf32> -> vector<1x128xf32>
    %366 = arith.truncf %365 : vector<1x128xf32> to vector<1x128xbf16>
    %c0_333 = arith.constant 0 : index
    %c0_334 = arith.constant 0 : index
    %c0_335 = arith.constant 0 : index
    %367 = vector.load %arg35[%c0_333, %c0_334, %c0_335] : memref<9x128x128xbf16, #tpu.memory_space<vmem>>, vector<1x128x128xbf16>
    %368 = vector.shape_cast %367 : vector<1x128x128xbf16> to vector<128x128xbf16>
    %cst_336 = arith.constant dense<0.000000e+00> : vector<1x128xf32>
    %369 = tpu.matmul %366, %368, %cst_336 {dimension_numbers = #tpu.dot_dimension_numbers<[1], [0], [0], [1], [0, 0, 1, 1], [], []>} : vector<1x128xbf16>, vector<128x128xbf16>, vector<1x128xf32> -> vector<1x128xf32>
    %c1_337 = arith.constant 1 : index
    %c0_338 = arith.constant 0 : index
    %c0_339 = arith.constant 0 : index
    %370 = vector.load %arg34[%c1_337, %c0_338, %c0_339] : memref<9x1x4xbf16, #tpu.memory_space<vmem>>, vector<1x1x4xbf16>
    %371 = vector.shape_cast %370 : vector<1x1x4xbf16> to vector<1x4xbf16>
    %cst_340 = arith.constant dense<0.000000e+00> : vector<1x128xf32>
    %372 = tpu.matmul %371, %362, %cst_340 {dimension_numbers = #tpu.dot_dimension_numbers<[1], [0], [0], [1], [0, 0, 1, 1], [], []>} : vector<1x4xbf16>, vector<4x128xbf16>, vector<1x128xf32> -> vector<1x128xf32>
    %373 = arith.truncf %372 : vector<1x128xf32> to vector<1x128xbf16>
    %c1_341 = arith.constant 1 : index
    %c0_342 = arith.constant 0 : index
    %c0_343 = arith.constant 0 : index
    %374 = vector.load %arg35[%c1_341, %c0_342, %c0_343] : memref<9x128x128xbf16, #tpu.memory_space<vmem>>, vector<1x128x128xbf16>
    %375 = vector.shape_cast %374 : vector<1x128x128xbf16> to vector<128x128xbf16>
    %cst_344 = arith.constant dense<0.000000e+00> : vector<1x128xf32>
    %376 = tpu.matmul %373, %375, %cst_344 {dimension_numbers = #tpu.dot_dimension_numbers<[1], [0], [0], [1], [0, 0, 1, 1], [], []>} : vector<1x128xbf16>, vector<128x128xbf16>, vector<1x128xf32> -> vector<1x128xf32>
    %377 = arith.addf %369, %376 : vector<1x128xf32>
    %c2_345 = arith.constant 2 : index
    %c0_346 = arith.constant 0 : index
    %c0_347 = arith.constant 0 : index
    %378 = vector.load %arg34[%c2_345, %c0_346, %c0_347] : memref<9x1x4xbf16, #tpu.memory_space<vmem>>, vector<1x1x4xbf16>
    %379 = vector.shape_cast %378 : vector<1x1x4xbf16> to vector<1x4xbf16>
    %cst_348 = arith.constant dense<0.000000e+00> : vector<1x128xf32>
    %380 = tpu.matmul %379, %362, %cst_348 {dimension_numbers = #tpu.dot_dimension_numbers<[1], [0], [0], [1], [0, 0, 1, 1], [], []>} : vector<1x4xbf16>, vector<4x128xbf16>, vector<1x128xf32> -> vector<1x128xf32>
    %381 = arith.truncf %380 : vector<1x128xf32> to vector<1x128xbf16>
    %c2_349 = arith.constant 2 : index
    %c0_350 = arith.constant 0 : index
    %c0_351 = arith.constant 0 : index
    %382 = vector.load %arg35[%c2_349, %c0_350, %c0_351] : memref<9x128x128xbf16, #tpu.memory_space<vmem>>, vector<1x128x128xbf16>
    %383 = vector.shape_cast %382 : vector<1x128x128xbf16> to vector<128x128xbf16>
    %cst_352 = arith.constant dense<0.000000e+00> : vector<1x128xf32>
    %384 = tpu.matmul %381, %383, %cst_352 {dimension_numbers = #tpu.dot_dimension_numbers<[1], [0], [0], [1], [0, 0, 1, 1], [], []>} : vector<1x128xbf16>, vector<128x128xbf16>, vector<1x128xf32> -> vector<1x128xf32>
    %385 = arith.addf %377, %384 : vector<1x128xf32>
    %c3_353 = arith.constant 3 : index
    %c0_354 = arith.constant 0 : index
    %c0_355 = arith.constant 0 : index
    %386 = vector.load %arg34[%c3_353, %c0_354, %c0_355] : memref<9x1x4xbf16, #tpu.memory_space<vmem>>, vector<1x1x4xbf16>
    %387 = vector.shape_cast %386 : vector<1x1x4xbf16> to vector<1x4xbf16>
    %cst_356 = arith.constant dense<0.000000e+00> : vector<1x128xf32>
    %388 = tpu.matmul %387, %362, %cst_356 {dimension_numbers = #tpu.dot_dimension_numbers<[1], [0], [0], [1], [0, 0, 1, 1], [], []>} : vector<1x4xbf16>, vector<4x128xbf16>, vector<1x128xf32> -> vector<1x128xf32>
    %389 = arith.truncf %388 : vector<1x128xf32> to vector<1x128xbf16>
    %c3_357 = arith.constant 3 : index
    %c0_358 = arith.constant 0 : index
    %c0_359 = arith.constant 0 : index
    %390 = vector.load %arg35[%c3_357, %c0_358, %c0_359] : memref<9x128x128xbf16, #tpu.memory_space<vmem>>, vector<1x128x128xbf16>
    %391 = vector.shape_cast %390 : vector<1x128x128xbf16> to vector<128x128xbf16>
    %cst_360 = arith.constant dense<0.000000e+00> : vector<1x128xf32>
    %392 = tpu.matmul %389, %391, %cst_360 {dimension_numbers = #tpu.dot_dimension_numbers<[1], [0], [0], [1], [0, 0, 1, 1], [], []>} : vector<1x128xbf16>, vector<128x128xbf16>, vector<1x128xf32> -> vector<1x128xf32>
    %393 = arith.addf %385, %392 : vector<1x128xf32>
    %c4_361 = arith.constant 4 : index
    %c0_362 = arith.constant 0 : index
    %c0_363 = arith.constant 0 : index
    %394 = vector.load %arg34[%c4_361, %c0_362, %c0_363] : memref<9x1x4xbf16, #tpu.memory_space<vmem>>, vector<1x1x4xbf16>
    %395 = vector.shape_cast %394 : vector<1x1x4xbf16> to vector<1x4xbf16>
    %cst_364 = arith.constant dense<0.000000e+00> : vector<1x128xf32>
    %396 = tpu.matmul %395, %362, %cst_364 {dimension_numbers = #tpu.dot_dimension_numbers<[1], [0], [0], [1], [0, 0, 1, 1], [], []>} : vector<1x4xbf16>, vector<4x128xbf16>, vector<1x128xf32> -> vector<1x128xf32>
    %397 = arith.truncf %396 : vector<1x128xf32> to vector<1x128xbf16>
    %c4_365 = arith.constant 4 : index
    %c0_366 = arith.constant 0 : index
    %c0_367 = arith.constant 0 : index
    %398 = vector.load %arg35[%c4_365, %c0_366, %c0_367] : memref<9x128x128xbf16, #tpu.memory_space<vmem>>, vector<1x128x128xbf16>
    %399 = vector.shape_cast %398 : vector<1x128x128xbf16> to vector<128x128xbf16>
    %cst_368 = arith.constant dense<0.000000e+00> : vector<1x128xf32>
    %400 = tpu.matmul %397, %399, %cst_368 {dimension_numbers = #tpu.dot_dimension_numbers<[1], [0], [0], [1], [0, 0, 1, 1], [], []>} : vector<1x128xbf16>, vector<128x128xbf16>, vector<1x128xf32> -> vector<1x128xf32>
    %401 = arith.addf %393, %400 : vector<1x128xf32>
    %c5_369 = arith.constant 5 : index
    %c0_370 = arith.constant 0 : index
    %c0_371 = arith.constant 0 : index
    %402 = vector.load %arg34[%c5_369, %c0_370, %c0_371] : memref<9x1x4xbf16, #tpu.memory_space<vmem>>, vector<1x1x4xbf16>
    %403 = vector.shape_cast %402 : vector<1x1x4xbf16> to vector<1x4xbf16>
    %cst_372 = arith.constant dense<0.000000e+00> : vector<1x128xf32>
    %404 = tpu.matmul %403, %362, %cst_372 {dimension_numbers = #tpu.dot_dimension_numbers<[1], [0], [0], [1], [0, 0, 1, 1], [], []>} : vector<1x4xbf16>, vector<4x128xbf16>, vector<1x128xf32> -> vector<1x128xf32>
    %405 = arith.truncf %404 : vector<1x128xf32> to vector<1x128xbf16>
    %c5_373 = arith.constant 5 : index
    %c0_374 = arith.constant 0 : index
    %c0_375 = arith.constant 0 : index
    %406 = vector.load %arg35[%c5_373, %c0_374, %c0_375] : memref<9x128x128xbf16, #tpu.memory_space<vmem>>, vector<1x128x128xbf16>
    %407 = vector.shape_cast %406 : vector<1x128x128xbf16> to vector<128x128xbf16>
    %cst_376 = arith.constant dense<0.000000e+00> : vector<1x128xf32>
    %408 = tpu.matmul %405, %407, %cst_376 {dimension_numbers = #tpu.dot_dimension_numbers<[1], [0], [0], [1], [0, 0, 1, 1], [], []>} : vector<1x128xbf16>, vector<128x128xbf16>, vector<1x128xf32> -> vector<1x128xf32>
    %409 = arith.addf %401, %408 : vector<1x128xf32>
    %c6_377 = arith.constant 6 : index
    %c0_378 = arith.constant 0 : index
    %c0_379 = arith.constant 0 : index
    %410 = vector.load %arg34[%c6_377, %c0_378, %c0_379] : memref<9x1x4xbf16, #tpu.memory_space<vmem>>, vector<1x1x4xbf16>
    %411 = vector.shape_cast %410 : vector<1x1x4xbf16> to vector<1x4xbf16>
    %cst_380 = arith.constant dense<0.000000e+00> : vector<1x128xf32>
    %412 = tpu.matmul %411, %362, %cst_380 {dimension_numbers = #tpu.dot_dimension_numbers<[1], [0], [0], [1], [0, 0, 1, 1], [], []>} : vector<1x4xbf16>, vector<4x128xbf16>, vector<1x128xf32> -> vector<1x128xf32>
    %413 = arith.truncf %412 : vector<1x128xf32> to vector<1x128xbf16>
    %c6_381 = arith.constant 6 : index
    %c0_382 = arith.constant 0 : index
    %c0_383 = arith.constant 0 : index
    %414 = vector.load %arg35[%c6_381, %c0_382, %c0_383] : memref<9x128x128xbf16, #tpu.memory_space<vmem>>, vector<1x128x128xbf16>
    %415 = vector.shape_cast %414 : vector<1x128x128xbf16> to vector<128x128xbf16>
    %cst_384 = arith.constant dense<0.000000e+00> : vector<1x128xf32>
    %416 = tpu.matmul %413, %415, %cst_384 {dimension_numbers = #tpu.dot_dimension_numbers<[1], [0], [0], [1], [0, 0, 1, 1], [], []>} : vector<1x128xbf16>, vector<128x128xbf16>, vector<1x128xf32> -> vector<1x128xf32>
    %417 = arith.addf %409, %416 : vector<1x128xf32>
    %c7_385 = arith.constant 7 : index
    %c0_386 = arith.constant 0 : index
    %c0_387 = arith.constant 0 : index
    %418 = vector.load %arg34[%c7_385, %c0_386, %c0_387] : memref<9x1x4xbf16, #tpu.memory_space<vmem>>, vector<1x1x4xbf16>
    %419 = vector.shape_cast %418 : vector<1x1x4xbf16> to vector<1x4xbf16>
    %cst_388 = arith.constant dense<0.000000e+00> : vector<1x128xf32>
    %420 = tpu.matmul %419, %362, %cst_388 {dimension_numbers = #tpu.dot_dimension_numbers<[1], [0], [0], [1], [0, 0, 1, 1], [], []>} : vector<1x4xbf16>, vector<4x128xbf16>, vector<1x128xf32> -> vector<1x128xf32>
    %421 = arith.truncf %420 : vector<1x128xf32> to vector<1x128xbf16>
    %c7_389 = arith.constant 7 : index
    %c0_390 = arith.constant 0 : index
    %c0_391 = arith.constant 0 : index
    %422 = vector.load %arg35[%c7_389, %c0_390, %c0_391] : memref<9x128x128xbf16, #tpu.memory_space<vmem>>, vector<1x128x128xbf16>
    %423 = vector.shape_cast %422 : vector<1x128x128xbf16> to vector<128x128xbf16>
    %cst_392 = arith.constant dense<0.000000e+00> : vector<1x128xf32>
    %424 = tpu.matmul %421, %423, %cst_392 {dimension_numbers = #tpu.dot_dimension_numbers<[1], [0], [0], [1], [0, 0, 1, 1], [], []>} : vector<1x128xbf16>, vector<128x128xbf16>, vector<1x128xf32> -> vector<1x128xf32>
    %425 = arith.addf %417, %424 : vector<1x128xf32>
    %c8_393 = arith.constant 8 : index
    %c0_394 = arith.constant 0 : index
    %c0_395 = arith.constant 0 : index
    %426 = vector.load %arg34[%c8_393, %c0_394, %c0_395] : memref<9x1x4xbf16, #tpu.memory_space<vmem>>, vector<1x1x4xbf16>
    %427 = vector.shape_cast %426 : vector<1x1x4xbf16> to vector<1x4xbf16>
    %cst_396 = arith.constant dense<0.000000e+00> : vector<1x128xf32>
    %428 = tpu.matmul %427, %362, %cst_396 {dimension_numbers = #tpu.dot_dimension_numbers<[1], [0], [0], [1], [0, 0, 1, 1], [], []>} : vector<1x4xbf16>, vector<4x128xbf16>, vector<1x128xf32> -> vector<1x128xf32>
    %429 = arith.truncf %428 : vector<1x128xf32> to vector<1x128xbf16>
    %c8_397 = arith.constant 8 : index
    %c0_398 = arith.constant 0 : index
    %c0_399 = arith.constant 0 : index
    %430 = vector.load %arg35[%c8_397, %c0_398, %c0_399] : memref<9x128x128xbf16, #tpu.memory_space<vmem>>, vector<1x128x128xbf16>
    %431 = vector.shape_cast %430 : vector<1x128x128xbf16> to vector<128x128xbf16>
    %cst_400 = arith.constant dense<0.000000e+00> : vector<1x128xf32>
    %432 = tpu.matmul %429, %431, %cst_400 {dimension_numbers = #tpu.dot_dimension_numbers<[1], [0], [0], [1], [0, 0, 1, 1], [], []>} : vector<1x128xbf16>, vector<128x128xbf16>, vector<1x128xf32> -> vector<1x128xf32>
    %433 = arith.addf %425, %432 : vector<1x128xf32>
    %c0_401 = arith.constant 0 : index
    %c0_402 = arith.constant 0 : index
    %434 = vector.load %arg36[%c0_401, %c0_402] : memref<1x128xf32, #tpu.memory_space<vmem>>, vector<1x128xf32>
    %435 = arith.addf %433, %434 : vector<1x128xf32>
    %cst_403 = arith.constant 0.000000e+00 : f32
    %436 = vector.broadcast %cst_403 : f32 to vector<1x128xf32>
    %437 = arith.maximumf %435, %436 : vector<1x128xf32>
    %438 = arith.truncf %437 : vector<1x128xf32> to vector<1x128xbf16>
    %c4_404 = arith.constant 4 : index
    %c0_405 = arith.constant 0 : index
    %c0_406 = arith.constant 0 : index
    %439 = vector.load %arg34[%c4_404, %c0_405, %c0_406] : memref<9x1x4xbf16, #tpu.memory_space<vmem>>, vector<1x1x4xbf16>
    %440 = vector.shape_cast %439 : vector<1x1x4xbf16> to vector<1x4xbf16>
    %cst_407 = arith.constant dense<0.000000e+00> : vector<1x128xf32>
    %441 = tpu.matmul %440, %354, %cst_407 {dimension_numbers = #tpu.dot_dimension_numbers<[1], [0], [0], [1], [0, 0, 1, 1], [], []>} : vector<1x4xbf16>, vector<4x128xbf16>, vector<1x128xf32> -> vector<1x128xf32>
    %442 = arith.truncf %441 : vector<1x128xf32> to vector<1x128xbf16>
    %c0_408 = arith.constant 0 : index
    %c0_409 = arith.constant 0 : index
    %443 = vector.load %arg39[%c0_408, %c0_409] : memref<128x256xbf16, #tpu.memory_space<vmem>>, vector<128x256xbf16>
    %cst_410 = arith.constant dense<0.000000e+00> : vector<1x256xf32>
    %444 = tpu.matmul %442, %443, %cst_410 {dimension_numbers = #tpu.dot_dimension_numbers<[1], [0], [0], [1], [0, 0, 1, 1], [], []>} : vector<1x128xbf16>, vector<128x256xbf16>, vector<1x256xf32> -> vector<1x256xf32>
    %c0_411 = arith.constant 0 : index
    %c0_412 = arith.constant 0 : index
    %445 = vector.load %arg40[%c0_411, %c0_412] : memref<1x256xf32, #tpu.memory_space<vmem>>, vector<1x256xf32>
    %446 = arith.addf %444, %445 : vector<1x256xf32>
    %c0_413 = arith.constant 0 : index
    %c0_414 = arith.constant 0 : index
    %447 = vector.load %arg37[%c0_413, %c0_414] : memref<128x256xbf16, #tpu.memory_space<vmem>>, vector<128x256xbf16>
    %cst_415 = arith.constant dense<0.000000e+00> : vector<1x256xf32>
    %448 = tpu.matmul %438, %447, %cst_415 {dimension_numbers = #tpu.dot_dimension_numbers<[1], [0], [0], [1], [0, 0, 1, 1], [], []>} : vector<1x128xbf16>, vector<128x256xbf16>, vector<1x256xf32> -> vector<1x256xf32>
    %c0_416 = arith.constant 0 : index
    %c0_417 = arith.constant 0 : index
    %449 = vector.load %arg38[%c0_416, %c0_417] : memref<1x256xf32, #tpu.memory_space<vmem>>, vector<1x256xf32>
    %450 = arith.addf %448, %449 : vector<1x256xf32>
    %451 = arith.addf %450, %446 : vector<1x256xf32>
    %cst_418 = arith.constant 0.000000e+00 : f32
    %452 = vector.broadcast %cst_418 : f32 to vector<1x256xf32>
    %453 = arith.maximumf %451, %452 : vector<1x256xf32>
    %cst_419 = arith.constant dense<0.000000e+00> : vector<256xf32>
    %454 = vector.multi_reduction <add>, %453, %cst_419 [0] : vector<1x256xf32> to vector<256xf32>
    %455 = vector.shape_cast %454 : vector<256xf32> to vector<1x256xf32>
    %cst_420 = arith.constant 1.000000e+00 : f32
    %456 = vector.broadcast %cst_420 : f32 to vector<1x256xf32>
    %457 = arith.divf %455, %456 : vector<1x256xf32>
    %c0_421 = arith.constant 0 : index
    %c0_422 = arith.constant 0 : index
    %c0_423 = arith.constant 0 : index
    %458 = vector.load %arg41[%c0_421, %c0_422, %c0_423] : memref<1x1x256xf32, #tpu.memory_space<vmem>>, vector<1x1x256xf32>
    %459 = vector.shape_cast %458 : vector<1x1x256xf32> to vector<1x256xf32>
    %460 = vector.shape_cast %457 : vector<1x256xf32> to vector<1x1x256xf32>
    tpu.vector_store %arg41[%c0_421, %c0_422, %c0_423], %460 {strides = array<i32>} : memref<1x1x256xf32, #tpu.memory_space<vmem>>, vector<1x1x256xf32>,
    return
  }
  func.func @transform_0(%arg0: i32) -> (i32, i32, i32) {
    %c0_i32 = arith.constant 0 : i32
    %c0_i32_0 = arith.constant 0 : i32
    %c0_i32_1 = arith.constant 0 : i32
    return %arg0, %c0_i32, %c0_i32_0 : i32, i32, i32
  }
  func.func @transform_1(%arg0: i32) -> (i32, i32) {
    %c0_i32 = arith.constant 0 : i32
    %c0_i32_0 = arith.constant 0 : i32
    %c0_i32_1 = arith.constant 0 : i32
    return %c0_i32, %c0_i32_0 : i32, i32
  }
  func.func @transform_2(%arg0: i32) -> (i32, i32) {
    %c0_i32 = arith.constant 0 : i32
    %c0_i32_0 = arith.constant 0 : i32
    %c0_i32_1 = arith.constant 0 : i32
    return %c0_i32, %c0_i32_0 : i32, i32
  }
  func.func @transform_3(%arg0: i32) -> (i32, i32, i32) {
    %c0_i32 = arith.constant 0 : i32
    %c0_i32_0 = arith.constant 0 : i32
    %c0_i32_1 = arith.constant 0 : i32
    %c0_i32_2 = arith.constant 0 : i32
    return %c0_i32, %c0_i32_0, %c0_i32_1 : i32, i32, i32
  }
  func.func @transform_4(%arg0: i32) -> (i32, i32) {
    %c0_i32 = arith.constant 0 : i32
    %c0_i32_0 = arith.constant 0 : i32
    %c0_i32_1 = arith.constant 0 : i32
    return %c0_i32, %c0_i32_0 : i32, i32
  }
  func.func @transform_5(%arg0: i32) -> (i32, i32) {
    %c0_i32 = arith.constant 0 : i32
    %c0_i32_0 = arith.constant 0 : i32
    %c0_i32_1 = arith.constant 0 : i32
    return %c0_i32, %c0_i32_0 : i32, i32
  }
  func.func @transform_6(%arg0: i32) -> (i32, i32, i32) {
    %c0_i32 = arith.constant 0 : i32
    %c0_i32_0 = arith.constant 0 : i32
    %c0_i32_1 = arith.constant 0 : i32
    %c0_i32_2 = arith.constant 0 : i32
    return %c0_i32, %c0_i32_0, %c0_i32_1 : i32, i32, i32
  }
  func.func @transform_7(%arg0: i32) -> (i32, i32, i32) {
    %c0_i32 = arith.constant 0 : i32
    %c0_i32_0 = arith.constant 0 : i32
    %c0_i32_1 = arith.constant 0 : i32
    %c0_i32_2 = arith.constant 0 : i32
    return %c0_i32, %c0_i32_0, %c0_i32_1 : i32, i32, i32
  }
  func.func @transform_8(%arg0: i32) -> (i32, i32) {
    %c0_i32 = arith.constant 0 : i32
    %c0_i32_0 = arith.constant 0 : i32
    %c0_i32_1 = arith.constant 0 : i32
    return %c0_i32, %c0_i32_0 : i32, i32
  }
  func.func @transform_9(%arg0: i32) -> (i32, i32) {
    %c0_i32 = arith.constant 0 : i32
    %c0_i32_0 = arith.constant 0 : i32
    %c0_i32_1 = arith.constant 0 : i32
    return %c0_i32, %c0_i32_0 : i32, i32
  }
  func.func @transform_10(%arg0: i32) -> (i32, i32) {
    %c0_i32 = arith.constant 0 : i32
    %c0_i32_0 = arith.constant 0 : i32
    %c0_i32_1 = arith.constant 0 : i32
    return %c0_i32, %c0_i32_0 : i32, i32
  }
  func.func @transform_11(%arg0: i32) -> (i32, i32) {
    %c0_i32 = arith.constant 0 : i32
    %c0_i32_0 = arith.constant 0 : i32
    %c0_i32_1 = arith.constant 0 : i32
    return %c0_i32, %c0_i32_0 : i32, i32
  }
  func.func @transform_12(%arg0: i32) -> (i32, i32) {
    %c0_i32 = arith.constant 0 : i32
    %c0_i32_0 = arith.constant 0 : i32
    %c0_i32_1 = arith.constant 0 : i32
    return %c0_i32, %c0_i32_0 : i32, i32
  }
  func.func @transform_13(%arg0: i32) -> (i32, i32) {
    %c0_i32 = arith.constant 0 : i32
    %c0_i32_0 = arith.constant 0 : i32
    %c0_i32_1 = arith.constant 0 : i32
    return %c0_i32, %c0_i32_0 : i32, i32
  }
  func.func @transform_14(%arg0: i32) -> (i32, i32) {
    %c0_i32 = arith.constant 0 : i32
    %c0_i32_0 = arith.constant 0 : i32
    %c0_i32_1 = arith.constant 0 : i32
    return %c0_i32, %c0_i32_0 : i32, i32
  }
  func.func @transform_15(%arg0: i32) -> (i32, i32, i32) {
    %c0_i32 = arith.constant 0 : i32
    %c0_i32_0 = arith.constant 0 : i32
    %c0_i32_1 = arith.constant 0 : i32
    %c0_i32_2 = arith.constant 0 : i32
    return %c0_i32, %c0_i32_0, %c0_i32_1 : i32, i32, i32
  }
  func.func @transform_16(%arg0: i32) -> (i32, i32, i32) {
    %c0_i32 = arith.constant 0 : i32
    %c0_i32_0 = arith.constant 0 : i32
    %c0_i32_1 = arith.constant 0 : i32
    %c0_i32_2 = arith.constant 0 : i32
    return %c0_i32, %c0_i32_0, %c0_i32_1 : i32, i32, i32
  }
  func.func @transform_17(%arg0: i32) -> (i32, i32) {
    %c0_i32 = arith.constant 0 : i32
    %c0_i32_0 = arith.constant 0 : i32
    %c0_i32_1 = arith.constant 0 : i32
    return %c0_i32, %c0_i32_0 : i32, i32
  }
  func.func @transform_18(%arg0: i32) -> (i32, i32) {
    %c0_i32 = arith.constant 0 : i32
    %c0_i32_0 = arith.constant 0 : i32
    %c0_i32_1 = arith.constant 0 : i32
    return %c0_i32, %c0_i32_0 : i32, i32
  }
  func.func @transform_19(%arg0: i32) -> (i32, i32) {
    %c0_i32 = arith.constant 0 : i32
    %c0_i32_0 = arith.constant 0 : i32
    %c0_i32_1 = arith.constant 0 : i32
    return %c0_i32, %c0_i32_0 : i32, i32
  }
  func.func @transform_20(%arg0: i32) -> (i32, i32) {
    %c0_i32 = arith.constant 0 : i32
    %c0_i32_0 = arith.constant 0 : i32
    %c0_i32_1 = arith.constant 0 : i32
    return %c0_i32, %c0_i32_0 : i32, i32
  }
  func.func @transform_21(%arg0: i32) -> (i32, i32) {
    %c0_i32 = arith.constant 0 : i32
    %c0_i32_0 = arith.constant 0 : i32
    %c0_i32_1 = arith.constant 0 : i32
    return %c0_i32, %c0_i32_0 : i32, i32
  }
  func.func @transform_22(%arg0: i32) -> (i32, i32) {
    %c0_i32 = arith.constant 0 : i32
    %c0_i32_0 = arith.constant 0 : i32
    %c0_i32_1 = arith.constant 0 : i32
    return %c0_i32, %c0_i32_0 : i32, i32
  }
  func.func @transform_23(%arg0: i32) -> (i32, i32) {
    %c0_i32 = arith.constant 0 : i32
    %c0_i32_0 = arith.constant 0 : i32
    %c0_i32_1 = arith.constant 0 : i32
    return %c0_i32, %c0_i32_0 : i32, i32
  }
  func.func @transform_24(%arg0: i32) -> (i32, i32, i32) {
    %c0_i32 = arith.constant 0 : i32
    %c0_i32_0 = arith.constant 0 : i32
    %c0_i32_1 = arith.constant 0 : i32
    %c0_i32_2 = arith.constant 0 : i32
    return %c0_i32, %c0_i32_0, %c0_i32_1 : i32, i32, i32
  }
  func.func @transform_25(%arg0: i32) -> (i32, i32, i32) {
    %c0_i32 = arith.constant 0 : i32
    %c0_i32_0 = arith.constant 0 : i32
    %c0_i32_1 = arith.constant 0 : i32
    %c0_i32_2 = arith.constant 0 : i32
    return %c0_i32, %c0_i32_0, %c0_i32_1 : i32, i32, i32
  }
  func.func @transform_26(%arg0: i32) -> (i32, i32) {
    %c0_i32 = arith.constant 0 : i32
    %c0_i32_0 = arith.constant 0 : i32
    %c0_i32_1 = arith.constant 0 : i32
    return %c0_i32, %c0_i32_0 : i32, i32
  }
  func.func @transform_27(%arg0: i32) -> (i32, i32) {
    %c0_i32 = arith.constant 0 : i32
    %c0_i32_0 = arith.constant 0 : i32
    %c0_i32_1 = arith.constant 0 : i32
    return %c0_i32, %c0_i32_0 : i32, i32
  }
  func.func @transform_28(%arg0: i32) -> (i32, i32) {
    %c0_i32 = arith.constant 0 : i32
    %c0_i32_0 = arith.constant 0 : i32
    %c0_i32_1 = arith.constant 0 : i32
    return %c0_i32, %c0_i32_0 : i32, i32
  }
  func.func @transform_29(%arg0: i32) -> (i32, i32) {
    %c0_i32 = arith.constant 0 : i32
    %c0_i32_0 = arith.constant 0 : i32
    %c0_i32_1 = arith.constant 0 : i32
    return %c0_i32, %c0_i32_0 : i32, i32
  }
  func.func @transform_30(%arg0: i32) -> (i32, i32) {
    %c0_i32 = arith.constant 0 : i32
    %c0_i32_0 = arith.constant 0 : i32
    %c0_i32_1 = arith.constant 0 : i32
    return %c0_i32, %c0_i32_0 : i32, i32
  }
  func.func @transform_31(%arg0: i32) -> (i32, i32) {
    %c0_i32 = arith.constant 0 : i32
    %c0_i32_0 = arith.constant 0 : i32
    %c0_i32_1 = arith.constant 0 : i32
    return %c0_i32, %c0_i32_0 : i32, i32
  }
  func.func @transform_32(%arg0: i32) -> (i32, i32) {
    %c0_i32 = arith.constant 0 : i32
    %c0_i32_0 = arith.constant 0 : i32
    %c0_i32_1 = arith.constant 0 : i32
    return %c0_i32, %c0_i32_0 : i32, i32
  }
  func.func @transform_33(%arg0: i32) -> (i32, i32, i32) {
    %c0_i32 = arith.constant 0 : i32
    %c0_i32_0 = arith.constant 0 : i32
    %c0_i32_1 = arith.constant 0 : i32
    %c0_i32_2 = arith.constant 0 : i32
    return %c0_i32, %c0_i32_0, %c0_i32_1 : i32, i32, i32
  }
  func.func @transform_34(%arg0: i32) -> (i32, i32, i32) {
    %c0_i32 = arith.constant 0 : i32
    %c0_i32_0 = arith.constant 0 : i32
    %c0_i32_1 = arith.constant 0 : i32
    %c0_i32_2 = arith.constant 0 : i32
    return %c0_i32, %c0_i32_0, %c0_i32_1 : i32, i32, i32
  }
  func.func @transform_35(%arg0: i32) -> (i32, i32) {
    %c0_i32 = arith.constant 0 : i32
    %c0_i32_0 = arith.constant 0 : i32
    %c0_i32_1 = arith.constant 0 : i32
    return %c0_i32, %c0_i32_0 : i32, i32
  }
  func.func @transform_36(%arg0: i32) -> (i32, i32) {
    %c0_i32 = arith.constant 0 : i32
    %c0_i32_0 = arith.constant 0 : i32
    %c0_i32_1 = arith.constant 0 : i32
    return %c0_i32, %c0_i32_0 : i32, i32
  }
  func.func @transform_37(%arg0: i32) -> (i32, i32) {
    %c0_i32 = arith.constant 0 : i32
    %c0_i32_0 = arith.constant 0 : i32
    %c0_i32_1 = arith.constant 0 : i32
    return %c0_i32, %c0_i32_0 : i32, i32
  }
  func.func @transform_38(%arg0: i32) -> (i32, i32) {
    %c0_i32 = arith.constant 0 : i32
    %c0_i32_0 = arith.constant 0 : i32
    %c0_i32_1 = arith.constant 0 : i32
    return %c0_i32, %c0_i32_0 : i32, i32
  }
  func.func @transform_39(%arg0: i32) -> (i32, i32) {
    %c0_i32 = arith.constant 0 : i32
    %c0_i32_0 = arith.constant 0 : i32
    %c0_i32_1 = arith.constant 0 : i32
    return %c0_i32, %c0_i32_0 : i32, i32
  }
  func.func @transform_40(%arg0: i32) -> (i32, i32, i32) {
    %c0_i32 = arith.constant 0 : i32
    %c0_i32_0 = arith.constant 0 : i32
    %c0_i32_1 = arith.constant 0 : i32
    return %arg0, %c0_i32, %c0_i32_0 : i32, i32, i32
  }
}

</mosaic_0001>

<llo_original>
// kernel: resnet_forward_pallas.1
$region0: #{resnet_forward_pallas.1}
  #allocation0 [shape = 'u32[]', space=smem, size = 0x4, offset = 0x4, fixed_abs, tag = 'smem constant byte address 0x4 - core index']
  #allocation1 [shape = 'u32[72,128]{1,0:T(1,128)}', space=vmem, size = 0x9000, scoped, tag = 'internal scratch']
  %s0 = inlined_call_operand.smem [shape: u32[41], index: -1, kind: input, shape index: {}]
  %s1 = sld [smem:[%s0]]
  %s2 = scalar_lea.smem %s0, 1
  %s3 = sld [smem:[%s2]]
  %s4 = scalar_lea.smem %s0, 2
  %s5 = sld [smem:[%s4]]
  %s6 = scalar_lea.smem %s0, 3
  %s7 = sld [smem:[%s6]]
  %s8 = scalar_lea.smem %s0, 4
  %s9 = sld [smem:[%s8]]
  %s10 = scalar_lea.smem %s0, 5
  %s11 = sld [smem:[%s10]]
  %s12 = scalar_lea.smem %s0, 6
  %s13 = sld [smem:[%s12]]
  %s14 = scalar_lea.smem %s0, 7
  %s15 = sld [smem:[%s14]]
  %s16 = scalar_lea.smem %s0, 8
  %s17 = sld [smem:[%s16]]
  %s18 = scalar_lea.smem %s0, 9
  %s19 = sld [smem:[%s18]]
  %s20 = scalar_lea.smem %s0, 10
  %s21 = sld [smem:[%s20]]
  %s22 = scalar_lea.smem %s0, 11
  %s23 = sld [smem:[%s22]]
  %s24 = scalar_lea.smem %s0, 12
  %s25 = sld [smem:[%s24]]
  %s26 = scalar_lea.smem %s0, 13
  %s27 = sld [smem:[%s26]]
  %s28 = scalar_lea.smem %s0, 14
  %s29 = sld [smem:[%s28]]
  %s30 = scalar_lea.smem %s0, 15
  %s31 = sld [smem:[%s30]]
  %s32 = scalar_lea.smem %s0, 16
  %s33 = sld [smem:[%s32]]
  %s34 = scalar_lea.smem %s0, 17
  %s35 = sld [smem:[%s34]]
  %s36 = scalar_lea.smem %s0, 18
  %s37 = sld [smem:[%s36]]
  %s38 = scalar_lea.smem %s0, 19
  %s39 = sld [smem:[%s38]]
  %s40 = scalar_lea.smem %s0, 20
  %s41 = sld [smem:[%s40]]
  %s42 = scalar_lea.smem %s0, 21
  %s43 = sld [smem:[%s42]]
  %s44 = scalar_lea.smem %s0, 22
  %s45 = sld [smem:[%s44]]
  %s46 = scalar_lea.smem %s0, 23
  %s47 = sld [smem:[%s46]]
  %s48 = scalar_lea.smem %s0, 24
  %s49 = sld [smem:[%s48]]
  %s50 = scalar_lea.smem %s0, 25
  %s51 = sld [smem:[%s50]]
  %s52 = scalar_lea.smem %s0, 26
  %s53 = sld [smem:[%s52]]
  %s54 = scalar_lea.smem %s0, 27
  %s55 = sld [smem:[%s54]]
  %s56 = scalar_lea.smem %s0, 28
  %s57 = sld [smem:[%s56]]
  %s58 = scalar_lea.smem %s0, 29
  %s59 = sld [smem:[%s58]]
  %s60 = scalar_lea.smem %s0, 30
  %s61 = sld [smem:[%s60]]
  %s62 = scalar_lea.smem %s0, 31
  %s63 = sld [smem:[%s62]]
  %s64 = scalar_lea.smem %s0, 32
  %s65 = sld [smem:[%s64]]
  %s66 = scalar_lea.smem %s0, 33
  %s67 = sld [smem:[%s66]]
  %s68 = scalar_lea.smem %s0, 34
  %s69 = sld [smem:[%s68]]
  %s70 = scalar_lea.smem %s0, 35
  %s71 = sld [smem:[%s70]]
  %s72 = scalar_lea.smem %s0, 36
  %s73 = sld [smem:[%s72]]
  %s74 = scalar_lea.smem %s0, 37
  %s75 = sld [smem:[%s74]]
  %s76 = scalar_lea.smem %s0, 38
  %s77 = sld [smem:[%s76]]
  %s78 = scalar_lea.smem %s0, 39
  %s79 = sld [smem:[%s78]]
  %s80 = scalar_lea.smem %s0, 40
  %s81 = sld [smem:[%s80]]
  %s82 = sld [smem:[#allocation0]]
  $region193: #{resnet_forward_pallas.1} parent=0
    _
  %s84 = ssub.s32 1, %s82
  %s85 = scalar_select 0, %s84, %s82
  loop: start=0, step=1, limit=4
  $region2: #{resnet_forward_pallas.1} parent=0 // loop_pre_header
    _
  $region3: #{resnet_forward_pallas.1} parent=0 // loop_header
    %s87 = sphi 0, %s91
    %p88 = scmp.ge.s32.totalorder %s87, 4
    %s97 = sphi 0, %s99
    %s100 = sphi 0, %s97
    %s101 = sphi 0, %s100
    %s117 = sphi 0, %s101
    %s121 = sphi 0, %s121
    %s123 = sphi 0, %s121
    %s124 = sphi 0, %s123
    %s138 = sphi 0, %s124
    %s142 = sphi 0, %s142
    %s144 = sphi 0, %s142
    %s145 = sphi 0, %s144
    %s159 = sphi 0, %s145
    %s163 = sphi 0, %s163
    %s165 = sphi 0, %s163
    %s166 = sphi 0, %s165
    %s180 = sphi 0, %s166
    %s184 = sphi 0, %s184
    %s186 = sphi 0, %s184
    %s187 = sphi 0, %s186
    %s201 = sphi 0, %s187
    %s205 = sphi 0, %s205
    %s207 = sphi 0, %s205
    %s208 = sphi 0, %s207
    %s222 = sphi 0, %s208
    %s226 = sphi 0, %s226
    %s228 = sphi 0, %s226
    %s229 = sphi 0, %s228
    %s243 = sphi 0, %s229
    %s247 = sphi 0, %s247
    %s249 = sphi 0, %s247
    %s250 = sphi 0, %s249
    %s264 = sphi 0, %s250
    %s268 = sphi 0, %s268
    %s270 = sphi 0, %s268
    %s271 = sphi 0, %s270
    %s285 = sphi 0, %s271
    %s289 = sphi 0, %s289
    %s291 = sphi 0, %s289
    %s292 = sphi 0, %s291
    %s306 = sphi 0, %s292
    %s310 = sphi 0, %s310
    %s312 = sphi 0, %s310
    %s313 = sphi 0, %s312
    %s327 = sphi 0, %s313
    %s331 = sphi 0, %s331
    %s333 = sphi 0, %s331
    %s334 = sphi 0, %s333
    %s348 = sphi 0, %s334
    %s352 = sphi 0, %s352
    %s354 = sphi 0, %s352
    %s355 = sphi 0, %s354
    %s369 = sphi 0, %s355
    %s373 = sphi 0, %s373
    %s375 = sphi 0, %s373
    %s376 = sphi 0, %s375
    %s390 = sphi 0, %s376
    %s394 = sphi 0, %s394
    %s396 = sphi 0, %s394
    %s397 = sphi 0, %s396
    %s411 = sphi 0, %s397
    %s415 = sphi 0, %s415
    %s417 = sphi 0, %s415
    %s418 = sphi 0, %s417
    %s432 = sphi 0, %s418
    %s436 = sphi 0, %s436
    %s438 = sphi 0, %s436
    %s439 = sphi 0, %s438
    %s453 = sphi 0, %s439
    %s457 = sphi 0, %s457
    %s459 = sphi 0, %s457
    %s460 = sphi 0, %s459
    %s474 = sphi 0, %s460
    %s478 = sphi 0, %s478
    %s480 = sphi 0, %s478
    %s481 = sphi 0, %s480
    %s495 = sphi 0, %s481
    %s499 = sphi 0, %s499
    %s501 = sphi 0, %s499
    %s502 = sphi 0, %s501
    %s516 = sphi 0, %s502
    %s520 = sphi 0, %s520
    %s522 = sphi 0, %s520
    %s523 = sphi 0, %s522
    %s537 = sphi 0, %s523
    %s541 = sphi 0, %s541
    %s543 = sphi 0, %s541
    %s544 = sphi 0, %s543
    %s558 = sphi 0, %s544
    %s562 = sphi 0, %s562
    %s564 = sphi 0, %s562
    %s565 = sphi 0, %s564
    %s579 = sphi 0, %s565
    %s583 = sphi 0, %s583
    %s585 = sphi 0, %s583
    %s586 = sphi 0, %s585
    %s600 = sphi 0, %s586
    %s604 = sphi 0, %s604
    %s606 = sphi 0, %s604
    %s607 = sphi 0, %s606
    %s621 = sphi 0, %s607
    %s625 = sphi 0, %s625
    %s627 = sphi 0, %s625
    %s628 = sphi 0, %s627
    %s642 = sphi 0, %s628
    %s646 = sphi 0, %s646
    %s648 = sphi 0, %s646
    %s649 = sphi 0, %s648
    %s663 = sphi 0, %s649
    %s667 = sphi 0, %s667
    %s669 = sphi 0, %s667
    %s670 = sphi 0, %s669
    %s684 = sphi 0, %s670
    %s688 = sphi 0, %s688
    %s690 = sphi 0, %s688
    %s691 = sphi 0, %s690
    %s705 = sphi 0, %s691
    %s709 = sphi 0, %s709
    %s711 = sphi 0, %s709
    %s712 = sphi 0, %s711
    %s726 = sphi 0, %s712
    %s730 = sphi 0, %s730
    %s732 = sphi 0, %s730
    %s733 = sphi 0, %s732
    %s747 = sphi 0, %s733
    %s751 = sphi 0, %s751
    %s753 = sphi 0, %s751
    %s754 = sphi 0, %s753
    %s768 = sphi 0, %s754
    %s772 = sphi 0, %s772
    %s774 = sphi 0, %s772
    %s775 = sphi 0, %s774
    %s789 = sphi 0, %s775
    %s793 = sphi 0, %s793
    %s795 = sphi 0, %s793
    %s796 = sphi 0, %s795
    %s810 = sphi 0, %s796
    %s814 = sphi 0, %s814
    %s816 = sphi 0, %s814
    %s817 = sphi 0, %s816
    %s831 = sphi 0, %s817
    %s835 = sphi 0, %s835
    %s837 = sphi 0, %s835
    %s838 = sphi 0, %s837
    %s852 = sphi 0, %s838
    %s856 = sphi 0, %s856
    %s858 = sphi 0, %s856
    %s859 = sphi 0, %s858
    %s873 = sphi 0, %s859
    %s877 = sphi 0, %s877
    %s879 = sphi 0, %s877
    %s880 = sphi 0, %s879
    %s894 = sphi 0, %s880
    %s898 = sphi 0, %s898
    %s900 = sphi 0, %s898
    %s901 = sphi 0, %s900
    %s915 = sphi 0, %s901
    %s919 = sphi 0, %s919
    %s921 = sphi 0, %s919
    %s922 = sphi 0, %s921
    %s936 = sphi 0, %s922
    %s942 = sphi 0, %s944
    %s945 = sphi 0, %s942
    %s946 = sphi 0, %s945
    %s962 = sphi 0, %s946
  $region4: #{resnet_forward_pallas.1} parent=0 // loop_header_branch
    %90 = sbr.rel (%p88) target = $region8
  $region5: #{resnet_forward_pallas.1} parent=0 // loop_body
    %s92 = ssub.s32 %s87, 1
    %s93 = ssub.s32 %s87, 2
    %s94 = sadd.s32 %s87, 1
    %s95 = ssub.s32 %s87, %s94
    %p96 = scmp.eq.s32.totalorder %s95, 0
    %s98 = sadd.s32 %s97, 1
    %s99 = scalar_select %p96, %s97, %s98
    %p102 = pneg %p96
    %p103 = scmp.eq.s32.totalorder %s87, 1
    %p104 = por %p102, %p103
    %p105 = scmp.ne.s32.totalorder %s97, %s100
    %p106 = scmp.eq.s32.totalorder %s87, 0
    %p107 = por %p105, %p106
    %p108 = scmp.ne.s32.totalorder %s97, %s100
    %p109 = scmp.eq.s32.totalorder %s92, 1
    %p110 = por %p108, %p109
    %p111 = scmp.ne.s32.totalorder %s100, %s101
    %p112 = scmp.eq.s32.totalorder %s92, 0
    %p113 = por %p111, %p112
    %p114 = scmp.ne.s32.totalorder %s100, %s101
    %p115 = scmp.eq.s32.totalorder %s93, 1
    %p116 = por %p114, %p115
    %p118 = scmp.ne.s32.totalorder %s101, %s117
    %p119 = scmp.eq.s32.totalorder %s93, 0
    %p120 = por %p118, %p119
    %s122 = sadd.s32 %s121, 1
    %p125 = scmp.eq.s32.totalorder %s87, 1
    %p126 = scmp.ne.s32.totalorder %s121, %s123
    %p127 = scmp.eq.s32.totalorder %s87, 0
    %p128 = por %p126, %p127
    %p129 = scmp.ne.s32.totalorder %s121, %s123
    %p130 = scmp.eq.s32.totalorder %s92, 1
    %p131 = por %p129, %p130
    %p132 = scmp.ne.s32.totalorder %s123, %s124
    %p133 = scmp.eq.s32.totalorder %s92, 0
    %p134 = por %p132, %p133
    %p135 = scmp.ne.s32.totalorder %s123, %s124
    %p136 = scmp.eq.s32.totalorder %s93, 1
    %p137 = por %p135, %p136
    %p139 = scmp.ne.s32.totalorder %s124, %s138
    %p140 = scmp.eq.s32.totalorder %s93, 0
    %p141 = por %p139, %p140
    %s143 = sadd.s32 %s142, 1
    %p146 = scmp.eq.s32.totalorder %s87, 1
    %p147 = scmp.ne.s32.totalorder %s142, %s144
    %p148 = scmp.eq.s32.totalorder %s87, 0
    %p149 = por %p147, %p148
    %p150 = scmp.ne.s32.totalorder %s142, %s144
    %p151 = scmp.eq.s32.totalorder %s92, 1
    %p152 = por %p150, %p151
    %p153 = scmp.ne.s32.totalorder %s144, %s145
    %p154 = scmp.eq.s32.totalorder %s92, 0
    %p155 = por %p153, %p154
    %p156 = scmp.ne.s32.totalorder %s144, %s145
    %p157 = scmp.eq.s32.totalorder %s93, 1
    %p158 = por %p156, %p157
    %p160 = scmp.ne.s32.totalorder %s145, %s159
    %p161 = scmp.eq.s32.totalorder %s93, 0
    %p162 = por %p160, %p161
    %s164 = sadd.s32 %s163, 1
    %p167 = scmp.eq.s32.totalorder %s87, 1
    %p168 = scmp.ne.s32.totalorder %s163, %s165
    %p169 = scmp.eq.s32.totalorder %s87, 0
    %p170 = por %p168, %p169
    %p171 = scmp.ne.s32.totalorder %s163, %s165
    %p172 = scmp.eq.s32.totalorder %s92, 1
    %p173 = por %p171, %p172
    %p174 = scmp.ne.s32.totalorder %s165, %s166
    %p175 = scmp.eq.s32.totalorder %s92, 0
    %p176 = por %p174, %p175
    %p177 = scmp.ne.s32.totalorder %s165, %s166
    %p178 = scmp.eq.s32.totalorder %s93, 1
    %p179 = por %p177, %p178
    %p181 = scmp.ne.s32.totalorder %s166, %s180
    %p182 = scmp.eq.s32.totalorder %s93, 0
    %p183 = por %p181, %p182
    %s185 = sadd.s32 %s184, 1
    %p188 = scmp.eq.s32.totalorder %s87, 1
    %p189 = scmp.ne.s32.totalorder %s184, %s186
    %p190 = scmp.eq.s32.totalorder %s87, 0
    %p191 = por %p189, %p190
    %p192 = scmp.ne.s32.totalorder %s184, %s186
    %p193 = scmp.eq.s32.totalorder %s92, 1
    %p194 = por %p192, %p193
    %p195 = scmp.ne.s32.totalorder %s186, %s187
    %p196 = scmp.eq.s32.totalorder %s92, 0
    %p197 = por %p195, %p196
    %p198 = scmp.ne.s32.totalorder %s186, %s187
    %p199 = scmp.eq.s32.totalorder %s93, 1
    %p200 = por %p198, %p199
    %p202 = scmp.ne.s32.totalorder %s187, %s201
    %p203 = scmp.eq.s32.totalorder %s93, 0
    %p204 = por %p202, %p203
    %s206 = sadd.s32 %s205, 1
    %p209 = scmp.eq.s32.totalorder %s87, 1
    %p210 = scmp.ne.s32.totalorder %s205, %s207
    %p211 = scmp.eq.s32.totalorder %s87, 0
    %p212 = por %p210, %p211
    %p213 = scmp.ne.s32.totalorder %s205, %s207
    %p214 = scmp.eq.s32.totalorder %s92, 1
    %p215 = por %p213, %p214
    %p216 = scmp.ne.s32.totalorder %s207, %s208
    %p217 = scmp.eq.s32.totalorder %s92, 0
    %p218 = por %p216, %p217
    %p219 = scmp.ne.s32.totalorder %s207, %s208
    %p220 = scmp.eq.s32.totalorder %s93, 1
    %p221 = por %p219, %p220
    %p223 = scmp.ne.s32.totalorder %s208, %s222
    %p224 = scmp.eq.s32.totalorder %s93, 0
    %p225 = por %p223, %p224
    %s227 = sadd.s32 %s226, 1
    %p230 = scmp.eq.s32.totalorder %s87, 1
    %p231 = scmp.ne.s32.totalorder %s226, %s228
    %p232 = scmp.eq.s32.totalorder %s87, 0
    %p233 = por %p231, %p232
    %p234 = scmp.ne.s32.totalorder %s226, %s228
    %p235 = scmp.eq.s32.totalorder %s92, 1
    %p236 = por %p234, %p235
    %p237 = scmp.ne.s32.totalorder %s228, %s229
    %p238 = scmp.eq.s32.totalorder %s92, 0
    %p239 = por %p237, %p238
    %p240 = scmp.ne.s32.totalorder %s228, %s229
    %p241 = scmp.eq.s32.totalorder %s93, 1
    %p242 = por %p240, %p241
    %p244 = scmp.ne.s32.totalorder %s229, %s243
    %p245 = scmp.eq.s32.totalorder %s93, 0
    %p246 = por %p244, %p245
    %s248 = sadd.s32 %s247, 1
    %p251 = scmp.eq.s32.totalorder %s87, 1
    %p252 = scmp.ne.s32.totalorder %s247, %s249
    %p253 = scmp.eq.s32.totalorder %s87, 0
    %p254 = por %p252, %p253
    %p255 = scmp.ne.s32.totalorder %s247, %s249
    %p256 = scmp.eq.s32.totalorder %s92, 1
    %p257 = por %p255, %p256
    %p258 = scmp.ne.s32.totalorder %s249, %s250
    %p259 = scmp.eq.s32.totalorder %s92, 0
    %p260 = por %p258, %p259
    %p261 = scmp.ne.s32.totalorder %s249, %s250
    %p262 = scmp.eq.s32.totalorder %s93, 1
    %p263 = por %p261, %p262
    %p265 = scmp.ne.s32.totalorder %s250, %s264
    %p266 = scmp.eq.s32.totalorder %s93, 0
    %p267 = por %p265, %p266
    %s269 = sadd.s32 %s268, 1
    %p272 = scmp.eq.s32.totalorder %s87, 1
    %p273 = scmp.ne.s32.totalorder %s268, %s270
    %p274 = scmp.eq.s32.totalorder %s87, 0
    %p275 = por %p273, %p274
    %p276 = scmp.ne.s32.totalorder %s268, %s270
    %p277 = scmp.eq.s32.totalorder %s92, 1
    %p278 = por %p276, %p277
    %p279 = scmp.ne.s32.totalorder %s270, %s271
    %p280 = scmp.eq.s32.totalorder %s92, 0
    %p281 = por %p279, %p280
    %p282 = scmp.ne.s32.totalorder %s270, %s271
    %p283 = scmp.eq.s32.totalorder %s93, 1
    %p284 = por %p282, %p283
    %p286 = scmp.ne.s32.totalorder %s271, %s285
    %p287 = scmp.eq.s32.totalorder %s93, 0
    %p288 = por %p286, %p287
    %s290 = sadd.s32 %s289, 1
    %p293 = scmp.eq.s32.totalorder %s87, 1
    %p294 = scmp.ne.s32.totalorder %s289, %s291
    %p295 = scmp.eq.s32.totalorder %s87, 0
    %p296 = por %p294, %p295
    %p297 = scmp.ne.s32.totalorder %s289, %s291
    %p298 = scmp.eq.s32.totalorder %s92, 1
    %p299 = por %p297, %p298
    %p300 = scmp.ne.s32.totalorder %s291, %s292
    %p301 = scmp.eq.s32.totalorder %s92, 0
    %p302 = por %p300, %p301
    %p303 = scmp.ne.s32.totalorder %s291, %s292
    %p304 = scmp.eq.s32.totalorder %s93, 1
    %p305 = por %p303, %p304
    %p307 = scmp.ne.s32.totalorder %s292, %s306
    %p308 = scmp.eq.s32.totalorder %s93, 0
    %p309 = por %p307, %p308
    %s311 = sadd.s32 %s310, 1
    %p314 = scmp.eq.s32.totalorder %s87, 1
    %p315 = scmp.ne.s32.totalorder %s310, %s312
    %p316 = scmp.eq.s32.totalorder %s87, 0
    %p317 = por %p315, %p316
    %p318 = scmp.ne.s32.totalorder %s310, %s312
    %p319 = scmp.eq.s32.totalorder %s92, 1
    %p320 = por %p318, %p319
    %p321 = scmp.ne.s32.totalorder %s312, %s313
    %p322 = scmp.eq.s32.totalorder %s92, 0
    %p323 = por %p321, %p322
    %p324 = scmp.ne.s32.totalorder %s312, %s313
    %p325 = scmp.eq.s32.totalorder %s93, 1
    %p326 = por %p324, %p325
    %p328 = scmp.ne.s32.totalorder %s313, %s327
    %p329 = scmp.eq.s32.totalorder %s93, 0
    %p330 = por %p328, %p329
    %s332 = sadd.s32 %s331, 1
    %p335 = scmp.eq.s32.totalorder %s87, 1
    %p336 = scmp.ne.s32.totalorder %s331, %s333
    %p337 = scmp.eq.s32.totalorder %s87, 0
    %p338 = por %p336, %p337
    %p339 = scmp.ne.s32.totalorder %s331, %s333
    %p340 = scmp.eq.s32.totalorder %s92, 1
    %p341 = por %p339, %p340
    %p342 = scmp.ne.s32.totalorder %s333, %s334
    %p343 = scmp.eq.s32.totalorder %s92, 0
    %p344 = por %p342, %p343
    %p345 = scmp.ne.s32.totalorder %s333, %s334
    %p346 = scmp.eq.s32.totalorder %s93, 1
    %p347 = por %p345, %p346
    %p349 = scmp.ne.s32.totalorder %s334, %s348
    %p350 = scmp.eq.s32.totalorder %s93, 0
    %p351 = por %p349, %p350
    %s353 = sadd.s32 %s352, 1
    %p356 = scmp.eq.s32.totalorder %s87, 1
    %p357 = scmp.ne.s32.totalorder %s352, %s354
    %p358 = scmp.eq.s32.totalorder %s87, 0
    %p359 = por %p357, %p358
    %p360 = scmp.ne.s32.totalorder %s352, %s354
    %p361 = scmp.eq.s32.totalorder %s92, 1
    %p362 = por %p360, %p361
    %p363 = scmp.ne.s32.totalorder %s354, %s355
    %p364 = scmp.eq.s32.totalorder %s92, 0
    %p365 = por %p363, %p364
    %p366 = scmp.ne.s32.totalorder %s354, %s355
    %p367 = scmp.eq.s32.totalorder %s93, 1
    %p368 = por %p366, %p367
    %p370 = scmp.ne.s32.totalorder %s355, %s369
    %p371 = scmp.eq.s32.totalorder %s93, 0
    %p372 = por %p370, %p371
    %s374 = sadd.s32 %s373, 1
    %p377 = scmp.eq.s32.totalorder %s87, 1
    %p378 = scmp.ne.s32.totalorder %s373, %s375
    %p379 = scmp.eq.s32.totalorder %s87, 0
    %p380 = por %p378, %p379
    %p381 = scmp.ne.s32.totalorder %s373, %s375
    %p382 = scmp.eq.s32.totalorder %s92, 1
    %p383 = por %p381, %p382
    %p384 = scmp.ne.s32.totalorder %s375, %s376
    %p385 = scmp.eq.s32.totalorder %s92, 0
    %p386 = por %p384, %p385
    %p387 = scmp.ne.s32.totalorder %s375, %s376
    %p388 = scmp.eq.s32.totalorder %s93, 1
    %p389 = por %p387, %p388
    %p391 = scmp.ne.s32.totalorder %s376, %s390
    %p392 = scmp.eq.s32.totalorder %s93, 0
    %p393 = por %p391, %p392
    %s395 = sadd.s32 %s394, 1
    %p398 = scmp.eq.s32.totalorder %s87, 1
    %p399 = scmp.ne.s32.totalorder %s394, %s396
    %p400 = scmp.eq.s32.totalorder %s87, 0
    %p401 = por %p399, %p400
    %p402 = scmp.ne.s32.totalorder %s394, %s396
    %p403 = scmp.eq.s32.totalorder %s92, 1
    %p404 = por %p402, %p403
    %p405 = scmp.ne.s32.totalorder %s396, %s397
    %p406 = scmp.eq.s32.totalorder %s92, 0
    %p407 = por %p405, %p406
    %p408 = scmp.ne.s32.totalorder %s396, %s397
    %p409 = scmp.eq.s32.totalorder %s93, 1
    %p410 = por %p408, %p409
    %p412 = scmp.ne.s32.totalorder %s397, %s411
    %p413 = scmp.eq.s32.totalorder %s93, 0
    %p414 = por %p412, %p413
    %s416 = sadd.s32 %s415, 1
    %p419 = scmp.eq.s32.totalorder %s87, 1
    %p420 = scmp.ne.s32.totalorder %s415, %s417
    %p421 = scmp.eq.s32.totalorder %s87, 0
    %p422 = por %p420, %p421
    %p423 = scmp.ne.s32.totalorder %s415, %s417
    %p424 = scmp.eq.s32.totalorder %s92, 1
    %p425 = por %p423, %p424
    %p426 = scmp.ne.s32.totalorder %s417, %s418
    %p427 = scmp.eq.s32.totalorder %s92, 0
    %p428 = por %p426, %p427
    %p429 = scmp.ne.s32.totalorder %s417, %s418
    %p430 = scmp.eq.s32.totalorder %s93, 1
    %p431 = por %p429, %p430
    %p433 = scmp.ne.s32.totalorder %s418, %s432
    %p434 = scmp.eq.s32.totalorder %s93, 0
    %p435 = por %p433, %p434
    %s437 = sadd.s32 %s436, 1
    %p440 = scmp.eq.s32.totalorder %s87, 1
    %p441 = scmp.ne.s32.totalorder %s436, %s438
    %p442 = scmp.eq.s32.totalorder %s87, 0
    %p443 = por %p441, %p442
    %p444 = scmp.ne.s32.totalorder %s436, %s438
    %p445 = scmp.eq.s32.totalorder %s92, 1
    %p446 = por %p444, %p445
    %p447 = scmp.ne.s32.totalorder %s438, %s439
    %p448 = scmp.eq.s32.totalorder %s92, 0
    %p449 = por %p447, %p448
    %p450 = scmp.ne.s32.totalorder %s438, %s439
    %p451 = scmp.eq.s32.totalorder %s93, 1
    %p452 = por %p450, %p451
    %p454 = scmp.ne.s32.totalorder %s439, %s453
    %p455 = scmp.eq.s32.totalorder %s93, 0
    %p456 = por %p454, %p455
    %s458 = sadd.s32 %s457, 1
    %p461 = scmp.eq.s32.totalorder %s87, 1
    %p462 = scmp.ne.s32.totalorder %s457, %s459
    %p463 = scmp.eq.s32.totalorder %s87, 0
    %p464 = por %p462, %p463
    %p465 = scmp.ne.s32.totalorder %s457, %s459
    %p466 = scmp.eq.s32.totalorder %s92, 1
    %p467 = por %p465, %p466
    %p468 = scmp.ne.s32.totalorder %s459, %s460
    %p469 = scmp.eq.s32.totalorder %s92, 0
    %p470 = por %p468, %p469
    %p471 = scmp.ne.s32.totalorder %s459, %s460
    %p472 = scmp.eq.s32.totalorder %s93, 1
    %p473 = por %p471, %p472
    %p475 = scmp.ne.s32.totalorder %s460, %s474
    %p476 = scmp.eq.s32.totalorder %s93, 0
    %p477 = por %p475, %p476
    %s479 = sadd.s32 %s478, 1
    %p482 = scmp.eq.s32.totalorder %s87, 1
    %p483 = scmp.ne.s32.totalorder %s478, %s480
    %p484 = scmp.eq.s32.totalorder %s87, 0
    %p485 = por %p483, %p484
    %p486 = scmp.ne.s32.totalorder %s478, %s480
    %p487 = scmp.eq.s32.totalorder %s92, 1
    %p488 = por %p486, %p487
    %p489 = scmp.ne.s32.totalorder %s480, %s481
    %p490 = scmp.eq.s32.totalorder %s92, 0
    %p491 = por %p489, %p490
    %p492 = scmp.ne.s32.totalorder %s480, %s481
    %p493 = scmp.eq.s32.totalorder %s93, 1
    %p494 = por %p492, %p493
    %p496 = scmp.ne.s32.totalorder %s481, %s495
    %p497 = scmp.eq.s32.totalorder %s93, 0
    %p498 = por %p496, %p497
    %s500 = sadd.s32 %s499, 1
    %p503 = scmp.eq.s32.totalorder %s87, 1
    %p504 = scmp.ne.s32.totalorder %s499, %s501
    %p505 = scmp.eq.s32.totalorder %s87, 0
    %p506 = por %p504, %p505
    %p507 = scmp.ne.s32.totalorder %s499, %s501
    %p508 = scmp.eq.s32.totalorder %s92, 1
    %p509 = por %p507, %p508
    %p510 = scmp.ne.s32.totalorder %s501, %s502
    %p511 = scmp.eq.s32.totalorder %s92, 0
    %p512 = por %p510, %p511
    %p513 = scmp.ne.s32.totalorder %s501, %s502
    %p514 = scmp.eq.s32.totalorder %s93, 1
    %p515 = por %p513, %p514
    %p517 = scmp.ne.s32.totalorder %s502, %s516
    %p518 = scmp.eq.s32.totalorder %s93, 0
    %p519 = por %p517, %p518
    %s521 = sadd.s32 %s520, 1
    %p524 = scmp.eq.s32.totalorder %s87, 1
    %p525 = scmp.ne.s32.totalorder %s520, %s522
    %p526 = scmp.eq.s32.totalorder %s87, 0
    %p527 = por %p525, %p526
    %p528 = scmp.ne.s32.totalorder %s520, %s522
    %p529 = scmp.eq.s32.totalorder %s92, 1
    %p530 = por %p528, %p529
    %p531 = scmp.ne.s32.totalorder %s522, %s523
    %p532 = scmp.eq.s32.totalorder %s92, 0
    %p533 = por %p531, %p532
    %p534 = scmp.ne.s32.totalorder %s522, %s523
    %p535 = scmp.eq.s32.totalorder %s93, 1
    %p536 = por %p534, %p535
    %p538 = scmp.ne.s32.totalorder %s523, %s537
    %p539 = scmp.eq.s32.totalorder %s93, 0
    %p540 = por %p538, %p539
    %s542 = sadd.s32 %s541, 1
    %p545 = scmp.eq.s32.totalorder %s87, 1
    %p546 = scmp.ne.s32.totalorder %s541, %s543
    %p547 = scmp.eq.s32.totalorder %s87, 0
    %p548 = por %p546, %p547
    %p549 = scmp.ne.s32.totalorder %s541, %s543
    %p550 = scmp.eq.s32.totalorder %s92, 1
    %p551 = por %p549, %p550
    %p552 = scmp.ne.s32.totalorder %s543, %s544
    %p553 = scmp.eq.s32.totalorder %s92, 0
    %p554 = por %p552, %p553
    %p555 = scmp.ne.s32.totalorder %s543, %s544
    %p556 = scmp.eq.s32.totalorder %s93, 1
    %p557 = por %p555, %p556
    %p559 = scmp.ne.s32.totalorder %s544, %s558
    %p560 = scmp.eq.s32.totalorder %s93, 0
    %p561 = por %p559, %p560
    %s563 = sadd.s32 %s562, 1
    %p566 = scmp.eq.s32.totalorder %s87, 1
    %p567 = scmp.ne.s32.totalorder %s562, %s564
    %p568 = scmp.eq.s32.totalorder %s87, 0
    %p569 = por %p567, %p568
    %p570 = scmp.ne.s32.totalorder %s562, %s564
    %p571 = scmp.eq.s32.totalorder %s92, 1
    %p572 = por %p570, %p571
    %p573 = scmp.ne.s32.totalorder %s564, %s565
    %p574 = scmp.eq.s32.totalorder %s92, 0
    %p575 = por %p573, %p574
    %p576 = scmp.ne.s32.totalorder %s564, %s565
    %p577 = scmp.eq.s32.totalorder %s93, 1
    %p578 = por %p576, %p577
    %p580 = scmp.ne.s32.totalorder %s565, %s579
    %p581 = scmp.eq.s32.totalorder %s93, 0
    %p582 = por %p580, %p581
    %s584 = sadd.s32 %s583, 1
    %p587 = scmp.eq.s32.totalorder %s87, 1
    %p588 = scmp.ne.s32.totalorder %s583, %s585
    %p589 = scmp.eq.s32.totalorder %s87, 0
    %p590 = por %p588, %p589
    %p591 = scmp.ne.s32.totalorder %s583, %s585
    %p592 = scmp.eq.s32.totalorder %s92, 1
    %p593 = por %p591, %p592
    %p594 = scmp.ne.s32.totalorder %s585, %s586
    %p595 = scmp.eq.s32.totalorder %s92, 0
    %p596 = por %p594, %p595
    %p597 = scmp.ne.s32.totalorder %s585, %s586
    %p598 = scmp.eq.s32.totalorder %s93, 1
    %p599 = por %p597, %p598
    %p601 = scmp.ne.s32.totalorder %s586, %s600
    %p602 = scmp.eq.s32.totalorder %s93, 0
    %p603 = por %p601, %p602
    %s605 = sadd.s32 %s604, 1
    %p608 = scmp.eq.s32.totalorder %s87, 1
    %p609 = scmp.ne.s32.totalorder %s604, %s606
    %p610 = scmp.eq.s32.totalorder %s87, 0
    %p611 = por %p609, %p610
    %p612 = scmp.ne.s32.totalorder %s604, %s606
    %p613 = scmp.eq.s32.totalorder %s92, 1
    %p614 = por %p612, %p613
    %p615 = scmp.ne.s32.totalorder %s606, %s607
    %p616 = scmp.eq.s32.totalorder %s92, 0
    %p617 = por %p615, %p616
    %p618 = scmp.ne.s32.totalorder %s606, %s607
    %p619 = scmp.eq.s32.totalorder %s93, 1
    %p620 = por %p618, %p619
    %p622 = scmp.ne.s32.totalorder %s607, %s621
    %p623 = scmp.eq.s32.totalorder %s93, 0
    %p624 = por %p622, %p623
    %s626 = sadd.s32 %s625, 1
    %p629 = scmp.eq.s32.totalorder %s87, 1
    %p630 = scmp.ne.s32.totalorder %s625, %s627
    %p631 = scmp.eq.s32.totalorder %s87, 0
    %p632 = por %p630, %p631
    %p633 = scmp.ne.s32.totalorder %s625, %s627
    %p634 = scmp.eq.s32.totalorder %s92, 1
    %p635 = por %p633, %p634
    %p636 = scmp.ne.s32.totalorder %s627, %s628
    %p637 = scmp.eq.s32.totalorder %s92, 0
    %p638 = por %p636, %p637
    %p639 = scmp.ne.s32.totalorder %s627, %s628
    %p640 = scmp.eq.s32.totalorder %s93, 1
    %p641 = por %p639, %p640
    %p643 = scmp.ne.s32.totalorder %s628, %s642
    %p644 = scmp.eq.s32.totalorder %s93, 0
    %p645 = por %p643, %p644
    %s647 = sadd.s32 %s646, 1
    %p650 = scmp.eq.s32.totalorder %s87, 1
    %p651 = scmp.ne.s32.totalorder %s646, %s648
    %p652 = scmp.eq.s32.totalorder %s87, 0
    %p653 = por %p651, %p652
    %p654 = scmp.ne.s32.totalorder %s646, %s648
    %p655 = scmp.eq.s32.totalorder %s92, 1
    %p656 = por %p654, %p655
    %p657 = scmp.ne.s32.totalorder %s648, %s649
    %p658 = scmp.eq.s32.totalorder %s92, 0
    %p659 = por %p657, %p658
    %p660 = scmp.ne.s32.totalorder %s648, %s649
    %p661 = scmp.eq.s32.totalorder %s93, 1
    %p662 = por %p660, %p661
    %p664 = scmp.ne.s32.totalorder %s649, %s663
    %p665 = scmp.eq.s32.totalorder %s93, 0
    %p666 = por %p664, %p665
    %s668 = sadd.s32 %s667, 1
    %p671 = scmp.eq.s32.totalorder %s87, 1
    %p672 = scmp.ne.s32.totalorder %s667, %s669
    %p673 = scmp.eq.s32.totalorder %s87, 0
    %p674 = por %p672, %p673
    %p675 = scmp.ne.s32.totalorder %s667, %s669
    %p676 = scmp.eq.s32.totalorder %s92, 1
    %p677 = por %p675, %p676
    %p678 = scmp.ne.s32.totalorder %s669, %s670
    %p679 = scmp.eq.s32.totalorder %s92, 0
    %p680 = por %p678, %p679
    %p681 = scmp.ne.s32.totalorder %s669, %s670
    %p682 = scmp.eq.s32.totalorder %s93, 1
    %p683 = por %p681, %p682
    %p685 = scmp.ne.s32.totalorder %s670, %s684
    %p686 = scmp.eq.s32.totalorder %s93, 0
    %p687 = por %p685, %p686
    %s689 = sadd.s32 %s688, 1
    %p692 = scmp.eq.s32.totalorder %s87, 1
    %p693 = scmp.ne.s32.totalorder %s688, %s690
    %p694 = scmp.eq.s32.totalorder %s87, 0
    %p695 = por %p693, %p694
    %p696 = scmp.ne.s32.totalorder %s688, %s690
    %p697 = scmp.eq.s32.totalorder %s92, 1
    %p698 = por %p696, %p697
    %p699 = scmp.ne.s32.totalorder %s690, %s691
    %p700 = scmp.eq.s32.totalorder %s92, 0
    %p701 = por %p699, %p700
    %p702 = scmp.ne.s32.totalorder %s690, %s691
    %p703 = scmp.eq.s32.totalorder %s93, 1
    %p704 = por %p702, %p703
    %p706 = scmp.ne.s32.totalorder %s691, %s705
    %p707 = scmp.eq.s32.totalorder %s93, 0
    %p708 = por %p706, %p707
    %s710 = sadd.s32 %s709, 1
    %p713 = scmp.eq.s32.totalorder %s87, 1
    %p714 = scmp.ne.s32.totalorder %s709, %s711
    %p715 = scmp.eq.s32.totalorder %s87, 0
    %p716 = por %p714, %p715
    %p717 = scmp.ne.s32.totalorder %s709, %s711
    %p718 = scmp.eq.s32.totalorder %s92, 1
    %p719 = por %p717, %p718
    %p720 = scmp.ne.s32.totalorder %s711, %s712
    %p721 = scmp.eq.s32.totalorder %s92, 0
    %p722 = por %p720, %p721
    %p723 = scmp.ne.s32.totalorder %s711, %s712
    %p724 = scmp.eq.s32.totalorder %s93, 1
    %p725 = por %p723, %p724
    %p727 = scmp.ne.s32.totalorder %s712, %s726
    %p728 = scmp.eq.s32.totalorder %s93, 0
    %p729 = por %p727, %p728
    %s731 = sadd.s32 %s730, 1
    %p734 = scmp.eq.s32.totalorder %s87, 1
    %p735 = scmp.ne.s32.totalorder %s730, %s732
    %p736 = scmp.eq.s32.totalorder %s87, 0
    %p737 = por %p735, %p736
    %p738 = scmp.ne.s32.totalorder %s730, %s732
    %p739 = scmp.eq.s32.totalorder %s92, 1
    %p740 = por %p738, %p739
    %p741 = scmp.ne.s32.totalorder %s732, %s733
    %p742 = scmp.eq.s32.totalorder %s92, 0
    %p743 = por %p741, %p742
    %p744 = scmp.ne.s32.totalorder %s732, %s733
    %p745 = scmp.eq.s32.totalorder %s93, 1
    %p746 = por %p744, %p745
    %p748 = scmp.ne.s32.totalorder %s733, %s747
    %p749 = scmp.eq.s32.totalorder %s93, 0
    %p750 = por %p748, %p749
    %s752 = sadd.s32 %s751, 1
    %p755 = scmp.eq.s32.totalorder %s87, 1
    %p756 = scmp.ne.s32.totalorder %s751, %s753
    %p757 = scmp.eq.s32.totalorder %s87, 0
    %p758 = por %p756, %p757
    %p759 = scmp.ne.s32.totalorder %s751, %s753
    %p760 = scmp.eq.s32.totalorder %s92, 1
    %p761 = por %p759, %p760
    %p762 = scmp.ne.s32.totalorder %s753, %s754
    %p763 = scmp.eq.s32.totalorder %s92, 0
    %p764 = por %p762, %p763
    %p765 = scmp.ne.s32.totalorder %s753, %s754
    %p766 = scmp.eq.s32.totalorder %s93, 1
    %p767 = por %p765, %p766
    %p769 = scmp.ne.s32.totalorder %s754, %s768
    %p770 = scmp.eq.s32.totalorder %s93, 0
    %p771 = por %p769, %p770
    %s773 = sadd.s32 %s772, 1
    %p776 = scmp.eq.s32.totalorder %s87, 1
    %p777 = scmp.ne.s32.totalorder %s772, %s774
    %p778 = scmp.eq.s32.totalorder %s87, 0
    %p779 = por %p777, %p778
    %p780 = scmp.ne.s32.totalorder %s772, %s774
    %p781 = scmp.eq.s32.totalorder %s92, 1
    %p782 = por %p780, %p781
    %p783 = scmp.ne.s32.totalorder %s774, %s775
    %p784 = scmp.eq.s32.totalorder %s92, 0
    %p785 = por %p783, %p784
    %p786 = scmp.ne.s32.totalorder %s774, %s775
    %p787 = scmp.eq.s32.totalorder %s93, 1
    %p788 = por %p786, %p787
    %p790 = scmp.ne.s32.totalorder %s775, %s789
    %p791 = scmp.eq.s32.totalorder %s93, 0
    %p792 = por %p790, %p791
    %s794 = sadd.s32 %s793, 1
    %p797 = scmp.eq.s32.totalorder %s87, 1
    %p798 = scmp.ne.s32.totalorder %s793, %s795
    %p799 = scmp.eq.s32.totalorder %s87, 0
    %p800 = por %p798, %p799
    %p801 = scmp.ne.s32.totalorder %s793, %s795
    %p802 = scmp.eq.s32.totalorder %s92, 1
    %p803 = por %p801, %p802
    %p804 = scmp.ne.s32.totalorder %s795, %s796
    %p805 = scmp.eq.s32.totalorder %s92, 0
    %p806 = por %p804, %p805
    %p807 = scmp.ne.s32.totalorder %s795, %s796
    %p808 = scmp.eq.s32.totalorder %s93, 1
    %p809 = por %p807, %p808
    %p811 = scmp.ne.s32.totalorder %s796, %s810
    %p812 = scmp.eq.s32.totalorder %s93, 0
    %p813 = por %p811, %p812
    %s815 = sadd.s32 %s814, 1
    %p818 = scmp.eq.s32.totalorder %s87, 1
    %p819 = scmp.ne.s32.totalorder %s814, %s816
    %p820 = scmp.eq.s32.totalorder %s87, 0
    %p821 = por %p819, %p820
    %p822 = scmp.ne.s32.totalorder %s814, %s816
    %p823 = scmp.eq.s32.totalorder %s92, 1
    %p824 = por %p822, %p823
    %p825 = scmp.ne.s32.totalorder %s816, %s817
    %p826 = scmp.eq.s32.totalorder %s92, 0
    %p827 = por %p825, %p826
    %p828 = scmp.ne.s32.totalorder %s816, %s817
    %p829 = scmp.eq.s32.totalorder %s93, 1
    %p830 = por %p828, %p829
    %p832 = scmp.ne.s32.totalorder %s817, %s831
    %p833 = scmp.eq.s32.totalorder %s93, 0
    %p834 = por %p832, %p833
    %s836 = sadd.s32 %s835, 1
    %p839 = scmp.eq.s32.totalorder %s87, 1
    %p840 = scmp.ne.s32.totalorder %s835, %s837
    %p841 = scmp.eq.s32.totalorder %s87, 0
    %p842 = por %p840, %p841
    %p843 = scmp.ne.s32.totalorder %s835, %s837
    %p844 = scmp.eq.s32.totalorder %s92, 1
    %p845 = por %p843, %p844
    %p846 = scmp.ne.s32.totalorder %s837, %s838
    %p847 = scmp.eq.s32.totalorder %s92, 0
    %p848 = por %p846, %p847
    %p849 = scmp.ne.s32.totalorder %s837, %s838
    %p850 = scmp.eq.s32.totalorder %s93, 1
    %p851 = por %p849, %p850
    %p853 = scmp.ne.s32.totalorder %s838, %s852
    %p854 = scmp.eq.s32.totalorder %s93, 0
    %p855 = por %p853, %p854
    %s857 = sadd.s32 %s856, 1
    %p860 = scmp.eq.s32.totalorder %s87, 1
    %p861 = scmp.ne.s32.totalorder %s856, %s858
    %p862 = scmp.eq.s32.totalorder %s87, 0
    %p863 = por %p861, %p862
    %p864 = scmp.ne.s32.totalorder %s856, %s858
    %p865 = scmp.eq.s32.totalorder %s92, 1
    %p866 = por %p864, %p865
    %p867 = scmp.ne.s32.totalorder %s858, %s859
    %p868 = scmp.eq.s32.totalorder %s92, 0
    %p869 = por %p867, %p868
    %p870 = scmp.ne.s32.totalorder %s858, %s859
    %p871 = scmp.eq.s32.totalorder %s93, 1
    %p872 = por %p870, %p871
    %p874 = scmp.ne.s32.totalorder %s859, %s873
    %p875 = scmp.eq.s32.totalorder %s93, 0
    %p876 = por %p874, %p875
    %s878 = sadd.s32 %s877, 1
    %p881 = scmp.eq.s32.totalorder %s87, 1
    %p882 = scmp.ne.s32.totalorder %s877, %s879
    %p883 = scmp.eq.s32.totalorder %s87, 0
    %p884 = por %p882, %p883
    %p885 = scmp.ne.s32.totalorder %s877, %s879
    %p886 = scmp.eq.s32.totalorder %s92, 1
    %p887 = por %p885, %p886
    %p888 = scmp.ne.s32.totalorder %s879, %s880
    %p889 = scmp.eq.s32.totalorder %s92, 0
    %p890 = por %p888, %p889
    %p891 = scmp.ne.s32.totalorder %s879, %s880
    %p892 = scmp.eq.s32.totalorder %s93, 1
    %p893 = por %p891, %p892
    %p895 = scmp.ne.s32.totalorder %s880, %s894
    %p896 = scmp.eq.s32.totalorder %s93, 0
    %p897 = por %p895, %p896
    %s899 = sadd.s32 %s898, 1
    %p902 = scmp.eq.s32.totalorder %s87, 1
    %p903 = scmp.ne.s32.totalorder %s898, %s900
    %p904 = scmp.eq.s32.totalorder %s87, 0
    %p905 = por %p903, %p904
    %p906 = scmp.ne.s32.totalorder %s898, %s900
    %p907 = scmp.eq.s32.totalorder %s92, 1
    %p908 = por %p906, %p907
    %p909 = scmp.ne.s32.totalorder %s900, %s901
    %p910 = scmp.eq.s32.totalorder %s92, 0
    %p911 = por %p909, %p910
    %p912 = scmp.ne.s32.totalorder %s900, %s901
    %p913 = scmp.eq.s32.totalorder %s93, 1
    %p914 = por %p912, %p913
    %p916 = scmp.ne.s32.totalorder %s901, %s915
    %p917 = scmp.eq.s32.totalorder %s93, 0
    %p918 = por %p916, %p917
    %s920 = sadd.s32 %s919, 1
    %p923 = scmp.eq.s32.totalorder %s87, 1
    %p924 = scmp.ne.s32.totalorder %s919, %s921
    %p925 = scmp.eq.s32.totalorder %s87, 0
    %p926 = por %p924, %p925
    %p927 = scmp.ne.s32.totalorder %s919, %s921
    %p928 = scmp.eq.s32.totalorder %s92, 1
    %p929 = por %p927, %p928
    %p930 = scmp.ne.s32.totalorder %s921, %s922
    %p931 = scmp.eq.s32.totalorder %s92, 0
    %p932 = por %p930, %p931
    %p933 = scmp.ne.s32.totalorder %s921, %s922
    %p934 = scmp.eq.s32.totalorder %s93, 1
    %p935 = por %p933, %p934
    %p937 = scmp.ne.s32.totalorder %s922, %s936
    %p938 = scmp.eq.s32.totalorder %s93, 0
    %p939 = por %p937, %p938
    %s940 = ssub.s32 %s87, %s94
    %p941 = scmp.eq.s32.totalorder %s940, 0
    %s943 = sadd.s32 %s942, 1
    %s944 = scalar_select %p941, %s942, %s943
    %p947 = pneg %p941
    %p948 = scmp.eq.s32.totalorder %s87, 1
    %p949 = por %p947, %p948
    %p950 = scmp.ne.s32.totalorder %s942, %s945
    %p951 = scmp.eq.s32.totalorder %s87, 0
    %p952 = por %p950, %p951
    %p953 = scmp.ne.s32.totalorder %s942, %s945
    %p954 = scmp.eq.s32.totalorder %s92, 1
    %p955 = por %p953, %p954
    %p956 = scmp.ne.s32.totalorder %s945, %s946
    %p957 = scmp.eq.s32.totalorder %s92, 0
    %p958 = por %p956, %p957
    %p959 = scmp.ne.s32.totalorder %s945, %s946
    %p960 = scmp.eq.s32.totalorder %s93, 1
    %p961 = por %p959, %p960
    %p963 = scmp.ne.s32.totalorder %s946, %s962
    %p964 = scmp.eq.s32.totalorder %s93, 0
    %p965 = por %p963, %p964
    %p966 = scmp.le.s32.totalorder 1, %s87
    %p967 = scmp.lt.s32.totalorder %s87, 3
    %p968 = pnand %p966, %p967
    %p969 = pneg %p968
    // Predicated region
    $region9: #{resnet_forward_pallas.1} parent=5 // pred_check
      _
    $region10: #{resnet_forward_pallas.1} parent=5 // pred_check_branch
      %971 = sbr.rel (%p968) target = $region12
    $region11: #{resnet_forward_pallas.1} parent=5 // pred_region
      %s972 = ssub.s32 %s87, 1
      // Predicated region
      $region13: #{resnet_forward_pallas.1} parent=11 // pred_check
        %p973 = pneg %p134
      $region14: #{resnet_forward_pallas.1} parent=11 // pred_check_branch
        %975 = sbr.rel (%p973) target = $region16
      $region15: #{resnet_forward_pallas.1} parent=11 // pred_region
        _
      $region16: #{resnet_forward_pallas.1} parent=11 // pred_fallthru
        _
      // Predicated region
      $region17: #{resnet_forward_pallas.1} parent=11 // pred_check
        %p976 = pneg %p155
      $region18: #{resnet_forward_pallas.1} parent=11 // pred_check_branch
        %978 = sbr.rel (%p976) target = $region20
      $region19: #{resnet_forward_pallas.1} parent=11 // pred_region
        _
      $region20: #{resnet_forward_pallas.1} parent=11 // pred_fallthru
        _
      // Predicated region
      $region21: #{resnet_forward_pallas.1} parent=11 // pred_check
        %p979 = pneg %p176
      $region22: #{resnet_forward_pallas.1} parent=11 // pred_check_branch
        %981 = sbr.rel (%p979) target = $region24
      $region23: #{resnet_forward_pallas.1} parent=11 // pred_region
        _
      $region24: #{resnet_forward_pallas.1} parent=11 // pred_fallthru
        _
      // Predicated region
      $region25: #{resnet_forward_pallas.1} parent=11 // pred_check
        %p982 = pneg %p197
      $region26: #{resnet_forward_pallas.1} parent=11 // pred_check_branch
        %984 = sbr.rel (%p982) target = $region28
      $region27: #{resnet_forward_pallas.1} parent=11 // pred_region
        _
      $region28: #{resnet_forward_pallas.1} parent=11 // pred_fallthru
        _
      // Predicated region
      $region29: #{resnet_forward_pallas.1} parent=11 // pred_check
        %p985 = pneg %p218
      $region30: #{resnet_forward_pallas.1} parent=11 // pred_check_branch
        %987 = sbr.rel (%p985) target = $region32
      $region31: #{resnet_forward_pallas.1} parent=11 // pred_region
        _
      $region32: #{resnet_forward_pallas.1} parent=11 // pred_fallthru
        _
      // Predicated region
      $region33: #{resnet_forward_pallas.1} parent=11 // pred_check
        %p988 = pneg %p239
      $region34: #{resnet_forward_pallas.1} parent=11 // pred_check_branch
        %990 = sbr.rel (%p988) target = $region36
      $region35: #{resnet_forward_pallas.1} parent=11 // pred_region
        _
      $region36: #{resnet_forward_pallas.1} parent=11 // pred_fallthru
        _
      // Predicated region
      $region37: #{resnet_forward_pallas.1} parent=11 // pred_check
        %p991 = pneg %p260
      $region38: #{resnet_forward_pallas.1} parent=11 // pred_check_branch
        %993 = sbr.rel (%p991) target = $region40
      $region39: #{resnet_forward_pallas.1} parent=11 // pred_region
        _
      $region40: #{resnet_forward_pallas.1} parent=11 // pred_fallthru
        _
      // Predicated region
      $region41: #{resnet_forward_pallas.1} parent=11 // pred_check
        %p994 = pneg %p281
      $region42: #{resnet_forward_pallas.1} parent=11 // pred_check_branch
        %996 = sbr.rel (%p994) target = $region44
      $region43: #{resnet_forward_pallas.1} parent=11 // pred_region
        _
      $region44: #{resnet_forward_pallas.1} parent=11 // pred_fallthru
        _
      // Predicated region
      $region45: #{resnet_forward_pallas.1} parent=11 // pred_check
        %p997 = pneg %p302
      $region46: #{resnet_forward_pallas.1} parent=11 // pred_check_branch
        %999 = sbr.rel (%p997) target = $region48
      $region47: #{resnet_forward_pallas.1} parent=11 // pred_region
        _
      $region48: #{resnet_forward_pallas.1} parent=11 // pred_fallthru
        _
      // Predicated region
      $region49: #{resnet_forward_pallas.1} parent=11 // pred_check
        %p1000 = pneg %p323
      $region50: #{resnet_forward_pallas.1} parent=11 // pred_check_branch
        %1002 = sbr.rel (%p1000) target = $region52
      $region51: #{resnet_forward_pallas.1} parent=11 // pred_region
        _
      $region52: #{resnet_forward_pallas.1} parent=11 // pred_fallthru
        _
      // Predicated region
      $region53: #{resnet_forward_pallas.1} parent=11 // pred_check
        %p1003 = pneg %p344
      $region54: #{resnet_forward_pallas.1} parent=11 // pred_check_branch
        %1005 = sbr.rel (%p1003) target = $region56
      $region55: #{resnet_forward_pallas.1} parent=11 // pred_region
        _
      $region56: #{resnet_forward_pallas.1} parent=11 // pred_fallthru
        _
      // Predicated region
      $region57: #{resnet_forward_pallas.1} parent=11 // pred_check
        %p1006 = pneg %p365
      $region58: #{resnet_forward_pallas.1} parent=11 // pred_check_branch
        %1008 = sbr.rel (%p1006) target = $region60
      $region59: #{resnet_forward_pallas.1} parent=11 // pred_region
        _
      $region60: #{resnet_forward_pallas.1} parent=11 // pred_fallthru
        _
      // Predicated region
      $region61: #{resnet_forward_pallas.1} parent=11 // pred_check
        %p1009 = pneg %p386
      $region62: #{resnet_forward_pallas.1} parent=11 // pred_check_branch
        %1011 = sbr.rel (%p1009) target = $region64
      $region63: #{resnet_forward_pallas.1} parent=11 // pred_region
        _
      $region64: #{resnet_forward_pallas.1} parent=11 // pred_fallthru
        _
      // Predicated region
      $region65: #{resnet_forward_pallas.1} parent=11 // pred_check
        %p1012 = pneg %p407
      $region66: #{resnet_forward_pallas.1} parent=11 // pred_check_branch
        %1014 = sbr.rel (%p1012) target = $region68
      $region67: #{resnet_forward_pallas.1} parent=11 // pred_region
        _
      $region68: #{resnet_forward_pallas.1} parent=11 // pred_fallthru
        _
      // Predicated region
      $region69: #{resnet_forward_pallas.1} parent=11 // pred_check
        %p1015 = pneg %p428
      $region70: #{resnet_forward_pallas.1} parent=11 // pred_check_branch
        %1017 = sbr.rel (%p1015) target = $region72
      $region71: #{resnet_forward_pallas.1} parent=11 // pred_region
        _
      $region72: #{resnet_forward_pallas.1} parent=11 // pred_fallthru
        _
      // Predicated region
      $region73: #{resnet_forward_pallas.1} parent=11 // pred_check
        %p1018 = pneg %p449
      $region74: #{resnet_forward_pallas.1} parent=11 // pred_check_branch
        %1020 = sbr.rel (%p1018) target = $region76
      $region75: #{resnet_forward_pallas.1} parent=11 // pred_region
        _
      $region76: #{resnet_forward_pallas.1} parent=11 // pred_fallthru
        _
      // Predicated region
      $region77: #{resnet_forward_pallas.1} parent=11 // pred_check
        %p1021 = pneg %p470
      $region78: #{resnet_forward_pallas.1} parent=11 // pred_check_branch
        %1023 = sbr.rel (%p1021) target = $region80
      $region79: #{resnet_forward_pallas.1} parent=11 // pred_region
        _
      $region80: #{resnet_forward_pallas.1} parent=11 // pred_fallthru
        _
      // Predicated region
      $region81: #{resnet_forward_pallas.1} parent=11 // pred_check
        %p1024 = pneg %p491
      $region82: #{resnet_forward_pallas.1} parent=11 // pred_check_branch
        %1026 = sbr.rel (%p1024) target = $region84
      $region83: #{resnet_forward_pallas.1} parent=11 // pred_region
        _
      $region84: #{resnet_forward_pallas.1} parent=11 // pred_fallthru
        _
      // Predicated region
      $region85: #{resnet_forward_pallas.1} parent=11 // pred_check
        %p1027 = pneg %p512
      $region86: #{resnet_forward_pallas.1} parent=11 // pred_check_branch
        %1029 = sbr.rel (%p1027) target = $region88
      $region87: #{resnet_forward_pallas.1} parent=11 // pred_region
        _
      $region88: #{resnet_forward_pallas.1} parent=11 // pred_fallthru
        _
      // Predicated region
      $region89: #{resnet_forward_pallas.1} parent=11 // pred_check
        %p1030 = pneg %p533
      $region90: #{resnet_forward_pallas.1} parent=11 // pred_check_branch
        %1032 = sbr.rel (%p1030) target = $region92
      $region91: #{resnet_forward_pallas.1} parent=11 // pred_region
        _
      $region92: #{resnet_forward_pallas.1} parent=11 // pred_fallthru
        _
      // Predicated region
      $region93: #{resnet_forward_pallas.1} parent=11 // pred_check
        %p1033 = pneg %p554
      $region94: #{resnet_forward_pallas.1} parent=11 // pred_check_branch
        %1035 = sbr.rel (%p1033) target = $region96
      $region95: #{resnet_forward_pallas.1} parent=11 // pred_region
        _
      $region96: #{resnet_forward_pallas.1} parent=11 // pred_fallthru
        _
      // Predicated region
      $region97: #{resnet_forward_pallas.1} parent=11 // pred_check
        %p1036 = pneg %p575
      $region98: #{resnet_forward_pallas.1} parent=11 // pred_check_branch
        %1038 = sbr.rel (%p1036) target = $region100
      $region99: #{resnet_forward_pallas.1} parent=11 // pred_region
        _
      $region100: #{resnet_forward_pallas.1} parent=11 // pred_fallthru
        _
      // Predicated region
      $region101: #{resnet_forward_pallas.1} parent=11 // pred_check
        %p1039 = pneg %p596
      $region102: #{resnet_forward_pallas.1} parent=11 // pred_check_branch
        %1041 = sbr.rel (%p1039) target = $region104
      $region103: #{resnet_forward_pallas.1} parent=11 // pred_region
        _
      $region104: #{resnet_forward_pallas.1} parent=11 // pred_fallthru
        _
      // Predicated region
      $region105: #{resnet_forward_pallas.1} parent=11 // pred_check
        %p1042 = pneg %p617
      $region106: #{resnet_forward_pallas.1} parent=11 // pred_check_branch
        %1044 = sbr.rel (%p1042) target = $region108
      $region107: #{resnet_forward_pallas.1} parent=11 // pred_region
        _
      $region108: #{resnet_forward_pallas.1} parent=11 // pred_fallthru
        _
      // Predicated region
      $region109: #{resnet_forward_pallas.1} parent=11 // pred_check
        %p1045 = pneg %p638
      $region110: #{resnet_forward_pallas.1} parent=11 // pred_check_branch
        %1047 = sbr.rel (%p1045) target = $region112
      $region111: #{resnet_forward_pallas.1} parent=11 // pred_region
        _
      $region112: #{resnet_forward_pallas.1} parent=11 // pred_fallthru
        _
      // Predicated region
      $region113: #{resnet_forward_pallas.1} parent=11 // pred_check
        %p1048 = pneg %p659
      $region114: #{resnet_forward_pallas.1} parent=11 // pred_check_branch
        %1050 = sbr.rel (%p1048) target = $region116
      $region115: #{resnet_forward_pallas.1} parent=11 // pred_region
        _
      $region116: #{resnet_forward_pallas.1} parent=11 // pred_fallthru
        _
      // Predicated region
      $region117: #{resnet_forward_pallas.1} parent=11 // pred_check
        %p1051 = pneg %p680
      $region118: #{resnet_forward_pallas.1} parent=11 // pred_check_branch
        %1053 = sbr.rel (%p1051) target = $region120
      $region119: #{resnet_forward_pallas.1} parent=11 // pred_region
        _
      $region120: #{resnet_forward_pallas.1} parent=11 // pred_fallthru
        _
      // Predicated region
      $region121: #{resnet_forward_pallas.1} parent=11 // pred_check
        %p1054 = pneg %p701
      $region122: #{resnet_forward_pallas.1} parent=11 // pred_check_branch
        %1056 = sbr.rel (%p1054) target = $region124
      $region123: #{resnet_forward_pallas.1} parent=11 // pred_region
        _
      $region124: #{resnet_forward_pallas.1} parent=11 // pred_fallthru
        _
      // Predicated region
      $region125: #{resnet_forward_pallas.1} parent=11 // pred_check
        %p1057 = pneg %p722
      $region126: #{resnet_forward_pallas.1} parent=11 // pred_check_branch
        %1059 = sbr.rel (%p1057) target = $region128
      $region127: #{resnet_forward_pallas.1} parent=11 // pred_region
        _
      $region128: #{resnet_forward_pallas.1} parent=11 // pred_fallthru
        _
      // Predicated region
      $region129: #{resnet_forward_pallas.1} parent=11 // pred_check
        %p1060 = pneg %p743
      $region130: #{resnet_forward_pallas.1} parent=11 // pred_check_branch
        %1062 = sbr.rel (%p1060) target = $region132
      $region131: #{resnet_forward_pallas.1} parent=11 // pred_region
        _
      $region132: #{resnet_forward_pallas.1} parent=11 // pred_fallthru
        _
      // Predicated region
      $region133: #{resnet_forward_pallas.1} parent=11 // pred_check
        %p1063 = pneg %p764
      $region134: #{resnet_forward_pallas.1} parent=11 // pred_check_branch
        %1065 = sbr.rel (%p1063) target = $region136
      $region135: #{resnet_forward_pallas.1} parent=11 // pred_region
        _
      $region136: #{resnet_forward_pallas.1} parent=11 // pred_fallthru
        _
      // Predicated region
      $region137: #{resnet_forward_pallas.1} parent=11 // pred_check
        %p1066 = pneg %p785
      $region138: #{resnet_forward_pallas.1} parent=11 // pred_check_branch
        %1068 = sbr.rel (%p1066) target = $region140
      $region139: #{resnet_forward_pallas.1} parent=11 // pred_region
        _
      $region140: #{resnet_forward_pallas.1} parent=11 // pred_fallthru
        _
      // Predicated region
      $region141: #{resnet_forward_pallas.1} parent=11 // pred_check
        %p1069 = pneg %p806
      $region142: #{resnet_forward_pallas.1} parent=11 // pred_check_branch
        %1071 = sbr.rel (%p1069) target = $region144
      $region143: #{resnet_forward_pallas.1} parent=11 // pred_region
        _
      $region144: #{resnet_forward_pallas.1} parent=11 // pred_fallthru
        _
      // Predicated region
      $region145: #{resnet_forward_pallas.1} parent=11 // pred_check
        %p1072 = pneg %p827
      $region146: #{resnet_forward_pallas.1} parent=11 // pred_check_branch
        %1074 = sbr.rel (%p1072) target = $region148
      $region147: #{resnet_forward_pallas.1} parent=11 // pred_region
        _
      $region148: #{resnet_forward_pallas.1} parent=11 // pred_fallthru
        _
      // Predicated region
      $region149: #{resnet_forward_pallas.1} parent=11 // pred_check
        %p1075 = pneg %p848
      $region150: #{resnet_forward_pallas.1} parent=11 // pred_check_branch
        %1077 = sbr.rel (%p1075) target = $region152
      $region151: #{resnet_forward_pallas.1} parent=11 // pred_region
        _
      $region152: #{resnet_forward_pallas.1} parent=11 // pred_fallthru
        _
      // Predicated region
      $region153: #{resnet_forward_pallas.1} parent=11 // pred_check
        %p1078 = pneg %p869
      $region154: #{resnet_forward_pallas.1} parent=11 // pred_check_branch
        %1080 = sbr.rel (%p1078) target = $region156
      $region155: #{resnet_forward_pallas.1} parent=11 // pred_region
        _
      $region156: #{resnet_forward_pallas.1} parent=11 // pred_fallthru
        _
      // Predicated region
      $region157: #{resnet_forward_pallas.1} parent=11 // pred_check
        %p1081 = pneg %p890
      $region158: #{resnet_forward_pallas.1} parent=11 // pred_check_branch
        %1083 = sbr.rel (%p1081) target = $region160
      $region159: #{resnet_forward_pallas.1} parent=11 // pred_region
        _
      $region160: #{resnet_forward_pallas.1} parent=11 // pred_fallthru
        _
      // Predicated region
      $region161: #{resnet_forward_pallas.1} parent=11 // pred_check
        %p1084 = pneg %p911
      $region162: #{resnet_forward_pallas.1} parent=11 // pred_check_branch
        %1086 = sbr.rel (%p1084) target = $region164
      $region163: #{resnet_forward_pallas.1} parent=11 // pred_region
        _
      $region164: #{resnet_forward_pallas.1} parent=11 // pred_fallthru
        _
      // Predicated region
      $region165: #{resnet_forward_pallas.1} parent=11 // pred_check
        %p1087 = pneg %p932
      $region166: #{resnet_forward_pallas.1} parent=11 // pred_check_branch
        %1089 = sbr.rel (%p1087) target = $region168
      $region167: #{resnet_forward_pallas.1} parent=11 // pred_region
        _
      $region168: #{resnet_forward_pallas.1} parent=11 // pred_fallthru
        _
    $region12: #{resnet_forward_pallas.1} parent=5 // pred_fallthru
      _
    %p1090 = scmp.lt.s32.totalorder %s87, 2
    // Predicated region
    $region169: #{resnet_forward_pallas.1} parent=5 // pred_check
      %p1091 = pneg %p1090
    $region170: #{resnet_forward_pallas.1} parent=5 // pred_check_branch
      %1093 = sbr.rel (%p1091) target = $region172
    $region171: #{resnet_forward_pallas.1} parent=5 // pred_region
      // Predicated region
      $region173: #{resnet_forward_pallas.1} parent=171 // pred_check
        %p1094 = pneg %p107
      $region174: #{resnet_forward_pallas.1} parent=171 // pred_check_branch
        %1096 = sbr.rel (%p1094) target = $region176
      $region175: #{resnet_forward_pallas.1} parent=171 // pred_region
        %p1097 = scmp.lt.s32.totalorder %s87, 1
        %s1098 = scalar_select %p1097, %s87, 1
        %s1099 = smul.addr %s1098, 64
        %s1100 = smul.addr %s1099, 4
        %s1101 = scalar_lea.vmem %s1, %s1100
      $region176: #{resnet_forward_pallas.1} parent=171 // pred_fallthru
        _
    $region172: #{resnet_forward_pallas.1} parent=5 // pred_fallthru
      _
    %p1102 = scmp.le.s32.totalorder 1, %s87
    %p1103 = scmp.lt.s32.totalorder %s87, 3
    %p1104 = pnand %p1102, %p1103
    %p1105 = pneg %p1104
    // Predicated region
    $region177: #{resnet_forward_pallas.1} parent=5 // pred_check
      _
    $region178: #{resnet_forward_pallas.1} parent=5 // pred_check_branch
      %1107 = sbr.rel (%p1104) target = $region180
    $region179: #{resnet_forward_pallas.1} parent=5 // pred_region
      %s1108 = ssub.s32 %s87, 1
      %p1109 = scmp.lt.s32.totalorder %s92, 1
      %s1110 = scalar_select %p1109, %s92, 1
      %s1111 = smul.addr %s1110, 64
      %s1112 = smul.addr %s1111, 4
      %s1113 = scalar_lea.vmem %s1, %s1112
      %p1114 = pneg %p113
      %p1115 = pneg %p110
      %p1116 = pneg %p134
      %p1117 = pneg %p131
      %p1118 = pneg %p155
      %p1119 = pneg %p152
      %p1120 = pneg %p176
      %p1121 = pneg %p173
      %p1122 = pneg %p197
      %p1123 = pneg %p194
      %p1124 = pneg %p218
      %p1125 = pneg %p215
      %p1126 = pneg %p239
      %p1127 = pneg %p236
      %p1128 = pneg %p260
      %p1129 = pneg %p257
      %p1130 = pneg %p281
      %p1131 = pneg %p278
      %p1132 = pneg %p302
      %p1133 = pneg %p299
      %p1134 = pneg %p323
      %p1135 = pneg %p320
      %p1136 = pneg %p344
      %p1137 = pneg %p341
      %p1138 = pneg %p365
      %p1139 = pneg %p362
      %p1140 = pneg %p386
      %p1141 = pneg %p383
      %p1142 = pneg %p407
      %p1143 = pneg %p404
      %p1144 = pneg %p428
      %p1145 = pneg %p425
      %p1146 = pneg %p449
      %p1147 = pneg %p446
      %p1148 = pneg %p470
      %p1149 = pneg %p467
      %p1150 = pneg %p491
      %p1151 = pneg %p488
      %p1152 = pneg %p512
      %p1153 = pneg %p509
      %p1154 = pneg %p533
      %p1155 = pneg %p530
      %p1156 = pneg %p554
      %p1157 = pneg %p551
      %p1158 = pneg %p575
      %p1159 = pneg %p572
      %p1160 = pneg %p596
      %p1161 = pneg %p593
      %p1162 = pneg %p617
      %p1163 = pneg %p614
      %p1164 = pneg %p638
      %p1165 = pneg %p635
      %p1166 = pneg %p659
      %p1167 = pneg %p656
      %p1168 = pneg %p680
      %p1169 = pneg %p677
      %p1170 = pneg %p701
      %p1171 = pneg %p698
      %p1172 = pneg %p722
      %p1173 = pneg %p719
      %p1174 = pneg %p743
      %p1175 = pneg %p740
      %p1176 = pneg %p764
      %p1177 = pneg %p761
      %p1178 = pneg %p785
      %p1179 = pneg %p782
      %p1180 = pneg %p806
      %p1181 = pneg %p803
      %p1182 = pneg %p827
      %p1183 = pneg %p824
      %p1184 = pneg %p848
      %p1185 = pneg %p845
      %p1186 = pneg %p869
      %p1187 = pneg %p866
      %p1188 = pneg %p890
      %p1189 = pneg %p887
      %p1190 = pneg %p911
      %p1191 = pneg %p908
      %p1192 = pneg %p932
      %p1193 = pneg %p929
      %p1194 = pneg %p958
      %p1195 = pneg %p955
      %p1196 = scmp.lt.s32.totalorder %s92, 1
      %s1197 = scalar_select %p1196, %s92, 1
      %s1198 = smul.addr %s1197, 2
      %s1199 = scalar_lea.vmem %s81, %s1198
      %p1200 = scmp.lt.s32.totalorder %s92, 1
      %s1201 = scalar_select %p1200, %s92, 1
      %s1202 = smul.addr %s1201, 64
      %s1203 = smul.addr %s1202, 4
      %s1204 = scalar_lea.vmem %s1, %s1203
      %p1205 = scmp.lt.s32.totalorder %s92, 1
      %s1206 = scalar_select %p1205, %s92, 1
      %s1207 = smul.addr %s1206, 2
      %s1208 = scalar_lea.vmem %s81, %s1207
      %v1210 = vld [vmem:[%s1204] sm:$0xff]
      %v1211 = vld [vmem:[%s1204 + $0x8] sm:$0xff]
      %v1212 = vld [vmem:[%s1204 + $0x10] sm:$0xff]
      %v1213 = vld [vmem:[%s1204 + $0x18] sm:$0xff]
      %v1214 = vld [vmem:[%s1204 + $0x20] sm:$0xff]
      %v1215 = vld [vmem:[%s1204 + $0x28] sm:$0xff]
      %v1216 = vld [vmem:[%s1204 + $0x30] sm:$0xff]
      %v1217 = vld [vmem:[%s1204 + $0x38] sm:$0xff]
      %v1218 = vld [vmem:[%s1204 + $0x40] sm:$0xff]
      %v1219 = vld [vmem:[%s1204 + $0x48] sm:$0xff]
      %v1220 = vld [vmem:[%s1204 + $0x50] sm:$0xff]
      %v1221 = vld [vmem:[%s1204 + $0x58] sm:$0xff]
      %v1222 = vld [vmem:[%s1204 + $0x60] sm:$0xff]
      %v1223 = vld [vmem:[%s1204 + $0x68] sm:$0xff]
      %v1224 = vld [vmem:[%s1204 + $0x70] sm:$0xff]
      %v1225 = vld [vmem:[%s1204 + $0x78] sm:$0xff]
      %v1226 = vld [vmem:[%s1204 + $0x80] sm:$0xff]
      %v1227 = vld [vmem:[%s1204 + $0x88] sm:$0xff]
      %v1228 = vld [vmem:[%s1204 + $0x90] sm:$0xff]
      %v1229 = vld [vmem:[%s1204 + $0x98] sm:$0xff]
      %v1230 = vld [vmem:[%s1204 + $0xa0] sm:$0xff]
      %v1231 = vld [vmem:[%s1204 + $0xa8] sm:$0xff]
      %v1232 = vld [vmem:[%s1204 + $0xb0] sm:$0xff]
      %v1233 = vld [vmem:[%s1204 + $0xb8] sm:$0xff]
      %v1234 = vld [vmem:[%s1204 + $0xc0] sm:$0xff]
      %v1235 = vld [vmem:[%s1204 + $0xc8] sm:$0xff]
      %v1236 = vld [vmem:[%s1204 + $0xd0] sm:$0xff]
      %v1237 = vld [vmem:[%s1204 + $0xd8] sm:$0xff]
      %v1238 = vld [vmem:[%s1204 + $0xe0] sm:$0xff]
      %v1239 = vld [vmem:[%s1204 + $0xe8] sm:$0xff]
      %v1240 = vld [vmem:[%s1204 + $0xf0] sm:$0xff]
      %v1241 = vld [vmem:[%s1204 + $0xf8] sm:$0xff]
      %v1242 = vld [vmem:[%s3] sm:$0xf]
      %v1243 = vld [vmem:[%s3 + $0x4] sm:$0xf]
      %v1244 = vld [vmem:[%s3 + $0x8] sm:$0xf]
      %v1245 = vld [vmem:[%s3 + $0xc] sm:$0xf]
      %v1246 = vld [vmem:[%s3 + $0x10] sm:$0xf]
      %v1247 = vld [vmem:[%s3 + $0x14] sm:$0xf]
      %v1248 = vld [vmem:[%s3 + $0x18] sm:$0xf]
      %v1249 = vld [vmem:[%s3 + $0x1c] sm:$0xf]
      %v1250 = vld [vmem:[%s3 + $0x20] sm:$0xf]
      %v1251 = vld [vmem:[%s3 + $0x24] sm:$0xf]
      %v1252 = vld [vmem:[%s3 + $0x28] sm:$0xf]
      %v1253 = vld [vmem:[%s3 + $0x2c] sm:$0xf]
      %v1254 = vld [vmem:[%s3 + $0x30] sm:$0xf]
      %v1255 = vld [vmem:[%s3 + $0x34] sm:$0xf]
      %v1256 = vld [vmem:[%s3 + $0x38] sm:$0xf]
      %v1257 = vld [vmem:[%s3 + $0x3c] sm:$0xf]
      %v1258 = vld [vmem:[%s3 + $0x40] sm:$0xf]
      %v1259 = vld [vmem:[%s3 + $0x44] sm:$0xf]
      %v1260 = vld [vmem:[%s3 + $0x48] sm:$0xf]
      %v1261 = vld [vmem:[%s3 + $0x4c] sm:$0xf]
      %v1262 = vld [vmem:[%s3 + $0x50] sm:$0xf]
      %v1263 = vld [vmem:[%s3 + $0x54] sm:$0xf]
      %v1264 = vld [vmem:[%s3 + $0x58] sm:$0xf]
      %v1265 = vld [vmem:[%s3 + $0x5c] sm:$0xf]
      %v1266 = vld [vmem:[%s3 + $0x60] sm:$0xf]
      %v1267 = vld [vmem:[%s3 + $0x64] sm:$0xf]
      %v1268 = vld [vmem:[%s3 + $0x68] sm:$0xf]
      %v1269 = vld [vmem:[%s3 + $0x6c] sm:$0xf]
      %v1270 = vld [vmem:[%s3 + $0x70] sm:$0xf]
      %v1271 = vld [vmem:[%s3 + $0x74] sm:$0xf]
      %v1272 = vld [vmem:[%s3 + $0x78] sm:$0xf]
      %v1273 = vld [vmem:[%s3 + $0x7c] sm:$0xf]
      %v1274 = vld [vmem:[%s5] sm:$0x1]
      %v1276 = vperm.slane %v1274, 0
      %v1310 = vunpack.c.l.b16 %v1210
      %v1311 = vunpack.c.h.b16 %v1210
      %v1312 = vunpack.c.l.b16 %v1211
      %v1313 = vunpack.c.h.b16 %v1211
      %v1314 = vunpack.c.l.b16 %v1212
      %v1315 = vunpack.c.h.b16 %v1212
      %v1316 = vunpack.c.l.b16 %v1213
      %v1317 = vunpack.c.h.b16 %v1213
      %v1318 = vunpack.c.l.b16 %v1214
      %v1319 = vunpack.c.h.b16 %v1214
      %v1320 = vunpack.c.l.b16 %v1215
      %v1321 = vunpack.c.h.b16 %v1215
      %v1322 = vunpack.c.l.b16 %v1216
      %v1323 = vunpack.c.h.b16 %v1216
      %v1324 = vunpack.c.l.b16 %v1217
      %v1325 = vunpack.c.h.b16 %v1217
      %v1326 = vunpack.c.l.b16 %v1218
      %v1327 = vunpack.c.h.b16 %v1218
      %v1328 = vunpack.c.l.b16 %v1219
      %v1329 = vunpack.c.h.b16 %v1219
      %v1330 = vunpack.c.l.b16 %v1220
      %v1331 = vunpack.c.h.b16 %v1220
      %v1332 = vunpack.c.l.b16 %v1221
      %v1333 = vunpack.c.h.b16 %v1221
      %v1334 = vunpack.c.l.b16 %v1222
      %v1335 = vunpack.c.h.b16 %v1222
      %v1336 = vunpack.c.l.b16 %v1223
      %v1337 = vunpack.c.h.b16 %v1223
      %v1338 = vunpack.c.l.b16 %v1224
      %v1339 = vunpack.c.h.b16 %v1224
      %v1340 = vunpack.c.l.b16 %v1225
      %v1341 = vunpack.c.h.b16 %v1225
      %v1342 = vunpack.c.l.b16 %v1226
      %v1343 = vunpack.c.h.b16 %v1226
      %v1344 = vunpack.c.l.b16 %v1227
      %v1345 = vunpack.c.h.b16 %v1227
      %v1346 = vunpack.c.l.b16 %v1228
      %v1347 = vunpack.c.h.b16 %v1228
      %v1348 = vunpack.c.l.b16 %v1229
      %v1349 = vunpack.c.h.b16 %v1229
      %v1350 = vunpack.c.l.b16 %v1230
      %v1351 = vunpack.c.h.b16 %v1230
      %v1352 = vunpack.c.l.b16 %v1231
      %v1353 = vunpack.c.h.b16 %v1231
      %v1354 = vunpack.c.l.b16 %v1232
      %v1355 = vunpack.c.h.b16 %v1232
      %v1356 = vunpack.c.l.b16 %v1233
      %v1357 = vunpack.c.h.b16 %v1233
      %v1358 = vunpack.c.l.b16 %v1234
      %v1359 = vunpack.c.h.b16 %v1234
      %v1360 = vunpack.c.l.b16 %v1235
      %v1361 = vunpack.c.h.b16 %v1235
      %v1362 = vunpack.c.l.b16 %v1236
      %v1363 = vunpack.c.h.b16 %v1236
      %v1364 = vunpack.c.l.b16 %v1237
      %v1365 = vunpack.c.h.b16 %v1237
      %v1366 = vunpack.c.l.b16 %v1238
      %v1367 = vunpack.c.h.b16 %v1238
      %v1368 = vunpack.c.l.b16 %v1239
      %v1369 = vunpack.c.h.b16 %v1239
      %v1370 = vunpack.c.l.b16 %v1240
      %v1371 = vunpack.c.h.b16 %v1240
      %v1372 = vunpack.c.l.b16 %v1241
      %v1373 = vunpack.c.h.b16 %v1241
      %v1374 = vpack.c.b16 %v1312, %v1310
      %v1375 = vpack.c.b16 %v1313, %v1311
      %v1376 = vpack.c.b16 %v1316, %v1314
      %v1377 = vpack.c.b16 %v1317, %v1315
      %v1378 = vpack.c.b16 %v1320, %v1318
      %v1379 = vpack.c.b16 %v1321, %v1319
      %v1380 = vpack.c.b16 %v1324, %v1322
      %v1381 = vpack.c.b16 %v1325, %v1323
      %v1382 = vpack.c.b16 %v1328, %v1326
      %v1383 = vpack.c.b16 %v1329, %v1327
      %v1384 = vpack.c.b16 %v1332, %v1330
      %v1385 = vpack.c.b16 %v1333, %v1331
      %v1386 = vpack.c.b16 %v1336, %v1334
      %v1387 = vpack.c.b16 %v1337, %v1335
      %v1388 = vpack.c.b16 %v1340, %v1338
      %v1389 = vpack.c.b16 %v1341, %v1339
      %v1390 = vpack.c.b16 %v1344, %v1342
      %v1391 = vpack.c.b16 %v1345, %v1343
      %v1392 = vpack.c.b16 %v1348, %v1346
      %v1393 = vpack.c.b16 %v1349, %v1347
      %v1394 = vpack.c.b16 %v1352, %v1350
      %v1395 = vpack.c.b16 %v1353, %v1351
      %v1396 = vpack.c.b16 %v1356, %v1354
      %v1397 = vpack.c.b16 %v1357, %v1355
      %v1398 = vpack.c.b16 %v1360, %v1358
      %v1399 = vpack.c.b16 %v1361, %v1359
      %v1400 = vpack.c.b16 %v1364, %v1362
      %v1401 = vpack.c.b16 %v1365, %v1363
      %v1402 = vpack.c.b16 %v1368, %v1366
      %v1403 = vpack.c.b16 %v1369, %v1367
      %v1404 = vpack.c.b16 %v1372, %v1370
      %v1405 = vpack.c.b16 %v1373, %v1371
      %v1470 = vunpack.c.l.b16 %v1242
      %v1471 = vunpack.c.l.b16 %v1243
      %v1472 = vunpack.c.l.b16 %v1244
      %v1473 = vunpack.c.l.b16 %v1245
      %v1474 = vunpack.c.l.b16 %v1246
      %v1475 = vunpack.c.l.b16 %v1247
      %v1476 = vunpack.c.l.b16 %v1248
      %v1477 = vunpack.c.l.b16 %v1249
      %v1478 = vunpack.c.l.b16 %v1250
      %v1479 = vunpack.c.l.b16 %v1251
      %v1480 = vunpack.c.l.b16 %v1252
      %v1481 = vunpack.c.l.b16 %v1253
      %v1482 = vunpack.c.l.b16 %v1254
      %v1483 = vunpack.c.l.b16 %v1255
      %v1484 = vunpack.c.l.b16 %v1256
      %v1485 = vunpack.c.l.b16 %v1257
      %v1486 = vunpack.c.l.b16 %v1258
      %v1487 = vunpack.c.l.b16 %v1259
      %v1488 = vunpack.c.l.b16 %v1260
      %v1489 = vunpack.c.l.b16 %v1261
      %v1490 = vunpack.c.l.b16 %v1262
      %v1491 = vunpack.c.l.b16 %v1263
      %v1492 = vunpack.c.l.b16 %v1264
      %v1493 = vunpack.c.l.b16 %v1265
      %v1494 = vunpack.c.l.b16 %v1266
      %v1495 = vunpack.c.l.b16 %v1267
      %v1496 = vunpack.c.l.b16 %v1268
      %v1497 = vunpack.c.l.b16 %v1269
      %v1498 = vunpack.c.l.b16 %v1270
      %v1499 = vunpack.c.l.b16 %v1271
      %v1500 = vunpack.c.l.b16 %v1272
      %v1501 = vunpack.c.l.b16 %v1273
      %v1502 = vpack.c.b16 %v1471, %v1470
      %v1503 = vpack.c.b16 %v1473, %v1472
      %v1504 = vpack.c.b16 %v1475, %v1474
      %v1505 = vpack.c.b16 %v1477, %v1476
      %v1506 = vpack.c.b16 %v1479, %v1478
      %v1507 = vpack.c.b16 %v1481, %v1480
      %v1508 = vpack.c.b16 %v1483, %v1482
      %v1509 = vpack.c.b16 %v1485, %v1484
      %v1510 = vpack.c.b16 %v1487, %v1486
      %v1511 = vpack.c.b16 %v1489, %v1488
      %v1512 = vpack.c.b16 %v1491, %v1490
      %v1513 = vpack.c.b16 %v1493, %v1492
      %v1514 = vpack.c.b16 %v1495, %v1494
      %v1515 = vpack.c.b16 %v1497, %v1496
      %v1516 = vpack.c.b16 %v1499, %v1498
      %v1517 = vpack.c.b16 %v1501, %v1500
      %1534 = vmatpush.bf16.msra.mxu0 %v1509
      %1535 = vmatpush.bf16.msra.mxu0 %v1508
      %1536 = vmatpush.bf16.msra.mxu0 %v1507
      %1537 = vmatpush.bf16.msra.mxu0 %v1506
      %1538 = vmatpush.bf16.msra.mxu0 %v1505
      %1539 = vmatpush.bf16.msra.mxu0 %v1504
      %1540 = vmatpush.bf16.msra.mxu0 %v1503
      %1541 = vmatpush.bf16.msra.mxu0 %v1502
      %1542 = vmatmul.bf16.gmra.mxu0 %v1374
      %v1543 = vpop.f32.mrf.mxu0
      %v1544 = vadd.f32 %v1276, %v1543
      %v1545 = vpop.f32.mrf.mxu0
      %v1546 = vadd.f32 %v1276, %v1545
      %1547 = vmatmul.bf16.gmra.mxu0 %v1376
      %v1548 = vpop.f32.mrf.mxu0
      %v1549 = vadd.f32 %v1276, %v1548
      %v1550 = vpop.f32.mrf.mxu0
      %v1551 = vadd.f32 %v1276, %v1550
      %1552 = vmatmul.bf16.gmra.mxu0 %v1378
      %v1553 = vpop.f32.mrf.mxu0
      %v1554 = vadd.f32 %v1276, %v1553
      %v1555 = vpop.f32.mrf.mxu0
      %v1556 = vadd.f32 %v1276, %v1555
      %1557 = vmatmul.bf16.gmra.mxu0 %v1380
      %v1558 = vpop.f32.mrf.mxu0
      %v1559 = vadd.f32 %v1276, %v1558
      %v1560 = vpop.f32.mrf.mxu0
      %v1561 = vadd.f32 %v1276, %v1560
      %1562 = vmatmul.bf16.gmra.mxu0 %v1382
      %v1563 = vpop.f32.mrf.mxu0
      %v1564 = vadd.f32 %v1276, %v1563
      %v1565 = vpop.f32.mrf.mxu0
      %v1566 = vadd.f32 %v1276, %v1565
      %1567 = vmatmul.bf16.gmra.mxu0 %v1384
      %v1568 = vpop.f32.mrf.mxu0
      %v1569 = vadd.f32 %v1276, %v1568
      %v1570 = vpop.f32.mrf.mxu0
      %v1571 = vadd.f32 %v1276, %v1570
      %1572 = vmatmul.bf16.gmra.mxu0 %v1386
      %v1573 = vpop.f32.mrf.mxu0
      %v1574 = vadd.f32 %v1276, %v1573
      %v1575 = vpop.f32.mrf.mxu0
      %v1576 = vadd.f32 %v1276, %v1575
      %1577 = vmatmul.bf16.gmra.mxu0 %v1388
      %v1578 = vpop.f32.mrf.mxu0
      %v1579 = vadd.f32 %v1276, %v1578
      %v1580 = vpop.f32.mrf.mxu0
      %v1581 = vadd.f32 %v1276, %v1580
      %1582 = vmatmul.bf16.gmra.mxu0 %v1390
      %v1583 = vpop.f32.mrf.mxu0
      %v1584 = vadd.f32 %v1276, %v1583
      %v1585 = vpop.f32.mrf.mxu0
      %v1586 = vadd.f32 %v1276, %v1585
      %1587 = vmatmul.bf16.gmra.mxu0 %v1392
      %v1588 = vpop.f32.mrf.mxu0
      %v1589 = vadd.f32 %v1276, %v1588
      %v1590 = vpop.f32.mrf.mxu0
      %v1591 = vadd.f32 %v1276, %v1590
      %1592 = vmatmul.bf16.gmra.mxu0 %v1394
      %v1593 = vpop.f32.mrf.mxu0
      %v1594 = vadd.f32 %v1276, %v1593
      %v1595 = vpop.f32.mrf.mxu0
      %v1596 = vadd.f32 %v1276, %v1595
      %1597 = vmatmul.bf16.gmra.mxu0 %v1396
      %v1598 = vpop.f32.mrf.mxu0
      %v1599 = vadd.f32 %v1276, %v1598
      %v1600 = vpop.f32.mrf.mxu0
      %v1601 = vadd.f32 %v1276, %v1600
      %1602 = vmatmul.bf16.gmra.mxu0 %v1398
      %v1603 = vpop.f32.mrf.mxu0
      %v1604 = vadd.f32 %v1276, %v1603
      %v1605 = vpop.f32.mrf.mxu0
      %v1606 = vadd.f32 %v1276, %v1605
      %1607 = vmatmul.bf16.gmra.mxu0 %v1400
      %v1608 = vpop.f32.mrf.mxu0
      %v1609 = vadd.f32 %v1276, %v1608
      %v1610 = vpop.f32.mrf.mxu0
      %v1611 = vadd.f32 %v1276, %v1610
      %1612 = vmatmul.bf16.gmra.mxu0 %v1402
      %v1613 = vpop.f32.mrf.mxu0
      %v1614 = vadd.f32 %v1276, %v1613
      %v1615 = vpop.f32.mrf.mxu0
      %v1616 = vadd.f32 %v1276, %v1615
      %1617 = vmatmul.bf16.gmra.mxu0 %v1404
      %v1618 = vpop.f32.mrf.mxu0
      %v1619 = vadd.f32 %v1276, %v1618
      %v1620 = vpop.f32.mrf.mxu0
      %v1621 = vadd.f32 %v1276, %v1620
      %1622 = vdwg.mxu0
      %1623 = vmatpush.bf16.msra.mxu0 %v1517
      %1624 = vmatpush.bf16.msra.mxu0 %v1516
      %1625 = vmatpush.bf16.msra.mxu0 %v1515
      %1626 = vmatpush.bf16.msra.mxu0 %v1514
      %1627 = vmatpush.bf16.msra.mxu0 %v1513
      %1628 = vmatpush.bf16.msra.mxu0 %v1512
      %1629 = vmatpush.bf16.msra.mxu0 %v1511
      %1630 = vmatpush.bf16.msra.mxu0 %v1510
      %1631 = vmatmul.bf16.gmra.mxu0 %v1375
      %v1632 = vpop.f32.mrf.mxu0
      %v1633 = vadd.f32 %v1544, %v1632
      %v1634 = vpop.f32.mrf.mxu0
      %v1635 = vadd.f32 %v1546, %v1634
      %1636 = vmatmul.bf16.gmra.mxu0 %v1377
      %v1637 = vpop.f32.mrf.mxu0
      %v1638 = vadd.f32 %v1549, %v1637
      %v1639 = vpop.f32.mrf.mxu0
      %v1640 = vadd.f32 %v1551, %v1639
      %1641 = vmatmul.bf16.gmra.mxu0 %v1379
      %v1642 = vpop.f32.mrf.mxu0
      %v1643 = vadd.f32 %v1554, %v1642
      %v1644 = vpop.f32.mrf.mxu0
      %v1645 = vadd.f32 %v1556, %v1644
      %1646 = vmatmul.bf16.gmra.mxu0 %v1381
      %v1647 = vpop.f32.mrf.mxu0
      %v1648 = vadd.f32 %v1559, %v1647
      %v1649 = vpop.f32.mrf.mxu0
      %v1650 = vadd.f32 %v1561, %v1649
      %1651 = vmatmul.bf16.gmra.mxu0 %v1383
      %v1652 = vpop.f32.mrf.mxu0
      %v1653 = vadd.f32 %v1564, %v1652
      %v1654 = vpop.f32.mrf.mxu0
      %v1655 = vadd.f32 %v1566, %v1654
      %1656 = vmatmul.bf16.gmra.mxu0 %v1385
      %v1657 = vpop.f32.mrf.mxu0
      %v1658 = vadd.f32 %v1569, %v1657
      %v1659 = vpop.f32.mrf.mxu0
      %v1660 = vadd.f32 %v1571, %v1659
      %1661 = vmatmul.bf16.gmra.mxu0 %v1387
      %v1662 = vpop.f32.mrf.mxu0
      %v1663 = vadd.f32 %v1574, %v1662
      %v1664 = vpop.f32.mrf.mxu0
      %v1665 = vadd.f32 %v1576, %v1664
      %1666 = vmatmul.bf16.gmra.mxu0 %v1389
      %v1667 = vpop.f32.mrf.mxu0
      %v1668 = vadd.f32 %v1579, %v1667
      %v1669 = vpop.f32.mrf.mxu0
      %v1670 = vadd.f32 %v1581, %v1669
      %1671 = vmatmul.bf16.gmra.mxu0 %v1391
      %v1672 = vpop.f32.mrf.mxu0
      %v1673 = vadd.f32 %v1584, %v1672
      %v1674 = vpop.f32.mrf.mxu0
      %v1675 = vadd.f32 %v1586, %v1674
      %1676 = vmatmul.bf16.gmra.mxu0 %v1393
      %v1677 = vpop.f32.mrf.mxu0
      %v1678 = vadd.f32 %v1589, %v1677
      %v1679 = vpop.f32.mrf.mxu0
      %v1680 = vadd.f32 %v1591, %v1679
      %1681 = vmatmul.bf16.gmra.mxu0 %v1395
      %v1682 = vpop.f32.mrf.mxu0
      %v1683 = vadd.f32 %v1594, %v1682
      %v1684 = vpop.f32.mrf.mxu0
      %v1685 = vadd.f32 %v1596, %v1684
      %1686 = vmatmul.bf16.gmra.mxu0 %v1397
      %v1687 = vpop.f32.mrf.mxu0
      %v1688 = vadd.f32 %v1599, %v1687
      %v1689 = vpop.f32.mrf.mxu0
      %v1690 = vadd.f32 %v1601, %v1689
      %1691 = vmatmul.bf16.gmra.mxu0 %v1399
      %v1692 = vpop.f32.mrf.mxu0
      %v1693 = vadd.f32 %v1604, %v1692
      %v1694 = vpop.f32.mrf.mxu0
      %v1695 = vadd.f32 %v1606, %v1694
      %1696 = vmatmul.bf16.gmra.mxu0 %v1401
      %v1697 = vpop.f32.mrf.mxu0
      %v1698 = vadd.f32 %v1609, %v1697
      %v1699 = vpop.f32.mrf.mxu0
      %v1700 = vadd.f32 %v1611, %v1699
      %1701 = vmatmul.bf16.gmra.mxu0 %v1403
      %v1702 = vpop.f32.mrf.mxu0
      %v1703 = vadd.f32 %v1614, %v1702
      %v1704 = vpop.f32.mrf.mxu0
      %v1705 = vadd.f32 %v1616, %v1704
      %1706 = vmatmul.bf16.gmra.mxu0 %v1405
      %v1707 = vpop.f32.mrf.mxu0
      %v1708 = vadd.f32 %v1619, %v1707
      %v1709 = vpop.f32.mrf.mxu0
      %v1710 = vadd.f32 %v1621, %v1709
      %1711 = vdwg.mxu0
      %v1712 = vmax.f32 %v1633, 0.0
      %v1713 = vmax.f32 %v1635, 0.0
      %v1714 = vmax.f32 %v1638, 0.0
      %v1715 = vmax.f32 %v1640, 0.0
      %v1716 = vmax.f32 %v1643, 0.0
      %v1717 = vmax.f32 %v1645, 0.0
      %v1718 = vmax.f32 %v1648, 0.0
      %v1719 = vmax.f32 %v1650, 0.0
      %v1720 = vmax.f32 %v1653, 0.0
      %v1721 = vmax.f32 %v1655, 0.0
      %v1722 = vmax.f32 %v1658, 0.0
      %v1723 = vmax.f32 %v1660, 0.0
      %v1724 = vmax.f32 %v1663, 0.0
      %v1725 = vmax.f32 %v1665, 0.0
      %v1726 = vmax.f32 %v1668, 0.0
      %v1727 = vmax.f32 %v1670, 0.0
      %v1728 = vmax.f32 %v1673, 0.0
      %v1729 = vmax.f32 %v1675, 0.0
      %v1730 = vmax.f32 %v1678, 0.0
      %v1731 = vmax.f32 %v1680, 0.0
      %v1732 = vmax.f32 %v1683, 0.0
      %v1733 = vmax.f32 %v1685, 0.0
      %v1734 = vmax.f32 %v1688, 0.0
      %v1735 = vmax.f32 %v1690, 0.0
      %v1736 = vmax.f32 %v1693, 0.0
      %v1737 = vmax.f32 %v1695, 0.0
      %v1738 = vmax.f32 %v1698, 0.0
      %v1739 = vmax.f32 %v1700, 0.0
      %v1740 = vmax.f32 %v1703, 0.0
      %v1741 = vmax.f32 %v1705, 0.0
      %v1742 = vmax.f32 %v1708, 0.0
      %v1743 = vmax.f32 %v1710, 0.0
      %v1744 = vpack.c.bf16 %v1713, %v1712
      %v1745 = vpack.c.bf16 %v1715, %v1714
      %v1746 = vpack.c.bf16 %v1717, %v1716
      %v1747 = vpack.c.bf16 %v1719, %v1718
      %v1748 = vpack.c.bf16 %v1721, %v1720
      %v1749 = vpack.c.bf16 %v1723, %v1722
      %v1750 = vpack.c.bf16 %v1725, %v1724
      %v1751 = vpack.c.bf16 %v1727, %v1726
      %v1752 = vpack.c.bf16 %v1729, %v1728
      %v1753 = vpack.c.bf16 %v1731, %v1730
      %v1754 = vpack.c.bf16 %v1733, %v1732
      %v1755 = vpack.c.bf16 %v1735, %v1734
      %v1756 = vpack.c.bf16 %v1737, %v1736
      %v1757 = vpack.c.bf16 %v1739, %v1738
      %v1758 = vpack.c.bf16 %v1741, %v1740
      %v1759 = vpack.c.bf16 %v1743, %v1742
      %v1760 = vld [vmem:[%s7] sm:$0xff]
      %v1761 = vld [vmem:[%s7 + $0x8] sm:$0xff]
      %v1762 = vld [vmem:[%s7 + $0x10] sm:$0xff]
      %v1763 = vld [vmem:[%s7 + $0x18] sm:$0xff]
      %v1764 = vld [vmem:[%s7 + $0x20] sm:$0xff]
      %v1765 = vld [vmem:[%s7 + $0x28] sm:$0xff]
      %v1766 = vld [vmem:[%s7 + $0x30] sm:$0xff]
      %v1767 = vld [vmem:[%s7 + $0x38] sm:$0xff]
      %v1776 = vunpack.c.l.b16 %v1760
      %v1777 = vunpack.c.h.b16 %v1760
      %v1778 = vunpack.c.l.b16 %v1761
      %v1779 = vunpack.c.h.b16 %v1761
      %v1780 = vunpack.c.l.b16 %v1762
      %v1781 = vunpack.c.h.b16 %v1762
      %v1782 = vunpack.c.l.b16 %v1763
      %v1783 = vunpack.c.h.b16 %v1763
      %v1784 = vunpack.c.l.b16 %v1764
      %v1785 = vunpack.c.h.b16 %v1764
      %v1786 = vunpack.c.l.b16 %v1765
      %v1787 = vunpack.c.h.b16 %v1765
      %v1788 = vunpack.c.l.b16 %v1766
      %v1789 = vunpack.c.h.b16 %v1766
      %v1790 = vunpack.c.l.b16 %v1767
      %v1791 = vunpack.c.h.b16 %v1767
      %v1792 = vpack.c.b16 %v1778, %v1776
      %v1793 = vpack.c.b16 %v1779, %v1777
      %v1794 = vpack.c.b16 %v1782, %v1780
      %v1795 = vpack.c.b16 %v1783, %v1781
      %v1796 = vpack.c.b16 %v1786, %v1784
      %v1797 = vpack.c.b16 %v1787, %v1785
      %v1798 = vpack.c.b16 %v1790, %v1788
      %v1799 = vpack.c.b16 %v1791, %v1789
      %1808 = vmatpush.bf16.msra.mxu0 %v1751
      %1809 = vmatpush.bf16.msra.mxu0 %v1750
      %1810 = vmatpush.bf16.msra.mxu0 %v1749
      %1811 = vmatpush.bf16.msra.mxu0 %v1748
      %1812 = vmatpush.bf16.msra.mxu0 %v1747
      %1813 = vmatpush.bf16.msra.mxu0 %v1746
      %1814 = vmatpush.bf16.msra.mxu0 %v1745
      %1815 = vmatpush.bf16.msra.mxu0 %v1744
      %1816 = vmatmul.bf16.gmra.mxu0 %v1792
      %v1817 = vpop.f32.mrf.mxu0
      %v1818 = vadd.f32 0.0, %v1817
      %v1819 = vpop.f32.mrf.mxu0
      %v1820 = vadd.f32 0.0, %v1819
      %1821 = vmatmul.bf16.gmra.mxu0 %v1794
      %v1822 = vpop.f32.mrf.mxu0
      %v1823 = vadd.f32 0.0, %v1822
      %v1824 = vpop.f32.mrf.mxu0
      %v1825 = vadd.f32 0.0, %v1824
      %1826 = vmatmul.bf16.gmra.mxu0 %v1796
      %v1827 = vpop.f32.mrf.mxu0
      %v1828 = vadd.f32 0.0, %v1827
      %v1829 = vpop.f32.mrf.mxu0
      %v1830 = vadd.f32 0.0, %v1829
      %1831 = vmatmul.bf16.gmra.mxu0 %v1798
      %v1832 = vpop.f32.mrf.mxu0
      %v1833 = vadd.f32 0.0, %v1832
      %v1834 = vpop.f32.mrf.mxu0
      %v1835 = vadd.f32 0.0, %v1834
      %1836 = vdwg.mxu0
      %1837 = vmatpush.bf16.msra.mxu0 %v1759
      %1838 = vmatpush.bf16.msra.mxu0 %v1758
      %1839 = vmatpush.bf16.msra.mxu0 %v1757
      %1840 = vmatpush.bf16.msra.mxu0 %v1756
      %1841 = vmatpush.bf16.msra.mxu0 %v1755
      %1842 = vmatpush.bf16.msra.mxu0 %v1754
      %1843 = vmatpush.bf16.msra.mxu0 %v1753
      %1844 = vmatpush.bf16.msra.mxu0 %v1752
      %1845 = vmatmul.bf16.gmra.mxu0 %v1793
      %v1846 = vpop.f32.mrf.mxu0
      %v1847 = vadd.f32 %v1818, %v1846
      %v1848 = vpop.f32.mrf.mxu0
      %v1849 = vadd.f32 %v1820, %v1848
      %1850 = vmatmul.bf16.gmra.mxu0 %v1795
      %v1851 = vpop.f32.mrf.mxu0
      %v1852 = vadd.f32 %v1823, %v1851
      %v1853 = vpop.f32.mrf.mxu0
      %v1854 = vadd.f32 %v1825, %v1853
      %1855 = vmatmul.bf16.gmra.mxu0 %v1797
      %v1856 = vpop.f32.mrf.mxu0
      %v1857 = vadd.f32 %v1828, %v1856
      %v1858 = vpop.f32.mrf.mxu0
      %v1859 = vadd.f32 %v1830, %v1858
      %1860 = vmatmul.bf16.gmra.mxu0 %v1799
      %v1861 = vpop.f32.mrf.mxu0
      %v1862 = vadd.f32 %v1833, %v1861
      %v1863 = vpop.f32.mrf.mxu0
      %v1864 = vadd.f32 %v1835, %v1863
      %1865 = vdwg.mxu0
      %s1866 = scalar_lea.vmem %s7, 64
      %v1867 = vld [vmem:[%s1866] sm:$0xff]
      %v1868 = vld [vmem:[%s1866 + $0x8] sm:$0xff]
      %v1869 = vld [vmem:[%s1866 + $0x10] sm:$0xff]
      %v1870 = vld [vmem:[%s1866 + $0x18] sm:$0xff]
      %v1871 = vld [vmem:[%s1866 + $0x20] sm:$0xff]
      %v1872 = vld [vmem:[%s1866 + $0x28] sm:$0xff]
      %v1873 = vld [vmem:[%s1866 + $0x30] sm:$0xff]
      %v1874 = vld [vmem:[%s1866 + $0x38] sm:$0xff]
      %v1883 = vunpack.c.l.b16 %v1867
      %v1884 = vunpack.c.h.b16 %v1867
      %v1885 = vunpack.c.l.b16 %v1868
      %v1886 = vunpack.c.h.b16 %v1868
      %v1887 = vunpack.c.l.b16 %v1869
      %v1888 = vunpack.c.h.b16 %v1869
      %v1889 = vunpack.c.l.b16 %v1870
      %v1890 = vunpack.c.h.b16 %v1870
      %v1891 = vunpack.c.l.b16 %v1871
      %v1892 = vunpack.c.h.b16 %v1871
      %v1893 = vunpack.c.l.b16 %v1872
      %v1894 = vunpack.c.h.b16 %v1872
      %v1895 = vunpack.c.l.b16 %v1873
      %v1896 = vunpack.c.h.b16 %v1873
      %v1897 = vunpack.c.l.b16 %v1874
      %v1898 = vunpack.c.h.b16 %v1874
      %v1899 = vpack.c.b16 %v1885, %v1883
      %v1900 = vpack.c.b16 %v1886, %v1884
      %v1901 = vpack.c.b16 %v1889, %v1887
      %v1902 = vpack.c.b16 %v1890, %v1888
      %v1903 = vpack.c.b16 %v1893, %v1891
      %v1904 = vpack.c.b16 %v1894, %v1892
      %v1905 = vpack.c.b16 %v1897, %v1895
      %v1906 = vpack.c.b16 %v1898, %v1896
      %1915 = vmatpush.bf16.msra.mxu0 %v1751
      %1916 = vmatpush.bf16.msra.mxu0 %v1750
      %1917 = vmatpush.bf16.msra.mxu0 %v1749
      %1918 = vmatpush.bf16.msra.mxu0 %v1748
      %1919 = vmatpush.bf16.msra.mxu0 %v1747
      %1920 = vmatpush.bf16.msra.mxu0 %v1746
      %1921 = vmatpush.bf16.msra.mxu0 %v1745
      %1922 = vmatpush.bf16.msra.mxu0 %v1744
      %1923 = vmatmul.bf16.gmra.mxu0 %v1899
      %v1924 = vpop.f32.mrf.mxu0
      %v1925 = vadd.f32 0.0, %v1924
      %v1926 = vpop.f32.mrf.mxu0
      %v1927 = vadd.f32 0.0, %v1926
      %1928 = vmatmul.bf16.gmra.mxu0 %v1901
      %v1929 = vpop.f32.mrf.mxu0
      %v1930 = vadd.f32 0.0, %v1929
      %v1931 = vpop.f32.mrf.mxu0
      %v1932 = vadd.f32 0.0, %v1931
      %1933 = vmatmul.bf16.gmra.mxu0 %v1903
      %v1934 = vpop.f32.mrf.mxu0
      %v1935 = vadd.f32 0.0, %v1934
      %v1936 = vpop.f32.mrf.mxu0
      %v1937 = vadd.f32 0.0, %v1936
      %1938 = vmatmul.bf16.gmra.mxu0 %v1905
      %v1939 = vpop.f32.mrf.mxu0
      %v1940 = vadd.f32 0.0, %v1939
      %v1941 = vpop.f32.mrf.mxu0
      %v1942 = vadd.f32 0.0, %v1941
      %1943 = vdwg.mxu0
      %1944 = vmatpush.bf16.msra.mxu0 %v1759
      %1945 = vmatpush.bf16.msra.mxu0 %v1758
      %1946 = vmatpush.bf16.msra.mxu0 %v1757
      %1947 = vmatpush.bf16.msra.mxu0 %v1756
      %1948 = vmatpush.bf16.msra.mxu0 %v1755
      %1949 = vmatpush.bf16.msra.mxu0 %v1754
      %1950 = vmatpush.bf16.msra.mxu0 %v1753
      %1951 = vmatpush.bf16.msra.mxu0 %v1752
      %1952 = vmatmul.bf16.gmra.mxu0 %v1900
      %v1953 = vpop.f32.mrf.mxu0
      %v1954 = vadd.f32 %v1925, %v1953
      %v1955 = vpop.f32.mrf.mxu0
      %v1956 = vadd.f32 %v1927, %v1955
      %1957 = vmatmul.bf16.gmra.mxu0 %v1902
      %v1958 = vpop.f32.mrf.mxu0
      %v1959 = vadd.f32 %v1930, %v1958
      %v1960 = vpop.f32.mrf.mxu0
      %v1961 = vadd.f32 %v1932, %v1960
      %1962 = vmatmul.bf16.gmra.mxu0 %v1904
      %v1963 = vpop.f32.mrf.mxu0
      %v1964 = vadd.f32 %v1935, %v1963
      %v1965 = vpop.f32.mrf.mxu0
      %v1966 = vadd.f32 %v1937, %v1965
      %1967 = vmatmul.bf16.gmra.mxu0 %v1906
      %v1968 = vpop.f32.mrf.mxu0
      %v1969 = vadd.f32 %v1940, %v1968
      %v1970 = vpop.f32.mrf.mxu0
      %v1971 = vadd.f32 %v1942, %v1970
      %1972 = vdwg.mxu0
      %v1973 = vmax.f32 %v1847, %v1954
      %v1974 = vmax.f32 %v1849, %v1956
      %v1975 = vmax.f32 %v1852, %v1959
      %v1976 = vmax.f32 %v1854, %v1961
      %v1977 = vmax.f32 %v1857, %v1964
      %v1978 = vmax.f32 %v1859, %v1966
      %v1979 = vmax.f32 %v1862, %v1969
      %v1980 = vmax.f32 %v1864, %v1971
      %s1981 = scalar_lea.vmem %s7, 128
      %v1982 = vld [vmem:[%s1981] sm:$0xff]
      %v1983 = vld [vmem:[%s1981 + $0x8] sm:$0xff]
      %v1984 = vld [vmem:[%s1981 + $0x10] sm:$0xff]
      %v1985 = vld [vmem:[%s1981 + $0x18] sm:$0xff]
      %v1986 = vld [vmem:[%s1981 + $0x20] sm:$0xff]
      %v1987 = vld [vmem:[%s1981 + $0x28] sm:$0xff]
      %v1988 = vld [vmem:[%s1981 + $0x30] sm:$0xff]
      %v1989 = vld [vmem:[%s1981 + $0x38] sm:$0xff]
      %v1998 = vunpack.c.l.b16 %v1982
      %v1999 = vunpack.c.h.b16 %v1982
      %v2000 = vunpack.c.l.b16 %v1983
      %v2001 = vunpack.c.h.b16 %v1983
      %v2002 = vunpack.c.l.b16 %v1984
      %v2003 = vunpack.c.h.b16 %v1984
      %v2004 = vunpack.c.l.b16 %v1985
      %v2005 = vunpack.c.h.b16 %v1985
      %v2006 = vunpack.c.l.b16 %v1986
      %v2007 = vunpack.c.h.b16 %v1986
      %v2008 = vunpack.c.l.b16 %v1987
      %v2009 = vunpack.c.h.b16 %v1987
      %v2010 = vunpack.c.l.b16 %v1988
      %v2011 = vunpack.c.h.b16 %v1988
      %v2012 = vunpack.c.l.b16 %v1989
      %v2013 = vunpack.c.h.b16 %v1989
      %v2014 = vpack.c.b16 %v2000, %v1998
      %v2015 = vpack.c.b16 %v2001, %v1999
      %v2016 = vpack.c.b16 %v2004, %v2002
      %v2017 = vpack.c.b16 %v2005, %v2003
      %v2018 = vpack.c.b16 %v2008, %v2006
      %v2019 = vpack.c.b16 %v2009, %v2007
      %v2020 = vpack.c.b16 %v2012, %v2010
      %v2021 = vpack.c.b16 %v2013, %v2011
      %2030 = vmatpush.bf16.msra.mxu0 %v1751
      %2031 = vmatpush.bf16.msra.mxu0 %v1750
      %2032 = vmatpush.bf16.msra.mxu0 %v1749
      %2033 = vmatpush.bf16.msra.mxu0 %v1748
      %2034 = vmatpush.bf16.msra.mxu0 %v1747
      %2035 = vmatpush.bf16.msra.mxu0 %v1746
      %2036 = vmatpush.bf16.msra.mxu0 %v1745
      %2037 = vmatpush.bf16.msra.mxu0 %v1744
      %2038 = vmatmul.bf16.gmra.mxu0 %v2014
      %v2039 = vpop.f32.mrf.mxu0
      %v2040 = vadd.f32 0.0, %v2039
      %v2041 = vpop.f32.mrf.mxu0
      %v2042 = vadd.f32 0.0, %v2041
      %2043 = vmatmul.bf16.gmra.mxu0 %v2016
      %v2044 = vpop.f32.mrf.mxu0
      %v2045 = vadd.f32 0.0, %v2044
      %v2046 = vpop.f32.mrf.mxu0
      %v2047 = vadd.f32 0.0, %v2046
      %2048 = vmatmul.bf16.gmra.mxu0 %v2018
      %v2049 = vpop.f32.mrf.mxu0
      %v2050 = vadd.f32 0.0, %v2049
      %v2051 = vpop.f32.mrf.mxu0
      %v2052 = vadd.f32 0.0, %v2051
      %2053 = vmatmul.bf16.gmra.mxu0 %v2020
      %v2054 = vpop.f32.mrf.mxu0
      %v2055 = vadd.f32 0.0, %v2054
      %v2056 = vpop.f32.mrf.mxu0
      %v2057 = vadd.f32 0.0, %v2056
      %2058 = vdwg.mxu0
      %2059 = vmatpush.bf16.msra.mxu0 %v1759
      %2060 = vmatpush.bf16.msra.mxu0 %v1758
      %2061 = vmatpush.bf16.msra.mxu0 %v1757
      %2062 = vmatpush.bf16.msra.mxu0 %v1756
      %2063 = vmatpush.bf16.msra.mxu0 %v1755
      %2064 = vmatpush.bf16.msra.mxu0 %v1754
      %2065 = vmatpush.bf16.msra.mxu0 %v1753
      %2066 = vmatpush.bf16.msra.mxu0 %v1752
      %2067 = vmatmul.bf16.gmra.mxu0 %v2015
      %v2068 = vpop.f32.mrf.mxu0
      %v2069 = vadd.f32 %v2040, %v2068
      %v2070 = vpop.f32.mrf.mxu0
      %v2071 = vadd.f32 %v2042, %v2070
      %2072 = vmatmul.bf16.gmra.mxu0 %v2017
      %v2073 = vpop.f32.mrf.mxu0
      %v2074 = vadd.f32 %v2045, %v2073
      %v2075 = vpop.f32.mrf.mxu0
      %v2076 = vadd.f32 %v2047, %v2075
      %2077 = vmatmul.bf16.gmra.mxu0 %v2019
      %v2078 = vpop.f32.mrf.mxu0
      %v2079 = vadd.f32 %v2050, %v2078
      %v2080 = vpop.f32.mrf.mxu0
      %v2081 = vadd.f32 %v2052, %v2080
      %2082 = vmatmul.bf16.gmra.mxu0 %v2021
      %v2083 = vpop.f32.mrf.mxu0
      %v2084 = vadd.f32 %v2055, %v2083
      %v2085 = vpop.f32.mrf.mxu0
      %v2086 = vadd.f32 %v2057, %v2085
      %2087 = vdwg.mxu0
      %v2088 = vmax.f32 %v1973, %v2069
      %v2089 = vmax.f32 %v1974, %v2071
      %v2090 = vmax.f32 %v1975, %v2074
      %v2091 = vmax.f32 %v1976, %v2076
      %v2092 = vmax.f32 %v1977, %v2079
      %v2093 = vmax.f32 %v1978, %v2081
      %v2094 = vmax.f32 %v1979, %v2084
      %v2095 = vmax.f32 %v1980, %v2086
      %s2096 = scalar_lea.vmem %s7, 192
      %v2097 = vld [vmem:[%s2096] sm:$0xff]
      %v2098 = vld [vmem:[%s2096 + $0x8] sm:$0xff]
      %v2099 = vld [vmem:[%s2096 + $0x10] sm:$0xff]
      %v2100 = vld [vmem:[%s2096 + $0x18] sm:$0xff]
      %v2101 = vld [vmem:[%s2096 + $0x20] sm:$0xff]
      %v2102 = vld [vmem:[%s2096 + $0x28] sm:$0xff]
      %v2103 = vld [vmem:[%s2096 + $0x30] sm:$0xff]
      %v2104 = vld [vmem:[%s2096 + $0x38] sm:$0xff]
      %v2113 = vunpack.c.l.b16 %v2097
      %v2114 = vunpack.c.h.b16 %v2097
      %v2115 = vunpack.c.l.b16 %v2098
      %v2116 = vunpack.c.h.b16 %v2098
      %v2117 = vunpack.c.l.b16 %v2099
      %v2118 = vunpack.c.h.b16 %v2099
      %v2119 = vunpack.c.l.b16 %v2100
      %v2120 = vunpack.c.h.b16 %v2100
      %v2121 = vunpack.c.l.b16 %v2101
      %v2122 = vunpack.c.h.b16 %v2101
      %v2123 = vunpack.c.l.b16 %v2102
      %v2124 = vunpack.c.h.b16 %v2102
      %v2125 = vunpack.c.l.b16 %v2103
      %v2126 = vunpack.c.h.b16 %v2103
      %v2127 = vunpack.c.l.b16 %v2104
      %v2128 = vunpack.c.h.b16 %v2104
      %v2129 = vpack.c.b16 %v2115, %v2113
      %v2130 = vpack.c.b16 %v2116, %v2114
      %v2131 = vpack.c.b16 %v2119, %v2117
      %v2132 = vpack.c.b16 %v2120, %v2118
      %v2133 = vpack.c.b16 %v2123, %v2121
      %v2134 = vpack.c.b16 %v2124, %v2122
      %v2135 = vpack.c.b16 %v2127, %v2125
      %v2136 = vpack.c.b16 %v2128, %v2126
      %2145 = vmatpush.bf16.msra.mxu0 %v1751
      %2146 = vmatpush.bf16.msra.mxu0 %v1750
      %2147 = vmatpush.bf16.msra.mxu0 %v1749
      %2148 = vmatpush.bf16.msra.mxu0 %v1748
      %2149 = vmatpush.bf16.msra.mxu0 %v1747
      %2150 = vmatpush.bf16.msra.mxu0 %v1746
      %2151 = vmatpush.bf16.msra.mxu0 %v1745
      %2152 = vmatpush.bf16.msra.mxu0 %v1744
      %2153 = vmatmul.bf16.gmra.mxu0 %v2129
      %v2154 = vpop.f32.mrf.mxu0
      %v2155 = vadd.f32 0.0, %v2154
      %v2156 = vpop.f32.mrf.mxu0
      %v2157 = vadd.f32 0.0, %v2156
      %2158 = vmatmul.bf16.gmra.mxu0 %v2131
      %v2159 = vpop.f32.mrf.mxu0
      %v2160 = vadd.f32 0.0, %v2159
      %v2161 = vpop.f32.mrf.mxu0
      %v2162 = vadd.f32 0.0, %v2161
      %2163 = vmatmul.bf16.gmra.mxu0 %v2133
      %v2164 = vpop.f32.mrf.mxu0
      %v2165 = vadd.f32 0.0, %v2164
      %v2166 = vpop.f32.mrf.mxu0
      %v2167 = vadd.f32 0.0, %v2166
      %2168 = vmatmul.bf16.gmra.mxu0 %v2135
      %v2169 = vpop.f32.mrf.mxu0
      %v2170 = vadd.f32 0.0, %v2169
      %v2171 = vpop.f32.mrf.mxu0
      %v2172 = vadd.f32 0.0, %v2171
      %2173 = vdwg.mxu0
      %2174 = vmatpush.bf16.msra.mxu0 %v1759
      %2175 = vmatpush.bf16.msra.mxu0 %v1758
      %2176 = vmatpush.bf16.msra.mxu0 %v1757
      %2177 = vmatpush.bf16.msra.mxu0 %v1756
      %2178 = vmatpush.bf16.msra.mxu0 %v1755
      %2179 = vmatpush.bf16.msra.mxu0 %v1754
      %2180 = vmatpush.bf16.msra.mxu0 %v1753
      %2181 = vmatpush.bf16.msra.mxu0 %v1752
      %2182 = vmatmul.bf16.gmra.mxu0 %v2130
      %v2183 = vpop.f32.mrf.mxu0
      %v2184 = vadd.f32 %v2155, %v2183
      %v2185 = vpop.f32.mrf.mxu0
      %v2186 = vadd.f32 %v2157, %v2185
      %2187 = vmatmul.bf16.gmra.mxu0 %v2132
      %v2188 = vpop.f32.mrf.mxu0
      %v2189 = vadd.f32 %v2160, %v2188
      %v2190 = vpop.f32.mrf.mxu0
      %v2191 = vadd.f32 %v2162, %v2190
      %2192 = vmatmul.bf16.gmra.mxu0 %v2134
      %v2193 = vpop.f32.mrf.mxu0
      %v2194 = vadd.f32 %v2165, %v2193
      %v2195 = vpop.f32.mrf.mxu0
      %v2196 = vadd.f32 %v2167, %v2195
      %2197 = vmatmul.bf16.gmra.mxu0 %v2136
      %v2198 = vpop.f32.mrf.mxu0
      %v2199 = vadd.f32 %v2170, %v2198
      %v2200 = vpop.f32.mrf.mxu0
      %v2201 = vadd.f32 %v2172, %v2200
      %2202 = vdwg.mxu0
      %v2203 = vmax.f32 %v2088, %v2184
      %v2204 = vmax.f32 %v2089, %v2186
      %v2205 = vmax.f32 %v2090, %v2189
      %v2206 = vmax.f32 %v2091, %v2191
      %v2207 = vmax.f32 %v2092, %v2194
      %v2208 = vmax.f32 %v2093, %v2196
      %v2209 = vmax.f32 %v2094, %v2199
      %v2210 = vmax.f32 %v2095, %v2201
      %s2211 = scalar_lea.vmem %s7, 256
      %v2212 = vld [vmem:[%s2211] sm:$0xff]
      %v2213 = vld [vmem:[%s2211 + $0x8] sm:$0xff]
      %v2214 = vld [vmem:[%s2211 + $0x10] sm:$0xff]
      %v2215 = vld [vmem:[%s2211 + $0x18] sm:$0xff]
      %v2216 = vld [vmem:[%s2211 + $0x20] sm:$0xff]
      %v2217 = vld [vmem:[%s2211 + $0x28] sm:$0xff]
      %v2218 = vld [vmem:[%s2211 + $0x30] sm:$0xff]
      %v2219 = vld [vmem:[%s2211 + $0x38] sm:$0xff]
      %v2228 = vunpack.c.l.b16 %v2212
      %v2229 = vunpack.c.h.b16 %v2212
      %v2230 = vunpack.c.l.b16 %v2213
      %v2231 = vunpack.c.h.b16 %v2213
      %v2232 = vunpack.c.l.b16 %v2214
      %v2233 = vunpack.c.h.b16 %v2214
      %v2234 = vunpack.c.l.b16 %v2215
      %v2235 = vunpack.c.h.b16 %v2215
      %v2236 = vunpack.c.l.b16 %v2216
      %v2237 = vunpack.c.h.b16 %v2216
      %v2238 = vunpack.c.l.b16 %v2217
      %v2239 = vunpack.c.h.b16 %v2217
      %v2240 = vunpack.c.l.b16 %v2218
      %v2241 = vunpack.c.h.b16 %v2218
      %v2242 = vunpack.c.l.b16 %v2219
      %v2243 = vunpack.c.h.b16 %v2219
      %v2244 = vpack.c.b16 %v2230, %v2228
      %v2245 = vpack.c.b16 %v2231, %v2229
      %v2246 = vpack.c.b16 %v2234, %v2232
      %v2247 = vpack.c.b16 %v2235, %v2233
      %v2248 = vpack.c.b16 %v2238, %v2236
      %v2249 = vpack.c.b16 %v2239, %v2237
      %v2250 = vpack.c.b16 %v2242, %v2240
      %v2251 = vpack.c.b16 %v2243, %v2241
      %2260 = vmatpush.bf16.msra.mxu0 %v1751
      %2261 = vmatpush.bf16.msra.mxu0 %v1750
      %2262 = vmatpush.bf16.msra.mxu0 %v1749
      %2263 = vmatpush.bf16.msra.mxu0 %v1748
      %2264 = vmatpush.bf16.msra.mxu0 %v1747
      %2265 = vmatpush.bf16.msra.mxu0 %v1746
      %2266 = vmatpush.bf16.msra.mxu0 %v1745
      %2267 = vmatpush.bf16.msra.mxu0 %v1744
      %2268 = vmatmul.bf16.gmra.mxu0 %v2244
      %v2269 = vpop.f32.mrf.mxu0
      %v2270 = vadd.f32 0.0, %v2269
      %v2271 = vpop.f32.mrf.mxu0
      %v2272 = vadd.f32 0.0, %v2271
      %2273 = vmatmul.bf16.gmra.mxu0 %v2246
      %v2274 = vpop.f32.mrf.mxu0
      %v2275 = vadd.f32 0.0, %v2274
      %v2276 = vpop.f32.mrf.mxu0
      %v2277 = vadd.f32 0.0, %v2276
      %2278 = vmatmul.bf16.gmra.mxu0 %v2248
      %v2279 = vpop.f32.mrf.mxu0
      %v2280 = vadd.f32 0.0, %v2279
      %v2281 = vpop.f32.mrf.mxu0
      %v2282 = vadd.f32 0.0, %v2281
      %2283 = vmatmul.bf16.gmra.mxu0 %v2250
      %v2284 = vpop.f32.mrf.mxu0
      %v2285 = vadd.f32 0.0, %v2284
      %v2286 = vpop.f32.mrf.mxu0
      %v2287 = vadd.f32 0.0, %v2286
      %2288 = vdwg.mxu0
      %2289 = vmatpush.bf16.msra.mxu0 %v1759
      %2290 = vmatpush.bf16.msra.mxu0 %v1758
      %2291 = vmatpush.bf16.msra.mxu0 %v1757
      %2292 = vmatpush.bf16.msra.mxu0 %v1756
      %2293 = vmatpush.bf16.msra.mxu0 %v1755
      %2294 = vmatpush.bf16.msra.mxu0 %v1754
      %2295 = vmatpush.bf16.msra.mxu0 %v1753
      %2296 = vmatpush.bf16.msra.mxu0 %v1752
      %2297 = vmatmul.bf16.gmra.mxu0 %v2245
      %v2298 = vpop.f32.mrf.mxu0
      %v2299 = vadd.f32 %v2270, %v2298
      %v2300 = vpop.f32.mrf.mxu0
      %v2301 = vadd.f32 %v2272, %v2300
      %2302 = vmatmul.bf16.gmra.mxu0 %v2247
      %v2303 = vpop.f32.mrf.mxu0
      %v2304 = vadd.f32 %v2275, %v2303
      %v2305 = vpop.f32.mrf.mxu0
      %v2306 = vadd.f32 %v2277, %v2305
      %2307 = vmatmul.bf16.gmra.mxu0 %v2249
      %v2308 = vpop.f32.mrf.mxu0
      %v2309 = vadd.f32 %v2280, %v2308
      %v2310 = vpop.f32.mrf.mxu0
      %v2311 = vadd.f32 %v2282, %v2310
      %2312 = vmatmul.bf16.gmra.mxu0 %v2251
      %v2313 = vpop.f32.mrf.mxu0
      %v2314 = vadd.f32 %v2285, %v2313
      %v2315 = vpop.f32.mrf.mxu0
      %v2316 = vadd.f32 %v2287, %v2315
      %2317 = vdwg.mxu0
      %v2318 = vmax.f32 %v2203, %v2299
      %v2319 = vmax.f32 %v2204, %v2301
      %v2320 = vmax.f32 %v2205, %v2304
      %v2321 = vmax.f32 %v2206, %v2306
      %v2322 = vmax.f32 %v2207, %v2309
      %v2323 = vmax.f32 %v2208, %v2311
      %v2324 = vmax.f32 %v2209, %v2314
      %v2325 = vmax.f32 %v2210, %v2316
      %s2326 = scalar_lea.vmem %s7, 320
      %v2327 = vld [vmem:[%s2326] sm:$0xff]
      %v2328 = vld [vmem:[%s2326 + $0x8] sm:$0xff]
      %v2329 = vld [vmem:[%s2326 + $0x10] sm:$0xff]
      %v2330 = vld [vmem:[%s2326 + $0x18] sm:$0xff]
      %v2331 = vld [vmem:[%s2326 + $0x20] sm:$0xff]
      %v2332 = vld [vmem:[%s2326 + $0x28] sm:$0xff]
      %v2333 = vld [vmem:[%s2326 + $0x30] sm:$0xff]
      %v2334 = vld [vmem:[%s2326 + $0x38] sm:$0xff]
      %v2343 = vunpack.c.l.b16 %v2327
      %v2344 = vunpack.c.h.b16 %v2327
      %v2345 = vunpack.c.l.b16 %v2328
      %v2346 = vunpack.c.h.b16 %v2328
      %v2347 = vunpack.c.l.b16 %v2329
      %v2348 = vunpack.c.h.b16 %v2329
      %v2349 = vunpack.c.l.b16 %v2330
      %v2350 = vunpack.c.h.b16 %v2330
      %v2351 = vunpack.c.l.b16 %v2331
      %v2352 = vunpack.c.h.b16 %v2331
      %v2353 = vunpack.c.l.b16 %v2332
      %v2354 = vunpack.c.h.b16 %v2332
      %v2355 = vunpack.c.l.b16 %v2333
      %v2356 = vunpack.c.h.b16 %v2333
      %v2357 = vunpack.c.l.b16 %v2334
      %v2358 = vunpack.c.h.b16 %v2334
      %v2359 = vpack.c.b16 %v2345, %v2343
      %v2360 = vpack.c.b16 %v2346, %v2344
      %v2361 = vpack.c.b16 %v2349, %v2347
      %v2362 = vpack.c.b16 %v2350, %v2348
      %v2363 = vpack.c.b16 %v2353, %v2351
      %v2364 = vpack.c.b16 %v2354, %v2352
      %v2365 = vpack.c.b16 %v2357, %v2355
      %v2366 = vpack.c.b16 %v2358, %v2356
      %2375 = vmatpush.bf16.msra.mxu0 %v1751
      %2376 = vmatpush.bf16.msra.mxu0 %v1750
      %2377 = vmatpush.bf16.msra.mxu0 %v1749
      %2378 = vmatpush.bf16.msra.mxu0 %v1748
      %2379 = vmatpush.bf16.msra.mxu0 %v1747
      %2380 = vmatpush.bf16.msra.mxu0 %v1746
      %2381 = vmatpush.bf16.msra.mxu0 %v1745
      %2382 = vmatpush.bf16.msra.mxu0 %v1744
      %2383 = vmatmul.bf16.gmra.mxu0 %v2359
      %v2384 = vpop.f32.mrf.mxu0
      %v2385 = vadd.f32 0.0, %v2384
      %v2386 = vpop.f32.mrf.mxu0
      %v2387 = vadd.f32 0.0, %v2386
      %2388 = vmatmul.bf16.gmra.mxu0 %v2361
      %v2389 = vpop.f32.mrf.mxu0
      %v2390 = vadd.f32 0.0, %v2389
      %v2391 = vpop.f32.mrf.mxu0
      %v2392 = vadd.f32 0.0, %v2391
      %2393 = vmatmul.bf16.gmra.mxu0 %v2363
      %v2394 = vpop.f32.mrf.mxu0
      %v2395 = vadd.f32 0.0, %v2394
      %v2396 = vpop.f32.mrf.mxu0
      %v2397 = vadd.f32 0.0, %v2396
      %2398 = vmatmul.bf16.gmra.mxu0 %v2365
      %v2399 = vpop.f32.mrf.mxu0
      %v2400 = vadd.f32 0.0, %v2399
      %v2401 = vpop.f32.mrf.mxu0
      %v2402 = vadd.f32 0.0, %v2401
      %2403 = vdwg.mxu0
      %2404 = vmatpush.bf16.msra.mxu0 %v1759
      %2405 = vmatpush.bf16.msra.mxu0 %v1758
      %2406 = vmatpush.bf16.msra.mxu0 %v1757
      %2407 = vmatpush.bf16.msra.mxu0 %v1756
      %2408 = vmatpush.bf16.msra.mxu0 %v1755
      %2409 = vmatpush.bf16.msra.mxu0 %v1754
      %2410 = vmatpush.bf16.msra.mxu0 %v1753
      %2411 = vmatpush.bf16.msra.mxu0 %v1752
      %2412 = vmatmul.bf16.gmra.mxu0 %v2360
      %v2413 = vpop.f32.mrf.mxu0
      %v2414 = vadd.f32 %v2385, %v2413
      %v2415 = vpop.f32.mrf.mxu0
      %v2416 = vadd.f32 %v2387, %v2415
      %2417 = vmatmul.bf16.gmra.mxu0 %v2362
      %v2418 = vpop.f32.mrf.mxu0
      %v2419 = vadd.f32 %v2390, %v2418
      %v2420 = vpop.f32.mrf.mxu0
      %v2421 = vadd.f32 %v2392, %v2420
      %2422 = vmatmul.bf16.gmra.mxu0 %v2364
      %v2423 = vpop.f32.mrf.mxu0
      %v2424 = vadd.f32 %v2395, %v2423
      %v2425 = vpop.f32.mrf.mxu0
      %v2426 = vadd.f32 %v2397, %v2425
      %2427 = vmatmul.bf16.gmra.mxu0 %v2366
      %v2428 = vpop.f32.mrf.mxu0
      %v2429 = vadd.f32 %v2400, %v2428
      %v2430 = vpop.f32.mrf.mxu0
      %v2431 = vadd.f32 %v2402, %v2430
      %2432 = vdwg.mxu0
      %v2433 = vmax.f32 %v2318, %v2414
      %v2434 = vmax.f32 %v2319, %v2416
      %v2435 = vmax.f32 %v2320, %v2419
      %v2436 = vmax.f32 %v2321, %v2421
      %v2437 = vmax.f32 %v2322, %v2424
      %v2438 = vmax.f32 %v2323, %v2426
      %v2439 = vmax.f32 %v2324, %v2429
      %v2440 = vmax.f32 %v2325, %v2431
      %s2441 = scalar_lea.vmem %s7, 384
      %v2442 = vld [vmem:[%s2441] sm:$0xff]
      %v2443 = vld [vmem:[%s2441 + $0x8] sm:$0xff]
      %v2444 = vld [vmem:[%s2441 + $0x10] sm:$0xff]
      %v2445 = vld [vmem:[%s2441 + $0x18] sm:$0xff]
      %v2446 = vld [vmem:[%s2441 + $0x20] sm:$0xff]
      %v2447 = vld [vmem:[%s2441 + $0x28] sm:$0xff]
      %v2448 = vld [vmem:[%s2441 + $0x30] sm:$0xff]
      %v2449 = vld [vmem:[%s2441 + $0x38] sm:$0xff]
      %v2458 = vunpack.c.l.b16 %v2442
      %v2459 = vunpack.c.h.b16 %v2442
      %v2460 = vunpack.c.l.b16 %v2443
      %v2461 = vunpack.c.h.b16 %v2443
      %v2462 = vunpack.c.l.b16 %v2444
      %v2463 = vunpack.c.h.b16 %v2444
      %v2464 = vunpack.c.l.b16 %v2445
      %v2465 = vunpack.c.h.b16 %v2445
      %v2466 = vunpack.c.l.b16 %v2446
      %v2467 = vunpack.c.h.b16 %v2446
      %v2468 = vunpack.c.l.b16 %v2447
      %v2469 = vunpack.c.h.b16 %v2447
      %v2470 = vunpack.c.l.b16 %v2448
      %v2471 = vunpack.c.h.b16 %v2448
      %v2472 = vunpack.c.l.b16 %v2449
      %v2473 = vunpack.c.h.b16 %v2449
      %v2474 = vpack.c.b16 %v2460, %v2458
      %v2475 = vpack.c.b16 %v2461, %v2459
      %v2476 = vpack.c.b16 %v2464, %v2462
      %v2477 = vpack.c.b16 %v2465, %v2463
      %v2478 = vpack.c.b16 %v2468, %v2466
      %v2479 = vpack.c.b16 %v2469, %v2467
      %v2480 = vpack.c.b16 %v2472, %v2470
      %v2481 = vpack.c.b16 %v2473, %v2471
      %2490 = vmatpush.bf16.msra.mxu0 %v1751
      %2491 = vmatpush.bf16.msra.mxu0 %v1750
      %2492 = vmatpush.bf16.msra.mxu0 %v1749
      %2493 = vmatpush.bf16.msra.mxu0 %v1748
      %2494 = vmatpush.bf16.msra.mxu0 %v1747
      %2495 = vmatpush.bf16.msra.mxu0 %v1746
      %2496 = vmatpush.bf16.msra.mxu0 %v1745
      %2497 = vmatpush.bf16.msra.mxu0 %v1744
      %2498 = vmatmul.bf16.gmra.mxu0 %v2474
      %v2499 = vpop.f32.mrf.mxu0
      %v2500 = vadd.f32 0.0, %v2499
      %v2501 = vpop.f32.mrf.mxu0
      %v2502 = vadd.f32 0.0, %v2501
      %2503 = vmatmul.bf16.gmra.mxu0 %v2476
      %v2504 = vpop.f32.mrf.mxu0
      %v2505 = vadd.f32 0.0, %v2504
      %v2506 = vpop.f32.mrf.mxu0
      %v2507 = vadd.f32 0.0, %v2506
      %2508 = vmatmul.bf16.gmra.mxu0 %v2478
      %v2509 = vpop.f32.mrf.mxu0
      %v2510 = vadd.f32 0.0, %v2509
      %v2511 = vpop.f32.mrf.mxu0
      %v2512 = vadd.f32 0.0, %v2511
      %2513 = vmatmul.bf16.gmra.mxu0 %v2480
      %v2514 = vpop.f32.mrf.mxu0
      %v2515 = vadd.f32 0.0, %v2514
      %v2516 = vpop.f32.mrf.mxu0
      %v2517 = vadd.f32 0.0, %v2516
      %2518 = vdwg.mxu0
      %2519 = vmatpush.bf16.msra.mxu0 %v1759
      %2520 = vmatpush.bf16.msra.mxu0 %v1758
      %2521 = vmatpush.bf16.msra.mxu0 %v1757
      %2522 = vmatpush.bf16.msra.mxu0 %v1756
      %2523 = vmatpush.bf16.msra.mxu0 %v1755
      %2524 = vmatpush.bf16.msra.mxu0 %v1754
      %2525 = vmatpush.bf16.msra.mxu0 %v1753
      %2526 = vmatpush.bf16.msra.mxu0 %v1752
      %2527 = vmatmul.bf16.gmra.mxu0 %v2475
      %v2528 = vpop.f32.mrf.mxu0
      %v2529 = vadd.f32 %v2500, %v2528
      %v2530 = vpop.f32.mrf.mxu0
      %v2531 = vadd.f32 %v2502, %v2530
      %2532 = vmatmul.bf16.gmra.mxu0 %v2477
      %v2533 = vpop.f32.mrf.mxu0
      %v2534 = vadd.f32 %v2505, %v2533
      %v2535 = vpop.f32.mrf.mxu0
      %v2536 = vadd.f32 %v2507, %v2535
      %2537 = vmatmul.bf16.gmra.mxu0 %v2479
      %v2538 = vpop.f32.mrf.mxu0
      %v2539 = vadd.f32 %v2510, %v2538
      %v2540 = vpop.f32.mrf.mxu0
      %v2541 = vadd.f32 %v2512, %v2540
      %2542 = vmatmul.bf16.gmra.mxu0 %v2481
      %v2543 = vpop.f32.mrf.mxu0
      %v2544 = vadd.f32 %v2515, %v2543
      %v2545 = vpop.f32.mrf.mxu0
      %v2546 = vadd.f32 %v2517, %v2545
      %2547 = vdwg.mxu0
      %v2548 = vmax.f32 %v2433, %v2529
      %v2549 = vmax.f32 %v2434, %v2531
      %v2550 = vmax.f32 %v2435, %v2534
      %v2551 = vmax.f32 %v2436, %v2536
      %v2552 = vmax.f32 %v2437, %v2539
      %v2553 = vmax.f32 %v2438, %v2541
      %v2554 = vmax.f32 %v2439, %v2544
      %v2555 = vmax.f32 %v2440, %v2546
      %s2556 = scalar_lea.vmem %s7, 448
      %v2557 = vld [vmem:[%s2556] sm:$0xff]
      %v2558 = vld [vmem:[%s2556 + $0x8] sm:$0xff]
      %v2559 = vld [vmem:[%s2556 + $0x10] sm:$0xff]
      %v2560 = vld [vmem:[%s2556 + $0x18] sm:$0xff]
      %v2561 = vld [vmem:[%s2556 + $0x20] sm:$0xff]
      %v2562 = vld [vmem:[%s2556 + $0x28] sm:$0xff]
      %v2563 = vld [vmem:[%s2556 + $0x30] sm:$0xff]
      %v2564 = vld [vmem:[%s2556 + $0x38] sm:$0xff]
      %v2573 = vunpack.c.l.b16 %v2557
      %v2574 = vunpack.c.h.b16 %v2557
      %v2575 = vunpack.c.l.b16 %v2558
      %v2576 = vunpack.c.h.b16 %v2558
      %v2577 = vunpack.c.l.b16 %v2559
      %v2578 = vunpack.c.h.b16 %v2559
      %v2579 = vunpack.c.l.b16 %v2560
      %v2580 = vunpack.c.h.b16 %v2560
      %v2581 = vunpack.c.l.b16 %v2561
      %v2582 = vunpack.c.h.b16 %v2561
      %v2583 = vunpack.c.l.b16 %v2562
      %v2584 = vunpack.c.h.b16 %v2562
      %v2585 = vunpack.c.l.b16 %v2563
      %v2586 = vunpack.c.h.b16 %v2563
      %v2587 = vunpack.c.l.b16 %v2564
      %v2588 = vunpack.c.h.b16 %v2564
      %v2589 = vpack.c.b16 %v2575, %v2573
      %v2590 = vpack.c.b16 %v2576, %v2574
      %v2591 = vpack.c.b16 %v2579, %v2577
      %v2592 = vpack.c.b16 %v2580, %v2578
      %v2593 = vpack.c.b16 %v2583, %v2581
      %v2594 = vpack.c.b16 %v2584, %v2582
      %v2595 = vpack.c.b16 %v2587, %v2585
      %v2596 = vpack.c.b16 %v2588, %v2586
      %2605 = vmatpush.bf16.msra.mxu0 %v1751
      %2606 = vmatpush.bf16.msra.mxu0 %v1750
      %2607 = vmatpush.bf16.msra.mxu0 %v1749
      %2608 = vmatpush.bf16.msra.mxu0 %v1748
      %2609 = vmatpush.bf16.msra.mxu0 %v1747
      %2610 = vmatpush.bf16.msra.mxu0 %v1746
      %2611 = vmatpush.bf16.msra.mxu0 %v1745
      %2612 = vmatpush.bf16.msra.mxu0 %v1744
      %2613 = vmatmul.bf16.gmra.mxu0 %v2589
      %v2614 = vpop.f32.mrf.mxu0
      %v2615 = vadd.f32 0.0, %v2614
      %v2616 = vpop.f32.mrf.mxu0
      %v2617 = vadd.f32 0.0, %v2616
      %2618 = vmatmul.bf16.gmra.mxu0 %v2591
      %v2619 = vpop.f32.mrf.mxu0
      %v2620 = vadd.f32 0.0, %v2619
      %v2621 = vpop.f32.mrf.mxu0
      %v2622 = vadd.f32 0.0, %v2621
      %2623 = vmatmul.bf16.gmra.mxu0 %v2593
      %v2624 = vpop.f32.mrf.mxu0
      %v2625 = vadd.f32 0.0, %v2624
      %v2626 = vpop.f32.mrf.mxu0
      %v2627 = vadd.f32 0.0, %v2626
      %2628 = vmatmul.bf16.gmra.mxu0 %v2595
      %v2629 = vpop.f32.mrf.mxu0
      %v2630 = vadd.f32 0.0, %v2629
      %v2631 = vpop.f32.mrf.mxu0
      %v2632 = vadd.f32 0.0, %v2631
      %2633 = vdwg.mxu0
      %2634 = vmatpush.bf16.msra.mxu0 %v1759
      %2635 = vmatpush.bf16.msra.mxu0 %v1758
      %2636 = vmatpush.bf16.msra.mxu0 %v1757
      %2637 = vmatpush.bf16.msra.mxu0 %v1756
      %2638 = vmatpush.bf16.msra.mxu0 %v1755
      %2639 = vmatpush.bf16.msra.mxu0 %v1754
      %2640 = vmatpush.bf16.msra.mxu0 %v1753
      %2641 = vmatpush.bf16.msra.mxu0 %v1752
      %2642 = vmatmul.bf16.gmra.mxu0 %v2590
      %v2643 = vpop.f32.mrf.mxu0
      %v2644 = vadd.f32 %v2615, %v2643
      %v2645 = vpop.f32.mrf.mxu0
      %v2646 = vadd.f32 %v2617, %v2645
      %2647 = vmatmul.bf16.gmra.mxu0 %v2592
      %v2648 = vpop.f32.mrf.mxu0
      %v2649 = vadd.f32 %v2620, %v2648
      %v2650 = vpop.f32.mrf.mxu0
      %v2651 = vadd.f32 %v2622, %v2650
      %2652 = vmatmul.bf16.gmra.mxu0 %v2594
      %v2653 = vpop.f32.mrf.mxu0
      %v2654 = vadd.f32 %v2625, %v2653
      %v2655 = vpop.f32.mrf.mxu0
      %v2656 = vadd.f32 %v2627, %v2655
      %2657 = vmatmul.bf16.gmra.mxu0 %v2596
      %v2658 = vpop.f32.mrf.mxu0
      %v2659 = vadd.f32 %v2630, %v2658
      %v2660 = vpop.f32.mrf.mxu0
      %v2661 = vadd.f32 %v2632, %v2660
      %2662 = vdwg.mxu0
      %v2663 = vmax.f32 %v2548, %v2644
      %v2664 = vmax.f32 %v2549, %v2646
      %v2665 = vmax.f32 %v2550, %v2649
      %v2666 = vmax.f32 %v2551, %v2651
      %v2667 = vmax.f32 %v2552, %v2654
      %v2668 = vmax.f32 %v2553, %v2656
      %v2669 = vmax.f32 %v2554, %v2659
      %v2670 = vmax.f32 %v2555, %v2661
      %s2671 = scalar_lea.vmem %s7, 512
      %v2672 = vld [vmem:[%s2671] sm:$0xff]
      %v2673 = vld [vmem:[%s2671 + $0x8] sm:$0xff]
      %v2674 = vld [vmem:[%s2671 + $0x10] sm:$0xff]
      %v2675 = vld [vmem:[%s2671 + $0x18] sm:$0xff]
      %v2676 = vld [vmem:[%s2671 + $0x20] sm:$0xff]
      %v2677 = vld [vmem:[%s2671 + $0x28] sm:$0xff]
      %v2678 = vld [vmem:[%s2671 + $0x30] sm:$0xff]
      %v2679 = vld [vmem:[%s2671 + $0x38] sm:$0xff]
      %v2688 = vunpack.c.l.b16 %v2672
      %v2689 = vunpack.c.h.b16 %v2672
      %v2690 = vunpack.c.l.b16 %v2673
      %v2691 = vunpack.c.h.b16 %v2673
      %v2692 = vunpack.c.l.b16 %v2674
      %v2693 = vunpack.c.h.b16 %v2674
      %v2694 = vunpack.c.l.b16 %v2675
      %v2695 = vunpack.c.h.b16 %v2675
      %v2696 = vunpack.c.l.b16 %v2676
      %v2697 = vunpack.c.h.b16 %v2676
      %v2698 = vunpack.c.l.b16 %v2677
      %v2699 = vunpack.c.h.b16 %v2677
      %v2700 = vunpack.c.l.b16 %v2678
      %v2701 = vunpack.c.h.b16 %v2678
      %v2702 = vunpack.c.l.b16 %v2679
      %v2703 = vunpack.c.h.b16 %v2679
      %v2704 = vpack.c.b16 %v2690, %v2688
      %v2705 = vpack.c.b16 %v2691, %v2689
      %v2706 = vpack.c.b16 %v2694, %v2692
      %v2707 = vpack.c.b16 %v2695, %v2693
      %v2708 = vpack.c.b16 %v2698, %v2696
      %v2709 = vpack.c.b16 %v2699, %v2697
      %v2710 = vpack.c.b16 %v2702, %v2700
      %v2711 = vpack.c.b16 %v2703, %v2701
      %2720 = vmatpush.bf16.msra.mxu0 %v1751
      %2721 = vmatpush.bf16.msra.mxu0 %v1750
      %2722 = vmatpush.bf16.msra.mxu0 %v1749
      %2723 = vmatpush.bf16.msra.mxu0 %v1748
      %2724 = vmatpush.bf16.msra.mxu0 %v1747
      %2725 = vmatpush.bf16.msra.mxu0 %v1746
      %2726 = vmatpush.bf16.msra.mxu0 %v1745
      %2727 = vmatpush.bf16.msra.mxu0 %v1744
      %2728 = vmatmul.bf16.gmra.mxu0 %v2704
      %v2729 = vpop.f32.mrf.mxu0
      %v2730 = vadd.f32 0.0, %v2729
      %v2731 = vpop.f32.mrf.mxu0
      %v2732 = vadd.f32 0.0, %v2731
      %2733 = vmatmul.bf16.gmra.mxu0 %v2706
      %v2734 = vpop.f32.mrf.mxu0
      %v2735 = vadd.f32 0.0, %v2734
      %v2736 = vpop.f32.mrf.mxu0
      %v2737 = vadd.f32 0.0, %v2736
      %2738 = vmatmul.bf16.gmra.mxu0 %v2708
      %v2739 = vpop.f32.mrf.mxu0
      %v2740 = vadd.f32 0.0, %v2739
      %v2741 = vpop.f32.mrf.mxu0
      %v2742 = vadd.f32 0.0, %v2741
      %2743 = vmatmul.bf16.gmra.mxu0 %v2710
      %v2744 = vpop.f32.mrf.mxu0
      %v2745 = vadd.f32 0.0, %v2744
      %v2746 = vpop.f32.mrf.mxu0
      %v2747 = vadd.f32 0.0, %v2746
      %2748 = vdwg.mxu0
      %2749 = vmatpush.bf16.msra.mxu0 %v1759
      %2750 = vmatpush.bf16.msra.mxu0 %v1758
      %2751 = vmatpush.bf16.msra.mxu0 %v1757
      %2752 = vmatpush.bf16.msra.mxu0 %v1756
      %2753 = vmatpush.bf16.msra.mxu0 %v1755
      %2754 = vmatpush.bf16.msra.mxu0 %v1754
      %2755 = vmatpush.bf16.msra.mxu0 %v1753
      %2756 = vmatpush.bf16.msra.mxu0 %v1752
      %2757 = vmatmul.bf16.gmra.mxu0 %v2705
      %v2758 = vpop.f32.mrf.mxu0
      %v2759 = vadd.f32 %v2730, %v2758
      %v2760 = vpop.f32.mrf.mxu0
      %v2761 = vadd.f32 %v2732, %v2760
      %2762 = vmatmul.bf16.gmra.mxu0 %v2707
      %v2763 = vpop.f32.mrf.mxu0
      %v2764 = vadd.f32 %v2735, %v2763
      %v2765 = vpop.f32.mrf.mxu0
      %v2766 = vadd.f32 %v2737, %v2765
      %2767 = vmatmul.bf16.gmra.mxu0 %v2709
      %v2768 = vpop.f32.mrf.mxu0
      %v2769 = vadd.f32 %v2740, %v2768
      %v2770 = vpop.f32.mrf.mxu0
      %v2771 = vadd.f32 %v2742, %v2770
      %2772 = vmatmul.bf16.gmra.mxu0 %v2711
      %v2773 = vpop.f32.mrf.mxu0
      %v2774 = vadd.f32 %v2745, %v2773
      %v2775 = vpop.f32.mrf.mxu0
      %v2776 = vadd.f32 %v2747, %v2775
      %2777 = vdwg.mxu0
      %v2778 = vmax.f32 %v2663, %v2759
      %v2779 = vmax.f32 %v2664, %v2761
      %v2780 = vmax.f32 %v2665, %v2764
      %v2781 = vmax.f32 %v2666, %v2766
      %v2782 = vmax.f32 %v2667, %v2769
      %v2783 = vmax.f32 %v2668, %v2771
      %v2784 = vmax.f32 %v2669, %v2774
      %v2785 = vmax.f32 %v2670, %v2776
      %v2786 = vpack.c.bf16 %v2779, %v2778
      %v2787 = vpack.c.bf16 %v2781, %v2780
      %v2788 = vpack.c.bf16 %v2783, %v2782
      %v2789 = vpack.c.bf16 %v2785, %v2784
      %v2790 = vld [vmem:[%s9] sm:$0xf]
      %v2791 = vld [vmem:[%s9 + $0x4] sm:$0xf]
      %v2792 = vld [vmem:[%s9 + $0x8] sm:$0xf]
      %v2793 = vld [vmem:[%s9 + $0xc] sm:$0xf]
      %v2794 = vld [vmem:[%s9 + $0x10] sm:$0xf]
      %v2795 = vld [vmem:[%s9 + $0x14] sm:$0xf]
      %v2796 = vld [vmem:[%s9 + $0x18] sm:$0xf]
      %v2797 = vld [vmem:[%s9 + $0x1c] sm:$0xf]
      %v2798 = vld [vmem:[%s9 + $0x20] sm:$0xf]
      %v2799 = vld [vmem:[%s9 + $0x24] sm:$0xf]
      %v2800 = vld [vmem:[%s9 + $0x28] sm:$0xf]
      %v2801 = vld [vmem:[%s9 + $0x2c] sm:$0xf]
      %v2802 = vld [vmem:[%s9 + $0x30] sm:$0xf]
      %v2803 = vld [vmem:[%s9 + $0x34] sm:$0xf]
      %v2804 = vld [vmem:[%s9 + $0x38] sm:$0xf]
      %v2805 = vld [vmem:[%s9 + $0x3c] sm:$0xf]
      %v2806 = vld [vmem:[%s11] sm:$0x1]
      %v2808 = vperm.slane %v2806, 0
      %v2826 = vunpack.c.l.b16 %v2790
      %v2827 = vunpack.c.l.b16 %v2791
      %v2828 = vunpack.c.l.b16 %v2792
      %v2829 = vunpack.c.l.b16 %v2793
      %v2830 = vunpack.c.l.b16 %v2794
      %v2831 = vunpack.c.l.b16 %v2795
      %v2832 = vunpack.c.l.b16 %v2796
      %v2833 = vunpack.c.l.b16 %v2797
      %v2834 = vunpack.c.l.b16 %v2798
      %v2835 = vunpack.c.l.b16 %v2799
      %v2836 = vunpack.c.l.b16 %v2800
      %v2837 = vunpack.c.l.b16 %v2801
      %v2838 = vunpack.c.l.b16 %v2802
      %v2839 = vunpack.c.l.b16 %v2803
      %v2840 = vunpack.c.l.b16 %v2804
      %v2841 = vunpack.c.l.b16 %v2805
      %v2842 = vpack.c.b16 %v2827, %v2826
      %v2843 = vpack.c.b16 %v2829, %v2828
      %v2844 = vpack.c.b16 %v2831, %v2830
      %v2845 = vpack.c.b16 %v2833, %v2832
      %v2846 = vpack.c.b16 %v2835, %v2834
      %v2847 = vpack.c.b16 %v2837, %v2836
      %v2848 = vpack.c.b16 %v2839, %v2838
      %v2849 = vpack.c.b16 %v2841, %v2840
      %2858 = vmatpush.bf16.msra.mxu0 %v2849
      %2859 = vmatpush.bf16.msra.mxu0 %v2848
      %2860 = vmatpush.bf16.msra.mxu0 %v2847
      %2861 = vmatpush.bf16.msra.mxu0 %v2846
      %2862 = vmatpush.bf16.msra.mxu0 %v2845
      %2863 = vmatpush.bf16.msra.mxu0 %v2844
      %2864 = vmatpush.bf16.msra.mxu0 %v2843
      %2865 = vmatpush.bf16.msra.mxu0 %v2842
      %2866 = vmatmul.bf16.gmra.mxu0 %v2786
      %v2867 = vpop.f32.mrf.mxu0
      %v2868 = vadd.f32 %v2808, %v2867
      %v2869 = vpop.f32.mrf.mxu0
      %v2870 = vadd.f32 %v2808, %v2869
      %2871 = vmatmul.bf16.gmra.mxu0 %v2787
      %v2872 = vpop.f32.mrf.mxu0
      %v2873 = vadd.f32 %v2808, %v2872
      %v2874 = vpop.f32.mrf.mxu0
      %v2875 = vadd.f32 %v2808, %v2874
      %2876 = vmatmul.bf16.gmra.mxu0 %v2788
      %v2877 = vpop.f32.mrf.mxu0
      %v2878 = vadd.f32 %v2808, %v2877
      %v2879 = vpop.f32.mrf.mxu0
      %v2880 = vadd.f32 %v2808, %v2879
      %2881 = vmatmul.bf16.gmra.mxu0 %v2789
      %v2882 = vpop.f32.mrf.mxu0
      %v2883 = vadd.f32 %v2808, %v2882
      %v2884 = vpop.f32.mrf.mxu0
      %v2885 = vadd.f32 %v2808, %v2884
      %2886 = vdwg.mxu0
      %v2887 = vmax.f32 %v2868, 0.0
      %v2888 = vmax.f32 %v2870, 0.0
      %v2889 = vmax.f32 %v2873, 0.0
      %v2890 = vmax.f32 %v2875, 0.0
      %v2891 = vmax.f32 %v2878, 0.0
      %v2892 = vmax.f32 %v2880, 0.0
      %v2893 = vmax.f32 %v2883, 0.0
      %v2894 = vmax.f32 %v2885, 0.0
      %v2895 = vpack.c.bf16 %v2888, %v2887
      %v2896 = vpack.c.bf16 %v2890, %v2889
      %v2897 = vpack.c.bf16 %v2892, %v2891
      %v2898 = vpack.c.bf16 %v2894, %v2893
      %v2899 = vld [vmem:[%s13] sm:$0xf]
      %v2900 = vld [vmem:[%s13 + $0x4] sm:$0xf]
      %v2901 = vld [vmem:[%s13 + $0x8] sm:$0xf]
      %v2902 = vld [vmem:[%s13 + $0xc] sm:$0xf]
      %v2903 = vld [vmem:[%s13 + $0x10] sm:$0xf]
      %v2904 = vld [vmem:[%s13 + $0x14] sm:$0xf]
      %v2905 = vld [vmem:[%s13 + $0x18] sm:$0xf]
      %v2906 = vld [vmem:[%s13 + $0x1c] sm:$0xf]
      %v2915 = vunpack.c.l.b16 %v2899
      %v2916 = vunpack.c.l.b16 %v2900
      %v2917 = vunpack.c.l.b16 %v2901
      %v2918 = vunpack.c.l.b16 %v2902
      %v2919 = vunpack.c.l.b16 %v2903
      %v2920 = vunpack.c.l.b16 %v2904
      %v2921 = vunpack.c.l.b16 %v2905
      %v2922 = vunpack.c.l.b16 %v2906
      %v2923 = vpack.c.b16 %v2916, %v2915
      %v2924 = vpack.c.b16 %v2918, %v2917
      %v2925 = vpack.c.b16 %v2920, %v2919
      %v2926 = vpack.c.b16 %v2922, %v2921
      %vm2927 = vcmask 523264
      %v2929 = vsel %vm2927, %v2923, 0
      %v2932 = vsel %vm2927, %v2924, 0
      %v2935 = vsel %vm2927, %v2925, 0
      %v2938 = vsel %vm2927, %v2926, 0
      %2940 = vmatpush.bf16.msra.mxu0 0
      %2941 = vmatpush.bf16.msra.mxu0 0
      %2942 = vmatpush.bf16.msra.mxu0 0
      %2943 = vmatpush.bf16.msra.mxu0 0
      %2944 = vmatpush.bf16.msra.mxu0 %v2898
      %2945 = vmatpush.bf16.msra.mxu0 %v2897
      %2946 = vmatpush.bf16.msra.mxu0 %v2896
      %2947 = vmatpush.bf16.msra.mxu0 %v2895
      %2948 = vmatmul.bf16.gmra.mxu0 %v2929
      %v2949 = vpop.f32.mrf.mxu0
      %v2950 = vadd.f32 0.0, %v2949
      %v2951 = vpop.f32.mrf.mxu0
      %v2952 = vadd.f32 0.0, %v2951
      %2953 = vmatmul.bf16.gmra.mxu0 %v2932
      %v2954 = vpop.f32.mrf.mxu0
      %v2955 = vadd.f32 0.0, %v2954
      %v2956 = vpop.f32.mrf.mxu0
      %v2957 = vadd.f32 0.0, %v2956
      %2958 = vmatmul.bf16.gmra.mxu0 %v2935
      %v2959 = vpop.f32.mrf.mxu0
      %v2960 = vadd.f32 0.0, %v2959
      %v2961 = vpop.f32.mrf.mxu0
      %v2962 = vadd.f32 0.0, %v2961
      %2963 = vmatmul.bf16.gmra.mxu0 %v2938
      %v2964 = vpop.f32.mrf.mxu0
      %v2965 = vadd.f32 0.0, %v2964
      %v2966 = vpop.f32.mrf.mxu0
      %v2967 = vadd.f32 0.0, %v2966
      %2968 = vdwg.mxu0
      %v2969 = vpack.c.bf16 %v2952, %v2950
      %v2970 = vpack.c.bf16 %v2957, %v2955
      %v2971 = vpack.c.bf16 %v2962, %v2960
      %v2972 = vpack.c.bf16 %v2967, %v2965
      %v2973 = vld [vmem:[%s15] sm:$0xf]
      %v2974 = vld [vmem:[%s15 + $0x4] sm:$0xf]
      %v2975 = vld [vmem:[%s15 + $0x8] sm:$0xf]
      %v2976 = vld [vmem:[%s15 + $0xc] sm:$0xf]
      %v2977 = vld [vmem:[%s15 + $0x10] sm:$0xf]
      %v2978 = vld [vmem:[%s15 + $0x14] sm:$0xf]
      %v2979 = vld [vmem:[%s15 + $0x18] sm:$0xf]
      %v2980 = vld [vmem:[%s15 + $0x1c] sm:$0xf]
      %v2981 = vld [vmem:[%s15 + $0x20] sm:$0xf]
      %v2982 = vld [vmem:[%s15 + $0x24] sm:$0xf]
      %v2983 = vld [vmem:[%s15 + $0x28] sm:$0xf]
      %v2984 = vld [vmem:[%s15 + $0x2c] sm:$0xf]
      %v2985 = vld [vmem:[%s15 + $0x30] sm:$0xf]
      %v2986 = vld [vmem:[%s15 + $0x34] sm:$0xf]
      %v2987 = vld [vmem:[%s15 + $0x38] sm:$0xf]
      %v2988 = vld [vmem:[%s15 + $0x3c] sm:$0xf]
      %s2989 = scalar_lea.vmem %s13, 32
      %v2990 = vld [vmem:[%s2989] sm:$0xf]
      %v2991 = vld [vmem:[%s2989 + $0x4] sm:$0xf]
      %v2992 = vld [vmem:[%s2989 + $0x8] sm:$0xf]
      %v2993 = vld [vmem:[%s2989 + $0xc] sm:$0xf]
      %v2994 = vld [vmem:[%s2989 + $0x10] sm:$0xf]
      %v2995 = vld [vmem:[%s2989 + $0x14] sm:$0xf]
      %v2996 = vld [vmem:[%s2989 + $0x18] sm:$0xf]
      %v2997 = vld [vmem:[%s2989 + $0x1c] sm:$0xf]
      %v3006 = vunpack.c.l.b16 %v2990
      %v3007 = vunpack.c.l.b16 %v2991
      %v3008 = vunpack.c.l.b16 %v2992
      %v3009 = vunpack.c.l.b16 %v2993
      %v3010 = vunpack.c.l.b16 %v2994
      %v3011 = vunpack.c.l.b16 %v2995
      %v3012 = vunpack.c.l.b16 %v2996
      %v3013 = vunpack.c.l.b16 %v2997
      %v3014 = vpack.c.b16 %v3007, %v3006
      %v3015 = vpack.c.b16 %v3009, %v3008
      %v3016 = vpack.c.b16 %v3011, %v3010
      %v3017 = vpack.c.b16 %v3013, %v3012
      %v3019 = vsel %vm2927, %v3014, 0
      %v3022 = vsel %vm2927, %v3015, 0
      %v3025 = vsel %vm2927, %v3016, 0
      %v3028 = vsel %vm2927, %v3017, 0
      %3030 = vmatpush.bf16.msra.mxu0 0
      %3031 = vmatpush.bf16.msra.mxu0 0
      %3032 = vmatpush.bf16.msra.mxu0 0
      %3033 = vmatpush.bf16.msra.mxu0 0
      %3034 = vmatpush.bf16.msra.mxu0 %v2898
      %3035 = vmatpush.bf16.msra.mxu0 %v2897
      %3036 = vmatpush.bf16.msra.mxu0 %v2896
      %3037 = vmatpush.bf16.msra.mxu0 %v2895
      %3038 = vmatmul.bf16.gmra.mxu0 %v3019
      %v3039 = vpop.f32.mrf.mxu0
      %v3040 = vadd.f32 0.0, %v3039
      %v3041 = vpop.f32.mrf.mxu0
      %v3042 = vadd.f32 0.0, %v3041
      %3043 = vmatmul.bf16.gmra.mxu0 %v3022
      %v3044 = vpop.f32.mrf.mxu0
      %v3045 = vadd.f32 0.0, %v3044
      %v3046 = vpop.f32.mrf.mxu0
      %v3047 = vadd.f32 0.0, %v3046
      %3048 = vmatmul.bf16.gmra.mxu0 %v3025
      %v3049 = vpop.f32.mrf.mxu0
      %v3050 = vadd.f32 0.0, %v3049
      %v3051 = vpop.f32.mrf.mxu0
      %v3052 = vadd.f32 0.0, %v3051
      %3053 = vmatmul.bf16.gmra.mxu0 %v3028
      %v3054 = vpop.f32.mrf.mxu0
      %v3055 = vadd.f32 0.0, %v3054
      %v3056 = vpop.f32.mrf.mxu0
      %v3057 = vadd.f32 0.0, %v3056
      %3058 = vdwg.mxu0
      %v3059 = vpack.c.bf16 %v3042, %v3040
      %v3060 = vpack.c.bf16 %v3047, %v3045
      %v3061 = vpack.c.bf16 %v3052, %v3050
      %v3062 = vpack.c.bf16 %v3057, %v3055
      %s3063 = scalar_lea.vmem %s15, 64
      %v3064 = vld [vmem:[%s3063] sm:$0xf]
      %v3065 = vld [vmem:[%s3063 + $0x4] sm:$0xf]
      %v3066 = vld [vmem:[%s3063 + $0x8] sm:$0xf]
      %v3067 = vld [vmem:[%s3063 + $0xc] sm:$0xf]
      %v3068 = vld [vmem:[%s3063 + $0x10] sm:$0xf]
      %v3069 = vld [vmem:[%s3063 + $0x14] sm:$0xf]
      %v3070 = vld [vmem:[%s3063 + $0x18] sm:$0xf]
      %v3071 = vld [vmem:[%s3063 + $0x1c] sm:$0xf]
      %v3072 = vld [vmem:[%s3063 + $0x20] sm:$0xf]
      %v3073 = vld [vmem:[%s3063 + $0x24] sm:$0xf]
      %v3074 = vld [vmem:[%s3063 + $0x28] sm:$0xf]
      %v3075 = vld [vmem:[%s3063 + $0x2c] sm:$0xf]
      %v3076 = vld [vmem:[%s3063 + $0x30] sm:$0xf]
      %v3077 = vld [vmem:[%s3063 + $0x34] sm:$0xf]
      %v3078 = vld [vmem:[%s3063 + $0x38] sm:$0xf]
      %v3079 = vld [vmem:[%s3063 + $0x3c] sm:$0xf]
      %v3096 = vunpack.c.l.b16 %v3064
      %v3097 = vunpack.c.l.b16 %v3065
      %v3098 = vunpack.c.l.b16 %v3066
      %v3099 = vunpack.c.l.b16 %v3067
      %v3100 = vunpack.c.l.b16 %v3068
      %v3101 = vunpack.c.l.b16 %v3069
      %v3102 = vunpack.c.l.b16 %v3070
      %v3103 = vunpack.c.l.b16 %v3071
      %v3104 = vunpack.c.l.b16 %v3072
      %v3105 = vunpack.c.l.b16 %v3073
      %v3106 = vunpack.c.l.b16 %v3074
      %v3107 = vunpack.c.l.b16 %v3075
      %v3108 = vunpack.c.l.b16 %v3076
      %v3109 = vunpack.c.l.b16 %v3077
      %v3110 = vunpack.c.l.b16 %v3078
      %v3111 = vunpack.c.l.b16 %v3079
      %v3112 = vpack.c.b16 %v3097, %v3096
      %v3113 = vpack.c.b16 %v3099, %v3098
      %v3114 = vpack.c.b16 %v3101, %v3100
      %v3115 = vpack.c.b16 %v3103, %v3102
      %v3116 = vpack.c.b16 %v3105, %v3104
      %v3117 = vpack.c.b16 %v3107, %v3106
      %v3118 = vpack.c.b16 %v3109, %v3108
      %v3119 = vpack.c.b16 %v3111, %v3110
      %3128 = vmatpush.bf16.msra.mxu0 %v3119
      %3129 = vmatpush.bf16.msra.mxu0 %v3118
      %3130 = vmatpush.bf16.msra.mxu0 %v3117
      %3131 = vmatpush.bf16.msra.mxu0 %v3116
      %3132 = vmatpush.bf16.msra.mxu0 %v3115
      %3133 = vmatpush.bf16.msra.mxu0 %v3114
      %3134 = vmatpush.bf16.msra.mxu0 %v3113
      %3135 = vmatpush.bf16.msra.mxu0 %v3112
      %3136 = vmatmul.bf16.gmra.mxu0 %v3059
      %v3137 = vpop.f32.mrf.mxu0
      %v3138 = vadd.f32 0.0, %v3137
      %v3139 = vpop.f32.mrf.mxu0
      %v3140 = vadd.f32 0.0, %v3139
      %3141 = vmatmul.bf16.gmra.mxu0 %v3060
      %v3142 = vpop.f32.mrf.mxu0
      %v3143 = vadd.f32 0.0, %v3142
      %v3144 = vpop.f32.mrf.mxu0
      %v3145 = vadd.f32 0.0, %v3144
      %3146 = vmatmul.bf16.gmra.mxu0 %v3061
      %v3147 = vpop.f32.mrf.mxu0
      %v3148 = vadd.f32 0.0, %v3147
      %v3149 = vpop.f32.mrf.mxu0
      %v3150 = vadd.f32 0.0, %v3149
      %3151 = vmatmul.bf16.gmra.mxu0 %v3062
      %v3152 = vpop.f32.mrf.mxu0
      %v3153 = vadd.f32 0.0, %v3152
      %v3154 = vpop.f32.mrf.mxu0
      %v3155 = vadd.f32 0.0, %v3154
      %3156 = vdwg.mxu0
      %v3173 = vunpack.c.l.b16 %v2973
      %v3174 = vunpack.c.l.b16 %v2974
      %v3175 = vunpack.c.l.b16 %v2975
      %v3176 = vunpack.c.l.b16 %v2976
      %v3177 = vunpack.c.l.b16 %v2977
      %v3178 = vunpack.c.l.b16 %v2978
      %v3179 = vunpack.c.l.b16 %v2979
      %v3180 = vunpack.c.l.b16 %v2980
      %v3181 = vunpack.c.l.b16 %v2981
      %v3182 = vunpack.c.l.b16 %v2982
      %v3183 = vunpack.c.l.b16 %v2983
      %v3184 = vunpack.c.l.b16 %v2984
      %v3185 = vunpack.c.l.b16 %v2985
      %v3186 = vunpack.c.l.b16 %v2986
      %v3187 = vunpack.c.l.b16 %v2987
      %v3188 = vunpack.c.l.b16 %v2988
      %v3189 = vpack.c.b16 %v3174, %v3173
      %v3190 = vpack.c.b16 %v3176, %v3175
      %v3191 = vpack.c.b16 %v3178, %v3177
      %v3192 = vpack.c.b16 %v3180, %v3179
      %v3193 = vpack.c.b16 %v3182, %v3181
      %v3194 = vpack.c.b16 %v3184, %v3183
      %v3195 = vpack.c.b16 %v3186, %v3185
      %v3196 = vpack.c.b16 %v3188, %v3187
      %3205 = vmatpush.bf16.msra.mxu0 %v3196
      %3206 = vmatpush.bf16.msra.mxu0 %v3195
      %3207 = vmatpush.bf16.msra.mxu0 %v3194
      %3208 = vmatpush.bf16.msra.mxu0 %v3193
      %3209 = vmatpush.bf16.msra.mxu0 %v3192
      %3210 = vmatpush.bf16.msra.mxu0 %v3191
      %3211 = vmatpush.bf16.msra.mxu0 %v3190
      %3212 = vmatpush.bf16.msra.mxu0 %v3189
      %3213 = vmatmul.bf16.gmra.mxu0 %v2969
      %v3214 = vpop.f32.mrf.mxu0
      %v3215 = vadd.f32 %v3138, %v3214
      %v3216 = vpop.f32.mrf.mxu0
      %v3217 = vadd.f32 %v3140, %v3216
      %3218 = vmatmul.bf16.gmra.mxu0 %v2970
      %v3219 = vpop.f32.mrf.mxu0
      %v3220 = vadd.f32 %v3143, %v3219
      %v3221 = vpop.f32.mrf.mxu0
      %v3222 = vadd.f32 %v3145, %v3221
      %3223 = vmatmul.bf16.gmra.mxu0 %v2971
      %v3224 = vpop.f32.mrf.mxu0
      %v3225 = vadd.f32 %v3148, %v3224
      %v3226 = vpop.f32.mrf.mxu0
      %v3227 = vadd.f32 %v3150, %v3226
      %3228 = vmatmul.bf16.gmra.mxu0 %v2972
      %v3229 = vpop.f32.mrf.mxu0
      %v3230 = vadd.f32 %v3153, %v3229
      %v3231 = vpop.f32.mrf.mxu0
      %v3232 = vadd.f32 %v3155, %v3231
      %3233 = vdwg.mxu0
      %s3234 = scalar_lea.vmem %s13, 64
      %v3235 = vld [vmem:[%s3234] sm:$0xf]
      %v3236 = vld [vmem:[%s3234 + $0x4] sm:$0xf]
      %v3237 = vld [vmem:[%s3234 + $0x8] sm:$0xf]
      %v3238 = vld [vmem:[%s3234 + $0xc] sm:$0xf]
      %v3239 = vld [vmem:[%s3234 + $0x10] sm:$0xf]
      %v3240 = vld [vmem:[%s3234 + $0x14] sm:$0xf]
      %v3241 = vld [vmem:[%s3234 + $0x18] sm:$0xf]
      %v3242 = vld [vmem:[%s3234 + $0x1c] sm:$0xf]
      %v3251 = vunpack.c.l.b16 %v3235
      %v3252 = vunpack.c.l.b16 %v3236
      %v3253 = vunpack.c.l.b16 %v3237
      %v3254 = vunpack.c.l.b16 %v3238
      %v3255 = vunpack.c.l.b16 %v3239
      %v3256 = vunpack.c.l.b16 %v3240
      %v3257 = vunpack.c.l.b16 %v3241
      %v3258 = vunpack.c.l.b16 %v3242
      %v3259 = vpack.c.b16 %v3252, %v3251
      %v3260 = vpack.c.b16 %v3254, %v3253
      %v3261 = vpack.c.b16 %v3256, %v3255
      %v3262 = vpack.c.b16 %v3258, %v3257
      %v3264 = vsel %vm2927, %v3259, 0
      %v3267 = vsel %vm2927, %v3260, 0
      %v3270 = vsel %vm2927, %v3261, 0
      %v3273 = vsel %vm2927, %v3262, 0
      %3275 = vmatpush.bf16.msra.mxu0 0
      %3276 = vmatpush.bf16.msra.mxu0 0
      %3277 = vmatpush.bf16.msra.mxu0 0
      %3278 = vmatpush.bf16.msra.mxu0 0
      %3279 = vmatpush.bf16.msra.mxu0 %v2898
      %3280 = vmatpush.bf16.msra.mxu0 %v2897
      %3281 = vmatpush.bf16.msra.mxu0 %v2896
      %3282 = vmatpush.bf16.msra.mxu0 %v2895
      %3283 = vmatmul.bf16.gmra.mxu0 %v3264
      %v3284 = vpop.f32.mrf.mxu0
      %v3285 = vadd.f32 0.0, %v3284
      %v3286 = vpop.f32.mrf.mxu0
      %v3287 = vadd.f32 0.0, %v3286
      %3288 = vmatmul.bf16.gmra.mxu0 %v3267
      %v3289 = vpop.f32.mrf.mxu0
      %v3290 = vadd.f32 0.0, %v3289
      %v3291 = vpop.f32.mrf.mxu0
      %v3292 = vadd.f32 0.0, %v3291
      %3293 = vmatmul.bf16.gmra.mxu0 %v3270
      %v3294 = vpop.f32.mrf.mxu0
      %v3295 = vadd.f32 0.0, %v3294
      %v3296 = vpop.f32.mrf.mxu0
      %v3297 = vadd.f32 0.0, %v3296
      %3298 = vmatmul.bf16.gmra.mxu0 %v3273
      %v3299 = vpop.f32.mrf.mxu0
      %v3300 = vadd.f32 0.0, %v3299
      %v3301 = vpop.f32.mrf.mxu0
      %v3302 = vadd.f32 0.0, %v3301
      %3303 = vdwg.mxu0
      %v3304 = vpack.c.bf16 %v3287, %v3285
      %v3305 = vpack.c.bf16 %v3292, %v3290
      %v3306 = vpack.c.bf16 %v3297, %v3295
      %v3307 = vpack.c.bf16 %v3302, %v3300
      %s3308 = scalar_lea.vmem %s15, 128
      %v3309 = vld [vmem:[%s3308] sm:$0xf]
      %v3310 = vld [vmem:[%s3308 + $0x4] sm:$0xf]
      %v3311 = vld [vmem:[%s3308 + $0x8] sm:$0xf]
      %v3312 = vld [vmem:[%s3308 + $0xc] sm:$0xf]
      %v3313 = vld [vmem:[%s3308 + $0x10] sm:$0xf]
      %v3314 = vld [vmem:[%s3308 + $0x14] sm:$0xf]
      %v3315 = vld [vmem:[%s3308 + $0x18] sm:$0xf]
      %v3316 = vld [vmem:[%s3308 + $0x1c] sm:$0xf]
      %v3317 = vld [vmem:[%s3308 + $0x20] sm:$0xf]
      %v3318 = vld [vmem:[%s3308 + $0x24] sm:$0xf]
      %v3319 = vld [vmem:[%s3308 + $0x28] sm:$0xf]
      %v3320 = vld [vmem:[%s3308 + $0x2c] sm:$0xf]
      %v3321 = vld [vmem:[%s3308 + $0x30] sm:$0xf]
      %v3322 = vld [vmem:[%s3308 + $0x34] sm:$0xf]
      %v3323 = vld [vmem:[%s3308 + $0x38] sm:$0xf]
      %v3324 = vld [vmem:[%s3308 + $0x3c] sm:$0xf]
      %v3341 = vunpack.c.l.b16 %v3309
      %v3342 = vunpack.c.l.b16 %v3310
      %v3343 = vunpack.c.l.b16 %v3311
      %v3344 = vunpack.c.l.b16 %v3312
      %v3345 = vunpack.c.l.b16 %v3313
      %v3346 = vunpack.c.l.b16 %v3314
      %v3347 = vunpack.c.l.b16 %v3315
      %v3348 = vunpack.c.l.b16 %v3316
      %v3349 = vunpack.c.l.b16 %v3317
      %v3350 = vunpack.c.l.b16 %v3318
      %v3351 = vunpack.c.l.b16 %v3319
      %v3352 = vunpack.c.l.b16 %v3320
      %v3353 = vunpack.c.l.b16 %v3321
      %v3354 = vunpack.c.l.b16 %v3322
      %v3355 = vunpack.c.l.b16 %v3323
      %v3356 = vunpack.c.l.b16 %v3324
      %v3357 = vpack.c.b16 %v3342, %v3341
      %v3358 = vpack.c.b16 %v3344, %v3343
      %v3359 = vpack.c.b16 %v3346, %v3345
      %v3360 = vpack.c.b16 %v3348, %v3347
      %v3361 = vpack.c.b16 %v3350, %v3349
      %v3362 = vpack.c.b16 %v3352, %v3351
      %v3363 = vpack.c.b16 %v3354, %v3353
      %v3364 = vpack.c.b16 %v3356, %v3355
      %3373 = vmatpush.bf16.msra.mxu0 %v3364
      %3374 = vmatpush.bf16.msra.mxu0 %v3363
      %3375 = vmatpush.bf16.msra.mxu0 %v3362
      %3376 = vmatpush.bf16.msra.mxu0 %v3361
      %3377 = vmatpush.bf16.msra.mxu0 %v3360
      %3378 = vmatpush.bf16.msra.mxu0 %v3359
      %3379 = vmatpush.bf16.msra.mxu0 %v3358
      %3380 = vmatpush.bf16.msra.mxu0 %v3357
      %3381 = vmatmul.bf16.gmra.mxu0 %v3304
      %v3382 = vpop.f32.mrf.mxu0
      %v3383 = vadd.f32 0.0, %v3382
      %v3384 = vpop.f32.mrf.mxu0
      %v3385 = vadd.f32 0.0, %v3384
      %3386 = vmatmul.bf16.gmra.mxu0 %v3305
      %v3387 = vpop.f32.mrf.mxu0
      %v3388 = vadd.f32 0.0, %v3387
      %v3389 = vpop.f32.mrf.mxu0
      %v3390 = vadd.f32 0.0, %v3389
      %3391 = vmatmul.bf16.gmra.mxu0 %v3306
      %v3392 = vpop.f32.mrf.mxu0
      %v3393 = vadd.f32 0.0, %v3392
      %v3394 = vpop.f32.mrf.mxu0
      %v3395 = vadd.f32 0.0, %v3394
      %3396 = vmatmul.bf16.gmra.mxu0 %v3307
      %v3397 = vpop.f32.mrf.mxu0
      %v3398 = vadd.f32 0.0, %v3397
      %v3399 = vpop.f32.mrf.mxu0
      %v3400 = vadd.f32 0.0, %v3399
      %3401 = vdwg.mxu0
      %v3402 = vadd.f32 %v3215, %v3383
      %v3403 = vadd.f32 %v3217, %v3385
      %v3404 = vadd.f32 %v3220, %v3388
      %v3405 = vadd.f32 %v3222, %v3390
      %v3406 = vadd.f32 %v3225, %v3393
      %v3407 = vadd.f32 %v3227, %v3395
      %v3408 = vadd.f32 %v3230, %v3398
      %v3409 = vadd.f32 %v3232, %v3400
      %s3410 = scalar_lea.vmem %s13, 96
      %v3411 = vld [vmem:[%s3410] sm:$0xf]
      %v3412 = vld [vmem:[%s3410 + $0x4] sm:$0xf]
      %v3413 = vld [vmem:[%s3410 + $0x8] sm:$0xf]
      %v3414 = vld [vmem:[%s3410 + $0xc] sm:$0xf]
      %v3415 = vld [vmem:[%s3410 + $0x10] sm:$0xf]
      %v3416 = vld [vmem:[%s3410 + $0x14] sm:$0xf]
      %v3417 = vld [vmem:[%s3410 + $0x18] sm:$0xf]
      %v3418 = vld [vmem:[%s3410 + $0x1c] sm:$0xf]
      %v3427 = vunpack.c.l.b16 %v3411
      %v3428 = vunpack.c.l.b16 %v3412
      %v3429 = vunpack.c.l.b16 %v3413
      %v3430 = vunpack.c.l.b16 %v3414
      %v3431 = vunpack.c.l.b16 %v3415
      %v3432 = vunpack.c.l.b16 %v3416
      %v3433 = vunpack.c.l.b16 %v3417
      %v3434 = vunpack.c.l.b16 %v3418
      %v3435 = vpack.c.b16 %v3428, %v3427
      %v3436 = vpack.c.b16 %v3430, %v3429
      %v3437 = vpack.c.b16 %v3432, %v3431
      %v3438 = vpack.c.b16 %v3434, %v3433
      %v3440 = vsel %vm2927, %v3435, 0
      %v3443 = vsel %vm2927, %v3436, 0
      %v3446 = vsel %vm2927, %v3437, 0
      %v3449 = vsel %vm2927, %v3438, 0
      %3451 = vmatpush.bf16.msra.mxu0 0
      %3452 = vmatpush.bf16.msra.mxu0 0
      %3453 = vmatpush.bf16.msra.mxu0 0
      %3454 = vmatpush.bf16.msra.mxu0 0
      %3455 = vmatpush.bf16.msra.mxu0 %v2898
      %3456 = vmatpush.bf16.msra.mxu0 %v2897
      %3457 = vmatpush.bf16.msra.mxu0 %v2896
      %3458 = vmatpush.bf16.msra.mxu0 %v2895
      %3459 = vmatmul.bf16.gmra.mxu0 %v3440
      %v3460 = vpop.f32.mrf.mxu0
      %v3461 = vadd.f32 0.0, %v3460
      %v3462 = vpop.f32.mrf.mxu0
      %v3463 = vadd.f32 0.0, %v3462
      %3464 = vmatmul.bf16.gmra.mxu0 %v3443
      %v3465 = vpop.f32.mrf.mxu0
      %v3466 = vadd.f32 0.0, %v3465
      %v3467 = vpop.f32.mrf.mxu0
      %v3468 = vadd.f32 0.0, %v3467
      %3469 = vmatmul.bf16.gmra.mxu0 %v3446
      %v3470 = vpop.f32.mrf.mxu0
      %v3471 = vadd.f32 0.0, %v3470
      %v3472 = vpop.f32.mrf.mxu0
      %v3473 = vadd.f32 0.0, %v3472
      %3474 = vmatmul.bf16.gmra.mxu0 %v3449
      %v3475 = vpop.f32.mrf.mxu0
      %v3476 = vadd.f32 0.0, %v3475
      %v3477 = vpop.f32.mrf.mxu0
      %v3478 = vadd.f32 0.0, %v3477
      %3479 = vdwg.mxu0
      %v3480 = vpack.c.bf16 %v3463, %v3461
      %v3481 = vpack.c.bf16 %v3468, %v3466
      %v3482 = vpack.c.bf16 %v3473, %v3471
      %v3483 = vpack.c.bf16 %v3478, %v3476
      %s3484 = scalar_lea.vmem %s15, 192
      %v3485 = vld [vmem:[%s3484] sm:$0xf]
      %v3486 = vld [vmem:[%s3484 + $0x4] sm:$0xf]
      %v3487 = vld [vmem:[%s3484 + $0x8] sm:$0xf]
      %v3488 = vld [vmem:[%s3484 + $0xc] sm:$0xf]
      %v3489 = vld [vmem:[%s3484 + $0x10] sm:$0xf]
      %v3490 = vld [vmem:[%s3484 + $0x14] sm:$0xf]
      %v3491 = vld [vmem:[%s3484 + $0x18] sm:$0xf]
      %v3492 = vld [vmem:[%s3484 + $0x1c] sm:$0xf]
      %v3493 = vld [vmem:[%s3484 + $0x20] sm:$0xf]
      %v3494 = vld [vmem:[%s3484 + $0x24] sm:$0xf]
      %v3495 = vld [vmem:[%s3484 + $0x28] sm:$0xf]
      %v3496 = vld [vmem:[%s3484 + $0x2c] sm:$0xf]
      %v3497 = vld [vmem:[%s3484 + $0x30] sm:$0xf]
      %v3498 = vld [vmem:[%s3484 + $0x34] sm:$0xf]
      %v3499 = vld [vmem:[%s3484 + $0x38] sm:$0xf]
      %v3500 = vld [vmem:[%s3484 + $0x3c] sm:$0xf]
      %v3517 = vunpack.c.l.b16 %v3485
      %v3518 = vunpack.c.l.b16 %v3486
      %v3519 = vunpack.c.l.b16 %v3487
      %v3520 = vunpack.c.l.b16 %v3488
      %v3521 = vunpack.c.l.b16 %v3489
      %v3522 = vunpack.c.l.b16 %v3490
      %v3523 = vunpack.c.l.b16 %v3491
      %v3524 = vunpack.c.l.b16 %v3492
      %v3525 = vunpack.c.l.b16 %v3493
      %v3526 = vunpack.c.l.b16 %v3494
      %v3527 = vunpack.c.l.b16 %v3495
      %v3528 = vunpack.c.l.b16 %v3496
      %v3529 = vunpack.c.l.b16 %v3497
      %v3530 = vunpack.c.l.b16 %v3498
      %v3531 = vunpack.c.l.b16 %v3499
      %v3532 = vunpack.c.l.b16 %v3500
      %v3533 = vpack.c.b16 %v3518, %v3517
      %v3534 = vpack.c.b16 %v3520, %v3519
      %v3535 = vpack.c.b16 %v3522, %v3521
      %v3536 = vpack.c.b16 %v3524, %v3523
      %v3537 = vpack.c.b16 %v3526, %v3525
      %v3538 = vpack.c.b16 %v3528, %v3527
      %v3539 = vpack.c.b16 %v3530, %v3529
      %v3540 = vpack.c.b16 %v3532, %v3531
      %3549 = vmatpush.bf16.msra.mxu0 %v3540
      %3550 = vmatpush.bf16.msra.mxu0 %v3539
      %3551 = vmatpush.bf16.msra.mxu0 %v3538
      %3552 = vmatpush.bf16.msra.mxu0 %v3537
      %3553 = vmatpush.bf16.msra.mxu0 %v3536
      %3554 = vmatpush.bf16.msra.mxu0 %v3535
      %3555 = vmatpush.bf16.msra.mxu0 %v3534
      %3556 = vmatpush.bf16.msra.mxu0 %v3533
      %3557 = vmatmul.bf16.gmra.mxu0 %v3480
      %v3558 = vpop.f32.mrf.mxu0
      %v3559 = vadd.f32 0.0, %v3558
      %v3560 = vpop.f32.mrf.mxu0
      %v3561 = vadd.f32 0.0, %v3560
      %3562 = vmatmul.bf16.gmra.mxu0 %v3481
      %v3563 = vpop.f32.mrf.mxu0
      %v3564 = vadd.f32 0.0, %v3563
      %v3565 = vpop.f32.mrf.mxu0
      %v3566 = vadd.f32 0.0, %v3565
      %3567 = vmatmul.bf16.gmra.mxu0 %v3482
      %v3568 = vpop.f32.mrf.mxu0
      %v3569 = vadd.f32 0.0, %v3568
      %v3570 = vpop.f32.mrf.mxu0
      %v3571 = vadd.f32 0.0, %v3570
      %3572 = vmatmul.bf16.gmra.mxu0 %v3483
      %v3573 = vpop.f32.mrf.mxu0
      %v3574 = vadd.f32 0.0, %v3573
      %v3575 = vpop.f32.mrf.mxu0
      %v3576 = vadd.f32 0.0, %v3575
      %3577 = vdwg.mxu0
      %v3578 = vadd.f32 %v3402, %v3559
      %v3579 = vadd.f32 %v3403, %v3561
      %v3580 = vadd.f32 %v3404, %v3564
      %v3581 = vadd.f32 %v3405, %v3566
      %v3582 = vadd.f32 %v3406, %v3569
      %v3583 = vadd.f32 %v3407, %v3571
      %v3584 = vadd.f32 %v3408, %v3574
      %v3585 = vadd.f32 %v3409, %v3576
      %s3586 = scalar_lea.vmem %s13, 128
      %v3587 = vld [vmem:[%s3586] sm:$0xf]
      %v3588 = vld [vmem:[%s3586 + $0x4] sm:$0xf]
      %v3589 = vld [vmem:[%s3586 + $0x8] sm:$0xf]
      %v3590 = vld [vmem:[%s3586 + $0xc] sm:$0xf]
      %v3591 = vld [vmem:[%s3586 + $0x10] sm:$0xf]
      %v3592 = vld [vmem:[%s3586 + $0x14] sm:$0xf]
      %v3593 = vld [vmem:[%s3586 + $0x18] sm:$0xf]
      %v3594 = vld [vmem:[%s3586 + $0x1c] sm:$0xf]
      %v3603 = vunpack.c.l.b16 %v3587
      %v3604 = vunpack.c.l.b16 %v3588
      %v3605 = vunpack.c.l.b16 %v3589
      %v3606 = vunpack.c.l.b16 %v3590
      %v3607 = vunpack.c.l.b16 %v3591
      %v3608 = vunpack.c.l.b16 %v3592
      %v3609 = vunpack.c.l.b16 %v3593
      %v3610 = vunpack.c.l.b16 %v3594
      %v3611 = vpack.c.b16 %v3604, %v3603
      %v3612 = vpack.c.b16 %v3606, %v3605
      %v3613 = vpack.c.b16 %v3608, %v3607
      %v3614 = vpack.c.b16 %v3610, %v3609
      %v3616 = vsel %vm2927, %v3611, 0
      %v3619 = vsel %vm2927, %v3612, 0
      %v3622 = vsel %vm2927, %v3613, 0
      %v3625 = vsel %vm2927, %v3614, 0
      %3627 = vmatpush.bf16.msra.mxu0 0
      %3628 = vmatpush.bf16.msra.mxu0 0
      %3629 = vmatpush.bf16.msra.mxu0 0
      %3630 = vmatpush.bf16.msra.mxu0 0
      %3631 = vmatpush.bf16.msra.mxu0 %v2898
      %3632 = vmatpush.bf16.msra.mxu0 %v2897
      %3633 = vmatpush.bf16.msra.mxu0 %v2896
      %3634 = vmatpush.bf16.msra.mxu0 %v2895
      %3635 = vmatmul.bf16.gmra.mxu0 %v3616
      %v3636 = vpop.f32.mrf.mxu0
      %v3637 = vadd.f32 0.0, %v3636
      %v3638 = vpop.f32.mrf.mxu0
      %v3639 = vadd.f32 0.0, %v3638
      %3640 = vmatmul.bf16.gmra.mxu0 %v3619
      %v3641 = vpop.f32.mrf.mxu0
      %v3642 = vadd.f32 0.0, %v3641
      %v3643 = vpop.f32.mrf.mxu0
      %v3644 = vadd.f32 0.0, %v3643
      %3645 = vmatmul.bf16.gmra.mxu0 %v3622
      %v3646 = vpop.f32.mrf.mxu0
      %v3647 = vadd.f32 0.0, %v3646
      %v3648 = vpop.f32.mrf.mxu0
      %v3649 = vadd.f32 0.0, %v3648
      %3650 = vmatmul.bf16.gmra.mxu0 %v3625
      %v3651 = vpop.f32.mrf.mxu0
      %v3652 = vadd.f32 0.0, %v3651
      %v3653 = vpop.f32.mrf.mxu0
      %v3654 = vadd.f32 0.0, %v3653
      %3655 = vdwg.mxu0
      %v3656 = vpack.c.bf16 %v3639, %v3637
      %v3657 = vpack.c.bf16 %v3644, %v3642
      %v3658 = vpack.c.bf16 %v3649, %v3647
      %v3659 = vpack.c.bf16 %v3654, %v3652
      %s3660 = scalar_lea.vmem %s15, 256
      %v3661 = vld [vmem:[%s3660] sm:$0xf]
      %v3662 = vld [vmem:[%s3660 + $0x4] sm:$0xf]
      %v3663 = vld [vmem:[%s3660 + $0x8] sm:$0xf]
      %v3664 = vld [vmem:[%s3660 + $0xc] sm:$0xf]
      %v3665 = vld [vmem:[%s3660 + $0x10] sm:$0xf]
      %v3666 = vld [vmem:[%s3660 + $0x14] sm:$0xf]
      %v3667 = vld [vmem:[%s3660 + $0x18] sm:$0xf]
      %v3668 = vld [vmem:[%s3660 + $0x1c] sm:$0xf]
      %v3669 = vld [vmem:[%s3660 + $0x20] sm:$0xf]
      %v3670 = vld [vmem:[%s3660 + $0x24] sm:$0xf]
      %v3671 = vld [vmem:[%s3660 + $0x28] sm:$0xf]
      %v3672 = vld [vmem:[%s3660 + $0x2c] sm:$0xf]
      %v3673 = vld [vmem:[%s3660 + $0x30] sm:$0xf]
      %v3674 = vld [vmem:[%s3660 + $0x34] sm:$0xf]
      %v3675 = vld [vmem:[%s3660 + $0x38] sm:$0xf]
      %v3676 = vld [vmem:[%s3660 + $0x3c] sm:$0xf]
      %v3693 = vunpack.c.l.b16 %v3661
      %v3694 = vunpack.c.l.b16 %v3662
      %v3695 = vunpack.c.l.b16 %v3663
      %v3696 = vunpack.c.l.b16 %v3664
      %v3697 = vunpack.c.l.b16 %v3665
      %v3698 = vunpack.c.l.b16 %v3666
      %v3699 = vunpack.c.l.b16 %v3667
      %v3700 = vunpack.c.l.b16 %v3668
      %v3701 = vunpack.c.l.b16 %v3669
      %v3702 = vunpack.c.l.b16 %v3670
      %v3703 = vunpack.c.l.b16 %v3671
      %v3704 = vunpack.c.l.b16 %v3672
      %v3705 = vunpack.c.l.b16 %v3673
      %v3706 = vunpack.c.l.b16 %v3674
      %v3707 = vunpack.c.l.b16 %v3675
      %v3708 = vunpack.c.l.b16 %v3676
      %v3709 = vpack.c.b16 %v3694, %v3693
      %v3710 = vpack.c.b16 %v3696, %v3695
      %v3711 = vpack.c.b16 %v3698, %v3697
      %v3712 = vpack.c.b16 %v3700, %v3699
      %v3713 = vpack.c.b16 %v3702, %v3701
      %v3714 = vpack.c.b16 %v3704, %v3703
      %v3715 = vpack.c.b16 %v3706, %v3705
      %v3716 = vpack.c.b16 %v3708, %v3707
      %3725 = vmatpush.bf16.msra.mxu0 %v3716
      %3726 = vmatpush.bf16.msra.mxu0 %v3715
      %3727 = vmatpush.bf16.msra.mxu0 %v3714
      %3728 = vmatpush.bf16.msra.mxu0 %v3713
      %3729 = vmatpush.bf16.msra.mxu0 %v3712
      %3730 = vmatpush.bf16.msra.mxu0 %v3711
      %3731 = vmatpush.bf16.msra.mxu0 %v3710
      %3732 = vmatpush.bf16.msra.mxu0 %v3709
      %3733 = vmatmul.bf16.gmra.mxu0 %v3656
      %v3734 = vpop.f32.mrf.mxu0
      %v3735 = vadd.f32 0.0, %v3734
      %v3736 = vpop.f32.mrf.mxu0
      %v3737 = vadd.f32 0.0, %v3736
      %3738 = vmatmul.bf16.gmra.mxu0 %v3657
      %v3739 = vpop.f32.mrf.mxu0
      %v3740 = vadd.f32 0.0, %v3739
      %v3741 = vpop.f32.mrf.mxu0
      %v3742 = vadd.f32 0.0, %v3741
      %3743 = vmatmul.bf16.gmra.mxu0 %v3658
      %v3744 = vpop.f32.mrf.mxu0
      %v3745 = vadd.f32 0.0, %v3744
      %v3746 = vpop.f32.mrf.mxu0
      %v3747 = vadd.f32 0.0, %v3746
      %3748 = vmatmul.bf16.gmra.mxu0 %v3659
      %v3749 = vpop.f32.mrf.mxu0
      %v3750 = vadd.f32 0.0, %v3749
      %v3751 = vpop.f32.mrf.mxu0
      %v3752 = vadd.f32 0.0, %v3751
      %3753 = vdwg.mxu0
      %v3754 = vadd.f32 %v3578, %v3735
      %v3755 = vadd.f32 %v3579, %v3737
      %v3756 = vadd.f32 %v3580, %v3740
      %v3757 = vadd.f32 %v3581, %v3742
      %v3758 = vadd.f32 %v3582, %v3745
      %v3759 = vadd.f32 %v3583, %v3747
      %v3760 = vadd.f32 %v3584, %v3750
      %v3761 = vadd.f32 %v3585, %v3752
      %s3762 = scalar_lea.vmem %s13, 160
      %v3763 = vld [vmem:[%s3762] sm:$0xf]
      %v3764 = vld [vmem:[%s3762 + $0x4] sm:$0xf]
      %v3765 = vld [vmem:[%s3762 + $0x8] sm:$0xf]
      %v3766 = vld [vmem:[%s3762 + $0xc] sm:$0xf]
      %v3767 = vld [vmem:[%s3762 + $0x10] sm:$0xf]
      %v3768 = vld [vmem:[%s3762 + $0x14] sm:$0xf]
      %v3769 = vld [vmem:[%s3762 + $0x18] sm:$0xf]
      %v3770 = vld [vmem:[%s3762 + $0x1c] sm:$0xf]
      %v3779 = vunpack.c.l.b16 %v3763
      %v3780 = vunpack.c.l.b16 %v3764
      %v3781 = vunpack.c.l.b16 %v3765
      %v3782 = vunpack.c.l.b16 %v3766
      %v3783 = vunpack.c.l.b16 %v3767
      %v3784 = vunpack.c.l.b16 %v3768
      %v3785 = vunpack.c.l.b16 %v3769
      %v3786 = vunpack.c.l.b16 %v3770
      %v3787 = vpack.c.b16 %v3780, %v3779
      %v3788 = vpack.c.b16 %v3782, %v3781
      %v3789 = vpack.c.b16 %v3784, %v3783
      %v3790 = vpack.c.b16 %v3786, %v3785
      %v3792 = vsel %vm2927, %v3787, 0
      %v3795 = vsel %vm2927, %v3788, 0
      %v3798 = vsel %vm2927, %v3789, 0
      %v3801 = vsel %vm2927, %v3790, 0
      %3803 = vmatpush.bf16.msra.mxu0 0
      %3804 = vmatpush.bf16.msra.mxu0 0
      %3805 = vmatpush.bf16.msra.mxu0 0
      %3806 = vmatpush.bf16.msra.mxu0 0
      %3807 = vmatpush.bf16.msra.mxu0 %v2898
      %3808 = vmatpush.bf16.msra.mxu0 %v2897
      %3809 = vmatpush.bf16.msra.mxu0 %v2896
      %3810 = vmatpush.bf16.msra.mxu0 %v2895
      %3811 = vmatmul.bf16.gmra.mxu0 %v3792
      %v3812 = vpop.f32.mrf.mxu0
      %v3813 = vadd.f32 0.0, %v3812
      %v3814 = vpop.f32.mrf.mxu0
      %v3815 = vadd.f32 0.0, %v3814
      %3816 = vmatmul.bf16.gmra.mxu0 %v3795
      %v3817 = vpop.f32.mrf.mxu0
      %v3818 = vadd.f32 0.0, %v3817
      %v3819 = vpop.f32.mrf.mxu0
      %v3820 = vadd.f32 0.0, %v3819
      %3821 = vmatmul.bf16.gmra.mxu0 %v3798
      %v3822 = vpop.f32.mrf.mxu0
      %v3823 = vadd.f32 0.0, %v3822
      %v3824 = vpop.f32.mrf.mxu0
      %v3825 = vadd.f32 0.0, %v3824
      %3826 = vmatmul.bf16.gmra.mxu0 %v3801
      %v3827 = vpop.f32.mrf.mxu0
      %v3828 = vadd.f32 0.0, %v3827
      %v3829 = vpop.f32.mrf.mxu0
      %v3830 = vadd.f32 0.0, %v3829
      %3831 = vdwg.mxu0
      %v3832 = vpack.c.bf16 %v3815, %v3813
      %v3833 = vpack.c.bf16 %v3820, %v3818
      %v3834 = vpack.c.bf16 %v3825, %v3823
      %v3835 = vpack.c.bf16 %v3830, %v3828
      %s3836 = scalar_lea.vmem %s15, 320
      %v3837 = vld [vmem:[%s3836] sm:$0xf]
      %v3838 = vld [vmem:[%s3836 + $0x4] sm:$0xf]
      %v3839 = vld [vmem:[%s3836 + $0x8] sm:$0xf]
      %v3840 = vld [vmem:[%s3836 + $0xc] sm:$0xf]
      %v3841 = vld [vmem:[%s3836 + $0x10] sm:$0xf]
      %v3842 = vld [vmem:[%s3836 + $0x14] sm:$0xf]
      %v3843 = vld [vmem:[%s3836 + $0x18] sm:$0xf]
      %v3844 = vld [vmem:[%s3836 + $0x1c] sm:$0xf]
      %v3845 = vld [vmem:[%s3836 + $0x20] sm:$0xf]
      %v3846 = vld [vmem:[%s3836 + $0x24] sm:$0xf]
      %v3847 = vld [vmem:[%s3836 + $0x28] sm:$0xf]
      %v3848 = vld [vmem:[%s3836 + $0x2c] sm:$0xf]
      %v3849 = vld [vmem:[%s3836 + $0x30] sm:$0xf]
      %v3850 = vld [vmem:[%s3836 + $0x34] sm:$0xf]
      %v3851 = vld [vmem:[%s3836 + $0x38] sm:$0xf]
      %v3852 = vld [vmem:[%s3836 + $0x3c] sm:$0xf]
      %v3869 = vunpack.c.l.b16 %v3837
      %v3870 = vunpack.c.l.b16 %v3838
      %v3871 = vunpack.c.l.b16 %v3839
      %v3872 = vunpack.c.l.b16 %v3840
      %v3873 = vunpack.c.l.b16 %v3841
      %v3874 = vunpack.c.l.b16 %v3842
      %v3875 = vunpack.c.l.b16 %v3843
      %v3876 = vunpack.c.l.b16 %v3844
      %v3877 = vunpack.c.l.b16 %v3845
      %v3878 = vunpack.c.l.b16 %v3846
      %v3879 = vunpack.c.l.b16 %v3847
      %v3880 = vunpack.c.l.b16 %v3848
      %v3881 = vunpack.c.l.b16 %v3849
      %v3882 = vunpack.c.l.b16 %v3850
      %v3883 = vunpack.c.l.b16 %v3851
      %v3884 = vunpack.c.l.b16 %v3852
      %v3885 = vpack.c.b16 %v3870, %v3869
      %v3886 = vpack.c.b16 %v3872, %v3871
      %v3887 = vpack.c.b16 %v3874, %v3873
      %v3888 = vpack.c.b16 %v3876, %v3875
      %v3889 = vpack.c.b16 %v3878, %v3877
      %v3890 = vpack.c.b16 %v3880, %v3879
      %v3891 = vpack.c.b16 %v3882, %v3881
      %v3892 = vpack.c.b16 %v3884, %v3883
      %3901 = vmatpush.bf16.msra.mxu0 %v3892
      %3902 = vmatpush.bf16.msra.mxu0 %v3891
      %3903 = vmatpush.bf16.msra.mxu0 %v3890
      %3904 = vmatpush.bf16.msra.mxu0 %v3889
      %3905 = vmatpush.bf16.msra.mxu0 %v3888
      %3906 = vmatpush.bf16.msra.mxu0 %v3887
      %3907 = vmatpush.bf16.msra.mxu0 %v3886
      %3908 = vmatpush.bf16.msra.mxu0 %v3885
      %3909 = vmatmul.bf16.gmra.mxu0 %v3832
      %v3910 = vpop.f32.mrf.mxu0
      %v3911 = vadd.f32 0.0, %v3910
      %v3912 = vpop.f32.mrf.mxu0
      %v3913 = vadd.f32 0.0, %v3912
      %3914 = vmatmul.bf16.gmra.mxu0 %v3833
      %v3915 = vpop.f32.mrf.mxu0
      %v3916 = vadd.f32 0.0, %v3915
      %v3917 = vpop.f32.mrf.mxu0
      %v3918 = vadd.f32 0.0, %v3917
      %3919 = vmatmul.bf16.gmra.mxu0 %v3834
      %v3920 = vpop.f32.mrf.mxu0
      %v3921 = vadd.f32 0.0, %v3920
      %v3922 = vpop.f32.mrf.mxu0
      %v3923 = vadd.f32 0.0, %v3922
      %3924 = vmatmul.bf16.gmra.mxu0 %v3835
      %v3925 = vpop.f32.mrf.mxu0
      %v3926 = vadd.f32 0.0, %v3925
      %v3927 = vpop.f32.mrf.mxu0
      %v3928 = vadd.f32 0.0, %v3927
      %3929 = vdwg.mxu0
      %v3930 = vadd.f32 %v3754, %v3911
      %v3931 = vadd.f32 %v3755, %v3913
      %v3932 = vadd.f32 %v3756, %v3916
      %v3933 = vadd.f32 %v3757, %v3918
      %v3934 = vadd.f32 %v3758, %v3921
      %v3935 = vadd.f32 %v3759, %v3923
      %v3936 = vadd.f32 %v3760, %v3926
      %v3937 = vadd.f32 %v3761, %v3928
      %s3938 = scalar_lea.vmem %s13, 192
      %v3939 = vld [vmem:[%s3938] sm:$0xf]
      %v3940 = vld [vmem:[%s3938 + $0x4] sm:$0xf]
      %v3941 = vld [vmem:[%s3938 + $0x8] sm:$0xf]
      %v3942 = vld [vmem:[%s3938 + $0xc] sm:$0xf]
      %v3943 = vld [vmem:[%s3938 + $0x10] sm:$0xf]
      %v3944 = vld [vmem:[%s3938 + $0x14] sm:$0xf]
      %v3945 = vld [vmem:[%s3938 + $0x18] sm:$0xf]
      %v3946 = vld [vmem:[%s3938 + $0x1c] sm:$0xf]
      %v3955 = vunpack.c.l.b16 %v3939
      %v3956 = vunpack.c.l.b16 %v3940
      %v3957 = vunpack.c.l.b16 %v3941
      %v3958 = vunpack.c.l.b16 %v3942
      %v3959 = vunpack.c.l.b16 %v3943
      %v3960 = vunpack.c.l.b16 %v3944
      %v3961 = vunpack.c.l.b16 %v3945
      %v3962 = vunpack.c.l.b16 %v3946
      %v3963 = vpack.c.b16 %v3956, %v3955
      %v3964 = vpack.c.b16 %v3958, %v3957
      %v3965 = vpack.c.b16 %v3960, %v3959
      %v3966 = vpack.c.b16 %v3962, %v3961
      %v3968 = vsel %vm2927, %v3963, 0
      %v3971 = vsel %vm2927, %v3964, 0
      %v3974 = vsel %vm2927, %v3965, 0
      %v3977 = vsel %vm2927, %v3966, 0
      %3979 = vmatpush.bf16.msra.mxu0 0
      %3980 = vmatpush.bf16.msra.mxu0 0
      %3981 = vmatpush.bf16.msra.mxu0 0
      %3982 = vmatpush.bf16.msra.mxu0 0
      %3983 = vmatpush.bf16.msra.mxu0 %v2898
      %3984 = vmatpush.bf16.msra.mxu0 %v2897
      %3985 = vmatpush.bf16.msra.mxu0 %v2896
      %3986 = vmatpush.bf16.msra.mxu0 %v2895
      %3987 = vmatmul.bf16.gmra.mxu0 %v3968
      %v3988 = vpop.f32.mrf.mxu0
      %v3989 = vadd.f32 0.0, %v3988
      %v3990 = vpop.f32.mrf.mxu0
      %v3991 = vadd.f32 0.0, %v3990
      %3992 = vmatmul.bf16.gmra.mxu0 %v3971
      %v3993 = vpop.f32.mrf.mxu0
      %v3994 = vadd.f32 0.0, %v3993
      %v3995 = vpop.f32.mrf.mxu0
      %v3996 = vadd.f32 0.0, %v3995
      %3997 = vmatmul.bf16.gmra.mxu0 %v3974
      %v3998 = vpop.f32.mrf.mxu0
      %v3999 = vadd.f32 0.0, %v3998
      %v4000 = vpop.f32.mrf.mxu0
      %v4001 = vadd.f32 0.0, %v4000
      %4002 = vmatmul.bf16.gmra.mxu0 %v3977
      %v4003 = vpop.f32.mrf.mxu0
      %v4004 = vadd.f32 0.0, %v4003
      %v4005 = vpop.f32.mrf.mxu0
      %v4006 = vadd.f32 0.0, %v4005
      %4007 = vdwg.mxu0
      %v4008 = vpack.c.bf16 %v3991, %v3989
      %v4009 = vpack.c.bf16 %v3996, %v3994
      %v4010 = vpack.c.bf16 %v4001, %v3999
      %v4011 = vpack.c.bf16 %v4006, %v4004
      %s4012 = scalar_lea.vmem %s15, 384
      %v4013 = vld [vmem:[%s4012] sm:$0xf]
      %v4014 = vld [vmem:[%s4012 + $0x4] sm:$0xf]
      %v4015 = vld [vmem:[%s4012 + $0x8] sm:$0xf]
      %v4016 = vld [vmem:[%s4012 + $0xc] sm:$0xf]
      %v4017 = vld [vmem:[%s4012 + $0x10] sm:$0xf]
      %v4018 = vld [vmem:[%s4012 + $0x14] sm:$0xf]
      %v4019 = vld [vmem:[%s4012 + $0x18] sm:$0xf]
      %v4020 = vld [vmem:[%s4012 + $0x1c] sm:$0xf]
      %v4021 = vld [vmem:[%s4012 + $0x20] sm:$0xf]
      %v4022 = vld [vmem:[%s4012 + $0x24] sm:$0xf]
      %v4023 = vld [vmem:[%s4012 + $0x28] sm:$0xf]
      %v4024 = vld [vmem:[%s4012 + $0x2c] sm:$0xf]
      %v4025 = vld [vmem:[%s4012 + $0x30] sm:$0xf]
      %v4026 = vld [vmem:[%s4012 + $0x34] sm:$0xf]
      %v4027 = vld [vmem:[%s4012 + $0x38] sm:$0xf]
      %v4028 = vld [vmem:[%s4012 + $0x3c] sm:$0xf]
      %v4045 = vunpack.c.l.b16 %v4013
      %v4046 = vunpack.c.l.b16 %v4014
      %v4047 = vunpack.c.l.b16 %v4015
      %v4048 = vunpack.c.l.b16 %v4016
      %v4049 = vunpack.c.l.b16 %v4017
      %v4050 = vunpack.c.l.b16 %v4018
      %v4051 = vunpack.c.l.b16 %v4019
      %v4052 = vunpack.c.l.b16 %v4020
      %v4053 = vunpack.c.l.b16 %v4021
      %v4054 = vunpack.c.l.b16 %v4022
      %v4055 = vunpack.c.l.b16 %v4023
      %v4056 = vunpack.c.l.b16 %v4024
      %v4057 = vunpack.c.l.b16 %v4025
      %v4058 = vunpack.c.l.b16 %v4026
      %v4059 = vunpack.c.l.b16 %v4027
      %v4060 = vunpack.c.l.b16 %v4028
      %v4061 = vpack.c.b16 %v4046, %v4045
      %v4062 = vpack.c.b16 %v4048, %v4047
      %v4063 = vpack.c.b16 %v4050, %v4049
      %v4064 = vpack.c.b16 %v4052, %v4051
      %v4065 = vpack.c.b16 %v4054, %v4053
      %v4066 = vpack.c.b16 %v4056, %v4055
      %v4067 = vpack.c.b16 %v4058, %v4057
      %v4068 = vpack.c.b16 %v4060, %v4059
      %4077 = vmatpush.bf16.msra.mxu0 %v4068
      %4078 = vmatpush.bf16.msra.mxu0 %v4067
      %4079 = vmatpush.bf16.msra.mxu0 %v4066
      %4080 = vmatpush.bf16.msra.mxu0 %v4065
      %4081 = vmatpush.bf16.msra.mxu0 %v4064
      %4082 = vmatpush.bf16.msra.mxu0 %v4063
      %4083 = vmatpush.bf16.msra.mxu0 %v4062
      %4084 = vmatpush.bf16.msra.mxu0 %v4061
      %4085 = vmatmul.bf16.gmra.mxu0 %v4008
      %v4086 = vpop.f32.mrf.mxu0
      %v4087 = vadd.f32 0.0, %v4086
      %v4088 = vpop.f32.mrf.mxu0
      %v4089 = vadd.f32 0.0, %v4088
      %4090 = vmatmul.bf16.gmra.mxu0 %v4009
      %v4091 = vpop.f32.mrf.mxu0
      %v4092 = vadd.f32 0.0, %v4091
      %v4093 = vpop.f32.mrf.mxu0
      %v4094 = vadd.f32 0.0, %v4093
      %4095 = vmatmul.bf16.gmra.mxu0 %v4010
      %v4096 = vpop.f32.mrf.mxu0
      %v4097 = vadd.f32 0.0, %v4096
      %v4098 = vpop.f32.mrf.mxu0
      %v4099 = vadd.f32 0.0, %v4098
      %4100 = vmatmul.bf16.gmra.mxu0 %v4011
      %v4101 = vpop.f32.mrf.mxu0
      %v4102 = vadd.f32 0.0, %v4101
      %v4103 = vpop.f32.mrf.mxu0
      %v4104 = vadd.f32 0.0, %v4103
      %4105 = vdwg.mxu0
      %v4106 = vadd.f32 %v3930, %v4087
      %v4107 = vadd.f32 %v3931, %v4089
      %v4108 = vadd.f32 %v3932, %v4092
      %v4109 = vadd.f32 %v3933, %v4094
      %v4110 = vadd.f32 %v3934, %v4097
      %v4111 = vadd.f32 %v3935, %v4099
      %v4112 = vadd.f32 %v3936, %v4102
      %v4113 = vadd.f32 %v3937, %v4104
      %s4114 = scalar_lea.vmem %s13, 224
      %v4115 = vld [vmem:[%s4114] sm:$0xf]
      %v4116 = vld [vmem:[%s4114 + $0x4] sm:$0xf]
      %v4117 = vld [vmem:[%s4114 + $0x8] sm:$0xf]
      %v4118 = vld [vmem:[%s4114 + $0xc] sm:$0xf]
      %v4119 = vld [vmem:[%s4114 + $0x10] sm:$0xf]
      %v4120 = vld [vmem:[%s4114 + $0x14] sm:$0xf]
      %v4121 = vld [vmem:[%s4114 + $0x18] sm:$0xf]
      %v4122 = vld [vmem:[%s4114 + $0x1c] sm:$0xf]
      %v4131 = vunpack.c.l.b16 %v4115
      %v4132 = vunpack.c.l.b16 %v4116
      %v4133 = vunpack.c.l.b16 %v4117
      %v4134 = vunpack.c.l.b16 %v4118
      %v4135 = vunpack.c.l.b16 %v4119
      %v4136 = vunpack.c.l.b16 %v4120
      %v4137 = vunpack.c.l.b16 %v4121
      %v4138 = vunpack.c.l.b16 %v4122
      %v4139 = vpack.c.b16 %v4132, %v4131
      %v4140 = vpack.c.b16 %v4134, %v4133
      %v4141 = vpack.c.b16 %v4136, %v4135
      %v4142 = vpack.c.b16 %v4138, %v4137
      %v4144 = vsel %vm2927, %v4139, 0
      %v4147 = vsel %vm2927, %v4140, 0
      %v4150 = vsel %vm2927, %v4141, 0
      %v4153 = vsel %vm2927, %v4142, 0
      %4155 = vmatpush.bf16.msra.mxu0 0
      %4156 = vmatpush.bf16.msra.mxu0 0
      %4157 = vmatpush.bf16.msra.mxu0 0
      %4158 = vmatpush.bf16.msra.mxu0 0
      %4159 = vmatpush.bf16.msra.mxu0 %v2898
      %4160 = vmatpush.bf16.msra.mxu0 %v2897
      %4161 = vmatpush.bf16.msra.mxu0 %v2896
      %4162 = vmatpush.bf16.msra.mxu0 %v2895
      %4163 = vmatmul.bf16.gmra.mxu0 %v4144
      %v4164 = vpop.f32.mrf.mxu0
      %v4165 = vadd.f32 0.0, %v4164
      %v4166 = vpop.f32.mrf.mxu0
      %v4167 = vadd.f32 0.0, %v4166
      %4168 = vmatmul.bf16.gmra.mxu0 %v4147
      %v4169 = vpop.f32.mrf.mxu0
      %v4170 = vadd.f32 0.0, %v4169
      %v4171 = vpop.f32.mrf.mxu0
      %v4172 = vadd.f32 0.0, %v4171
      %4173 = vmatmul.bf16.gmra.mxu0 %v4150
      %v4174 = vpop.f32.mrf.mxu0
      %v4175 = vadd.f32 0.0, %v4174
      %v4176 = vpop.f32.mrf.mxu0
      %v4177 = vadd.f32 0.0, %v4176
      %4178 = vmatmul.bf16.gmra.mxu0 %v4153
      %v4179 = vpop.f32.mrf.mxu0
      %v4180 = vadd.f32 0.0, %v4179
      %v4181 = vpop.f32.mrf.mxu0
      %v4182 = vadd.f32 0.0, %v4181
      %4183 = vdwg.mxu0
      %v4184 = vpack.c.bf16 %v4167, %v4165
      %v4185 = vpack.c.bf16 %v4172, %v4170
      %v4186 = vpack.c.bf16 %v4177, %v4175
      %v4187 = vpack.c.bf16 %v4182, %v4180
      %s4188 = scalar_lea.vmem %s15, 448
      %v4189 = vld [vmem:[%s4188] sm:$0xf]
      %v4190 = vld [vmem:[%s4188 + $0x4] sm:$0xf]
      %v4191 = vld [vmem:[%s4188 + $0x8] sm:$0xf]
      %v4192 = vld [vmem:[%s4188 + $0xc] sm:$0xf]
      %v4193 = vld [vmem:[%s4188 + $0x10] sm:$0xf]
      %v4194 = vld [vmem:[%s4188 + $0x14] sm:$0xf]
      %v4195 = vld [vmem:[%s4188 + $0x18] sm:$0xf]
      %v4196 = vld [vmem:[%s4188 + $0x1c] sm:$0xf]
      %v4197 = vld [vmem:[%s4188 + $0x20] sm:$0xf]
      %v4198 = vld [vmem:[%s4188 + $0x24] sm:$0xf]
      %v4199 = vld [vmem:[%s4188 + $0x28] sm:$0xf]
      %v4200 = vld [vmem:[%s4188 + $0x2c] sm:$0xf]
      %v4201 = vld [vmem:[%s4188 + $0x30] sm:$0xf]
      %v4202 = vld [vmem:[%s4188 + $0x34] sm:$0xf]
      %v4203 = vld [vmem:[%s4188 + $0x38] sm:$0xf]
      %v4204 = vld [vmem:[%s4188 + $0x3c] sm:$0xf]
      %v4221 = vunpack.c.l.b16 %v4189
      %v4222 = vunpack.c.l.b16 %v4190
      %v4223 = vunpack.c.l.b16 %v4191
      %v4224 = vunpack.c.l.b16 %v4192
      %v4225 = vunpack.c.l.b16 %v4193
      %v4226 = vunpack.c.l.b16 %v4194
      %v4227 = vunpack.c.l.b16 %v4195
      %v4228 = vunpack.c.l.b16 %v4196
      %v4229 = vunpack.c.l.b16 %v4197
      %v4230 = vunpack.c.l.b16 %v4198
      %v4231 = vunpack.c.l.b16 %v4199
      %v4232 = vunpack.c.l.b16 %v4200
      %v4233 = vunpack.c.l.b16 %v4201
      %v4234 = vunpack.c.l.b16 %v4202
      %v4235 = vunpack.c.l.b16 %v4203
      %v4236 = vunpack.c.l.b16 %v4204
      %v4237 = vpack.c.b16 %v4222, %v4221
      %v4238 = vpack.c.b16 %v4224, %v4223
      %v4239 = vpack.c.b16 %v4226, %v4225
      %v4240 = vpack.c.b16 %v4228, %v4227
      %v4241 = vpack.c.b16 %v4230, %v4229
      %v4242 = vpack.c.b16 %v4232, %v4231
      %v4243 = vpack.c.b16 %v4234, %v4233
      %v4244 = vpack.c.b16 %v4236, %v4235
      %4253 = vmatpush.bf16.msra.mxu0 %v4244
      %4254 = vmatpush.bf16.msra.mxu0 %v4243
      %4255 = vmatpush.bf16.msra.mxu0 %v4242
      %4256 = vmatpush.bf16.msra.mxu0 %v4241
      %4257 = vmatpush.bf16.msra.mxu0 %v4240
      %4258 = vmatpush.bf16.msra.mxu0 %v4239
      %4259 = vmatpush.bf16.msra.mxu0 %v4238
      %4260 = vmatpush.bf16.msra.mxu0 %v4237
      %4261 = vmatmul.bf16.gmra.mxu0 %v4184
      %v4262 = vpop.f32.mrf.mxu0
      %v4263 = vadd.f32 0.0, %v4262
      %v4264 = vpop.f32.mrf.mxu0
      %v4265 = vadd.f32 0.0, %v4264
      %4266 = vmatmul.bf16.gmra.mxu0 %v4185
      %v4267 = vpop.f32.mrf.mxu0
      %v4268 = vadd.f32 0.0, %v4267
      %v4269 = vpop.f32.mrf.mxu0
      %v4270 = vadd.f32 0.0, %v4269
      %4271 = vmatmul.bf16.gmra.mxu0 %v4186
      %v4272 = vpop.f32.mrf.mxu0
      %v4273 = vadd.f32 0.0, %v4272
      %v4274 = vpop.f32.mrf.mxu0
      %v4275 = vadd.f32 0.0, %v4274
      %4276 = vmatmul.bf16.gmra.mxu0 %v4187
      %v4277 = vpop.f32.mrf.mxu0
      %v4278 = vadd.f32 0.0, %v4277
      %v4279 = vpop.f32.mrf.mxu0
      %v4280 = vadd.f32 0.0, %v4279
      %4281 = vdwg.mxu0
      %v4282 = vadd.f32 %v4106, %v4263
      %v4283 = vadd.f32 %v4107, %v4265
      %v4284 = vadd.f32 %v4108, %v4268
      %v4285 = vadd.f32 %v4109, %v4270
      %v4286 = vadd.f32 %v4110, %v4273
      %v4287 = vadd.f32 %v4111, %v4275
      %v4288 = vadd.f32 %v4112, %v4278
      %v4289 = vadd.f32 %v4113, %v4280
      %s4290 = scalar_lea.vmem %s13, 256
      %v4291 = vld [vmem:[%s4290] sm:$0xf]
      %v4292 = vld [vmem:[%s4290 + $0x4] sm:$0xf]
      %v4293 = vld [vmem:[%s4290 + $0x8] sm:$0xf]
      %v4294 = vld [vmem:[%s4290 + $0xc] sm:$0xf]
      %v4295 = vld [vmem:[%s4290 + $0x10] sm:$0xf]
      %v4296 = vld [vmem:[%s4290 + $0x14] sm:$0xf]
      %v4297 = vld [vmem:[%s4290 + $0x18] sm:$0xf]
      %v4298 = vld [vmem:[%s4290 + $0x1c] sm:$0xf]
      %v4307 = vunpack.c.l.b16 %v4291
      %v4308 = vunpack.c.l.b16 %v4292
      %v4309 = vunpack.c.l.b16 %v4293
      %v4310 = vunpack.c.l.b16 %v4294
      %v4311 = vunpack.c.l.b16 %v4295
      %v4312 = vunpack.c.l.b16 %v4296
      %v4313 = vunpack.c.l.b16 %v4297
      %v4314 = vunpack.c.l.b16 %v4298
      %v4315 = vpack.c.b16 %v4308, %v4307
      %v4316 = vpack.c.b16 %v4310, %v4309
      %v4317 = vpack.c.b16 %v4312, %v4311
      %v4318 = vpack.c.b16 %v4314, %v4313
      %v4320 = vsel %vm2927, %v4315, 0
      %v4323 = vsel %vm2927, %v4316, 0
      %v4326 = vsel %vm2927, %v4317, 0
      %v4329 = vsel %vm2927, %v4318, 0
      %4331 = vmatpush.bf16.msra.mxu0 0
      %4332 = vmatpush.bf16.msra.mxu0 0
      %4333 = vmatpush.bf16.msra.mxu0 0
      %4334 = vmatpush.bf16.msra.mxu0 0
      %4335 = vmatpush.bf16.msra.mxu0 %v2898
      %4336 = vmatpush.bf16.msra.mxu0 %v2897
      %4337 = vmatpush.bf16.msra.mxu0 %v2896
      %4338 = vmatpush.bf16.msra.mxu0 %v2895
      %4339 = vmatmul.bf16.gmra.mxu0 %v4320
      %v4340 = vpop.f32.mrf.mxu0
      %v4341 = vadd.f32 0.0, %v4340
      %v4342 = vpop.f32.mrf.mxu0
      %v4343 = vadd.f32 0.0, %v4342
      %4344 = vmatmul.bf16.gmra.mxu0 %v4323
      %v4345 = vpop.f32.mrf.mxu0
      %v4346 = vadd.f32 0.0, %v4345
      %v4347 = vpop.f32.mrf.mxu0
      %v4348 = vadd.f32 0.0, %v4347
      %4349 = vmatmul.bf16.gmra.mxu0 %v4326
      %v4350 = vpop.f32.mrf.mxu0
      %v4351 = vadd.f32 0.0, %v4350
      %v4352 = vpop.f32.mrf.mxu0
      %v4353 = vadd.f32 0.0, %v4352
      %4354 = vmatmul.bf16.gmra.mxu0 %v4329
      %v4355 = vpop.f32.mrf.mxu0
      %v4356 = vadd.f32 0.0, %v4355
      %v4357 = vpop.f32.mrf.mxu0
      %v4358 = vadd.f32 0.0, %v4357
      %4359 = vdwg.mxu0
      %v4360 = vpack.c.bf16 %v4343, %v4341
      %v4361 = vpack.c.bf16 %v4348, %v4346
      %v4362 = vpack.c.bf16 %v4353, %v4351
      %v4363 = vpack.c.bf16 %v4358, %v4356
      %s4364 = scalar_lea.vmem %s15, 512
      %v4365 = vld [vmem:[%s4364] sm:$0xf]
      %v4366 = vld [vmem:[%s4364 + $0x4] sm:$0xf]
      %v4367 = vld [vmem:[%s4364 + $0x8] sm:$0xf]
      %v4368 = vld [vmem:[%s4364 + $0xc] sm:$0xf]
      %v4369 = vld [vmem:[%s4364 + $0x10] sm:$0xf]
      %v4370 = vld [vmem:[%s4364 + $0x14] sm:$0xf]
      %v4371 = vld [vmem:[%s4364 + $0x18] sm:$0xf]
      %v4372 = vld [vmem:[%s4364 + $0x1c] sm:$0xf]
      %v4373 = vld [vmem:[%s4364 + $0x20] sm:$0xf]
      %v4374 = vld [vmem:[%s4364 + $0x24] sm:$0xf]
      %v4375 = vld [vmem:[%s4364 + $0x28] sm:$0xf]
      %v4376 = vld [vmem:[%s4364 + $0x2c] sm:$0xf]
      %v4377 = vld [vmem:[%s4364 + $0x30] sm:$0xf]
      %v4378 = vld [vmem:[%s4364 + $0x34] sm:$0xf]
      %v4379 = vld [vmem:[%s4364 + $0x38] sm:$0xf]
      %v4380 = vld [vmem:[%s4364 + $0x3c] sm:$0xf]
      %v4397 = vunpack.c.l.b16 %v4365
      %v4398 = vunpack.c.l.b16 %v4366
      %v4399 = vunpack.c.l.b16 %v4367
      %v4400 = vunpack.c.l.b16 %v4368
      %v4401 = vunpack.c.l.b16 %v4369
      %v4402 = vunpack.c.l.b16 %v4370
      %v4403 = vunpack.c.l.b16 %v4371
      %v4404 = vunpack.c.l.b16 %v4372
      %v4405 = vunpack.c.l.b16 %v4373
      %v4406 = vunpack.c.l.b16 %v4374
      %v4407 = vunpack.c.l.b16 %v4375
      %v4408 = vunpack.c.l.b16 %v4376
      %v4409 = vunpack.c.l.b16 %v4377
      %v4410 = vunpack.c.l.b16 %v4378
      %v4411 = vunpack.c.l.b16 %v4379
      %v4412 = vunpack.c.l.b16 %v4380
      %v4413 = vpack.c.b16 %v4398, %v4397
      %v4414 = vpack.c.b16 %v4400, %v4399
      %v4415 = vpack.c.b16 %v4402, %v4401
      %v4416 = vpack.c.b16 %v4404, %v4403
      %v4417 = vpack.c.b16 %v4406, %v4405
      %v4418 = vpack.c.b16 %v4408, %v4407
      %v4419 = vpack.c.b16 %v4410, %v4409
      %v4420 = vpack.c.b16 %v4412, %v4411
      %4429 = vmatpush.bf16.msra.mxu0 %v4420
      %4430 = vmatpush.bf16.msra.mxu0 %v4419
      %4431 = vmatpush.bf16.msra.mxu0 %v4418
      %4432 = vmatpush.bf16.msra.mxu0 %v4417
      %4433 = vmatpush.bf16.msra.mxu0 %v4416
      %4434 = vmatpush.bf16.msra.mxu0 %v4415
      %4435 = vmatpush.bf16.msra.mxu0 %v4414
      %4436 = vmatpush.bf16.msra.mxu0 %v4413
      %4437 = vmatmul.bf16.gmra.mxu0 %v4360
      %v4438 = vpop.f32.mrf.mxu0
      %v4439 = vadd.f32 0.0, %v4438
      %v4440 = vpop.f32.mrf.mxu0
      %v4441 = vadd.f32 0.0, %v4440
      %4442 = vmatmul.bf16.gmra.mxu0 %v4361
      %v4443 = vpop.f32.mrf.mxu0
      %v4444 = vadd.f32 0.0, %v4443
      %v4445 = vpop.f32.mrf.mxu0
      %v4446 = vadd.f32 0.0, %v4445
      %4447 = vmatmul.bf16.gmra.mxu0 %v4362
      %v4448 = vpop.f32.mrf.mxu0
      %v4449 = vadd.f32 0.0, %v4448
      %v4450 = vpop.f32.mrf.mxu0
      %v4451 = vadd.f32 0.0, %v4450
      %4452 = vmatmul.bf16.gmra.mxu0 %v4363
      %v4453 = vpop.f32.mrf.mxu0
      %v4454 = vadd.f32 0.0, %v4453
      %v4455 = vpop.f32.mrf.mxu0
      %v4456 = vadd.f32 0.0, %v4455
      %4457 = vdwg.mxu0
      %v4458 = vadd.f32 %v4282, %v4439
      %v4459 = vadd.f32 %v4283, %v4441
      %v4460 = vadd.f32 %v4284, %v4444
      %v4461 = vadd.f32 %v4285, %v4446
      %v4462 = vadd.f32 %v4286, %v4449
      %v4463 = vadd.f32 %v4287, %v4451
      %v4464 = vadd.f32 %v4288, %v4454
      %v4465 = vadd.f32 %v4289, %v4456
      %v4466 = vld [vmem:[%s17] sm:$0x1]
      %v4468 = vperm.slane %v4466, 0
      %v4470 = vadd.f32 %v4458, %v4468
      %v4471 = vadd.f32 %v4459, %v4468
      %v4472 = vadd.f32 %v4460, %v4468
      %v4473 = vadd.f32 %v4461, %v4468
      %v4474 = vadd.f32 %v4462, %v4468
      %v4475 = vadd.f32 %v4463, %v4468
      %v4476 = vadd.f32 %v4464, %v4468
      %v4477 = vadd.f32 %v4465, %v4468
      %v4478 = vmax.f32 %v4470, 0.0
      %v4479 = vmax.f32 %v4471, 0.0
      %v4480 = vmax.f32 %v4472, 0.0
      %v4481 = vmax.f32 %v4473, 0.0
      %v4482 = vmax.f32 %v4474, 0.0
      %v4483 = vmax.f32 %v4475, 0.0
      %v4484 = vmax.f32 %v4476, 0.0
      %v4485 = vmax.f32 %v4477, 0.0
      %v4486 = vpack.c.bf16 %v4479, %v4478
      %v4487 = vpack.c.bf16 %v4481, %v4480
      %v4488 = vpack.c.bf16 %v4483, %v4482
      %v4489 = vpack.c.bf16 %v4485, %v4484
      %4490 = vmatpush.bf16.msra.mxu0 0
      %4491 = vmatpush.bf16.msra.mxu0 0
      %4492 = vmatpush.bf16.msra.mxu0 0
      %4493 = vmatpush.bf16.msra.mxu0 0
      %4494 = vmatpush.bf16.msra.mxu0 %v2789
      %4495 = vmatpush.bf16.msra.mxu0 %v2788
      %4496 = vmatpush.bf16.msra.mxu0 %v2787
      %4497 = vmatpush.bf16.msra.mxu0 %v2786
      %4498 = vmatmul.bf16.gmra.mxu0 %v3616
      %v4499 = vpop.f32.mrf.mxu0
      %v4500 = vadd.f32 0.0, %v4499
      %v4501 = vpop.f32.mrf.mxu0
      %v4502 = vadd.f32 0.0, %v4501
      %4503 = vmatmul.bf16.gmra.mxu0 %v3619
      %v4504 = vpop.f32.mrf.mxu0
      %v4505 = vadd.f32 0.0, %v4504
      %v4506 = vpop.f32.mrf.mxu0
      %v4507 = vadd.f32 0.0, %v4506
      %4508 = vmatmul.bf16.gmra.mxu0 %v3622
      %v4509 = vpop.f32.mrf.mxu0
      %v4510 = vadd.f32 0.0, %v4509
      %v4511 = vpop.f32.mrf.mxu0
      %v4512 = vadd.f32 0.0, %v4511
      %4513 = vmatmul.bf16.gmra.mxu0 %v3625
      %v4514 = vpop.f32.mrf.mxu0
      %v4515 = vadd.f32 0.0, %v4514
      %v4516 = vpop.f32.mrf.mxu0
      %v4517 = vadd.f32 0.0, %v4516
      %4518 = vdwg.mxu0
      %v4519 = vpack.c.bf16 %v4502, %v4500
      %v4520 = vpack.c.bf16 %v4507, %v4505
      %v4521 = vpack.c.bf16 %v4512, %v4510
      %v4522 = vpack.c.bf16 %v4517, %v4515
      %v4523 = vld [vmem:[%s23] sm:$0xf]
      %v4524 = vld [vmem:[%s23 + $0x4] sm:$0xf]
      %v4525 = vld [vmem:[%s23 + $0x8] sm:$0xf]
      %v4526 = vld [vmem:[%s23 + $0xc] sm:$0xf]
      %v4527 = vld [vmem:[%s23 + $0x10] sm:$0xf]
      %v4528 = vld [vmem:[%s23 + $0x14] sm:$0xf]
      %v4529 = vld [vmem:[%s23 + $0x18] sm:$0xf]
      %v4530 = vld [vmem:[%s23 + $0x1c] sm:$0xf]
      %v4531 = vld [vmem:[%s23 + $0x20] sm:$0xf]
      %v4532 = vld [vmem:[%s23 + $0x24] sm:$0xf]
      %v4533 = vld [vmem:[%s23 + $0x28] sm:$0xf]
      %v4534 = vld [vmem:[%s23 + $0x2c] sm:$0xf]
      %v4535 = vld [vmem:[%s23 + $0x30] sm:$0xf]
      %v4536 = vld [vmem:[%s23 + $0x34] sm:$0xf]
      %v4537 = vld [vmem:[%s23 + $0x38] sm:$0xf]
      %v4538 = vld [vmem:[%s23 + $0x3c] sm:$0xf]
      %v4539 = vld [vmem:[%s25] sm:$0x1]
      %v4541 = vperm.slane %v4539, 0
      %v4559 = vunpack.c.l.b16 %v4523
      %v4560 = vunpack.c.l.b16 %v4524
      %v4561 = vunpack.c.l.b16 %v4525
      %v4562 = vunpack.c.l.b16 %v4526
      %v4563 = vunpack.c.l.b16 %v4527
      %v4564 = vunpack.c.l.b16 %v4528
      %v4565 = vunpack.c.l.b16 %v4529
      %v4566 = vunpack.c.l.b16 %v4530
      %v4567 = vunpack.c.l.b16 %v4531
      %v4568 = vunpack.c.l.b16 %v4532
      %v4569 = vunpack.c.l.b16 %v4533
      %v4570 = vunpack.c.l.b16 %v4534
      %v4571 = vunpack.c.l.b16 %v4535
      %v4572 = vunpack.c.l.b16 %v4536
      %v4573 = vunpack.c.l.b16 %v4537
      %v4574 = vunpack.c.l.b16 %v4538
      %v4575 = vpack.c.b16 %v4560, %v4559
      %v4576 = vpack.c.b16 %v4562, %v4561
      %v4577 = vpack.c.b16 %v4564, %v4563
      %v4578 = vpack.c.b16 %v4566, %v4565
      %v4579 = vpack.c.b16 %v4568, %v4567
      %v4580 = vpack.c.b16 %v4570, %v4569
      %v4581 = vpack.c.b16 %v4572, %v4571
      %v4582 = vpack.c.b16 %v4574, %v4573
      %4591 = vmatpush.bf16.msra.mxu0 %v4582
      %4592 = vmatpush.bf16.msra.mxu0 %v4581
      %4593 = vmatpush.bf16.msra.mxu0 %v4580
      %4594 = vmatpush.bf16.msra.mxu0 %v4579
      %4595 = vmatpush.bf16.msra.mxu0 %v4578
      %4596 = vmatpush.bf16.msra.mxu0 %v4577
      %4597 = vmatpush.bf16.msra.mxu0 %v4576
      %4598 = vmatpush.bf16.msra.mxu0 %v4575
      %4599 = vmatmul.bf16.gmra.mxu0 %v4519
      %v4600 = vpop.f32.mrf.mxu0
      %v4601 = vadd.f32 %v4541, %v4600
      %v4602 = vpop.f32.mrf.mxu0
      %v4603 = vadd.f32 %v4541, %v4602
      %4604 = vmatmul.bf16.gmra.mxu0 %v4520
      %v4605 = vpop.f32.mrf.mxu0
      %v4606 = vadd.f32 %v4541, %v4605
      %v4607 = vpop.f32.mrf.mxu0
      %v4608 = vadd.f32 %v4541, %v4607
      %4609 = vmatmul.bf16.gmra.mxu0 %v4521
      %v4610 = vpop.f32.mrf.mxu0
      %v4611 = vadd.f32 %v4541, %v4610
      %v4612 = vpop.f32.mrf.mxu0
      %v4613 = vadd.f32 %v4541, %v4612
      %4614 = vmatmul.bf16.gmra.mxu0 %v4522
      %v4615 = vpop.f32.mrf.mxu0
      %v4616 = vadd.f32 %v4541, %v4615
      %v4617 = vpop.f32.mrf.mxu0
      %v4618 = vadd.f32 %v4541, %v4617
      %4619 = vdwg.mxu0
      %v4620 = vld [vmem:[%s19] sm:$0xf]
      %v4621 = vld [vmem:[%s19 + $0x4] sm:$0xf]
      %v4622 = vld [vmem:[%s19 + $0x8] sm:$0xf]
      %v4623 = vld [vmem:[%s19 + $0xc] sm:$0xf]
      %v4624 = vld [vmem:[%s19 + $0x10] sm:$0xf]
      %v4625 = vld [vmem:[%s19 + $0x14] sm:$0xf]
      %v4626 = vld [vmem:[%s19 + $0x18] sm:$0xf]
      %v4627 = vld [vmem:[%s19 + $0x1c] sm:$0xf]
      %v4628 = vld [vmem:[%s19 + $0x20] sm:$0xf]
      %v4629 = vld [vmem:[%s19 + $0x24] sm:$0xf]
      %v4630 = vld [vmem:[%s19 + $0x28] sm:$0xf]
      %v4631 = vld [vmem:[%s19 + $0x2c] sm:$0xf]
      %v4632 = vld [vmem:[%s19 + $0x30] sm:$0xf]
      %v4633 = vld [vmem:[%s19 + $0x34] sm:$0xf]
      %v4634 = vld [vmem:[%s19 + $0x38] sm:$0xf]
      %v4635 = vld [vmem:[%s19 + $0x3c] sm:$0xf]
      %v4636 = vld [vmem:[%s21] sm:$0x1]
      %v4638 = vperm.slane %v4636, 0
      %v4656 = vunpack.c.l.b16 %v4620
      %v4657 = vunpack.c.l.b16 %v4621
      %v4658 = vunpack.c.l.b16 %v4622
      %v4659 = vunpack.c.l.b16 %v4623
      %v4660 = vunpack.c.l.b16 %v4624
      %v4661 = vunpack.c.l.b16 %v4625
      %v4662 = vunpack.c.l.b16 %v4626
      %v4663 = vunpack.c.l.b16 %v4627
      %v4664 = vunpack.c.l.b16 %v4628
      %v4665 = vunpack.c.l.b16 %v4629
      %v4666 = vunpack.c.l.b16 %v4630
      %v4667 = vunpack.c.l.b16 %v4631
      %v4668 = vunpack.c.l.b16 %v4632
      %v4669 = vunpack.c.l.b16 %v4633
      %v4670 = vunpack.c.l.b16 %v4634
      %v4671 = vunpack.c.l.b16 %v4635
      %v4672 = vpack.c.b16 %v4657, %v4656
      %v4673 = vpack.c.b16 %v4659, %v4658
      %v4674 = vpack.c.b16 %v4661, %v4660
      %v4675 = vpack.c.b16 %v4663, %v4662
      %v4676 = vpack.c.b16 %v4665, %v4664
      %v4677 = vpack.c.b16 %v4667, %v4666
      %v4678 = vpack.c.b16 %v4669, %v4668
      %v4679 = vpack.c.b16 %v4671, %v4670
      %4688 = vmatpush.bf16.msra.mxu0 %v4679
      %4689 = vmatpush.bf16.msra.mxu0 %v4678
      %4690 = vmatpush.bf16.msra.mxu0 %v4677
      %4691 = vmatpush.bf16.msra.mxu0 %v4676
      %4692 = vmatpush.bf16.msra.mxu0 %v4675
      %4693 = vmatpush.bf16.msra.mxu0 %v4674
      %4694 = vmatpush.bf16.msra.mxu0 %v4673
      %4695 = vmatpush.bf16.msra.mxu0 %v4672
      %4696 = vmatmul.bf16.gmra.mxu0 %v4486
      %v4697 = vpop.f32.mrf.mxu0
      %v4698 = vadd.f32 %v4638, %v4697
      %v4699 = vpop.f32.mrf.mxu0
      %v4700 = vadd.f32 %v4638, %v4699
      %4701 = vmatmul.bf16.gmra.mxu0 %v4487
      %v4702 = vpop.f32.mrf.mxu0
      %v4703 = vadd.f32 %v4638, %v4702
      %v4704 = vpop.f32.mrf.mxu0
      %v4705 = vadd.f32 %v4638, %v4704
      %4706 = vmatmul.bf16.gmra.mxu0 %v4488
      %v4707 = vpop.f32.mrf.mxu0
      %v4708 = vadd.f32 %v4638, %v4707
      %v4709 = vpop.f32.mrf.mxu0
      %v4710 = vadd.f32 %v4638, %v4709
      %4711 = vmatmul.bf16.gmra.mxu0 %v4489
      %v4712 = vpop.f32.mrf.mxu0
      %v4713 = vadd.f32 %v4638, %v4712
      %v4714 = vpop.f32.mrf.mxu0
      %v4715 = vadd.f32 %v4638, %v4714
      %4716 = vdwg.mxu0
      %v4717 = vadd.f32 %v4698, %v4601
      %v4718 = vadd.f32 %v4700, %v4603
      %v4719 = vadd.f32 %v4703, %v4606
      %v4720 = vadd.f32 %v4705, %v4608
      %v4721 = vadd.f32 %v4708, %v4611
      %v4722 = vadd.f32 %v4710, %v4613
      %v4723 = vadd.f32 %v4713, %v4616
      %v4724 = vadd.f32 %v4715, %v4618
      %v4725 = vmax.f32 %v4717, 0.0
      %v4726 = vmax.f32 %v4718, 0.0
      %v4727 = vmax.f32 %v4719, 0.0
      %v4728 = vmax.f32 %v4720, 0.0
      %v4729 = vmax.f32 %v4721, 0.0
      %v4730 = vmax.f32 %v4722, 0.0
      %v4731 = vmax.f32 %v4723, 0.0
      %v4732 = vmax.f32 %v4724, 0.0
      %v4733 = vpack.c.bf16 %v4726, %v4725
      %v4734 = vpack.c.bf16 %v4728, %v4727
      %v4735 = vpack.c.bf16 %v4730, %v4729
      %v4736 = vpack.c.bf16 %v4732, %v4731
      %v4737 = vld [vmem:[%s27] sm:$0xf]
      %v4738 = vld [vmem:[%s27 + $0x4] sm:$0xf]
      %v4739 = vld [vmem:[%s27 + $0x8] sm:$0xf]
      %v4740 = vld [vmem:[%s27 + $0xc] sm:$0xf]
      %v4741 = vld [vmem:[%s27 + $0x10] sm:$0xf]
      %v4742 = vld [vmem:[%s27 + $0x14] sm:$0xf]
      %v4743 = vld [vmem:[%s27 + $0x18] sm:$0xf]
      %v4744 = vld [vmem:[%s27 + $0x1c] sm:$0xf]
      %v4745 = vld [vmem:[%s27 + $0x20] sm:$0xf]
      %v4746 = vld [vmem:[%s27 + $0x24] sm:$0xf]
      %v4747 = vld [vmem:[%s27 + $0x28] sm:$0xf]
      %v4748 = vld [vmem:[%s27 + $0x2c] sm:$0xf]
      %v4749 = vld [vmem:[%s27 + $0x30] sm:$0xf]
      %v4750 = vld [vmem:[%s27 + $0x34] sm:$0xf]
      %v4751 = vld [vmem:[%s27 + $0x38] sm:$0xf]
      %v4752 = vld [vmem:[%s27 + $0x3c] sm:$0xf]
      %v4753 = vld [vmem:[%s29] sm:$0x1]
      %v4755 = vperm.slane %v4753, 0
      %v4773 = vunpack.c.l.b16 %v4737
      %v4774 = vunpack.c.l.b16 %v4738
      %v4775 = vunpack.c.l.b16 %v4739
      %v4776 = vunpack.c.l.b16 %v4740
      %v4777 = vunpack.c.l.b16 %v4741
      %v4778 = vunpack.c.l.b16 %v4742
      %v4779 = vunpack.c.l.b16 %v4743
      %v4780 = vunpack.c.l.b16 %v4744
      %v4781 = vunpack.c.l.b16 %v4745
      %v4782 = vunpack.c.l.b16 %v4746
      %v4783 = vunpack.c.l.b16 %v4747
      %v4784 = vunpack.c.l.b16 %v4748
      %v4785 = vunpack.c.l.b16 %v4749
      %v4786 = vunpack.c.l.b16 %v4750
      %v4787 = vunpack.c.l.b16 %v4751
      %v4788 = vunpack.c.l.b16 %v4752
      %v4789 = vpack.c.b16 %v4774, %v4773
      %v4790 = vpack.c.b16 %v4776, %v4775
      %v4791 = vpack.c.b16 %v4778, %v4777
      %v4792 = vpack.c.b16 %v4780, %v4779
      %v4793 = vpack.c.b16 %v4782, %v4781
      %v4794 = vpack.c.b16 %v4784, %v4783
      %v4795 = vpack.c.b16 %v4786, %v4785
      %v4796 = vpack.c.b16 %v4788, %v4787
      %4805 = vmatpush.bf16.msra.mxu0 %v4796
      %4806 = vmatpush.bf16.msra.mxu0 %v4795
      %4807 = vmatpush.bf16.msra.mxu0 %v4794
      %4808 = vmatpush.bf16.msra.mxu0 %v4793
      %4809 = vmatpush.bf16.msra.mxu0 %v4792
      %4810 = vmatpush.bf16.msra.mxu0 %v4791
      %4811 = vmatpush.bf16.msra.mxu0 %v4790
      %4812 = vmatpush.bf16.msra.mxu0 %v4789
      %4813 = vmatmul.bf16.gmra.mxu0 %v4733
      %v4814 = vpop.f32.mrf.mxu0
      %v4815 = vadd.f32 %v4755, %v4814
      %v4816 = vpop.f32.mrf.mxu0
      %v4817 = vadd.f32 %v4755, %v4816
      %4818 = vmatmul.bf16.gmra.mxu0 %v4734
      %v4819 = vpop.f32.mrf.mxu0
      %v4820 = vadd.f32 %v4755, %v4819
      %v4821 = vpop.f32.mrf.mxu0
      %v4822 = vadd.f32 %v4755, %v4821
      %4823 = vmatmul.bf16.gmra.mxu0 %v4735
      %v4824 = vpop.f32.mrf.mxu0
      %v4825 = vadd.f32 %v4755, %v4824
      %v4826 = vpop.f32.mrf.mxu0
      %v4827 = vadd.f32 %v4755, %v4826
      %4828 = vmatmul.bf16.gmra.mxu0 %v4736
      %v4829 = vpop.f32.mrf.mxu0
      %v4830 = vadd.f32 %v4755, %v4829
      %v4831 = vpop.f32.mrf.mxu0
      %v4832 = vadd.f32 %v4755, %v4831
      %4833 = vdwg.mxu0
      %v4834 = vmax.f32 %v4815, 0.0
      %v4835 = vmax.f32 %v4817, 0.0
      %v4836 = vmax.f32 %v4820, 0.0
      %v4837 = vmax.f32 %v4822, 0.0
      %v4838 = vmax.f32 %v4825, 0.0
      %v4839 = vmax.f32 %v4827, 0.0
      %v4840 = vmax.f32 %v4830, 0.0
      %v4841 = vmax.f32 %v4832, 0.0
      %v4842 = vpack.c.bf16 %v4835, %v4834
      %v4843 = vpack.c.bf16 %v4837, %v4836
      %v4844 = vpack.c.bf16 %v4839, %v4838
      %v4845 = vpack.c.bf16 %v4841, %v4840
      %v4846 = vld [vmem:[%s31] sm:$0xf]
      %v4847 = vld [vmem:[%s31 + $0x4] sm:$0xf]
      %v4850 = vunpack.c.l.b16 %v4846
      %v4851 = vunpack.c.l.b16 %v4847
      %v4852 = vpack.c.b16 %v4851, %v4850
      %v4854 = vsel %vm2927, %v4852, 0
      %4856 = vmatpush.bf16.msra.mxu0 0
      %4857 = vmatpush.bf16.msra.mxu0 0
      %4858 = vmatpush.bf16.msra.mxu0 0
      %4859 = vmatpush.bf16.msra.mxu0 0
      %4860 = vmatpush.bf16.msra.mxu0 %v4845
      %4861 = vmatpush.bf16.msra.mxu0 %v4844
      %4862 = vmatpush.bf16.msra.mxu0 %v4843
      %4863 = vmatpush.bf16.msra.mxu0 %v4842
      %4864 = vmatmul.bf16.gmra.mxu0 %v4854
      %v4865 = vpop.f32.mrf.mxu0
      %v4866 = vadd.f32 0.0, %v4865
      %v4867 = vpop.f32.mrf.mxu0
      %v4868 = vadd.f32 0.0, %v4867
      %4869 = vdwg.mxu0
      %v4870 = vpack.c.bf16 %v4868, %v4866
      %v4871 = vld [vmem:[%s33] sm:$0xf]
      %v4872 = vld [vmem:[%s33 + $0x4] sm:$0xf]
      %v4873 = vld [vmem:[%s33 + $0x8] sm:$0xf]
      %v4874 = vld [vmem:[%s33 + $0xc] sm:$0xf]
      %v4875 = vld [vmem:[%s33 + $0x10] sm:$0xf]
      %v4876 = vld [vmem:[%s33 + $0x14] sm:$0xf]
      %v4877 = vld [vmem:[%s33 + $0x18] sm:$0xf]
      %v4878 = vld [vmem:[%s33 + $0x1c] sm:$0xf]
      %v4879 = vld [vmem:[%s33 + $0x20] sm:$0xf]
      %v4880 = vld [vmem:[%s33 + $0x24] sm:$0xf]
      %v4881 = vld [vmem:[%s33 + $0x28] sm:$0xf]
      %v4882 = vld [vmem:[%s33 + $0x2c] sm:$0xf]
      %v4883 = vld [vmem:[%s33 + $0x30] sm:$0xf]
      %v4884 = vld [vmem:[%s33 + $0x34] sm:$0xf]
      %v4885 = vld [vmem:[%s33 + $0x38] sm:$0xf]
      %v4886 = vld [vmem:[%s33 + $0x3c] sm:$0xf]
      %s4887 = scalar_lea.vmem %s31, 8
      %v4888 = vld [vmem:[%s4887] sm:$0xf]
      %v4889 = vld [vmem:[%s4887 + $0x4] sm:$0xf]
      %v4892 = vunpack.c.l.b16 %v4888
      %v4893 = vunpack.c.l.b16 %v4889
      %v4894 = vpack.c.b16 %v4893, %v4892
      %v4896 = vsel %vm2927, %v4894, 0
      %4898 = vmatpush.bf16.msra.mxu0 0
      %4899 = vmatpush.bf16.msra.mxu0 0
      %4900 = vmatpush.bf16.msra.mxu0 0
      %4901 = vmatpush.bf16.msra.mxu0 0
      %4902 = vmatpush.bf16.msra.mxu0 %v4845
      %4903 = vmatpush.bf16.msra.mxu0 %v4844
      %4904 = vmatpush.bf16.msra.mxu0 %v4843
      %4905 = vmatpush.bf16.msra.mxu0 %v4842
      %4906 = vmatmul.bf16.gmra.mxu0 %v4896
      %v4907 = vpop.f32.mrf.mxu0
      %v4908 = vadd.f32 0.0, %v4907
      %v4909 = vpop.f32.mrf.mxu0
      %v4910 = vadd.f32 0.0, %v4909
      %4911 = vdwg.mxu0
      %v4912 = vpack.c.bf16 %v4910, %v4908
      %s4913 = scalar_lea.vmem %s33, 64
      %v4914 = vld [vmem:[%s4913] sm:$0xf]
      %v4915 = vld [vmem:[%s4913 + $0x4] sm:$0xf]
      %v4916 = vld [vmem:[%s4913 + $0x8] sm:$0xf]
      %v4917 = vld [vmem:[%s4913 + $0xc] sm:$0xf]
      %v4918 = vld [vmem:[%s4913 + $0x10] sm:$0xf]
      %v4919 = vld [vmem:[%s4913 + $0x14] sm:$0xf]
      %v4920 = vld [vmem:[%s4913 + $0x18] sm:$0xf]
      %v4921 = vld [vmem:[%s4913 + $0x1c] sm:$0xf]
      %v4922 = vld [vmem:[%s4913 + $0x20] sm:$0xf]
      %v4923 = vld [vmem:[%s4913 + $0x24] sm:$0xf]
      %v4924 = vld [vmem:[%s4913 + $0x28] sm:$0xf]
      %v4925 = vld [vmem:[%s4913 + $0x2c] sm:$0xf]
      %v4926 = vld [vmem:[%s4913 + $0x30] sm:$0xf]
      %v4927 = vld [vmem:[%s4913 + $0x34] sm:$0xf]
      %v4928 = vld [vmem:[%s4913 + $0x38] sm:$0xf]
      %v4929 = vld [vmem:[%s4913 + $0x3c] sm:$0xf]
      %v4946 = vunpack.c.l.b16 %v4914
      %v4947 = vunpack.c.l.b16 %v4915
      %v4948 = vunpack.c.l.b16 %v4916
      %v4949 = vunpack.c.l.b16 %v4917
      %v4950 = vunpack.c.l.b16 %v4918
      %v4951 = vunpack.c.l.b16 %v4919
      %v4952 = vunpack.c.l.b16 %v4920
      %v4953 = vunpack.c.l.b16 %v4921
      %v4954 = vunpack.c.l.b16 %v4922
      %v4955 = vunpack.c.l.b16 %v4923
      %v4956 = vunpack.c.l.b16 %v4924
      %v4957 = vunpack.c.l.b16 %v4925
      %v4958 = vunpack.c.l.b16 %v4926
      %v4959 = vunpack.c.l.b16 %v4927
      %v4960 = vunpack.c.l.b16 %v4928
      %v4961 = vunpack.c.l.b16 %v4929
      %v4962 = vpack.c.b16 %v4947, %v4946
      %v4963 = vpack.c.b16 %v4949, %v4948
      %v4964 = vpack.c.b16 %v4951, %v4950
      %v4965 = vpack.c.b16 %v4953, %v4952
      %v4966 = vpack.c.b16 %v4955, %v4954
      %v4967 = vpack.c.b16 %v4957, %v4956
      %v4968 = vpack.c.b16 %v4959, %v4958
      %v4969 = vpack.c.b16 %v4961, %v4960
      %4978 = vmatpush.bf16.msra.mxu0 %v4969
      %4979 = vmatpush.bf16.msra.mxu0 %v4968
      %4980 = vmatpush.bf16.msra.mxu0 %v4967
      %4981 = vmatpush.bf16.msra.mxu0 %v4966
      %4982 = vmatpush.bf16.msra.mxu0 %v4965
      %4983 = vmatpush.bf16.msra.mxu0 %v4964
      %4984 = vmatpush.bf16.msra.mxu0 %v4963
      %4985 = vmatpush.bf16.msra.mxu0 %v4962
      %4986 = vmatmul.bf16.gmra.mxu0 %v4912
      %v4987 = vpop.f32.mrf.mxu0
      %v4988 = vadd.f32 0.0, %v4987
      %v4989 = vpop.f32.mrf.mxu0
      %v4990 = vadd.f32 0.0, %v4989
      %4991 = vdwg.mxu0
      %v5008 = vunpack.c.l.b16 %v4871
      %v5009 = vunpack.c.l.b16 %v4872
      %v5010 = vunpack.c.l.b16 %v4873
      %v5011 = vunpack.c.l.b16 %v4874
      %v5012 = vunpack.c.l.b16 %v4875
      %v5013 = vunpack.c.l.b16 %v4876
      %v5014 = vunpack.c.l.b16 %v4877
      %v5015 = vunpack.c.l.b16 %v4878
      %v5016 = vunpack.c.l.b16 %v4879
      %v5017 = vunpack.c.l.b16 %v4880
      %v5018 = vunpack.c.l.b16 %v4881
      %v5019 = vunpack.c.l.b16 %v4882
      %v5020 = vunpack.c.l.b16 %v4883
      %v5021 = vunpack.c.l.b16 %v4884
      %v5022 = vunpack.c.l.b16 %v4885
      %v5023 = vunpack.c.l.b16 %v4886
      %v5024 = vpack.c.b16 %v5009, %v5008
      %v5025 = vpack.c.b16 %v5011, %v5010
      %v5026 = vpack.c.b16 %v5013, %v5012
      %v5027 = vpack.c.b16 %v5015, %v5014
      %v5028 = vpack.c.b16 %v5017, %v5016
      %v5029 = vpack.c.b16 %v5019, %v5018
      %v5030 = vpack.c.b16 %v5021, %v5020
      %v5031 = vpack.c.b16 %v5023, %v5022
      %5040 = vmatpush.bf16.msra.mxu0 %v5031
      %5041 = vmatpush.bf16.msra.mxu0 %v5030
      %5042 = vmatpush.bf16.msra.mxu0 %v5029
      %5043 = vmatpush.bf16.msra.mxu0 %v5028
      %5044 = vmatpush.bf16.msra.mxu0 %v5027
      %5045 = vmatpush.bf16.msra.mxu0 %v5026
      %5046 = vmatpush.bf16.msra.mxu0 %v5025
      %5047 = vmatpush.bf16.msra.mxu0 %v5024
      %5048 = vmatmul.bf16.gmra.mxu0 %v4870
      %v5049 = vpop.f32.mrf.mxu0
      %v5050 = vadd.f32 %v4988, %v5049
      %v5051 = vpop.f32.mrf.mxu0
      %v5052 = vadd.f32 %v4990, %v5051
      %5053 = vdwg.mxu0
      %s5054 = scalar_lea.vmem %s31, 16
      %v5055 = vld [vmem:[%s5054] sm:$0xf]
      %v5056 = vld [vmem:[%s5054 + $0x4] sm:$0xf]
      %v5059 = vunpack.c.l.b16 %v5055
      %v5060 = vunpack.c.l.b16 %v5056
      %v5061 = vpack.c.b16 %v5060, %v5059
      %v5063 = vsel %vm2927, %v5061, 0
      %5065 = vmatpush.bf16.msra.mxu0 0
      %5066 = vmatpush.bf16.msra.mxu0 0
      %5067 = vmatpush.bf16.msra.mxu0 0
      %5068 = vmatpush.bf16.msra.mxu0 0
      %5069 = vmatpush.bf16.msra.mxu0 %v4845
      %5070 = vmatpush.bf16.msra.mxu0 %v4844
      %5071 = vmatpush.bf16.msra.mxu0 %v4843
      %5072 = vmatpush.bf16.msra.mxu0 %v4842
      %5073 = vmatmul.bf16.gmra.mxu0 %v5063
      %v5074 = vpop.f32.mrf.mxu0
      %v5075 = vadd.f32 0.0, %v5074
      %v5076 = vpop.f32.mrf.mxu0
      %v5077 = vadd.f32 0.0, %v5076
      %5078 = vdwg.mxu0
      %v5079 = vpack.c.bf16 %v5077, %v5075
      %s5080 = scalar_lea.vmem %s33, 128
      %v5081 = vld [vmem:[%s5080] sm:$0xf]
      %v5082 = vld [vmem:[%s5080 + $0x4] sm:$0xf]
      %v5083 = vld [vmem:[%s5080 + $0x8] sm:$0xf]
      %v5084 = vld [vmem:[%s5080 + $0xc] sm:$0xf]
      %v5085 = vld [vmem:[%s5080 + $0x10] sm:$0xf]
      %v5086 = vld [vmem:[%s5080 + $0x14] sm:$0xf]
      %v5087 = vld [vmem:[%s5080 + $0x18] sm:$0xf]
      %v5088 = vld [vmem:[%s5080 + $0x1c] sm:$0xf]
      %v5089 = vld [vmem:[%s5080 + $0x20] sm:$0xf]
      %v5090 = vld [vmem:[%s5080 + $0x24] sm:$0xf]
      %v5091 = vld [vmem:[%s5080 + $0x28] sm:$0xf]
      %v5092 = vld [vmem:[%s5080 + $0x2c] sm:$0xf]
      %v5093 = vld [vmem:[%s5080 + $0x30] sm:$0xf]
      %v5094 = vld [vmem:[%s5080 + $0x34] sm:$0xf]
      %v5095 = vld [vmem:[%s5080 + $0x38] sm:$0xf]
      %v5096 = vld [vmem:[%s5080 + $0x3c] sm:$0xf]
      %v5113 = vunpack.c.l.b16 %v5081
      %v5114 = vunpack.c.l.b16 %v5082
      %v5115 = vunpack.c.l.b16 %v5083
      %v5116 = vunpack.c.l.b16 %v5084
      %v5117 = vunpack.c.l.b16 %v5085
      %v5118 = vunpack.c.l.b16 %v5086
      %v5119 = vunpack.c.l.b16 %v5087
      %v5120 = vunpack.c.l.b16 %v5088
      %v5121 = vunpack.c.l.b16 %v5089
      %v5122 = vunpack.c.l.b16 %v5090
      %v5123 = vunpack.c.l.b16 %v5091
      %v5124 = vunpack.c.l.b16 %v5092
      %v5125 = vunpack.c.l.b16 %v5093
      %v5126 = vunpack.c.l.b16 %v5094
      %v5127 = vunpack.c.l.b16 %v5095
      %v5128 = vunpack.c.l.b16 %v5096
      %v5129 = vpack.c.b16 %v5114, %v5113
      %v5130 = vpack.c.b16 %v5116, %v5115
      %v5131 = vpack.c.b16 %v5118, %v5117
      %v5132 = vpack.c.b16 %v5120, %v5119
      %v5133 = vpack.c.b16 %v5122, %v5121
      %v5134 = vpack.c.b16 %v5124, %v5123
      %v5135 = vpack.c.b16 %v5126, %v5125
      %v5136 = vpack.c.b16 %v5128, %v5127
      %5145 = vmatpush.bf16.msra.mxu0 %v5136
      %5146 = vmatpush.bf16.msra.mxu0 %v5135
      %5147 = vmatpush.bf16.msra.mxu0 %v5134
      %5148 = vmatpush.bf16.msra.mxu0 %v5133
      %5149 = vmatpush.bf16.msra.mxu0 %v5132
      %5150 = vmatpush.bf16.msra.mxu0 %v5131
      %5151 = vmatpush.bf16.msra.mxu0 %v5130
      %5152 = vmatpush.bf16.msra.mxu0 %v5129
      %5153 = vmatmul.bf16.gmra.mxu0 %v5079
      %v5154 = vpop.f32.mrf.mxu0
      %v5155 = vadd.f32 0.0, %v5154
      %v5156 = vpop.f32.mrf.mxu0
      %v5157 = vadd.f32 0.0, %v5156
      %5158 = vdwg.mxu0
      %v5159 = vadd.f32 %v5050, %v5155
      %v5160 = vadd.f32 %v5052, %v5157
      %s5161 = scalar_lea.vmem %s31, 24
      %v5162 = vld [vmem:[%s5161] sm:$0xf]
      %v5163 = vld [vmem:[%s5161 + $0x4] sm:$0xf]
      %v5166 = vunpack.c.l.b16 %v5162
      %v5167 = vunpack.c.l.b16 %v5163
      %v5168 = vpack.c.b16 %v5167, %v5166
      %v5170 = vsel %vm2927, %v5168, 0
      %5172 = vmatpush.bf16.msra.mxu0 0
      %5173 = vmatpush.bf16.msra.mxu0 0
      %5174 = vmatpush.bf16.msra.mxu0 0
      %5175 = vmatpush.bf16.msra.mxu0 0
      %5176 = vmatpush.bf16.msra.mxu0 %v4845
      %5177 = vmatpush.bf16.msra.mxu0 %v4844
      %5178 = vmatpush.bf16.msra.mxu0 %v4843
      %5179 = vmatpush.bf16.msra.mxu0 %v4842
      %5180 = vmatmul.bf16.gmra.mxu0 %v5170
      %v5181 = vpop.f32.mrf.mxu0
      %v5182 = vadd.f32 0.0, %v5181
      %v5183 = vpop.f32.mrf.mxu0
      %v5184 = vadd.f32 0.0, %v5183
      %5185 = vdwg.mxu0
      %v5186 = vpack.c.bf16 %v5184, %v5182
      %s5187 = scalar_lea.vmem %s33, 192
      %v5188 = vld [vmem:[%s5187] sm:$0xf]
      %v5189 = vld [vmem:[%s5187 + $0x4] sm:$0xf]
      %v5190 = vld [vmem:[%s5187 + $0x8] sm:$0xf]
      %v5191 = vld [vmem:[%s5187 + $0xc] sm:$0xf]
      %v5192 = vld [vmem:[%s5187 + $0x10] sm:$0xf]
      %v5193 = vld [vmem:[%s5187 + $0x14] sm:$0xf]
      %v5194 = vld [vmem:[%s5187 + $0x18] sm:$0xf]
      %v5195 = vld [vmem:[%s5187 + $0x1c] sm:$0xf]
      %v5196 = vld [vmem:[%s5187 + $0x20] sm:$0xf]
      %v5197 = vld [vmem:[%s5187 + $0x24] sm:$0xf]
      %v5198 = vld [vmem:[%s5187 + $0x28] sm:$0xf]
      %v5199 = vld [vmem:[%s5187 + $0x2c] sm:$0xf]
      %v5200 = vld [vmem:[%s5187 + $0x30] sm:$0xf]
      %v5201 = vld [vmem:[%s5187 + $0x34] sm:$0xf]
      %v5202 = vld [vmem:[%s5187 + $0x38] sm:$0xf]
      %v5203 = vld [vmem:[%s5187 + $0x3c] sm:$0xf]
      %v5220 = vunpack.c.l.b16 %v5188
      %v5221 = vunpack.c.l.b16 %v5189
      %v5222 = vunpack.c.l.b16 %v5190
      %v5223 = vunpack.c.l.b16 %v5191
      %v5224 = vunpack.c.l.b16 %v5192
      %v5225 = vunpack.c.l.b16 %v5193
      %v5226 = vunpack.c.l.b16 %v5194
      %v5227 = vunpack.c.l.b16 %v5195
      %v5228 = vunpack.c.l.b16 %v5196
      %v5229 = vunpack.c.l.b16 %v5197
      %v5230 = vunpack.c.l.b16 %v5198
      %v5231 = vunpack.c.l.b16 %v5199
      %v5232 = vunpack.c.l.b16 %v5200
      %v5233 = vunpack.c.l.b16 %v5201
      %v5234 = vunpack.c.l.b16 %v5202
      %v5235 = vunpack.c.l.b16 %v5203
      %v5236 = vpack.c.b16 %v5221, %v5220
      %v5237 = vpack.c.b16 %v5223, %v5222
      %v5238 = vpack.c.b16 %v5225, %v5224
      %v5239 = vpack.c.b16 %v5227, %v5226
      %v5240 = vpack.c.b16 %v5229, %v5228
      %v5241 = vpack.c.b16 %v5231, %v5230
      %v5242 = vpack.c.b16 %v5233, %v5232
      %v5243 = vpack.c.b16 %v5235, %v5234
      %5252 = vmatpush.bf16.msra.mxu0 %v5243
      %5253 = vmatpush.bf16.msra.mxu0 %v5242
      %5254 = vmatpush.bf16.msra.mxu0 %v5241
      %5255 = vmatpush.bf16.msra.mxu0 %v5240
      %5256 = vmatpush.bf16.msra.mxu0 %v5239
      %5257 = vmatpush.bf16.msra.mxu0 %v5238
      %5258 = vmatpush.bf16.msra.mxu0 %v5237
      %5259 = vmatpush.bf16.msra.mxu0 %v5236
      %5260 = vmatmul.bf16.gmra.mxu0 %v5186
      %v5261 = vpop.f32.mrf.mxu0
      %v5262 = vadd.f32 0.0, %v5261
      %v5263 = vpop.f32.mrf.mxu0
      %v5264 = vadd.f32 0.0, %v5263
      %5265 = vdwg.mxu0
      %v5266 = vadd.f32 %v5159, %v5262
      %v5267 = vadd.f32 %v5160, %v5264
      %s5268 = scalar_lea.vmem %s31, 32
      %v5269 = vld [vmem:[%s5268] sm:$0xf]
      %v5270 = vld [vmem:[%s5268 + $0x4] sm:$0xf]
      %v5273 = vunpack.c.l.b16 %v5269
      %v5274 = vunpack.c.l.b16 %v5270
      %v5275 = vpack.c.b16 %v5274, %v5273
      %v5277 = vsel %vm2927, %v5275, 0
      %5279 = vmatpush.bf16.msra.mxu0 0
      %5280 = vmatpush.bf16.msra.mxu0 0
      %5281 = vmatpush.bf16.msra.mxu0 0
      %5282 = vmatpush.bf16.msra.mxu0 0
      %5283 = vmatpush.bf16.msra.mxu0 %v4845
      %5284 = vmatpush.bf16.msra.mxu0 %v4844
      %5285 = vmatpush.bf16.msra.mxu0 %v4843
      %5286 = vmatpush.bf16.msra.mxu0 %v4842
      %5287 = vmatmul.bf16.gmra.mxu0 %v5277
      %v5288 = vpop.f32.mrf.mxu0
      %v5289 = vadd.f32 0.0, %v5288
      %v5290 = vpop.f32.mrf.mxu0
      %v5291 = vadd.f32 0.0, %v5290
      %5292 = vdwg.mxu0
      %v5293 = vpack.c.bf16 %v5291, %v5289
      %s5294 = scalar_lea.vmem %s33, 256
      %v5295 = vld [vmem:[%s5294] sm:$0xf]
      %v5296 = vld [vmem:[%s5294 + $0x4] sm:$0xf]
      %v5297 = vld [vmem:[%s5294 + $0x8] sm:$0xf]
      %v5298 = vld [vmem:[%s5294 + $0xc] sm:$0xf]
      %v5299 = vld [vmem:[%s5294 + $0x10] sm:$0xf]
      %v5300 = vld [vmem:[%s5294 + $0x14] sm:$0xf]
      %v5301 = vld [vmem:[%s5294 + $0x18] sm:$0xf]
      %v5302 = vld [vmem:[%s5294 + $0x1c] sm:$0xf]
      %v5303 = vld [vmem:[%s5294 + $0x20] sm:$0xf]
      %v5304 = vld [vmem:[%s5294 + $0x24] sm:$0xf]
      %v5305 = vld [vmem:[%s5294 + $0x28] sm:$0xf]
      %v5306 = vld [vmem:[%s5294 + $0x2c] sm:$0xf]
      %v5307 = vld [vmem:[%s5294 + $0x30] sm:$0xf]
      %v5308 = vld [vmem:[%s5294 + $0x34] sm:$0xf]
      %v5309 = vld [vmem:[%s5294 + $0x38] sm:$0xf]
      %v5310 = vld [vmem:[%s5294 + $0x3c] sm:$0xf]
      %v5327 = vunpack.c.l.b16 %v5295
      %v5328 = vunpack.c.l.b16 %v5296
      %v5329 = vunpack.c.l.b16 %v5297
      %v5330 = vunpack.c.l.b16 %v5298
      %v5331 = vunpack.c.l.b16 %v5299
      %v5332 = vunpack.c.l.b16 %v5300
      %v5333 = vunpack.c.l.b16 %v5301
      %v5334 = vunpack.c.l.b16 %v5302
      %v5335 = vunpack.c.l.b16 %v5303
      %v5336 = vunpack.c.l.b16 %v5304
      %v5337 = vunpack.c.l.b16 %v5305
      %v5338 = vunpack.c.l.b16 %v5306
      %v5339 = vunpack.c.l.b16 %v5307
      %v5340 = vunpack.c.l.b16 %v5308
      %v5341 = vunpack.c.l.b16 %v5309
      %v5342 = vunpack.c.l.b16 %v5310
      %v5343 = vpack.c.b16 %v5328, %v5327
      %v5344 = vpack.c.b16 %v5330, %v5329
      %v5345 = vpack.c.b16 %v5332, %v5331
      %v5346 = vpack.c.b16 %v5334, %v5333
      %v5347 = vpack.c.b16 %v5336, %v5335
      %v5348 = vpack.c.b16 %v5338, %v5337
      %v5349 = vpack.c.b16 %v5340, %v5339
      %v5350 = vpack.c.b16 %v5342, %v5341
      %5359 = vmatpush.bf16.msra.mxu0 %v5350
      %5360 = vmatpush.bf16.msra.mxu0 %v5349
      %5361 = vmatpush.bf16.msra.mxu0 %v5348
      %5362 = vmatpush.bf16.msra.mxu0 %v5347
      %5363 = vmatpush.bf16.msra.mxu0 %v5346
      %5364 = vmatpush.bf16.msra.mxu0 %v5345
      %5365 = vmatpush.bf16.msra.mxu0 %v5344
      %5366 = vmatpush.bf16.msra.mxu0 %v5343
      %5367 = vmatmul.bf16.gmra.mxu0 %v5293
      %v5368 = vpop.f32.mrf.mxu0
      %v5369 = vadd.f32 0.0, %v5368
      %v5370 = vpop.f32.mrf.mxu0
      %v5371 = vadd.f32 0.0, %v5370
      %5372 = vdwg.mxu0
      %v5373 = vadd.f32 %v5266, %v5369
      %v5374 = vadd.f32 %v5267, %v5371
      %s5375 = scalar_lea.vmem %s31, 40
      %v5376 = vld [vmem:[%s5375] sm:$0xf]
      %v5377 = vld [vmem:[%s5375 + $0x4] sm:$0xf]
      %v5380 = vunpack.c.l.b16 %v5376
      %v5381 = vunpack.c.l.b16 %v5377
      %v5382 = vpack.c.b16 %v5381, %v5380
      %v5384 = vsel %vm2927, %v5382, 0
      %5386 = vmatpush.bf16.msra.mxu0 0
      %5387 = vmatpush.bf16.msra.mxu0 0
      %5388 = vmatpush.bf16.msra.mxu0 0
      %5389 = vmatpush.bf16.msra.mxu0 0
      %5390 = vmatpush.bf16.msra.mxu0 %v4845
      %5391 = vmatpush.bf16.msra.mxu0 %v4844
      %5392 = vmatpush.bf16.msra.mxu0 %v4843
      %5393 = vmatpush.bf16.msra.mxu0 %v4842
      %5394 = vmatmul.bf16.gmra.mxu0 %v5384
      %v5395 = vpop.f32.mrf.mxu0
      %v5396 = vadd.f32 0.0, %v5395
      %v5397 = vpop.f32.mrf.mxu0
      %v5398 = vadd.f32 0.0, %v5397
      %5399 = vdwg.mxu0
      %v5400 = vpack.c.bf16 %v5398, %v5396
      %s5401 = scalar_lea.vmem %s33, 320
      %v5402 = vld [vmem:[%s5401] sm:$0xf]
      %v5403 = vld [vmem:[%s5401 + $0x4] sm:$0xf]
      %v5404 = vld [vmem:[%s5401 + $0x8] sm:$0xf]
      %v5405 = vld [vmem:[%s5401 + $0xc] sm:$0xf]
      %v5406 = vld [vmem:[%s5401 + $0x10] sm:$0xf]
      %v5407 = vld [vmem:[%s5401 + $0x14] sm:$0xf]
      %v5408 = vld [vmem:[%s5401 + $0x18] sm:$0xf]
      %v5409 = vld [vmem:[%s5401 + $0x1c] sm:$0xf]
      %v5410 = vld [vmem:[%s5401 + $0x20] sm:$0xf]
      %v5411 = vld [vmem:[%s5401 + $0x24] sm:$0xf]
      %v5412 = vld [vmem:[%s5401 + $0x28] sm:$0xf]
      %v5413 = vld [vmem:[%s5401 + $0x2c] sm:$0xf]
      %v5414 = vld [vmem:[%s5401 + $0x30] sm:$0xf]
      %v5415 = vld [vmem:[%s5401 + $0x34] sm:$0xf]
      %v5416 = vld [vmem:[%s5401 + $0x38] sm:$0xf]
      %v5417 = vld [vmem:[%s5401 + $0x3c] sm:$0xf]
      %v5434 = vunpack.c.l.b16 %v5402
      %v5435 = vunpack.c.l.b16 %v5403
      %v5436 = vunpack.c.l.b16 %v5404
      %v5437 = vunpack.c.l.b16 %v5405
      %v5438 = vunpack.c.l.b16 %v5406
      %v5439 = vunpack.c.l.b16 %v5407
      %v5440 = vunpack.c.l.b16 %v5408
      %v5441 = vunpack.c.l.b16 %v5409
      %v5442 = vunpack.c.l.b16 %v5410
      %v5443 = vunpack.c.l.b16 %v5411
      %v5444 = vunpack.c.l.b16 %v5412
      %v5445 = vunpack.c.l.b16 %v5413
      %v5446 = vunpack.c.l.b16 %v5414
      %v5447 = vunpack.c.l.b16 %v5415
      %v5448 = vunpack.c.l.b16 %v5416
      %v5449 = vunpack.c.l.b16 %v5417
      %v5450 = vpack.c.b16 %v5435, %v5434
      %v5451 = vpack.c.b16 %v5437, %v5436
      %v5452 = vpack.c.b16 %v5439, %v5438
      %v5453 = vpack.c.b16 %v5441, %v5440
      %v5454 = vpack.c.b16 %v5443, %v5442
      %v5455 = vpack.c.b16 %v5445, %v5444
      %v5456 = vpack.c.b16 %v5447, %v5446
      %v5457 = vpack.c.b16 %v5449, %v5448
      %5466 = vmatpush.bf16.msra.mxu0 %v5457
      %5467 = vmatpush.bf16.msra.mxu0 %v5456
      %5468 = vmatpush.bf16.msra.mxu0 %v5455
      %5469 = vmatpush.bf16.msra.mxu0 %v5454
      %5470 = vmatpush.bf16.msra.mxu0 %v5453
      %5471 = vmatpush.bf16.msra.mxu0 %v5452
      %5472 = vmatpush.bf16.msra.mxu0 %v5451
      %5473 = vmatpush.bf16.msra.mxu0 %v5450
      %5474 = vmatmul.bf16.gmra.mxu0 %v5400
      %v5475 = vpop.f32.mrf.mxu0
      %v5476 = vadd.f32 0.0, %v5475
      %v5477 = vpop.f32.mrf.mxu0
      %v5478 = vadd.f32 0.0, %v5477
      %5479 = vdwg.mxu0
      %v5480 = vadd.f32 %v5373, %v5476
      %v5481 = vadd.f32 %v5374, %v5478
      %s5482 = scalar_lea.vmem %s31, 48
      %v5483 = vld [vmem:[%s5482] sm:$0xf]
      %v5484 = vld [vmem:[%s5482 + $0x4] sm:$0xf]
      %v5487 = vunpack.c.l.b16 %v5483
      %v5488 = vunpack.c.l.b16 %v5484
      %v5489 = vpack.c.b16 %v5488, %v5487
      %v5491 = vsel %vm2927, %v5489, 0
      %5493 = vmatpush.bf16.msra.mxu0 0
      %5494 = vmatpush.bf16.msra.mxu0 0
      %5495 = vmatpush.bf16.msra.mxu0 0
      %5496 = vmatpush.bf16.msra.mxu0 0
      %5497 = vmatpush.bf16.msra.mxu0 %v4845
      %5498 = vmatpush.bf16.msra.mxu0 %v4844
      %5499 = vmatpush.bf16.msra.mxu0 %v4843
      %5500 = vmatpush.bf16.msra.mxu0 %v4842
      %5501 = vmatmul.bf16.gmra.mxu0 %v5491
      %v5502 = vpop.f32.mrf.mxu0
      %v5503 = vadd.f32 0.0, %v5502
      %v5504 = vpop.f32.mrf.mxu0
      %v5505 = vadd.f32 0.0, %v5504
      %5506 = vdwg.mxu0
      %v5507 = vpack.c.bf16 %v5505, %v5503
      %s5508 = scalar_lea.vmem %s33, 384
      %v5509 = vld [vmem:[%s5508] sm:$0xf]
      %v5510 = vld [vmem:[%s5508 + $0x4] sm:$0xf]
      %v5511 = vld [vmem:[%s5508 + $0x8] sm:$0xf]
      %v5512 = vld [vmem:[%s5508 + $0xc] sm:$0xf]
      %v5513 = vld [vmem:[%s5508 + $0x10] sm:$0xf]
      %v5514 = vld [vmem:[%s5508 + $0x14] sm:$0xf]
      %v5515 = vld [vmem:[%s5508 + $0x18] sm:$0xf]
      %v5516 = vld [vmem:[%s5508 + $0x1c] sm:$0xf]
      %v5517 = vld [vmem:[%s5508 + $0x20] sm:$0xf]
      %v5518 = vld [vmem:[%s5508 + $0x24] sm:$0xf]
      %v5519 = vld [vmem:[%s5508 + $0x28] sm:$0xf]
      %v5520 = vld [vmem:[%s5508 + $0x2c] sm:$0xf]
      %v5521 = vld [vmem:[%s5508 + $0x30] sm:$0xf]
      %v5522 = vld [vmem:[%s5508 + $0x34] sm:$0xf]
      %v5523 = vld [vmem:[%s5508 + $0x38] sm:$0xf]
      %v5524 = vld [vmem:[%s5508 + $0x3c] sm:$0xf]
      %v5541 = vunpack.c.l.b16 %v5509
      %v5542 = vunpack.c.l.b16 %v5510
      %v5543 = vunpack.c.l.b16 %v5511
      %v5544 = vunpack.c.l.b16 %v5512
      %v5545 = vunpack.c.l.b16 %v5513
      %v5546 = vunpack.c.l.b16 %v5514
      %v5547 = vunpack.c.l.b16 %v5515
      %v5548 = vunpack.c.l.b16 %v5516
      %v5549 = vunpack.c.l.b16 %v5517
      %v5550 = vunpack.c.l.b16 %v5518
      %v5551 = vunpack.c.l.b16 %v5519
      %v5552 = vunpack.c.l.b16 %v5520
      %v5553 = vunpack.c.l.b16 %v5521
      %v5554 = vunpack.c.l.b16 %v5522
      %v5555 = vunpack.c.l.b16 %v5523
      %v5556 = vunpack.c.l.b16 %v5524
      %v5557 = vpack.c.b16 %v5542, %v5541
      %v5558 = vpack.c.b16 %v5544, %v5543
      %v5559 = vpack.c.b16 %v5546, %v5545
      %v5560 = vpack.c.b16 %v5548, %v5547
      %v5561 = vpack.c.b16 %v5550, %v5549
      %v5562 = vpack.c.b16 %v5552, %v5551
      %v5563 = vpack.c.b16 %v5554, %v5553
      %v5564 = vpack.c.b16 %v5556, %v5555
      %5573 = vmatpush.bf16.msra.mxu0 %v5564
      %5574 = vmatpush.bf16.msra.mxu0 %v5563
      %5575 = vmatpush.bf16.msra.mxu0 %v5562
      %5576 = vmatpush.bf16.msra.mxu0 %v5561
      %5577 = vmatpush.bf16.msra.mxu0 %v5560
      %5578 = vmatpush.bf16.msra.mxu0 %v5559
      %5579 = vmatpush.bf16.msra.mxu0 %v5558
      %5580 = vmatpush.bf16.msra.mxu0 %v5557
      %5581 = vmatmul.bf16.gmra.mxu0 %v5507
      %v5582 = vpop.f32.mrf.mxu0
      %v5583 = vadd.f32 0.0, %v5582
      %v5584 = vpop.f32.mrf.mxu0
      %v5585 = vadd.f32 0.0, %v5584
      %5586 = vdwg.mxu0
      %v5587 = vadd.f32 %v5480, %v5583
      %v5588 = vadd.f32 %v5481, %v5585
      %s5589 = scalar_lea.vmem %s31, 56
      %v5590 = vld [vmem:[%s5589] sm:$0xf]
      %v5591 = vld [vmem:[%s5589 + $0x4] sm:$0xf]
      %v5594 = vunpack.c.l.b16 %v5590
      %v5595 = vunpack.c.l.b16 %v5591
      %v5596 = vpack.c.b16 %v5595, %v5594
      %v5598 = vsel %vm2927, %v5596, 0
      %5600 = vmatpush.bf16.msra.mxu0 0
      %5601 = vmatpush.bf16.msra.mxu0 0
      %5602 = vmatpush.bf16.msra.mxu0 0
      %5603 = vmatpush.bf16.msra.mxu0 0
      %5604 = vmatpush.bf16.msra.mxu0 %v4845
      %5605 = vmatpush.bf16.msra.mxu0 %v4844
      %5606 = vmatpush.bf16.msra.mxu0 %v4843
      %5607 = vmatpush.bf16.msra.mxu0 %v4842
      %5608 = vmatmul.bf16.gmra.mxu0 %v5598
      %v5609 = vpop.f32.mrf.mxu0
      %v5610 = vadd.f32 0.0, %v5609
      %v5611 = vpop.f32.mrf.mxu0
      %v5612 = vadd.f32 0.0, %v5611
      %5613 = vdwg.mxu0
      %v5614 = vpack.c.bf16 %v5612, %v5610
      %s5615 = scalar_lea.vmem %s33, 448
      %v5616 = vld [vmem:[%s5615] sm:$0xf]
      %v5617 = vld [vmem:[%s5615 + $0x4] sm:$0xf]
      %v5618 = vld [vmem:[%s5615 + $0x8] sm:$0xf]
      %v5619 = vld [vmem:[%s5615 + $0xc] sm:$0xf]
      %v5620 = vld [vmem:[%s5615 + $0x10] sm:$0xf]
      %v5621 = vld [vmem:[%s5615 + $0x14] sm:$0xf]
      %v5622 = vld [vmem:[%s5615 + $0x18] sm:$0xf]
      %v5623 = vld [vmem:[%s5615 + $0x1c] sm:$0xf]
      %v5624 = vld [vmem:[%s5615 + $0x20] sm:$0xf]
      %v5625 = vld [vmem:[%s5615 + $0x24] sm:$0xf]
      %v5626 = vld [vmem:[%s5615 + $0x28] sm:$0xf]
      %v5627 = vld [vmem:[%s5615 + $0x2c] sm:$0xf]
      %v5628 = vld [vmem:[%s5615 + $0x30] sm:$0xf]
      %v5629 = vld [vmem:[%s5615 + $0x34] sm:$0xf]
      %v5630 = vld [vmem:[%s5615 + $0x38] sm:$0xf]
      %v5631 = vld [vmem:[%s5615 + $0x3c] sm:$0xf]
      %v5648 = vunpack.c.l.b16 %v5616
      %v5649 = vunpack.c.l.b16 %v5617
      %v5650 = vunpack.c.l.b16 %v5618
      %v5651 = vunpack.c.l.b16 %v5619
      %v5652 = vunpack.c.l.b16 %v5620
      %v5653 = vunpack.c.l.b16 %v5621
      %v5654 = vunpack.c.l.b16 %v5622
      %v5655 = vunpack.c.l.b16 %v5623
      %v5656 = vunpack.c.l.b16 %v5624
      %v5657 = vunpack.c.l.b16 %v5625
      %v5658 = vunpack.c.l.b16 %v5626
      %v5659 = vunpack.c.l.b16 %v5627
      %v5660 = vunpack.c.l.b16 %v5628
      %v5661 = vunpack.c.l.b16 %v5629
      %v5662 = vunpack.c.l.b16 %v5630
      %v5663 = vunpack.c.l.b16 %v5631
      %v5664 = vpack.c.b16 %v5649, %v5648
      %v5665 = vpack.c.b16 %v5651, %v5650
      %v5666 = vpack.c.b16 %v5653, %v5652
      %v5667 = vpack.c.b16 %v5655, %v5654
      %v5668 = vpack.c.b16 %v5657, %v5656
      %v5669 = vpack.c.b16 %v5659, %v5658
      %v5670 = vpack.c.b16 %v5661, %v5660
      %v5671 = vpack.c.b16 %v5663, %v5662
      %5680 = vmatpush.bf16.msra.mxu0 %v5671
      %5681 = vmatpush.bf16.msra.mxu0 %v5670
      %5682 = vmatpush.bf16.msra.mxu0 %v5669
      %5683 = vmatpush.bf16.msra.mxu0 %v5668
      %5684 = vmatpush.bf16.msra.mxu0 %v5667
      %5685 = vmatpush.bf16.msra.mxu0 %v5666
      %5686 = vmatpush.bf16.msra.mxu0 %v5665
      %5687 = vmatpush.bf16.msra.mxu0 %v5664
      %5688 = vmatmul.bf16.gmra.mxu0 %v5614
      %v5689 = vpop.f32.mrf.mxu0
      %v5690 = vadd.f32 0.0, %v5689
      %v5691 = vpop.f32.mrf.mxu0
      %v5692 = vadd.f32 0.0, %v5691
      %5693 = vdwg.mxu0
      %v5694 = vadd.f32 %v5587, %v5690
      %v5695 = vadd.f32 %v5588, %v5692
      %s5696 = scalar_lea.vmem %s31, 64
      %v5697 = vld [vmem:[%s5696] sm:$0xf]
      %v5698 = vld [vmem:[%s5696 + $0x4] sm:$0xf]
      %v5701 = vunpack.c.l.b16 %v5697
      %v5702 = vunpack.c.l.b16 %v5698
      %v5703 = vpack.c.b16 %v5702, %v5701
      %v5705 = vsel %vm2927, %v5703, 0
      %5707 = vmatpush.bf16.msra.mxu0 0
      %5708 = vmatpush.bf16.msra.mxu0 0
      %5709 = vmatpush.bf16.msra.mxu0 0
      %5710 = vmatpush.bf16.msra.mxu0 0
      %5711 = vmatpush.bf16.msra.mxu0 %v4845
      %5712 = vmatpush.bf16.msra.mxu0 %v4844
      %5713 = vmatpush.bf16.msra.mxu0 %v4843
      %5714 = vmatpush.bf16.msra.mxu0 %v4842
      %5715 = vmatmul.bf16.gmra.mxu0 %v5705
      %v5716 = vpop.f32.mrf.mxu0
      %v5717 = vadd.f32 0.0, %v5716
      %v5718 = vpop.f32.mrf.mxu0
      %v5719 = vadd.f32 0.0, %v5718
      %5720 = vdwg.mxu0
      %v5721 = vpack.c.bf16 %v5719, %v5717
      %s5722 = scalar_lea.vmem %s33, 512
      %v5723 = vld [vmem:[%s5722] sm:$0xf]
      %v5724 = vld [vmem:[%s5722 + $0x4] sm:$0xf]
      %v5725 = vld [vmem:[%s5722 + $0x8] sm:$0xf]
      %v5726 = vld [vmem:[%s5722 + $0xc] sm:$0xf]
      %v5727 = vld [vmem:[%s5722 + $0x10] sm:$0xf]
      %v5728 = vld [vmem:[%s5722 + $0x14] sm:$0xf]
      %v5729 = vld [vmem:[%s5722 + $0x18] sm:$0xf]
      %v5730 = vld [vmem:[%s5722 + $0x1c] sm:$0xf]
      %v5731 = vld [vmem:[%s5722 + $0x20] sm:$0xf]
      %v5732 = vld [vmem:[%s5722 + $0x24] sm:$0xf]
      %v5733 = vld [vmem:[%s5722 + $0x28] sm:$0xf]
      %v5734 = vld [vmem:[%s5722 + $0x2c] sm:$0xf]
      %v5735 = vld [vmem:[%s5722 + $0x30] sm:$0xf]
      %v5736 = vld [vmem:[%s5722 + $0x34] sm:$0xf]
      %v5737 = vld [vmem:[%s5722 + $0x38] sm:$0xf]
      %v5738 = vld [vmem:[%s5722 + $0x3c] sm:$0xf]
      %v5755 = vunpack.c.l.b16 %v5723
      %v5756 = vunpack.c.l.b16 %v5724
      %v5757 = vunpack.c.l.b16 %v5725
      %v5758 = vunpack.c.l.b16 %v5726
      %v5759 = vunpack.c.l.b16 %v5727
      %v5760 = vunpack.c.l.b16 %v5728
      %v5761 = vunpack.c.l.b16 %v5729
      %v5762 = vunpack.c.l.b16 %v5730
      %v5763 = vunpack.c.l.b16 %v5731
      %v5764 = vunpack.c.l.b16 %v5732
      %v5765 = vunpack.c.l.b16 %v5733
      %v5766 = vunpack.c.l.b16 %v5734
      %v5767 = vunpack.c.l.b16 %v5735
      %v5768 = vunpack.c.l.b16 %v5736
      %v5769 = vunpack.c.l.b16 %v5737
      %v5770 = vunpack.c.l.b16 %v5738
      %v5771 = vpack.c.b16 %v5756, %v5755
      %v5772 = vpack.c.b16 %v5758, %v5757
      %v5773 = vpack.c.b16 %v5760, %v5759
      %v5774 = vpack.c.b16 %v5762, %v5761
      %v5775 = vpack.c.b16 %v5764, %v5763
      %v5776 = vpack.c.b16 %v5766, %v5765
      %v5777 = vpack.c.b16 %v5768, %v5767
      %v5778 = vpack.c.b16 %v5770, %v5769
      %5787 = vmatpush.bf16.msra.mxu0 %v5778
      %5788 = vmatpush.bf16.msra.mxu0 %v5777
      %5789 = vmatpush.bf16.msra.mxu0 %v5776
      %5790 = vmatpush.bf16.msra.mxu0 %v5775
      %5791 = vmatpush.bf16.msra.mxu0 %v5774
      %5792 = vmatpush.bf16.msra.mxu0 %v5773
      %5793 = vmatpush.bf16.msra.mxu0 %v5772
      %5794 = vmatpush.bf16.msra.mxu0 %v5771
      %5795 = vmatmul.bf16.gmra.mxu0 %v5721
      %v5796 = vpop.f32.mrf.mxu0
      %v5797 = vadd.f32 0.0, %v5796
      %v5798 = vpop.f32.mrf.mxu0
      %v5799 = vadd.f32 0.0, %v5798
      %5800 = vdwg.mxu0
      %v5801 = vadd.f32 %v5694, %v5797
      %v5802 = vadd.f32 %v5695, %v5799
      %v5803 = vld [vmem:[%s35] sm:$0x1]
      %v5805 = vperm.slane %v5803, 0
      %v5807 = vadd.f32 %v5801, %v5805
      %v5808 = vadd.f32 %v5802, %v5805
      %v5809 = vmax.f32 %v5807, 0.0
      %v5810 = vmax.f32 %v5808, 0.0
      %v5811 = vpack.c.bf16 %v5810, %v5809
      %5812 = vmatpush.bf16.msra.mxu0 0
      %5813 = vmatpush.bf16.msra.mxu0 0
      %5814 = vmatpush.bf16.msra.mxu0 0
      %5815 = vmatpush.bf16.msra.mxu0 0
      %5816 = vmatpush.bf16.msra.mxu0 %v4736
      %5817 = vmatpush.bf16.msra.mxu0 %v4735
      %5818 = vmatpush.bf16.msra.mxu0 %v4734
      %5819 = vmatpush.bf16.msra.mxu0 %v4733
      %5820 = vmatmul.bf16.gmra.mxu0 %v5277
      %v5821 = vpop.f32.mrf.mxu0
      %v5822 = vadd.f32 0.0, %v5821
      %v5823 = vpop.f32.mrf.mxu0
      %v5824 = vadd.f32 0.0, %v5823
      %5825 = vdwg.mxu0
      %v5826 = vpack.c.bf16 %v5824, %v5822
      %v5827 = vld [vmem:[%s41] sm:$0xf]
      %v5828 = vld [vmem:[%s41 + $0x4] sm:$0xf]
      %v5829 = vld [vmem:[%s41 + $0x8] sm:$0xf]
      %v5830 = vld [vmem:[%s41 + $0xc] sm:$0xf]
      %v5831 = vld [vmem:[%s41 + $0x10] sm:$0xf]
      %v5832 = vld [vmem:[%s41 + $0x14] sm:$0xf]
      %v5833 = vld [vmem:[%s41 + $0x18] sm:$0xf]
      %v5834 = vld [vmem:[%s41 + $0x1c] sm:$0xf]
      %v5835 = vld [vmem:[%s41 + $0x20] sm:$0xf]
      %v5836 = vld [vmem:[%s41 + $0x24] sm:$0xf]
      %v5837 = vld [vmem:[%s41 + $0x28] sm:$0xf]
      %v5838 = vld [vmem:[%s41 + $0x2c] sm:$0xf]
      %v5839 = vld [vmem:[%s41 + $0x30] sm:$0xf]
      %v5840 = vld [vmem:[%s41 + $0x34] sm:$0xf]
      %v5841 = vld [vmem:[%s41 + $0x38] sm:$0xf]
      %v5842 = vld [vmem:[%s41 + $0x3c] sm:$0xf]
      %v5843 = vld [vmem:[%s43] sm:$0x1]
      %v5845 = vperm.slane %v5843, 0
      %v5863 = vunpack.c.l.b16 %v5827
      %v5864 = vunpack.c.l.b16 %v5828
      %v5865 = vunpack.c.l.b16 %v5829
      %v5866 = vunpack.c.l.b16 %v5830
      %v5867 = vunpack.c.l.b16 %v5831
      %v5868 = vunpack.c.l.b16 %v5832
      %v5869 = vunpack.c.l.b16 %v5833
      %v5870 = vunpack.c.l.b16 %v5834
      %v5871 = vunpack.c.l.b16 %v5835
      %v5872 = vunpack.c.l.b16 %v5836
      %v5873 = vunpack.c.l.b16 %v5837
      %v5874 = vunpack.c.l.b16 %v5838
      %v5875 = vunpack.c.l.b16 %v5839
      %v5876 = vunpack.c.l.b16 %v5840
      %v5877 = vunpack.c.l.b16 %v5841
      %v5878 = vunpack.c.l.b16 %v5842
      %v5879 = vpack.c.b16 %v5864, %v5863
      %v5880 = vpack.c.b16 %v5866, %v5865
      %v5881 = vpack.c.b16 %v5868, %v5867
      %v5882 = vpack.c.b16 %v5870, %v5869
      %v5883 = vpack.c.b16 %v5872, %v5871
      %v5884 = vpack.c.b16 %v5874, %v5873
      %v5885 = vpack.c.b16 %v5876, %v5875
      %v5886 = vpack.c.b16 %v5878, %v5877
      %5895 = vmatpush.bf16.msra.mxu0 %v5886
      %5896 = vmatpush.bf16.msra.mxu0 %v5885
      %5897 = vmatpush.bf16.msra.mxu0 %v5884
      %5898 = vmatpush.bf16.msra.mxu0 %v5883
      %5899 = vmatpush.bf16.msra.mxu0 %v5882
      %5900 = vmatpush.bf16.msra.mxu0 %v5881
      %5901 = vmatpush.bf16.msra.mxu0 %v5880
      %5902 = vmatpush.bf16.msra.mxu0 %v5879
      %5903 = vmatmul.bf16.gmra.mxu0 %v5826
      %v5904 = vpop.f32.mrf.mxu0
      %v5905 = vadd.f32 %v5845, %v5904
      %v5906 = vpop.f32.mrf.mxu0
      %v5907 = vadd.f32 %v5845, %v5906
      %5908 = vdwg.mxu0
      %v5909 = vld [vmem:[%s37] sm:$0xf]
      %v5910 = vld [vmem:[%s37 + $0x4] sm:$0xf]
      %v5911 = vld [vmem:[%s37 + $0x8] sm:$0xf]
      %v5912 = vld [vmem:[%s37 + $0xc] sm:$0xf]
      %v5913 = vld [vmem:[%s37 + $0x10] sm:$0xf]
      %v5914 = vld [vmem:[%s37 + $0x14] sm:$0xf]
      %v5915 = vld [vmem:[%s37 + $0x18] sm:$0xf]
      %v5916 = vld [vmem:[%s37 + $0x1c] sm:$0xf]
      %v5917 = vld [vmem:[%s37 + $0x20] sm:$0xf]
      %v5918 = vld [vmem:[%s37 + $0x24] sm:$0xf]
      %v5919 = vld [vmem:[%s37 + $0x28] sm:$0xf]
      %v5920 = vld [vmem:[%s37 + $0x2c] sm:$0xf]
      %v5921 = vld [vmem:[%s37 + $0x30] sm:$0xf]
      %v5922 = vld [vmem:[%s37 + $0x34] sm:$0xf]
      %v5923 = vld [vmem:[%s37 + $0x38] sm:$0xf]
      %v5924 = vld [vmem:[%s37 + $0x3c] sm:$0xf]
      %v5925 = vld [vmem:[%s39] sm:$0x1]
      %v5927 = vperm.slane %v5925, 0
      %v5945 = vunpack.c.l.b16 %v5909
      %v5946 = vunpack.c.l.b16 %v5910
      %v5947 = vunpack.c.l.b16 %v5911
      %v5948 = vunpack.c.l.b16 %v5912
      %v5949 = vunpack.c.l.b16 %v5913
      %v5950 = vunpack.c.l.b16 %v5914
      %v5951 = vunpack.c.l.b16 %v5915
      %v5952 = vunpack.c.l.b16 %v5916
      %v5953 = vunpack.c.l.b16 %v5917
      %v5954 = vunpack.c.l.b16 %v5918
      %v5955 = vunpack.c.l.b16 %v5919
      %v5956 = vunpack.c.l.b16 %v5920
      %v5957 = vunpack.c.l.b16 %v5921
      %v5958 = vunpack.c.l.b16 %v5922
      %v5959 = vunpack.c.l.b16 %v5923
      %v5960 = vunpack.c.l.b16 %v5924
      %v5961 = vpack.c.b16 %v5946, %v5945
      %v5962 = vpack.c.b16 %v5948, %v5947
      %v5963 = vpack.c.b16 %v5950, %v5949
      %v5964 = vpack.c.b16 %v5952, %v5951
      %v5965 = vpack.c.b16 %v5954, %v5953
      %v5966 = vpack.c.b16 %v5956, %v5955
      %v5967 = vpack.c.b16 %v5958, %v5957
      %v5968 = vpack.c.b16 %v5960, %v5959
      %5977 = vmatpush.bf16.msra.mxu0 %v5968
      %5978 = vmatpush.bf16.msra.mxu0 %v5967
      %5979 = vmatpush.bf16.msra.mxu0 %v5966
      %5980 = vmatpush.bf16.msra.mxu0 %v5965
      %5981 = vmatpush.bf16.msra.mxu0 %v5964
      %5982 = vmatpush.bf16.msra.mxu0 %v5963
      %5983 = vmatpush.bf16.msra.mxu0 %v5962
      %5984 = vmatpush.bf16.msra.mxu0 %v5961
      %5985 = vmatmul.bf16.gmra.mxu0 %v5811
      %v5986 = vpop.f32.mrf.mxu0
      %v5987 = vadd.f32 %v5927, %v5986
      %v5988 = vpop.f32.mrf.mxu0
      %v5989 = vadd.f32 %v5927, %v5988
      %5990 = vdwg.mxu0
      %v5991 = vadd.f32 %v5987, %v5905
      %v5992 = vadd.f32 %v5989, %v5907
      %v5993 = vmax.f32 %v5991, 0.0
      %v5994 = vmax.f32 %v5992, 0.0
      %v5995 = vpack.c.bf16 %v5994, %v5993
      %v5996 = vld [vmem:[%s45] sm:$0xf]
      %v5997 = vld [vmem:[%s45 + $0x4] sm:$0xf]
      %v5998 = vld [vmem:[%s45 + $0x8] sm:$0xf]
      %v5999 = vld [vmem:[%s45 + $0xc] sm:$0xf]
      %v6000 = vld [vmem:[%s45 + $0x10] sm:$0xf]
      %v6001 = vld [vmem:[%s45 + $0x14] sm:$0xf]
      %v6002 = vld [vmem:[%s45 + $0x18] sm:$0xf]
      %v6003 = vld [vmem:[%s45 + $0x1c] sm:$0xf]
      %v6004 = vld [vmem:[%s45 + $0x20] sm:$0xf]
      %v6005 = vld [vmem:[%s45 + $0x24] sm:$0xf]
      %v6006 = vld [vmem:[%s45 + $0x28] sm:$0xf]
      %v6007 = vld [vmem:[%s45 + $0x2c] sm:$0xf]
      %v6008 = vld [vmem:[%s45 + $0x30] sm:$0xf]
      %v6009 = vld [vmem:[%s45 + $0x34] sm:$0xf]
      %v6010 = vld [vmem:[%s45 + $0x38] sm:$0xf]
      %v6011 = vld [vmem:[%s45 + $0x3c] sm:$0xf]
      %v6012 = vld [vmem:[%s47] sm:$0x1]
      %v6014 = vperm.slane %v6012, 0
      %v6032 = vunpack.c.l.b16 %v5996
      %v6033 = vunpack.c.l.b16 %v5997
      %v6034 = vunpack.c.l.b16 %v5998
      %v6035 = vunpack.c.l.b16 %v5999
      %v6036 = vunpack.c.l.b16 %v6000
      %v6037 = vunpack.c.l.b16 %v6001
      %v6038 = vunpack.c.l.b16 %v6002
      %v6039 = vunpack.c.l.b16 %v6003
      %v6040 = vunpack.c.l.b16 %v6004
      %v6041 = vunpack.c.l.b16 %v6005
      %v6042 = vunpack.c.l.b16 %v6006
      %v6043 = vunpack.c.l.b16 %v6007
      %v6044 = vunpack.c.l.b16 %v6008
      %v6045 = vunpack.c.l.b16 %v6009
      %v6046 = vunpack.c.l.b16 %v6010
      %v6047 = vunpack.c.l.b16 %v6011
      %v6048 = vpack.c.b16 %v6033, %v6032
      %v6049 = vpack.c.b16 %v6035, %v6034
      %v6050 = vpack.c.b16 %v6037, %v6036
      %v6051 = vpack.c.b16 %v6039, %v6038
      %v6052 = vpack.c.b16 %v6041, %v6040
      %v6053 = vpack.c.b16 %v6043, %v6042
      %v6054 = vpack.c.b16 %v6045, %v6044
      %v6055 = vpack.c.b16 %v6047, %v6046
      %6064 = vmatpush.bf16.msra.mxu0 %v6055
      %6065 = vmatpush.bf16.msra.mxu0 %v6054
      %6066 = vmatpush.bf16.msra.mxu0 %v6053
      %6067 = vmatpush.bf16.msra.mxu0 %v6052
      %6068 = vmatpush.bf16.msra.mxu0 %v6051
      %6069 = vmatpush.bf16.msra.mxu0 %v6050
      %6070 = vmatpush.bf16.msra.mxu0 %v6049
      %6071 = vmatpush.bf16.msra.mxu0 %v6048
      %6072 = vmatmul.bf16.gmra.mxu0 %v5995
      %v6073 = vpop.f32.mrf.mxu0
      %v6074 = vadd.f32 %v6014, %v6073
      %v6075 = vpop.f32.mrf.mxu0
      %v6076 = vadd.f32 %v6014, %v6075
      %6077 = vdwg.mxu0
      %v6078 = vmax.f32 %v6074, 0.0
      %v6079 = vmax.f32 %v6076, 0.0
      %v6080 = vpack.c.bf16 %v6079, %v6078
      %v6081 = vld [vmem:[%s49] sm:$0x3]
      %vm6082 = vcmask 130048
      %v6084 = vsel %vm6082, %v6081, 0
      %6086 = vmatpush.bf16.msra.mxu0 0
      %6087 = vmatpush.bf16.msra.mxu0 0
      %6088 = vmatpush.bf16.msra.mxu0 0
      %6089 = vmatpush.bf16.msra.mxu0 0
      %6090 = vmatpush.bf16.msra.mxu0 0
      %6091 = vmatpush.bf16.msra.mxu0 0
      %6092 = vmatpush.bf16.msra.mxu0 0
      %6093 = vmatpush.bf16.msra.mxu0 %v6080
      %6094 = vmatmul.bf16.gmra.mxu0 %v6084
      %v6095 = vpop.f32.mrf.mxu0
      %v6096 = vadd.f32 0.0, %v6095
      %v6097 = vpop.f32.mrf.mxu0
      %6098 = vdwg.mxu0
      %v6099 = vpack.c.bf16 %v6096, %v6096
      %v6100 = vld [vmem:[%s51] sm:$0xf]
      %v6101 = vld [vmem:[%s51 + $0x4] sm:$0xf]
      %v6102 = vld [vmem:[%s51 + $0x8] sm:$0xf]
      %v6103 = vld [vmem:[%s51 + $0xc] sm:$0xf]
      %v6104 = vld [vmem:[%s51 + $0x10] sm:$0xf]
      %v6105 = vld [vmem:[%s51 + $0x14] sm:$0xf]
      %v6106 = vld [vmem:[%s51 + $0x18] sm:$0xf]
      %v6107 = vld [vmem:[%s51 + $0x1c] sm:$0xf]
      %v6108 = vld [vmem:[%s51 + $0x20] sm:$0xf]
      %v6109 = vld [vmem:[%s51 + $0x24] sm:$0xf]
      %v6110 = vld [vmem:[%s51 + $0x28] sm:$0xf]
      %v6111 = vld [vmem:[%s51 + $0x2c] sm:$0xf]
      %v6112 = vld [vmem:[%s51 + $0x30] sm:$0xf]
      %v6113 = vld [vmem:[%s51 + $0x34] sm:$0xf]
      %v6114 = vld [vmem:[%s51 + $0x38] sm:$0xf]
      %v6115 = vld [vmem:[%s51 + $0x3c] sm:$0xf]
      %s6116 = scalar_lea.vmem %s49, 2
      %v6117 = vld [vmem:[%s6116] sm:$0x3]
      %v6119 = vsel %vm6082, %v6117, 0
      %6121 = vmatpush.bf16.msra.mxu0 0
      %6122 = vmatpush.bf16.msra.mxu0 0
      %6123 = vmatpush.bf16.msra.mxu0 0
      %6124 = vmatpush.bf16.msra.mxu0 0
      %6125 = vmatpush.bf16.msra.mxu0 0
      %6126 = vmatpush.bf16.msra.mxu0 0
      %6127 = vmatpush.bf16.msra.mxu0 0
      %6128 = vmatpush.bf16.msra.mxu0 %v6080
      %6129 = vmatmul.bf16.gmra.mxu0 %v6119
      %v6130 = vpop.f32.mrf.mxu0
      %v6131 = vadd.f32 0.0, %v6130
      %v6132 = vpop.f32.mrf.mxu0
      %6133 = vdwg.mxu0
      %v6134 = vpack.c.bf16 %v6131, %v6131
      %s6135 = scalar_lea.vmem %s51, 64
      %v6136 = vld [vmem:[%s6135] sm:$0xf]
      %v6137 = vld [vmem:[%s6135 + $0x4] sm:$0xf]
      %v6138 = vld [vmem:[%s6135 + $0x8] sm:$0xf]
      %v6139 = vld [vmem:[%s6135 + $0xc] sm:$0xf]
      %v6140 = vld [vmem:[%s6135 + $0x10] sm:$0xf]
      %v6141 = vld [vmem:[%s6135 + $0x14] sm:$0xf]
      %v6142 = vld [vmem:[%s6135 + $0x18] sm:$0xf]
      %v6143 = vld [vmem:[%s6135 + $0x1c] sm:$0xf]
      %v6144 = vld [vmem:[%s6135 + $0x20] sm:$0xf]
      %v6145 = vld [vmem:[%s6135 + $0x24] sm:$0xf]
      %v6146 = vld [vmem:[%s6135 + $0x28] sm:$0xf]
      %v6147 = vld [vmem:[%s6135 + $0x2c] sm:$0xf]
      %v6148 = vld [vmem:[%s6135 + $0x30] sm:$0xf]
      %v6149 = vld [vmem:[%s6135 + $0x34] sm:$0xf]
      %v6150 = vld [vmem:[%s6135 + $0x38] sm:$0xf]
      %v6151 = vld [vmem:[%s6135 + $0x3c] sm:$0xf]
      %v6168 = vunpack.c.l.b16 %v6136
      %v6169 = vunpack.c.l.b16 %v6137
      %v6170 = vunpack.c.l.b16 %v6138
      %v6171 = vunpack.c.l.b16 %v6139
      %v6172 = vunpack.c.l.b16 %v6140
      %v6173 = vunpack.c.l.b16 %v6141
      %v6174 = vunpack.c.l.b16 %v6142
      %v6175 = vunpack.c.l.b16 %v6143
      %v6176 = vunpack.c.l.b16 %v6144
      %v6177 = vunpack.c.l.b16 %v6145
      %v6178 = vunpack.c.l.b16 %v6146
      %v6179 = vunpack.c.l.b16 %v6147
      %v6180 = vunpack.c.l.b16 %v6148
      %v6181 = vunpack.c.l.b16 %v6149
      %v6182 = vunpack.c.l.b16 %v6150
      %v6183 = vunpack.c.l.b16 %v6151
      %v6184 = vpack.c.b16 %v6169, %v6168
      %v6185 = vpack.c.b16 %v6171, %v6170
      %v6186 = vpack.c.b16 %v6173, %v6172
      %v6187 = vpack.c.b16 %v6175, %v6174
      %v6188 = vpack.c.b16 %v6177, %v6176
      %v6189 = vpack.c.b16 %v6179, %v6178
      %v6190 = vpack.c.b16 %v6181, %v6180
      %v6191 = vpack.c.b16 %v6183, %v6182
      %6200 = vmatpush.bf16.msra.mxu0 %v6191
      %6201 = vmatpush.bf16.msra.mxu0 %v6190
      %6202 = vmatpush.bf16.msra.mxu0 %v6189
      %6203 = vmatpush.bf16.msra.mxu0 %v6188
      %6204 = vmatpush.bf16.msra.mxu0 %v6187
      %6205 = vmatpush.bf16.msra.mxu0 %v6186
      %6206 = vmatpush.bf16.msra.mxu0 %v6185
      %6207 = vmatpush.bf16.msra.mxu0 %v6184
      %6208 = vmatmul.bf16.gmra.mxu0 %v6134
      %v6209 = vpop.f32.mrf.mxu0
      %v6210 = vadd.f32 0.0, %v6209
      %v6211 = vpop.f32.mrf.mxu0
      %6212 = vdwg.mxu0
      %v6229 = vunpack.c.l.b16 %v6100
      %v6230 = vunpack.c.l.b16 %v6101
      %v6231 = vunpack.c.l.b16 %v6102
      %v6232 = vunpack.c.l.b16 %v6103
      %v6233 = vunpack.c.l.b16 %v6104
      %v6234 = vunpack.c.l.b16 %v6105
      %v6235 = vunpack.c.l.b16 %v6106
      %v6236 = vunpack.c.l.b16 %v6107
      %v6237 = vunpack.c.l.b16 %v6108
      %v6238 = vunpack.c.l.b16 %v6109
      %v6239 = vunpack.c.l.b16 %v6110
      %v6240 = vunpack.c.l.b16 %v6111
      %v6241 = vunpack.c.l.b16 %v6112
      %v6242 = vunpack.c.l.b16 %v6113
      %v6243 = vunpack.c.l.b16 %v6114
      %v6244 = vunpack.c.l.b16 %v6115
      %v6245 = vpack.c.b16 %v6230, %v6229
      %v6246 = vpack.c.b16 %v6232, %v6231
      %v6247 = vpack.c.b16 %v6234, %v6233
      %v6248 = vpack.c.b16 %v6236, %v6235
      %v6249 = vpack.c.b16 %v6238, %v6237
      %v6250 = vpack.c.b16 %v6240, %v6239
      %v6251 = vpack.c.b16 %v6242, %v6241
      %v6252 = vpack.c.b16 %v6244, %v6243
      %6261 = vmatpush.bf16.msra.mxu0 %v6252
      %6262 = vmatpush.bf16.msra.mxu0 %v6251
      %6263 = vmatpush.bf16.msra.mxu0 %v6250
      %6264 = vmatpush.bf16.msra.mxu0 %v6249
      %6265 = vmatpush.bf16.msra.mxu0 %v6248
      %6266 = vmatpush.bf16.msra.mxu0 %v6247
      %6267 = vmatpush.bf16.msra.mxu0 %v6246
      %6268 = vmatpush.bf16.msra.mxu0 %v6245
      %6269 = vmatmul.bf16.gmra.mxu0 %v6099
      %v6270 = vpop.f32.mrf.mxu0
      %v6271 = vadd.f32 %v6210, %v6270
      %v6272 = vpop.f32.mrf.mxu0
      %6273 = vdwg.mxu0
      %s6274 = scalar_lea.vmem %s49, 4
      %v6275 = vld [vmem:[%s6274] sm:$0x3]
      %v6277 = vsel %vm6082, %v6275, 0
      %6279 = vmatpush.bf16.msra.mxu0 0
      %6280 = vmatpush.bf16.msra.mxu0 0
      %6281 = vmatpush.bf16.msra.mxu0 0
      %6282 = vmatpush.bf16.msra.mxu0 0
      %6283 = vmatpush.bf16.msra.mxu0 0
      %6284 = vmatpush.bf16.msra.mxu0 0
      %6285 = vmatpush.bf16.msra.mxu0 0
      %6286 = vmatpush.bf16.msra.mxu0 %v6080
      %6287 = vmatmul.bf16.gmra.mxu0 %v6277
      %v6288 = vpop.f32.mrf.mxu0
      %v6289 = vadd.f32 0.0, %v6288
      %v6290 = vpop.f32.mrf.mxu0
      %6291 = vdwg.mxu0
      %v6292 = vpack.c.bf16 %v6289, %v6289
      %s6293 = scalar_lea.vmem %s51, 128
      %v6294 = vld [vmem:[%s6293] sm:$0xf]
      %v6295 = vld [vmem:[%s6293 + $0x4] sm:$0xf]
      %v6296 = vld [vmem:[%s6293 + $0x8] sm:$0xf]
      %v6297 = vld [vmem:[%s6293 + $0xc] sm:$0xf]
      %v6298 = vld [vmem:[%s6293 + $0x10] sm:$0xf]
      %v6299 = vld [vmem:[%s6293 + $0x14] sm:$0xf]
      %v6300 = vld [vmem:[%s6293 + $0x18] sm:$0xf]
      %v6301 = vld [vmem:[%s6293 + $0x1c] sm:$0xf]
      %v6302 = vld [vmem:[%s6293 + $0x20] sm:$0xf]
      %v6303 = vld [vmem:[%s6293 + $0x24] sm:$0xf]
      %v6304 = vld [vmem:[%s6293 + $0x28] sm:$0xf]
      %v6305 = vld [vmem:[%s6293 + $0x2c] sm:$0xf]
      %v6306 = vld [vmem:[%s6293 + $0x30] sm:$0xf]
      %v6307 = vld [vmem:[%s6293 + $0x34] sm:$0xf]
      %v6308 = vld [vmem:[%s6293 + $0x38] sm:$0xf]
      %v6309 = vld [vmem:[%s6293 + $0x3c] sm:$0xf]
      %v6326 = vunpack.c.l.b16 %v6294
      %v6327 = vunpack.c.l.b16 %v6295
      %v6328 = vunpack.c.l.b16 %v6296
      %v6329 = vunpack.c.l.b16 %v6297
      %v6330 = vunpack.c.l.b16 %v6298
      %v6331 = vunpack.c.l.b16 %v6299
      %v6332 = vunpack.c.l.b16 %v6300
      %v6333 = vunpack.c.l.b16 %v6301
      %v6334 = vunpack.c.l.b16 %v6302
      %v6335 = vunpack.c.l.b16 %v6303
      %v6336 = vunpack.c.l.b16 %v6304
      %v6337 = vunpack.c.l.b16 %v6305
      %v6338 = vunpack.c.l.b16 %v6306
      %v6339 = vunpack.c.l.b16 %v6307
      %v6340 = vunpack.c.l.b16 %v6308
      %v6341 = vunpack.c.l.b16 %v6309
      %v6342 = vpack.c.b16 %v6327, %v6326
      %v6343 = vpack.c.b16 %v6329, %v6328
      %v6344 = vpack.c.b16 %v6331, %v6330
      %v6345 = vpack.c.b16 %v6333, %v6332
      %v6346 = vpack.c.b16 %v6335, %v6334
      %v6347 = vpack.c.b16 %v6337, %v6336
      %v6348 = vpack.c.b16 %v6339, %v6338
      %v6349 = vpack.c.b16 %v6341, %v6340
      %6358 = vmatpush.bf16.msra.mxu0 %v6349
      %6359 = vmatpush.bf16.msra.mxu0 %v6348
      %6360 = vmatpush.bf16.msra.mxu0 %v6347
      %6361 = vmatpush.bf16.msra.mxu0 %v6346
      %6362 = vmatpush.bf16.msra.mxu0 %v6345
      %6363 = vmatpush.bf16.msra.mxu0 %v6344
      %6364 = vmatpush.bf16.msra.mxu0 %v6343
      %6365 = vmatpush.bf16.msra.mxu0 %v6342
      %6366 = vmatmul.bf16.gmra.mxu0 %v6292
      %v6367 = vpop.f32.mrf.mxu0
      %v6368 = vadd.f32 0.0, %v6367
      %v6369 = vpop.f32.mrf.mxu0
      %6370 = vdwg.mxu0
      %v6371 = vadd.f32 %v6271, %v6368
      %s6372 = scalar_lea.vmem %s49, 6
      %v6373 = vld [vmem:[%s6372] sm:$0x3]
      %v6375 = vsel %vm6082, %v6373, 0
      %6377 = vmatpush.bf16.msra.mxu0 0
      %6378 = vmatpush.bf16.msra.mxu0 0
      %6379 = vmatpush.bf16.msra.mxu0 0
      %6380 = vmatpush.bf16.msra.mxu0 0
      %6381 = vmatpush.bf16.msra.mxu0 0
      %6382 = vmatpush.bf16.msra.mxu0 0
      %6383 = vmatpush.bf16.msra.mxu0 0
      %6384 = vmatpush.bf16.msra.mxu0 %v6080
      %6385 = vmatmul.bf16.gmra.mxu0 %v6375
      %v6386 = vpop.f32.mrf.mxu0
      %v6387 = vadd.f32 0.0, %v6386
      %v6388 = vpop.f32.mrf.mxu0
      %6389 = vdwg.mxu0
      %v6390 = vpack.c.bf16 %v6387, %v6387
      %s6391 = scalar_lea.vmem %s51, 192
      %v6392 = vld [vmem:[%s6391] sm:$0xf]
      %v6393 = vld [vmem:[%s6391 + $0x4] sm:$0xf]
      %v6394 = vld [vmem:[%s6391 + $0x8] sm:$0xf]
      %v6395 = vld [vmem:[%s6391 + $0xc] sm:$0xf]
      %v6396 = vld [vmem:[%s6391 + $0x10] sm:$0xf]
      %v6397 = vld [vmem:[%s6391 + $0x14] sm:$0xf]
      %v6398 = vld [vmem:[%s6391 + $0x18] sm:$0xf]
      %v6399 = vld [vmem:[%s6391 + $0x1c] sm:$0xf]
      %v6400 = vld [vmem:[%s6391 + $0x20] sm:$0xf]
      %v6401 = vld [vmem:[%s6391 + $0x24] sm:$0xf]
      %v6402 = vld [vmem:[%s6391 + $0x28] sm:$0xf]
      %v6403 = vld [vmem:[%s6391 + $0x2c] sm:$0xf]
      %v6404 = vld [vmem:[%s6391 + $0x30] sm:$0xf]
      %v6405 = vld [vmem:[%s6391 + $0x34] sm:$0xf]
      %v6406 = vld [vmem:[%s6391 + $0x38] sm:$0xf]
      %v6407 = vld [vmem:[%s6391 + $0x3c] sm:$0xf]
      %v6424 = vunpack.c.l.b16 %v6392
      %v6425 = vunpack.c.l.b16 %v6393
      %v6426 = vunpack.c.l.b16 %v6394
      %v6427 = vunpack.c.l.b16 %v6395
      %v6428 = vunpack.c.l.b16 %v6396
      %v6429 = vunpack.c.l.b16 %v6397
      %v6430 = vunpack.c.l.b16 %v6398
      %v6431 = vunpack.c.l.b16 %v6399
      %v6432 = vunpack.c.l.b16 %v6400
      %v6433 = vunpack.c.l.b16 %v6401
      %v6434 = vunpack.c.l.b16 %v6402
      %v6435 = vunpack.c.l.b16 %v6403
      %v6436 = vunpack.c.l.b16 %v6404
      %v6437 = vunpack.c.l.b16 %v6405
      %v6438 = vunpack.c.l.b16 %v6406
      %v6439 = vunpack.c.l.b16 %v6407
      %v6440 = vpack.c.b16 %v6425, %v6424
      %v6441 = vpack.c.b16 %v6427, %v6426
      %v6442 = vpack.c.b16 %v6429, %v6428
      %v6443 = vpack.c.b16 %v6431, %v6430
      %v6444 = vpack.c.b16 %v6433, %v6432
      %v6445 = vpack.c.b16 %v6435, %v6434
      %v6446 = vpack.c.b16 %v6437, %v6436
      %v6447 = vpack.c.b16 %v6439, %v6438
      %6456 = vmatpush.bf16.msra.mxu0 %v6447
      %6457 = vmatpush.bf16.msra.mxu0 %v6446
      %6458 = vmatpush.bf16.msra.mxu0 %v6445
      %6459 = vmatpush.bf16.msra.mxu0 %v6444
      %6460 = vmatpush.bf16.msra.mxu0 %v6443
      %6461 = vmatpush.bf16.msra.mxu0 %v6442
      %6462 = vmatpush.bf16.msra.mxu0 %v6441
      %6463 = vmatpush.bf16.msra.mxu0 %v6440
      %6464 = vmatmul.bf16.gmra.mxu0 %v6390
      %v6465 = vpop.f32.mrf.mxu0
      %v6466 = vadd.f32 0.0, %v6465
      %v6467 = vpop.f32.mrf.mxu0
      %6468 = vdwg.mxu0
      %v6469 = vadd.f32 %v6371, %v6466
      %s6470 = scalar_lea.vmem %s49, 8
      %v6471 = vld [vmem:[%s6470] sm:$0x3]
      %v6473 = vsel %vm6082, %v6471, 0
      %6475 = vmatpush.bf16.msra.mxu0 0
      %6476 = vmatpush.bf16.msra.mxu0 0
      %6477 = vmatpush.bf16.msra.mxu0 0
      %6478 = vmatpush.bf16.msra.mxu0 0
      %6479 = vmatpush.bf16.msra.mxu0 0
      %6480 = vmatpush.bf16.msra.mxu0 0
      %6481 = vmatpush.bf16.msra.mxu0 0
      %6482 = vmatpush.bf16.msra.mxu0 %v6080
      %6483 = vmatmul.bf16.gmra.mxu0 %v6473
      %v6484 = vpop.f32.mrf.mxu0
      %v6485 = vadd.f32 0.0, %v6484
      %v6486 = vpop.f32.mrf.mxu0
      %6487 = vdwg.mxu0
      %v6488 = vpack.c.bf16 %v6485, %v6485
      %s6489 = scalar_lea.vmem %s51, 256
      %v6490 = vld [vmem:[%s6489] sm:$0xf]
      %v6491 = vld [vmem:[%s6489 + $0x4] sm:$0xf]
      %v6492 = vld [vmem:[%s6489 + $0x8] sm:$0xf]
      %v6493 = vld [vmem:[%s6489 + $0xc] sm:$0xf]
      %v6494 = vld [vmem:[%s6489 + $0x10] sm:$0xf]
      %v6495 = vld [vmem:[%s6489 + $0x14] sm:$0xf]
      %v6496 = vld [vmem:[%s6489 + $0x18] sm:$0xf]
      %v6497 = vld [vmem:[%s6489 + $0x1c] sm:$0xf]
      %v6498 = vld [vmem:[%s6489 + $0x20] sm:$0xf]
      %v6499 = vld [vmem:[%s6489 + $0x24] sm:$0xf]
      %v6500 = vld [vmem:[%s6489 + $0x28] sm:$0xf]
      %v6501 = vld [vmem:[%s6489 + $0x2c] sm:$0xf]
      %v6502 = vld [vmem:[%s6489 + $0x30] sm:$0xf]
      %v6503 = vld [vmem:[%s6489 + $0x34] sm:$0xf]
      %v6504 = vld [vmem:[%s6489 + $0x38] sm:$0xf]
      %v6505 = vld [vmem:[%s6489 + $0x3c] sm:$0xf]
      %v6522 = vunpack.c.l.b16 %v6490
      %v6523 = vunpack.c.l.b16 %v6491
      %v6524 = vunpack.c.l.b16 %v6492
      %v6525 = vunpack.c.l.b16 %v6493
      %v6526 = vunpack.c.l.b16 %v6494
      %v6527 = vunpack.c.l.b16 %v6495
      %v6528 = vunpack.c.l.b16 %v6496
      %v6529 = vunpack.c.l.b16 %v6497
      %v6530 = vunpack.c.l.b16 %v6498
      %v6531 = vunpack.c.l.b16 %v6499
      %v6532 = vunpack.c.l.b16 %v6500
      %v6533 = vunpack.c.l.b16 %v6501
      %v6534 = vunpack.c.l.b16 %v6502
      %v6535 = vunpack.c.l.b16 %v6503
      %v6536 = vunpack.c.l.b16 %v6504
      %v6537 = vunpack.c.l.b16 %v6505
      %v6538 = vpack.c.b16 %v6523, %v6522
      %v6539 = vpack.c.b16 %v6525, %v6524
      %v6540 = vpack.c.b16 %v6527, %v6526
      %v6541 = vpack.c.b16 %v6529, %v6528
      %v6542 = vpack.c.b16 %v6531, %v6530
      %v6543 = vpack.c.b16 %v6533, %v6532
      %v6544 = vpack.c.b16 %v6535, %v6534
      %v6545 = vpack.c.b16 %v6537, %v6536
      %6554 = vmatpush.bf16.msra.mxu0 %v6545
      %6555 = vmatpush.bf16.msra.mxu0 %v6544
      %6556 = vmatpush.bf16.msra.mxu0 %v6543
      %6557 = vmatpush.bf16.msra.mxu0 %v6542
      %6558 = vmatpush.bf16.msra.mxu0 %v6541
      %6559 = vmatpush.bf16.msra.mxu0 %v6540
      %6560 = vmatpush.bf16.msra.mxu0 %v6539
      %6561 = vmatpush.bf16.msra.mxu0 %v6538
      %6562 = vmatmul.bf16.gmra.mxu0 %v6488
      %v6563 = vpop.f32.mrf.mxu0
      %v6564 = vadd.f32 0.0, %v6563
      %v6565 = vpop.f32.mrf.mxu0
      %6566 = vdwg.mxu0
      %v6567 = vadd.f32 %v6469, %v6564
      %s6568 = scalar_lea.vmem %s49, 10
      %v6569 = vld [vmem:[%s6568] sm:$0x3]
      %v6571 = vsel %vm6082, %v6569, 0
      %6573 = vmatpush.bf16.msra.mxu0 0
      %6574 = vmatpush.bf16.msra.mxu0 0
      %6575 = vmatpush.bf16.msra.mxu0 0
      %6576 = vmatpush.bf16.msra.mxu0 0
      %6577 = vmatpush.bf16.msra.mxu0 0
      %6578 = vmatpush.bf16.msra.mxu0 0
      %6579 = vmatpush.bf16.msra.mxu0 0
      %6580 = vmatpush.bf16.msra.mxu0 %v6080
      %6581 = vmatmul.bf16.gmra.mxu0 %v6571
      %v6582 = vpop.f32.mrf.mxu0
      %v6583 = vadd.f32 0.0, %v6582
      %v6584 = vpop.f32.mrf.mxu0
      %6585 = vdwg.mxu0
      %v6586 = vpack.c.bf16 %v6583, %v6583
      %s6587 = scalar_lea.vmem %s51, 320
      %v6588 = vld [vmem:[%s6587] sm:$0xf]
      %v6589 = vld [vmem:[%s6587 + $0x4] sm:$0xf]
      %v6590 = vld [vmem:[%s6587 + $0x8] sm:$0xf]
      %v6591 = vld [vmem:[%s6587 + $0xc] sm:$0xf]
      %v6592 = vld [vmem:[%s6587 + $0x10] sm:$0xf]
      %v6593 = vld [vmem:[%s6587 + $0x14] sm:$0xf]
      %v6594 = vld [vmem:[%s6587 + $0x18] sm:$0xf]
      %v6595 = vld [vmem:[%s6587 + $0x1c] sm:$0xf]
      %v6596 = vld [vmem:[%s6587 + $0x20] sm:$0xf]
      %v6597 = vld [vmem:[%s6587 + $0x24] sm:$0xf]
      %v6598 = vld [vmem:[%s6587 + $0x28] sm:$0xf]
      %v6599 = vld [vmem:[%s6587 + $0x2c] sm:$0xf]
      %v6600 = vld [vmem:[%s6587 + $0x30] sm:$0xf]
      %v6601 = vld [vmem:[%s6587 + $0x34] sm:$0xf]
      %v6602 = vld [vmem:[%s6587 + $0x38] sm:$0xf]
      %v6603 = vld [vmem:[%s6587 + $0x3c] sm:$0xf]
      %v6620 = vunpack.c.l.b16 %v6588
      %v6621 = vunpack.c.l.b16 %v6589
      %v6622 = vunpack.c.l.b16 %v6590
      %v6623 = vunpack.c.l.b16 %v6591
      %v6624 = vunpack.c.l.b16 %v6592
      %v6625 = vunpack.c.l.b16 %v6593
      %v6626 = vunpack.c.l.b16 %v6594
      %v6627 = vunpack.c.l.b16 %v6595
      %v6628 = vunpack.c.l.b16 %v6596
      %v6629 = vunpack.c.l.b16 %v6597
      %v6630 = vunpack.c.l.b16 %v6598
      %v6631 = vunpack.c.l.b16 %v6599
      %v6632 = vunpack.c.l.b16 %v6600
      %v6633 = vunpack.c.l.b16 %v6601
      %v6634 = vunpack.c.l.b16 %v6602
      %v6635 = vunpack.c.l.b16 %v6603
      %v6636 = vpack.c.b16 %v6621, %v6620
      %v6637 = vpack.c.b16 %v6623, %v6622
      %v6638 = vpack.c.b16 %v6625, %v6624
      %v6639 = vpack.c.b16 %v6627, %v6626
      %v6640 = vpack.c.b16 %v6629, %v6628
      %v6641 = vpack.c.b16 %v6631, %v6630
      %v6642 = vpack.c.b16 %v6633, %v6632
      %v6643 = vpack.c.b16 %v6635, %v6634
      %6652 = vmatpush.bf16.msra.mxu0 %v6643
      %6653 = vmatpush.bf16.msra.mxu0 %v6642
      %6654 = vmatpush.bf16.msra.mxu0 %v6641
      %6655 = vmatpush.bf16.msra.mxu0 %v6640
      %6656 = vmatpush.bf16.msra.mxu0 %v6639
      %6657 = vmatpush.bf16.msra.mxu0 %v6638
      %6658 = vmatpush.bf16.msra.mxu0 %v6637
      %6659 = vmatpush.bf16.msra.mxu0 %v6636
      %6660 = vmatmul.bf16.gmra.mxu0 %v6586
      %v6661 = vpop.f32.mrf.mxu0
      %v6662 = vadd.f32 0.0, %v6661
      %v6663 = vpop.f32.mrf.mxu0
      %6664 = vdwg.mxu0
      %v6665 = vadd.f32 %v6567, %v6662
      %s6666 = scalar_lea.vmem %s49, 12
      %v6667 = vld [vmem:[%s6666] sm:$0x3]
      %v6669 = vsel %vm6082, %v6667, 0
      %6671 = vmatpush.bf16.msra.mxu0 0
      %6672 = vmatpush.bf16.msra.mxu0 0
      %6673 = vmatpush.bf16.msra.mxu0 0
      %6674 = vmatpush.bf16.msra.mxu0 0
      %6675 = vmatpush.bf16.msra.mxu0 0
      %6676 = vmatpush.bf16.msra.mxu0 0
      %6677 = vmatpush.bf16.msra.mxu0 0
      %6678 = vmatpush.bf16.msra.mxu0 %v6080
      %6679 = vmatmul.bf16.gmra.mxu0 %v6669
      %v6680 = vpop.f32.mrf.mxu0
      %v6681 = vadd.f32 0.0, %v6680
      %v6682 = vpop.f32.mrf.mxu0
      %6683 = vdwg.mxu0
      %v6684 = vpack.c.bf16 %v6681, %v6681
      %s6685 = scalar_lea.vmem %s51, 384
      %v6686 = vld [vmem:[%s6685] sm:$0xf]
      %v6687 = vld [vmem:[%s6685 + $0x4] sm:$0xf]
      %v6688 = vld [vmem:[%s6685 + $0x8] sm:$0xf]
      %v6689 = vld [vmem:[%s6685 + $0xc] sm:$0xf]
      %v6690 = vld [vmem:[%s6685 + $0x10] sm:$0xf]
      %v6691 = vld [vmem:[%s6685 + $0x14] sm:$0xf]
      %v6692 = vld [vmem:[%s6685 + $0x18] sm:$0xf]
      %v6693 = vld [vmem:[%s6685 + $0x1c] sm:$0xf]
      %v6694 = vld [vmem:[%s6685 + $0x20] sm:$0xf]
      %v6695 = vld [vmem:[%s6685 + $0x24] sm:$0xf]
      %v6696 = vld [vmem:[%s6685 + $0x28] sm:$0xf]
      %v6697 = vld [vmem:[%s6685 + $0x2c] sm:$0xf]
      %v6698 = vld [vmem:[%s6685 + $0x30] sm:$0xf]
      %v6699 = vld [vmem:[%s6685 + $0x34] sm:$0xf]
      %v6700 = vld [vmem:[%s6685 + $0x38] sm:$0xf]
      %v6701 = vld [vmem:[%s6685 + $0x3c] sm:$0xf]
      %v6718 = vunpack.c.l.b16 %v6686
      %v6719 = vunpack.c.l.b16 %v6687
      %v6720 = vunpack.c.l.b16 %v6688
      %v6721 = vunpack.c.l.b16 %v6689
      %v6722 = vunpack.c.l.b16 %v6690
      %v6723 = vunpack.c.l.b16 %v6691
      %v6724 = vunpack.c.l.b16 %v6692
      %v6725 = vunpack.c.l.b16 %v6693
      %v6726 = vunpack.c.l.b16 %v6694
      %v6727 = vunpack.c.l.b16 %v6695
      %v6728 = vunpack.c.l.b16 %v6696
      %v6729 = vunpack.c.l.b16 %v6697
      %v6730 = vunpack.c.l.b16 %v6698
      %v6731 = vunpack.c.l.b16 %v6699
      %v6732 = vunpack.c.l.b16 %v6700
      %v6733 = vunpack.c.l.b16 %v6701
      %v6734 = vpack.c.b16 %v6719, %v6718
      %v6735 = vpack.c.b16 %v6721, %v6720
      %v6736 = vpack.c.b16 %v6723, %v6722
      %v6737 = vpack.c.b16 %v6725, %v6724
      %v6738 = vpack.c.b16 %v6727, %v6726
      %v6739 = vpack.c.b16 %v6729, %v6728
      %v6740 = vpack.c.b16 %v6731, %v6730
      %v6741 = vpack.c.b16 %v6733, %v6732
      %6750 = vmatpush.bf16.msra.mxu0 %v6741
      %6751 = vmatpush.bf16.msra.mxu0 %v6740
      %6752 = vmatpush.bf16.msra.mxu0 %v6739
      %6753 = vmatpush.bf16.msra.mxu0 %v6738
      %6754 = vmatpush.bf16.msra.mxu0 %v6737
      %6755 = vmatpush.bf16.msra.mxu0 %v6736
      %6756 = vmatpush.bf16.msra.mxu0 %v6735
      %6757 = vmatpush.bf16.msra.mxu0 %v6734
      %6758 = vmatmul.bf16.gmra.mxu0 %v6684
      %v6759 = vpop.f32.mrf.mxu0
      %v6760 = vadd.f32 0.0, %v6759
      %v6761 = vpop.f32.mrf.mxu0
      %6762 = vdwg.mxu0
      %v6763 = vadd.f32 %v6665, %v6760
      %s6764 = scalar_lea.vmem %s49, 14
      %v6765 = vld [vmem:[%s6764] sm:$0x3]
      %v6767 = vsel %vm6082, %v6765, 0
      %6769 = vmatpush.bf16.msra.mxu0 0
      %6770 = vmatpush.bf16.msra.mxu0 0
      %6771 = vmatpush.bf16.msra.mxu0 0
      %6772 = vmatpush.bf16.msra.mxu0 0
      %6773 = vmatpush.bf16.msra.mxu0 0
      %6774 = vmatpush.bf16.msra.mxu0 0
      %6775 = vmatpush.bf16.msra.mxu0 0
      %6776 = vmatpush.bf16.msra.mxu0 %v6080
      %6777 = vmatmul.bf16.gmra.mxu0 %v6767
      %v6778 = vpop.f32.mrf.mxu0
      %v6779 = vadd.f32 0.0, %v6778
      %v6780 = vpop.f32.mrf.mxu0
      %6781 = vdwg.mxu0
      %v6782 = vpack.c.bf16 %v6779, %v6779
      %s6783 = scalar_lea.vmem %s51, 448
      %v6784 = vld [vmem:[%s6783] sm:$0xf]
      %v6785 = vld [vmem:[%s6783 + $0x4] sm:$0xf]
      %v6786 = vld [vmem:[%s6783 + $0x8] sm:$0xf]
      %v6787 = vld [vmem:[%s6783 + $0xc] sm:$0xf]
      %v6788 = vld [vmem:[%s6783 + $0x10] sm:$0xf]
      %v6789 = vld [vmem:[%s6783 + $0x14] sm:$0xf]
      %v6790 = vld [vmem:[%s6783 + $0x18] sm:$0xf]
      %v6791 = vld [vmem:[%s6783 + $0x1c] sm:$0xf]
      %v6792 = vld [vmem:[%s6783 + $0x20] sm:$0xf]
      %v6793 = vld [vmem:[%s6783 + $0x24] sm:$0xf]
      %v6794 = vld [vmem:[%s6783 + $0x28] sm:$0xf]
      %v6795 = vld [vmem:[%s6783 + $0x2c] sm:$0xf]
      %v6796 = vld [vmem:[%s6783 + $0x30] sm:$0xf]
      %v6797 = vld [vmem:[%s6783 + $0x34] sm:$0xf]
      %v6798 = vld [vmem:[%s6783 + $0x38] sm:$0xf]
      %v6799 = vld [vmem:[%s6783 + $0x3c] sm:$0xf]
      %v6816 = vunpack.c.l.b16 %v6784
      %v6817 = vunpack.c.l.b16 %v6785
      %v6818 = vunpack.c.l.b16 %v6786
      %v6819 = vunpack.c.l.b16 %v6787
      %v6820 = vunpack.c.l.b16 %v6788
      %v6821 = vunpack.c.l.b16 %v6789
      %v6822 = vunpack.c.l.b16 %v6790
      %v6823 = vunpack.c.l.b16 %v6791
      %v6824 = vunpack.c.l.b16 %v6792
      %v6825 = vunpack.c.l.b16 %v6793
      %v6826 = vunpack.c.l.b16 %v6794
      %v6827 = vunpack.c.l.b16 %v6795
      %v6828 = vunpack.c.l.b16 %v6796
      %v6829 = vunpack.c.l.b16 %v6797
      %v6830 = vunpack.c.l.b16 %v6798
      %v6831 = vunpack.c.l.b16 %v6799
      %v6832 = vpack.c.b16 %v6817, %v6816
      %v6833 = vpack.c.b16 %v6819, %v6818
      %v6834 = vpack.c.b16 %v6821, %v6820
      %v6835 = vpack.c.b16 %v6823, %v6822
      %v6836 = vpack.c.b16 %v6825, %v6824
      %v6837 = vpack.c.b16 %v6827, %v6826
      %v6838 = vpack.c.b16 %v6829, %v6828
      %v6839 = vpack.c.b16 %v6831, %v6830
      %6848 = vmatpush.bf16.msra.mxu0 %v6839
      %6849 = vmatpush.bf16.msra.mxu0 %v6838
      %6850 = vmatpush.bf16.msra.mxu0 %v6837
      %6851 = vmatpush.bf16.msra.mxu0 %v6836
      %6852 = vmatpush.bf16.msra.mxu0 %v6835
      %6853 = vmatpush.bf16.msra.mxu0 %v6834
      %6854 = vmatpush.bf16.msra.mxu0 %v6833
      %6855 = vmatpush.bf16.msra.mxu0 %v6832
      %6856 = vmatmul.bf16.gmra.mxu0 %v6782
      %v6857 = vpop.f32.mrf.mxu0
      %v6858 = vadd.f32 0.0, %v6857
      %v6859 = vpop.f32.mrf.mxu0
      %6860 = vdwg.mxu0
      %v6861 = vadd.f32 %v6763, %v6858
      %s6862 = scalar_lea.vmem %s49, 16
      %v6863 = vld [vmem:[%s6862] sm:$0x3]
      %v6865 = vsel %vm6082, %v6863, 0
      %6867 = vmatpush.bf16.msra.mxu0 0
      %6868 = vmatpush.bf16.msra.mxu0 0
      %6869 = vmatpush.bf16.msra.mxu0 0
      %6870 = vmatpush.bf16.msra.mxu0 0
      %6871 = vmatpush.bf16.msra.mxu0 0
      %6872 = vmatpush.bf16.msra.mxu0 0
      %6873 = vmatpush.bf16.msra.mxu0 0
      %6874 = vmatpush.bf16.msra.mxu0 %v6080
      %6875 = vmatmul.bf16.gmra.mxu0 %v6865
      %v6876 = vpop.f32.mrf.mxu0
      %v6877 = vadd.f32 0.0, %v6876
      %v6878 = vpop.f32.mrf.mxu0
      %6879 = vdwg.mxu0
      %v6880 = vpack.c.bf16 %v6877, %v6877
      %s6881 = scalar_lea.vmem %s51, 512
      %v6882 = vld [vmem:[%s6881] sm:$0xf]
      %v6883 = vld [vmem:[%s6881 + $0x4] sm:$0xf]
      %v6884 = vld [vmem:[%s6881 + $0x8] sm:$0xf]
      %v6885 = vld [vmem:[%s6881 + $0xc] sm:$0xf]
      %v6886 = vld [vmem:[%s6881 + $0x10] sm:$0xf]
      %v6887 = vld [vmem:[%s6881 + $0x14] sm:$0xf]
      %v6888 = vld [vmem:[%s6881 + $0x18] sm:$0xf]
      %v6889 = vld [vmem:[%s6881 + $0x1c] sm:$0xf]
      %v6890 = vld [vmem:[%s6881 + $0x20] sm:$0xf]
      %v6891 = vld [vmem:[%s6881 + $0x24] sm:$0xf]
      %v6892 = vld [vmem:[%s6881 + $0x28] sm:$0xf]
      %v6893 = vld [vmem:[%s6881 + $0x2c] sm:$0xf]
      %v6894 = vld [vmem:[%s6881 + $0x30] sm:$0xf]
      %v6895 = vld [vmem:[%s6881 + $0x34] sm:$0xf]
      %v6896 = vld [vmem:[%s6881 + $0x38] sm:$0xf]
      %v6897 = vld [vmem:[%s6881 + $0x3c] sm:$0xf]
      %v6914 = vunpack.c.l.b16 %v6882
      %v6915 = vunpack.c.l.b16 %v6883
      %v6916 = vunpack.c.l.b16 %v6884
      %v6917 = vunpack.c.l.b16 %v6885
      %v6918 = vunpack.c.l.b16 %v6886
      %v6919 = vunpack.c.l.b16 %v6887
      %v6920 = vunpack.c.l.b16 %v6888
      %v6921 = vunpack.c.l.b16 %v6889
      %v6922 = vunpack.c.l.b16 %v6890
      %v6923 = vunpack.c.l.b16 %v6891
      %v6924 = vunpack.c.l.b16 %v6892
      %v6925 = vunpack.c.l.b16 %v6893
      %v6926 = vunpack.c.l.b16 %v6894
      %v6927 = vunpack.c.l.b16 %v6895
      %v6928 = vunpack.c.l.b16 %v6896
      %v6929 = vunpack.c.l.b16 %v6897
      %v6930 = vpack.c.b16 %v6915, %v6914
      %v6931 = vpack.c.b16 %v6917, %v6916
      %v6932 = vpack.c.b16 %v6919, %v6918
      %v6933 = vpack.c.b16 %v6921, %v6920
      %v6934 = vpack.c.b16 %v6923, %v6922
      %v6935 = vpack.c.b16 %v6925, %v6924
      %v6936 = vpack.c.b16 %v6927, %v6926
      %v6937 = vpack.c.b16 %v6929, %v6928
      %6946 = vmatpush.bf16.msra.mxu0 %v6937
      %6947 = vmatpush.bf16.msra.mxu0 %v6936
      %6948 = vmatpush.bf16.msra.mxu0 %v6935
      %6949 = vmatpush.bf16.msra.mxu0 %v6934
      %6950 = vmatpush.bf16.msra.mxu0 %v6933
      %6951 = vmatpush.bf16.msra.mxu0 %v6932
      %6952 = vmatpush.bf16.msra.mxu0 %v6931
      %6953 = vmatpush.bf16.msra.mxu0 %v6930
      %6954 = vmatmul.bf16.gmra.mxu0 %v6880
      %v6955 = vpop.f32.mrf.mxu0
      %v6956 = vadd.f32 0.0, %v6955
      %v6957 = vpop.f32.mrf.mxu0
      %6958 = vdwg.mxu0
      %v6959 = vadd.f32 %v6861, %v6956
      %v6960 = vld [vmem:[%s53] sm:$0x1]
      %v6962 = vperm.slane %v6960, 0
      %v6964 = vadd.f32 %v6959, %v6962
      %v6965 = vmax.f32 %v6964, 0.0
      %v6966 = vpack.c.bf16 %v6965, %v6965
      %6967 = vmatpush.bf16.msra.mxu0 0
      %6968 = vmatpush.bf16.msra.mxu0 0
      %6969 = vmatpush.bf16.msra.mxu0 0
      %6970 = vmatpush.bf16.msra.mxu0 0
      %6971 = vmatpush.bf16.msra.mxu0 0
      %6972 = vmatpush.bf16.msra.mxu0 0
      %6973 = vmatpush.bf16.msra.mxu0 0
      %6974 = vmatpush.bf16.msra.mxu0 %v5995
      %6975 = vmatmul.bf16.gmra.mxu0 %v6473
      %v6976 = vpop.f32.mrf.mxu0
      %v6977 = vadd.f32 0.0, %v6976
      %v6978 = vpop.f32.mrf.mxu0
      %6979 = vdwg.mxu0
      %v6980 = vpack.c.bf16 %v6977, %v6977
      %v6981 = vld [vmem:[%s59] sm:$0xf]
      %v6982 = vld [vmem:[%s59 + $0x4] sm:$0xf]
      %v6983 = vld [vmem:[%s59 + $0x8] sm:$0xf]
      %v6984 = vld [vmem:[%s59 + $0xc] sm:$0xf]
      %v6985 = vld [vmem:[%s59 + $0x10] sm:$0xf]
      %v6986 = vld [vmem:[%s59 + $0x14] sm:$0xf]
      %v6987 = vld [vmem:[%s59 + $0x18] sm:$0xf]
      %v6988 = vld [vmem:[%s59 + $0x1c] sm:$0xf]
      %v6989 = vld [vmem:[%s59 + $0x20] sm:$0xf]
      %v6990 = vld [vmem:[%s59 + $0x24] sm:$0xf]
      %v6991 = vld [vmem:[%s59 + $0x28] sm:$0xf]
      %v6992 = vld [vmem:[%s59 + $0x2c] sm:$0xf]
      %v6993 = vld [vmem:[%s59 + $0x30] sm:$0xf]
      %v6994 = vld [vmem:[%s59 + $0x34] sm:$0xf]
      %v6995 = vld [vmem:[%s59 + $0x38] sm:$0xf]
      %v6996 = vld [vmem:[%s59 + $0x3c] sm:$0xf]
      %v6997 = vld [vmem:[%s61] sm:$0x1]
      %v6999 = vperm.slane %v6997, 0
      %v7017 = vunpack.c.l.b16 %v6981
      %v7018 = vunpack.c.l.b16 %v6982
      %v7019 = vunpack.c.l.b16 %v6983
      %v7020 = vunpack.c.l.b16 %v6984
      %v7021 = vunpack.c.l.b16 %v6985
      %v7022 = vunpack.c.l.b16 %v6986
      %v7023 = vunpack.c.l.b16 %v6987
      %v7024 = vunpack.c.l.b16 %v6988
      %v7025 = vunpack.c.l.b16 %v6989
      %v7026 = vunpack.c.l.b16 %v6990
      %v7027 = vunpack.c.l.b16 %v6991
      %v7028 = vunpack.c.l.b16 %v6992
      %v7029 = vunpack.c.l.b16 %v6993
      %v7030 = vunpack.c.l.b16 %v6994
      %v7031 = vunpack.c.l.b16 %v6995
      %v7032 = vunpack.c.l.b16 %v6996
      %v7033 = vpack.c.b16 %v7018, %v7017
      %v7034 = vpack.c.b16 %v7020, %v7019
      %v7035 = vpack.c.b16 %v7022, %v7021
      %v7036 = vpack.c.b16 %v7024, %v7023
      %v7037 = vpack.c.b16 %v7026, %v7025
      %v7038 = vpack.c.b16 %v7028, %v7027
      %v7039 = vpack.c.b16 %v7030, %v7029
      %v7040 = vpack.c.b16 %v7032, %v7031
      %7049 = vmatpush.bf16.msra.mxu0 %v7040
      %7050 = vmatpush.bf16.msra.mxu0 %v7039
      %7051 = vmatpush.bf16.msra.mxu0 %v7038
      %7052 = vmatpush.bf16.msra.mxu0 %v7037
      %7053 = vmatpush.bf16.msra.mxu0 %v7036
      %7054 = vmatpush.bf16.msra.mxu0 %v7035
      %7055 = vmatpush.bf16.msra.mxu0 %v7034
      %7056 = vmatpush.bf16.msra.mxu0 %v7033
      %7057 = vmatmul.bf16.gmra.mxu0 %v6980
      %v7058 = vpop.f32.mrf.mxu0
      %v7059 = vadd.f32 %v6999, %v7058
      %v7060 = vpop.f32.mrf.mxu0
      %7061 = vdwg.mxu0
      %v7062 = vld [vmem:[%s55] sm:$0xf]
      %v7063 = vld [vmem:[%s55 + $0x4] sm:$0xf]
      %v7064 = vld [vmem:[%s55 + $0x8] sm:$0xf]
      %v7065 = vld [vmem:[%s55 + $0xc] sm:$0xf]
      %v7066 = vld [vmem:[%s55 + $0x10] sm:$0xf]
      %v7067 = vld [vmem:[%s55 + $0x14] sm:$0xf]
      %v7068 = vld [vmem:[%s55 + $0x18] sm:$0xf]
      %v7069 = vld [vmem:[%s55 + $0x1c] sm:$0xf]
      %v7070 = vld [vmem:[%s55 + $0x20] sm:$0xf]
      %v7071 = vld [vmem:[%s55 + $0x24] sm:$0xf]
      %v7072 = vld [vmem:[%s55 + $0x28] sm:$0xf]
      %v7073 = vld [vmem:[%s55 + $0x2c] sm:$0xf]
      %v7074 = vld [vmem:[%s55 + $0x30] sm:$0xf]
      %v7075 = vld [vmem:[%s55 + $0x34] sm:$0xf]
      %v7076 = vld [vmem:[%s55 + $0x38] sm:$0xf]
      %v7077 = vld [vmem:[%s55 + $0x3c] sm:$0xf]
      %v7078 = vld [vmem:[%s57] sm:$0x1]
      %v7080 = vperm.slane %v7078, 0
      %v7098 = vunpack.c.l.b16 %v7062
      %v7099 = vunpack.c.l.b16 %v7063
      %v7100 = vunpack.c.l.b16 %v7064
      %v7101 = vunpack.c.l.b16 %v7065
      %v7102 = vunpack.c.l.b16 %v7066
      %v7103 = vunpack.c.l.b16 %v7067
      %v7104 = vunpack.c.l.b16 %v7068
      %v7105 = vunpack.c.l.b16 %v7069
      %v7106 = vunpack.c.l.b16 %v7070
      %v7107 = vunpack.c.l.b16 %v7071
      %v7108 = vunpack.c.l.b16 %v7072
      %v7109 = vunpack.c.l.b16 %v7073
      %v7110 = vunpack.c.l.b16 %v7074
      %v7111 = vunpack.c.l.b16 %v7075
      %v7112 = vunpack.c.l.b16 %v7076
      %v7113 = vunpack.c.l.b16 %v7077
      %v7114 = vpack.c.b16 %v7099, %v7098
      %v7115 = vpack.c.b16 %v7101, %v7100
      %v7116 = vpack.c.b16 %v7103, %v7102
      %v7117 = vpack.c.b16 %v7105, %v7104
      %v7118 = vpack.c.b16 %v7107, %v7106
      %v7119 = vpack.c.b16 %v7109, %v7108
      %v7120 = vpack.c.b16 %v7111, %v7110
      %v7121 = vpack.c.b16 %v7113, %v7112
      %7130 = vmatpush.bf16.msra.mxu0 %v7121
      %7131 = vmatpush.bf16.msra.mxu0 %v7120
      %7132 = vmatpush.bf16.msra.mxu0 %v7119
      %7133 = vmatpush.bf16.msra.mxu0 %v7118
      %7134 = vmatpush.bf16.msra.mxu0 %v7117
      %7135 = vmatpush.bf16.msra.mxu0 %v7116
      %7136 = vmatpush.bf16.msra.mxu0 %v7115
      %7137 = vmatpush.bf16.msra.mxu0 %v7114
      %7138 = vmatmul.bf16.gmra.mxu0 %v6966
      %v7139 = vpop.f32.mrf.mxu0
      %v7140 = vadd.f32 %v7080, %v7139
      %v7141 = vpop.f32.mrf.mxu0
      %7142 = vdwg.mxu0
      %v7143 = vadd.f32 %v7140, %v7059
      %v7144 = vmax.f32 %v7143, 0.0
      %v7145 = vpack.c.bf16 %v7144, %v7144
      %v7146 = vld [vmem:[%s63] sm:$0xf]
      %v7147 = vld [vmem:[%s63 + $0x4] sm:$0xf]
      %v7148 = vld [vmem:[%s63 + $0x8] sm:$0xf]
      %v7149 = vld [vmem:[%s63 + $0xc] sm:$0xf]
      %v7150 = vld [vmem:[%s63 + $0x10] sm:$0xf]
      %v7151 = vld [vmem:[%s63 + $0x14] sm:$0xf]
      %v7152 = vld [vmem:[%s63 + $0x18] sm:$0xf]
      %v7153 = vld [vmem:[%s63 + $0x1c] sm:$0xf]
      %v7154 = vld [vmem:[%s63 + $0x20] sm:$0xf]
      %v7155 = vld [vmem:[%s63 + $0x24] sm:$0xf]
      %v7156 = vld [vmem:[%s63 + $0x28] sm:$0xf]
      %v7157 = vld [vmem:[%s63 + $0x2c] sm:$0xf]
      %v7158 = vld [vmem:[%s63 + $0x30] sm:$0xf]
      %v7159 = vld [vmem:[%s63 + $0x34] sm:$0xf]
      %v7160 = vld [vmem:[%s63 + $0x38] sm:$0xf]
      %v7161 = vld [vmem:[%s63 + $0x3c] sm:$0xf]
      %v7162 = vld [vmem:[%s65] sm:$0x1]
      %v7164 = vperm.slane %v7162, 0
      %v7182 = vunpack.c.l.b16 %v7146
      %v7183 = vunpack.c.l.b16 %v7147
      %v7184 = vunpack.c.l.b16 %v7148
      %v7185 = vunpack.c.l.b16 %v7149
      %v7186 = vunpack.c.l.b16 %v7150
      %v7187 = vunpack.c.l.b16 %v7151
      %v7188 = vunpack.c.l.b16 %v7152
      %v7189 = vunpack.c.l.b16 %v7153
      %v7190 = vunpack.c.l.b16 %v7154
      %v7191 = vunpack.c.l.b16 %v7155
      %v7192 = vunpack.c.l.b16 %v7156
      %v7193 = vunpack.c.l.b16 %v7157
      %v7194 = vunpack.c.l.b16 %v7158
      %v7195 = vunpack.c.l.b16 %v7159
      %v7196 = vunpack.c.l.b16 %v7160
      %v7197 = vunpack.c.l.b16 %v7161
      %v7198 = vpack.c.b16 %v7183, %v7182
      %v7199 = vpack.c.b16 %v7185, %v7184
      %v7200 = vpack.c.b16 %v7187, %v7186
      %v7201 = vpack.c.b16 %v7189, %v7188
      %v7202 = vpack.c.b16 %v7191, %v7190
      %v7203 = vpack.c.b16 %v7193, %v7192
      %v7204 = vpack.c.b16 %v7195, %v7194
      %v7205 = vpack.c.b16 %v7197, %v7196
      %7214 = vmatpush.bf16.msra.mxu0 %v7205
      %7215 = vmatpush.bf16.msra.mxu0 %v7204
      %7216 = vmatpush.bf16.msra.mxu0 %v7203
      %7217 = vmatpush.bf16.msra.mxu0 %v7202
      %7218 = vmatpush.bf16.msra.mxu0 %v7201
      %7219 = vmatpush.bf16.msra.mxu0 %v7200
      %7220 = vmatpush.bf16.msra.mxu0 %v7199
      %7221 = vmatpush.bf16.msra.mxu0 %v7198
      %7222 = vmatmul.bf16.gmra.mxu0 %v7145
      %v7223 = vpop.f32.mrf.mxu0
      %v7224 = vadd.f32 %v7164, %v7223
      %v7225 = vpop.f32.mrf.mxu0
      %7226 = vdwg.mxu0
      %v7227 = vmax.f32 %v7224, 0.0
      %v7228 = vpack.c.bf16 %v7227, %v7227
      %v7229 = vld [vmem:[%s67] sm:$0x1]
      %vm7230 = vcmask 31744
      %v7232 = vsel %vm7230, %v7229, 0
      %vm7234 = vcmask 1041408
      %v7236 = vsel %vm7234, %v7228, 0
      %7238 = vmatpush.bf16.msra.mxu0 0
      %7239 = vmatpush.bf16.msra.mxu0 0
      %7240 = vmatpush.bf16.msra.mxu0 0
      %7241 = vmatpush.bf16.msra.mxu0 0
      %7242 = vmatpush.bf16.msra.mxu0 0
      %7243 = vmatpush.bf16.msra.mxu0 0
      %7244 = vmatpush.bf16.msra.mxu0 0
      %7245 = vmatpush.bf16.msra.mxu0 %v7236
      %7246 = vmatmul.bf16.gmra.mxu0 %v7232
      %v7247 = vpop.f32.mrf.mxu0
      %v7248 = vadd.f32 0.0, %v7247
      %v7249 = vpop.f32.mrf.mxu0
      %7250 = vdwg.mxu0
      %v7251 = vpack.c.bf16 %v7248, %v7248
      %v7252 = vld [vmem:[%s69] sm:$0xf]
      %v7253 = vld [vmem:[%s69 + $0x4] sm:$0xf]
      %v7254 = vld [vmem:[%s69 + $0x8] sm:$0xf]
      %v7255 = vld [vmem:[%s69 + $0xc] sm:$0xf]
      %v7256 = vld [vmem:[%s69 + $0x10] sm:$0xf]
      %v7257 = vld [vmem:[%s69 + $0x14] sm:$0xf]
      %v7258 = vld [vmem:[%s69 + $0x18] sm:$0xf]
      %v7259 = vld [vmem:[%s69 + $0x1c] sm:$0xf]
      %v7260 = vld [vmem:[%s69 + $0x20] sm:$0xf]
      %v7261 = vld [vmem:[%s69 + $0x24] sm:$0xf]
      %v7262 = vld [vmem:[%s69 + $0x28] sm:$0xf]
      %v7263 = vld [vmem:[%s69 + $0x2c] sm:$0xf]
      %v7264 = vld [vmem:[%s69 + $0x30] sm:$0xf]
      %v7265 = vld [vmem:[%s69 + $0x34] sm:$0xf]
      %v7266 = vld [vmem:[%s69 + $0x38] sm:$0xf]
      %v7267 = vld [vmem:[%s69 + $0x3c] sm:$0xf]
      %s7268 = scalar_lea.vmem %s67, 1
      %v7269 = vld [vmem:[%s7268] sm:$0x1]
      %v7271 = vsel %vm7230, %v7269, 0
      %7273 = vmatpush.bf16.msra.mxu0 0
      %7274 = vmatpush.bf16.msra.mxu0 0
      %7275 = vmatpush.bf16.msra.mxu0 0
      %7276 = vmatpush.bf16.msra.mxu0 0
      %7277 = vmatpush.bf16.msra.mxu0 0
      %7278 = vmatpush.bf16.msra.mxu0 0
      %7279 = vmatpush.bf16.msra.mxu0 0
      %7280 = vmatpush.bf16.msra.mxu0 %v7236
      %7281 = vmatmul.bf16.gmra.mxu0 %v7271
      %v7282 = vpop.f32.mrf.mxu0
      %v7283 = vadd.f32 0.0, %v7282
      %v7284 = vpop.f32.mrf.mxu0
      %7285 = vdwg.mxu0
      %v7286 = vpack.c.bf16 %v7283, %v7283
      %s7287 = scalar_lea.vmem %s69, 64
      %v7288 = vld [vmem:[%s7287] sm:$0xf]
      %v7289 = vld [vmem:[%s7287 + $0x4] sm:$0xf]
      %v7290 = vld [vmem:[%s7287 + $0x8] sm:$0xf]
      %v7291 = vld [vmem:[%s7287 + $0xc] sm:$0xf]
      %v7292 = vld [vmem:[%s7287 + $0x10] sm:$0xf]
      %v7293 = vld [vmem:[%s7287 + $0x14] sm:$0xf]
      %v7294 = vld [vmem:[%s7287 + $0x18] sm:$0xf]
      %v7295 = vld [vmem:[%s7287 + $0x1c] sm:$0xf]
      %v7296 = vld [vmem:[%s7287 + $0x20] sm:$0xf]
      %v7297 = vld [vmem:[%s7287 + $0x24] sm:$0xf]
      %v7298 = vld [vmem:[%s7287 + $0x28] sm:$0xf]
      %v7299 = vld [vmem:[%s7287 + $0x2c] sm:$0xf]
      %v7300 = vld [vmem:[%s7287 + $0x30] sm:$0xf]
      %v7301 = vld [vmem:[%s7287 + $0x34] sm:$0xf]
      %v7302 = vld [vmem:[%s7287 + $0x38] sm:$0xf]
      %v7303 = vld [vmem:[%s7287 + $0x3c] sm:$0xf]
      %v7320 = vunpack.c.l.b16 %v7288
      %v7321 = vunpack.c.l.b16 %v7289
      %v7322 = vunpack.c.l.b16 %v7290
      %v7323 = vunpack.c.l.b16 %v7291
      %v7324 = vunpack.c.l.b16 %v7292
      %v7325 = vunpack.c.l.b16 %v7293
      %v7326 = vunpack.c.l.b16 %v7294
      %v7327 = vunpack.c.l.b16 %v7295
      %v7328 = vunpack.c.l.b16 %v7296
      %v7329 = vunpack.c.l.b16 %v7297
      %v7330 = vunpack.c.l.b16 %v7298
      %v7331 = vunpack.c.l.b16 %v7299
      %v7332 = vunpack.c.l.b16 %v7300
      %v7333 = vunpack.c.l.b16 %v7301
      %v7334 = vunpack.c.l.b16 %v7302
      %v7335 = vunpack.c.l.b16 %v7303
      %v7336 = vpack.c.b16 %v7321, %v7320
      %v7337 = vpack.c.b16 %v7323, %v7322
      %v7338 = vpack.c.b16 %v7325, %v7324
      %v7339 = vpack.c.b16 %v7327, %v7326
      %v7340 = vpack.c.b16 %v7329, %v7328
      %v7341 = vpack.c.b16 %v7331, %v7330
      %v7342 = vpack.c.b16 %v7333, %v7332
      %v7343 = vpack.c.b16 %v7335, %v7334
      %7352 = vmatpush.bf16.msra.mxu0 %v7343
      %7353 = vmatpush.bf16.msra.mxu0 %v7342
      %7354 = vmatpush.bf16.msra.mxu0 %v7341
      %7355 = vmatpush.bf16.msra.mxu0 %v7340
      %7356 = vmatpush.bf16.msra.mxu0 %v7339
      %7357 = vmatpush.bf16.msra.mxu0 %v7338
      %7358 = vmatpush.bf16.msra.mxu0 %v7337
      %7359 = vmatpush.bf16.msra.mxu0 %v7336
      %7360 = vmatmul.bf16.gmra.mxu0 %v7286
      %v7361 = vpop.f32.mrf.mxu0
      %v7362 = vadd.f32 0.0, %v7361
      %v7363 = vpop.f32.mrf.mxu0
      %7364 = vdwg.mxu0
      %v7381 = vunpack.c.l.b16 %v7252
      %v7382 = vunpack.c.l.b16 %v7253
      %v7383 = vunpack.c.l.b16 %v7254
      %v7384 = vunpack.c.l.b16 %v7255
      %v7385 = vunpack.c.l.b16 %v7256
      %v7386 = vunpack.c.l.b16 %v7257
      %v7387 = vunpack.c.l.b16 %v7258
      %v7388 = vunpack.c.l.b16 %v7259
      %v7389 = vunpack.c.l.b16 %v7260
      %v7390 = vunpack.c.l.b16 %v7261
      %v7391 = vunpack.c.l.b16 %v7262
      %v7392 = vunpack.c.l.b16 %v7263
      %v7393 = vunpack.c.l.b16 %v7264
      %v7394 = vunpack.c.l.b16 %v7265
      %v7395 = vunpack.c.l.b16 %v7266
      %v7396 = vunpack.c.l.b16 %v7267
      %v7397 = vpack.c.b16 %v7382, %v7381
      %v7398 = vpack.c.b16 %v7384, %v7383
      %v7399 = vpack.c.b16 %v7386, %v7385
      %v7400 = vpack.c.b16 %v7388, %v7387
      %v7401 = vpack.c.b16 %v7390, %v7389
      %v7402 = vpack.c.b16 %v7392, %v7391
      %v7403 = vpack.c.b16 %v7394, %v7393
      %v7404 = vpack.c.b16 %v7396, %v7395
      %7413 = vmatpush.bf16.msra.mxu0 %v7404
      %7414 = vmatpush.bf16.msra.mxu0 %v7403
      %7415 = vmatpush.bf16.msra.mxu0 %v7402
      %7416 = vmatpush.bf16.msra.mxu0 %v7401
      %7417 = vmatpush.bf16.msra.mxu0 %v7400
      %7418 = vmatpush.bf16.msra.mxu0 %v7399
      %7419 = vmatpush.bf16.msra.mxu0 %v7398
      %7420 = vmatpush.bf16.msra.mxu0 %v7397
      %7421 = vmatmul.bf16.gmra.mxu0 %v7251
      %v7422 = vpop.f32.mrf.mxu0
      %v7423 = vadd.f32 %v7362, %v7422
      %v7424 = vpop.f32.mrf.mxu0
      %7425 = vdwg.mxu0
      %s7426 = scalar_lea.vmem %s67, 2
      %v7427 = vld [vmem:[%s7426] sm:$0x1]
      %v7429 = vsel %vm7230, %v7427, 0
      %7431 = vmatpush.bf16.msra.mxu0 0
      %7432 = vmatpush.bf16.msra.mxu0 0
      %7433 = vmatpush.bf16.msra.mxu0 0
      %7434 = vmatpush.bf16.msra.mxu0 0
      %7435 = vmatpush.bf16.msra.mxu0 0
      %7436 = vmatpush.bf16.msra.mxu0 0
      %7437 = vmatpush.bf16.msra.mxu0 0
      %7438 = vmatpush.bf16.msra.mxu0 %v7236
      %7439 = vmatmul.bf16.gmra.mxu0 %v7429
      %v7440 = vpop.f32.mrf.mxu0
      %v7441 = vadd.f32 0.0, %v7440
      %v7442 = vpop.f32.mrf.mxu0
      %7443 = vdwg.mxu0
      %v7444 = vpack.c.bf16 %v7441, %v7441
      %s7445 = scalar_lea.vmem %s69, 128
      %v7446 = vld [vmem:[%s7445] sm:$0xf]
      %v7447 = vld [vmem:[%s7445 + $0x4] sm:$0xf]
      %v7448 = vld [vmem:[%s7445 + $0x8] sm:$0xf]
      %v7449 = vld [vmem:[%s7445 + $0xc] sm:$0xf]
      %v7450 = vld [vmem:[%s7445 + $0x10] sm:$0xf]
      %v7451 = vld [vmem:[%s7445 + $0x14] sm:$0xf]
      %v7452 = vld [vmem:[%s7445 + $0x18] sm:$0xf]
      %v7453 = vld [vmem:[%s7445 + $0x1c] sm:$0xf]
      %v7454 = vld [vmem:[%s7445 + $0x20] sm:$0xf]
      %v7455 = vld [vmem:[%s7445 + $0x24] sm:$0xf]
      %v7456 = vld [vmem:[%s7445 + $0x28] sm:$0xf]
      %v7457 = vld [vmem:[%s7445 + $0x2c] sm:$0xf]
      %v7458 = vld [vmem:[%s7445 + $0x30] sm:$0xf]
      %v7459 = vld [vmem:[%s7445 + $0x34] sm:$0xf]
      %v7460 = vld [vmem:[%s7445 + $0x38] sm:$0xf]
      %v7461 = vld [vmem:[%s7445 + $0x3c] sm:$0xf]
      %v7478 = vunpack.c.l.b16 %v7446
      %v7479 = vunpack.c.l.b16 %v7447
      %v7480 = vunpack.c.l.b16 %v7448
      %v7481 = vunpack.c.l.b16 %v7449
      %v7482 = vunpack.c.l.b16 %v7450
      %v7483 = vunpack.c.l.b16 %v7451
      %v7484 = vunpack.c.l.b16 %v7452
      %v7485 = vunpack.c.l.b16 %v7453
      %v7486 = vunpack.c.l.b16 %v7454
      %v7487 = vunpack.c.l.b16 %v7455
      %v7488 = vunpack.c.l.b16 %v7456
      %v7489 = vunpack.c.l.b16 %v7457
      %v7490 = vunpack.c.l.b16 %v7458
      %v7491 = vunpack.c.l.b16 %v7459
      %v7492 = vunpack.c.l.b16 %v7460
      %v7493 = vunpack.c.l.b16 %v7461
      %v7494 = vpack.c.b16 %v7479, %v7478
      %v7495 = vpack.c.b16 %v7481, %v7480
      %v7496 = vpack.c.b16 %v7483, %v7482
      %v7497 = vpack.c.b16 %v7485, %v7484
      %v7498 = vpack.c.b16 %v7487, %v7486
      %v7499 = vpack.c.b16 %v7489, %v7488
      %v7500 = vpack.c.b16 %v7491, %v7490
      %v7501 = vpack.c.b16 %v7493, %v7492
      %7510 = vmatpush.bf16.msra.mxu0 %v7501
      %7511 = vmatpush.bf16.msra.mxu0 %v7500
      %7512 = vmatpush.bf16.msra.mxu0 %v7499
      %7513 = vmatpush.bf16.msra.mxu0 %v7498
      %7514 = vmatpush.bf16.msra.mxu0 %v7497
      %7515 = vmatpush.bf16.msra.mxu0 %v7496
      %7516 = vmatpush.bf16.msra.mxu0 %v7495
      %7517 = vmatpush.bf16.msra.mxu0 %v7494
      %7518 = vmatmul.bf16.gmra.mxu0 %v7444
      %v7519 = vpop.f32.mrf.mxu0
      %v7520 = vadd.f32 0.0, %v7519
      %v7521 = vpop.f32.mrf.mxu0
      %7522 = vdwg.mxu0
      %v7523 = vadd.f32 %v7423, %v7520
      %s7524 = scalar_lea.vmem %s67, 3
      %v7525 = vld [vmem:[%s7524] sm:$0x1]
      %v7527 = vsel %vm7230, %v7525, 0
      %7529 = vmatpush.bf16.msra.mxu0 0
      %7530 = vmatpush.bf16.msra.mxu0 0
      %7531 = vmatpush.bf16.msra.mxu0 0
      %7532 = vmatpush.bf16.msra.mxu0 0
      %7533 = vmatpush.bf16.msra.mxu0 0
      %7534 = vmatpush.bf16.msra.mxu0 0
      %7535 = vmatpush.bf16.msra.mxu0 0
      %7536 = vmatpush.bf16.msra.mxu0 %v7236
      %7537 = vmatmul.bf16.gmra.mxu0 %v7527
      %v7538 = vpop.f32.mrf.mxu0
      %v7539 = vadd.f32 0.0, %v7538
      %v7540 = vpop.f32.mrf.mxu0
      %7541 = vdwg.mxu0
      %v7542 = vpack.c.bf16 %v7539, %v7539
      %s7543 = scalar_lea.vmem %s69, 192
      %v7544 = vld [vmem:[%s7543] sm:$0xf]
      %v7545 = vld [vmem:[%s7543 + $0x4] sm:$0xf]
      %v7546 = vld [vmem:[%s7543 + $0x8] sm:$0xf]
      %v7547 = vld [vmem:[%s7543 + $0xc] sm:$0xf]
      %v7548 = vld [vmem:[%s7543 + $0x10] sm:$0xf]
      %v7549 = vld [vmem:[%s7543 + $0x14] sm:$0xf]
      %v7550 = vld [vmem:[%s7543 + $0x18] sm:$0xf]
      %v7551 = vld [vmem:[%s7543 + $0x1c] sm:$0xf]
      %v7552 = vld [vmem:[%s7543 + $0x20] sm:$0xf]
      %v7553 = vld [vmem:[%s7543 + $0x24] sm:$0xf]
      %v7554 = vld [vmem:[%s7543 + $0x28] sm:$0xf]
      %v7555 = vld [vmem:[%s7543 + $0x2c] sm:$0xf]
      %v7556 = vld [vmem:[%s7543 + $0x30] sm:$0xf]
      %v7557 = vld [vmem:[%s7543 + $0x34] sm:$0xf]
      %v7558 = vld [vmem:[%s7543 + $0x38] sm:$0xf]
      %v7559 = vld [vmem:[%s7543 + $0x3c] sm:$0xf]
      %v7576 = vunpack.c.l.b16 %v7544
      %v7577 = vunpack.c.l.b16 %v7545
      %v7578 = vunpack.c.l.b16 %v7546
      %v7579 = vunpack.c.l.b16 %v7547
      %v7580 = vunpack.c.l.b16 %v7548
      %v7581 = vunpack.c.l.b16 %v7549
      %v7582 = vunpack.c.l.b16 %v7550
      %v7583 = vunpack.c.l.b16 %v7551
      %v7584 = vunpack.c.l.b16 %v7552
      %v7585 = vunpack.c.l.b16 %v7553
      %v7586 = vunpack.c.l.b16 %v7554
      %v7587 = vunpack.c.l.b16 %v7555
      %v7588 = vunpack.c.l.b16 %v7556
      %v7589 = vunpack.c.l.b16 %v7557
      %v7590 = vunpack.c.l.b16 %v7558
      %v7591 = vunpack.c.l.b16 %v7559
      %v7592 = vpack.c.b16 %v7577, %v7576
      %v7593 = vpack.c.b16 %v7579, %v7578
      %v7594 = vpack.c.b16 %v7581, %v7580
      %v7595 = vpack.c.b16 %v7583, %v7582
      %v7596 = vpack.c.b16 %v7585, %v7584
      %v7597 = vpack.c.b16 %v7587, %v7586
      %v7598 = vpack.c.b16 %v7589, %v7588
      %v7599 = vpack.c.b16 %v7591, %v7590
      %7608 = vmatpush.bf16.msra.mxu0 %v7599
      %7609 = vmatpush.bf16.msra.mxu0 %v7598
      %7610 = vmatpush.bf16.msra.mxu0 %v7597
      %7611 = vmatpush.bf16.msra.mxu0 %v7596
      %7612 = vmatpush.bf16.msra.mxu0 %v7595
      %7613 = vmatpush.bf16.msra.mxu0 %v7594
      %7614 = vmatpush.bf16.msra.mxu0 %v7593
      %7615 = vmatpush.bf16.msra.mxu0 %v7592
      %7616 = vmatmul.bf16.gmra.mxu0 %v7542
      %v7617 = vpop.f32.mrf.mxu0
      %v7618 = vadd.f32 0.0, %v7617
      %v7619 = vpop.f32.mrf.mxu0
      %7620 = vdwg.mxu0
      %v7621 = vadd.f32 %v7523, %v7618
      %s7622 = scalar_lea.vmem %s67, 4
      %v7623 = vld [vmem:[%s7622] sm:$0x1]
      %v7625 = vsel %vm7230, %v7623, 0
      %7627 = vmatpush.bf16.msra.mxu0 0
      %7628 = vmatpush.bf16.msra.mxu0 0
      %7629 = vmatpush.bf16.msra.mxu0 0
      %7630 = vmatpush.bf16.msra.mxu0 0
      %7631 = vmatpush.bf16.msra.mxu0 0
      %7632 = vmatpush.bf16.msra.mxu0 0
      %7633 = vmatpush.bf16.msra.mxu0 0
      %7634 = vmatpush.bf16.msra.mxu0 %v7236
      %7635 = vmatmul.bf16.gmra.mxu0 %v7625
      %v7636 = vpop.f32.mrf.mxu0
      %v7637 = vadd.f32 0.0, %v7636
      %v7638 = vpop.f32.mrf.mxu0
      %7639 = vdwg.mxu0
      %v7640 = vpack.c.bf16 %v7637, %v7637
      %s7641 = scalar_lea.vmem %s69, 256
      %v7642 = vld [vmem:[%s7641] sm:$0xf]
      %v7643 = vld [vmem:[%s7641 + $0x4] sm:$0xf]
      %v7644 = vld [vmem:[%s7641 + $0x8] sm:$0xf]
      %v7645 = vld [vmem:[%s7641 + $0xc] sm:$0xf]
      %v7646 = vld [vmem:[%s7641 + $0x10] sm:$0xf]
      %v7647 = vld [vmem:[%s7641 + $0x14] sm:$0xf]
      %v7648 = vld [vmem:[%s7641 + $0x18] sm:$0xf]
      %v7649 = vld [vmem:[%s7641 + $0x1c] sm:$0xf]
      %v7650 = vld [vmem:[%s7641 + $0x20] sm:$0xf]
      %v7651 = vld [vmem:[%s7641 + $0x24] sm:$0xf]
      %v7652 = vld [vmem:[%s7641 + $0x28] sm:$0xf]
      %v7653 = vld [vmem:[%s7641 + $0x2c] sm:$0xf]
      %v7654 = vld [vmem:[%s7641 + $0x30] sm:$0xf]
      %v7655 = vld [vmem:[%s7641 + $0x34] sm:$0xf]
      %v7656 = vld [vmem:[%s7641 + $0x38] sm:$0xf]
      %v7657 = vld [vmem:[%s7641 + $0x3c] sm:$0xf]
      %v7674 = vunpack.c.l.b16 %v7642
      %v7675 = vunpack.c.l.b16 %v7643
      %v7676 = vunpack.c.l.b16 %v7644
      %v7677 = vunpack.c.l.b16 %v7645
      %v7678 = vunpack.c.l.b16 %v7646
      %v7679 = vunpack.c.l.b16 %v7647
      %v7680 = vunpack.c.l.b16 %v7648
      %v7681 = vunpack.c.l.b16 %v7649
      %v7682 = vunpack.c.l.b16 %v7650
      %v7683 = vunpack.c.l.b16 %v7651
      %v7684 = vunpack.c.l.b16 %v7652
      %v7685 = vunpack.c.l.b16 %v7653
      %v7686 = vunpack.c.l.b16 %v7654
      %v7687 = vunpack.c.l.b16 %v7655
      %v7688 = vunpack.c.l.b16 %v7656
      %v7689 = vunpack.c.l.b16 %v7657
      %v7690 = vpack.c.b16 %v7675, %v7674
      %v7691 = vpack.c.b16 %v7677, %v7676
      %v7692 = vpack.c.b16 %v7679, %v7678
      %v7693 = vpack.c.b16 %v7681, %v7680
      %v7694 = vpack.c.b16 %v7683, %v7682
      %v7695 = vpack.c.b16 %v7685, %v7684
      %v7696 = vpack.c.b16 %v7687, %v7686
      %v7697 = vpack.c.b16 %v7689, %v7688
      %7706 = vmatpush.bf16.msra.mxu0 %v7697
      %7707 = vmatpush.bf16.msra.mxu0 %v7696
      %7708 = vmatpush.bf16.msra.mxu0 %v7695
      %7709 = vmatpush.bf16.msra.mxu0 %v7694
      %7710 = vmatpush.bf16.msra.mxu0 %v7693
      %7711 = vmatpush.bf16.msra.mxu0 %v7692
      %7712 = vmatpush.bf16.msra.mxu0 %v7691
      %7713 = vmatpush.bf16.msra.mxu0 %v7690
      %7714 = vmatmul.bf16.gmra.mxu0 %v7640
      %v7715 = vpop.f32.mrf.mxu0
      %v7716 = vadd.f32 0.0, %v7715
      %v7717 = vpop.f32.mrf.mxu0
      %7718 = vdwg.mxu0
      %v7719 = vadd.f32 %v7621, %v7716
      %s7720 = scalar_lea.vmem %s67, 5
      %v7721 = vld [vmem:[%s7720] sm:$0x1]
      %v7723 = vsel %vm7230, %v7721, 0
      %7725 = vmatpush.bf16.msra.mxu0 0
      %7726 = vmatpush.bf16.msra.mxu0 0
      %7727 = vmatpush.bf16.msra.mxu0 0
      %7728 = vmatpush.bf16.msra.mxu0 0
      %7729 = vmatpush.bf16.msra.mxu0 0
      %7730 = vmatpush.bf16.msra.mxu0 0
      %7731 = vmatpush.bf16.msra.mxu0 0
      %7732 = vmatpush.bf16.msra.mxu0 %v7236
      %7733 = vmatmul.bf16.gmra.mxu0 %v7723
      %v7734 = vpop.f32.mrf.mxu0
      %v7735 = vadd.f32 0.0, %v7734
      %v7736 = vpop.f32.mrf.mxu0
      %7737 = vdwg.mxu0
      %v7738 = vpack.c.bf16 %v7735, %v7735
      %s7739 = scalar_lea.vmem %s69, 320
      %v7740 = vld [vmem:[%s7739] sm:$0xf]
      %v7741 = vld [vmem:[%s7739 + $0x4] sm:$0xf]
      %v7742 = vld [vmem:[%s7739 + $0x8] sm:$0xf]
      %v7743 = vld [vmem:[%s7739 + $0xc] sm:$0xf]
      %v7744 = vld [vmem:[%s7739 + $0x10] sm:$0xf]
      %v7745 = vld [vmem:[%s7739 + $0x14] sm:$0xf]
      %v7746 = vld [vmem:[%s7739 + $0x18] sm:$0xf]
      %v7747 = vld [vmem:[%s7739 + $0x1c] sm:$0xf]
      %v7748 = vld [vmem:[%s7739 + $0x20] sm:$0xf]
      %v7749 = vld [vmem:[%s7739 + $0x24] sm:$0xf]
      %v7750 = vld [vmem:[%s7739 + $0x28] sm:$0xf]
      %v7751 = vld [vmem:[%s7739 + $0x2c] sm:$0xf]
      %v7752 = vld [vmem:[%s7739 + $0x30] sm:$0xf]
      %v7753 = vld [vmem:[%s7739 + $0x34] sm:$0xf]
      %v7754 = vld [vmem:[%s7739 + $0x38] sm:$0xf]
      %v7755 = vld [vmem:[%s7739 + $0x3c] sm:$0xf]
      %v7772 = vunpack.c.l.b16 %v7740
      %v7773 = vunpack.c.l.b16 %v7741
      %v7774 = vunpack.c.l.b16 %v7742
      %v7775 = vunpack.c.l.b16 %v7743
      %v7776 = vunpack.c.l.b16 %v7744
      %v7777 = vunpack.c.l.b16 %v7745
      %v7778 = vunpack.c.l.b16 %v7746
      %v7779 = vunpack.c.l.b16 %v7747
      %v7780 = vunpack.c.l.b16 %v7748
      %v7781 = vunpack.c.l.b16 %v7749
      %v7782 = vunpack.c.l.b16 %v7750
      %v7783 = vunpack.c.l.b16 %v7751
      %v7784 = vunpack.c.l.b16 %v7752
      %v7785 = vunpack.c.l.b16 %v7753
      %v7786 = vunpack.c.l.b16 %v7754
      %v7787 = vunpack.c.l.b16 %v7755
      %v7788 = vpack.c.b16 %v7773, %v7772
      %v7789 = vpack.c.b16 %v7775, %v7774
      %v7790 = vpack.c.b16 %v7777, %v7776
      %v7791 = vpack.c.b16 %v7779, %v7778
      %v7792 = vpack.c.b16 %v7781, %v7780
      %v7793 = vpack.c.b16 %v7783, %v7782
      %v7794 = vpack.c.b16 %v7785, %v7784
      %v7795 = vpack.c.b16 %v7787, %v7786
      %7804 = vmatpush.bf16.msra.mxu0 %v7795
      %7805 = vmatpush.bf16.msra.mxu0 %v7794
      %7806 = vmatpush.bf16.msra.mxu0 %v7793
      %7807 = vmatpush.bf16.msra.mxu0 %v7792
      %7808 = vmatpush.bf16.msra.mxu0 %v7791
      %7809 = vmatpush.bf16.msra.mxu0 %v7790
      %7810 = vmatpush.bf16.msra.mxu0 %v7789
      %7811 = vmatpush.bf16.msra.mxu0 %v7788
      %7812 = vmatmul.bf16.gmra.mxu0 %v7738
      %v7813 = vpop.f32.mrf.mxu0
      %v7814 = vadd.f32 0.0, %v7813
      %v7815 = vpop.f32.mrf.mxu0
      %7816 = vdwg.mxu0
      %v7817 = vadd.f32 %v7719, %v7814
      %s7818 = scalar_lea.vmem %s67, 6
      %v7819 = vld [vmem:[%s7818] sm:$0x1]
      %v7821 = vsel %vm7230, %v7819, 0
      %7823 = vmatpush.bf16.msra.mxu0 0
      %7824 = vmatpush.bf16.msra.mxu0 0
      %7825 = vmatpush.bf16.msra.mxu0 0
      %7826 = vmatpush.bf16.msra.mxu0 0
      %7827 = vmatpush.bf16.msra.mxu0 0
      %7828 = vmatpush.bf16.msra.mxu0 0
      %7829 = vmatpush.bf16.msra.mxu0 0
      %7830 = vmatpush.bf16.msra.mxu0 %v7236
      %7831 = vmatmul.bf16.gmra.mxu0 %v7821
      %v7832 = vpop.f32.mrf.mxu0
      %v7833 = vadd.f32 0.0, %v7832
      %v7834 = vpop.f32.mrf.mxu0
      %7835 = vdwg.mxu0
      %v7836 = vpack.c.bf16 %v7833, %v7833
      %s7837 = scalar_lea.vmem %s69, 384
      %v7838 = vld [vmem:[%s7837] sm:$0xf]
      %v7839 = vld [vmem:[%s7837 + $0x4] sm:$0xf]
      %v7840 = vld [vmem:[%s7837 + $0x8] sm:$0xf]
      %v7841 = vld [vmem:[%s7837 + $0xc] sm:$0xf]
      %v7842 = vld [vmem:[%s7837 + $0x10] sm:$0xf]
      %v7843 = vld [vmem:[%s7837 + $0x14] sm:$0xf]
      %v7844 = vld [vmem:[%s7837 + $0x18] sm:$0xf]
      %v7845 = vld [vmem:[%s7837 + $0x1c] sm:$0xf]
      %v7846 = vld [vmem:[%s7837 + $0x20] sm:$0xf]
      %v7847 = vld [vmem:[%s7837 + $0x24] sm:$0xf]
      %v7848 = vld [vmem:[%s7837 + $0x28] sm:$0xf]
      %v7849 = vld [vmem:[%s7837 + $0x2c] sm:$0xf]
      %v7850 = vld [vmem:[%s7837 + $0x30] sm:$0xf]
      %v7851 = vld [vmem:[%s7837 + $0x34] sm:$0xf]
      %v7852 = vld [vmem:[%s7837 + $0x38] sm:$0xf]
      %v7853 = vld [vmem:[%s7837 + $0x3c] sm:$0xf]
      %v7870 = vunpack.c.l.b16 %v7838
      %v7871 = vunpack.c.l.b16 %v7839
      %v7872 = vunpack.c.l.b16 %v7840
      %v7873 = vunpack.c.l.b16 %v7841
      %v7874 = vunpack.c.l.b16 %v7842
      %v7875 = vunpack.c.l.b16 %v7843
      %v7876 = vunpack.c.l.b16 %v7844
      %v7877 = vunpack.c.l.b16 %v7845
      %v7878 = vunpack.c.l.b16 %v7846
      %v7879 = vunpack.c.l.b16 %v7847
      %v7880 = vunpack.c.l.b16 %v7848
      %v7881 = vunpack.c.l.b16 %v7849
      %v7882 = vunpack.c.l.b16 %v7850
      %v7883 = vunpack.c.l.b16 %v7851
      %v7884 = vunpack.c.l.b16 %v7852
      %v7885 = vunpack.c.l.b16 %v7853
      %v7886 = vpack.c.b16 %v7871, %v7870
      %v7887 = vpack.c.b16 %v7873, %v7872
      %v7888 = vpack.c.b16 %v7875, %v7874
      %v7889 = vpack.c.b16 %v7877, %v7876
      %v7890 = vpack.c.b16 %v7879, %v7878
      %v7891 = vpack.c.b16 %v7881, %v7880
      %v7892 = vpack.c.b16 %v7883, %v7882
      %v7893 = vpack.c.b16 %v7885, %v7884
      %7902 = vmatpush.bf16.msra.mxu0 %v7893
      %7903 = vmatpush.bf16.msra.mxu0 %v7892
      %7904 = vmatpush.bf16.msra.mxu0 %v7891
      %7905 = vmatpush.bf16.msra.mxu0 %v7890
      %7906 = vmatpush.bf16.msra.mxu0 %v7889
      %7907 = vmatpush.bf16.msra.mxu0 %v7888
      %7908 = vmatpush.bf16.msra.mxu0 %v7887
      %7909 = vmatpush.bf16.msra.mxu0 %v7886
      %7910 = vmatmul.bf16.gmra.mxu0 %v7836
      %v7911 = vpop.f32.mrf.mxu0
      %v7912 = vadd.f32 0.0, %v7911
      %v7913 = vpop.f32.mrf.mxu0
      %7914 = vdwg.mxu0
      %v7915 = vadd.f32 %v7817, %v7912
      %s7916 = scalar_lea.vmem %s67, 7
      %v7917 = vld [vmem:[%s7916] sm:$0x1]
      %v7919 = vsel %vm7230, %v7917, 0
      %7921 = vmatpush.bf16.msra.mxu0 0
      %7922 = vmatpush.bf16.msra.mxu0 0
      %7923 = vmatpush.bf16.msra.mxu0 0
      %7924 = vmatpush.bf16.msra.mxu0 0
      %7925 = vmatpush.bf16.msra.mxu0 0
      %7926 = vmatpush.bf16.msra.mxu0 0
      %7927 = vmatpush.bf16.msra.mxu0 0
      %7928 = vmatpush.bf16.msra.mxu0 %v7236
      %7929 = vmatmul.bf16.gmra.mxu0 %v7919
      %v7930 = vpop.f32.mrf.mxu0
      %v7931 = vadd.f32 0.0, %v7930
      %v7932 = vpop.f32.mrf.mxu0
      %7933 = vdwg.mxu0
      %v7934 = vpack.c.bf16 %v7931, %v7931
      %s7935 = scalar_lea.vmem %s69, 448
      %v7936 = vld [vmem:[%s7935] sm:$0xf]
      %v7937 = vld [vmem:[%s7935 + $0x4] sm:$0xf]
      %v7938 = vld [vmem:[%s7935 + $0x8] sm:$0xf]
      %v7939 = vld [vmem:[%s7935 + $0xc] sm:$0xf]
      %v7940 = vld [vmem:[%s7935 + $0x10] sm:$0xf]
      %v7941 = vld [vmem:[%s7935 + $0x14] sm:$0xf]
      %v7942 = vld [vmem:[%s7935 + $0x18] sm:$0xf]
      %v7943 = vld [vmem:[%s7935 + $0x1c] sm:$0xf]
      %v7944 = vld [vmem:[%s7935 + $0x20] sm:$0xf]
      %v7945 = vld [vmem:[%s7935 + $0x24] sm:$0xf]
      %v7946 = vld [vmem:[%s7935 + $0x28] sm:$0xf]
      %v7947 = vld [vmem:[%s7935 + $0x2c] sm:$0xf]
      %v7948 = vld [vmem:[%s7935 + $0x30] sm:$0xf]
      %v7949 = vld [vmem:[%s7935 + $0x34] sm:$0xf]
      %v7950 = vld [vmem:[%s7935 + $0x38] sm:$0xf]
      %v7951 = vld [vmem:[%s7935 + $0x3c] sm:$0xf]
      %v7968 = vunpack.c.l.b16 %v7936
      %v7969 = vunpack.c.l.b16 %v7937
      %v7970 = vunpack.c.l.b16 %v7938
      %v7971 = vunpack.c.l.b16 %v7939
      %v7972 = vunpack.c.l.b16 %v7940
      %v7973 = vunpack.c.l.b16 %v7941
      %v7974 = vunpack.c.l.b16 %v7942
      %v7975 = vunpack.c.l.b16 %v7943
      %v7976 = vunpack.c.l.b16 %v7944
      %v7977 = vunpack.c.l.b16 %v7945
      %v7978 = vunpack.c.l.b16 %v7946
      %v7979 = vunpack.c.l.b16 %v7947
      %v7980 = vunpack.c.l.b16 %v7948
      %v7981 = vunpack.c.l.b16 %v7949
      %v7982 = vunpack.c.l.b16 %v7950
      %v7983 = vunpack.c.l.b16 %v7951
      %v7984 = vpack.c.b16 %v7969, %v7968
      %v7985 = vpack.c.b16 %v7971, %v7970
      %v7986 = vpack.c.b16 %v7973, %v7972
      %v7987 = vpack.c.b16 %v7975, %v7974
      %v7988 = vpack.c.b16 %v7977, %v7976
      %v7989 = vpack.c.b16 %v7979, %v7978
      %v7990 = vpack.c.b16 %v7981, %v7980
      %v7991 = vpack.c.b16 %v7983, %v7982
      %8000 = vmatpush.bf16.msra.mxu0 %v7991
      %8001 = vmatpush.bf16.msra.mxu0 %v7990
      %8002 = vmatpush.bf16.msra.mxu0 %v7989
      %8003 = vmatpush.bf16.msra.mxu0 %v7988
      %8004 = vmatpush.bf16.msra.mxu0 %v7987
      %8005 = vmatpush.bf16.msra.mxu0 %v7986
      %8006 = vmatpush.bf16.msra.mxu0 %v7985
      %8007 = vmatpush.bf16.msra.mxu0 %v7984
      %8008 = vmatmul.bf16.gmra.mxu0 %v7934
      %v8009 = vpop.f32.mrf.mxu0
      %v8010 = vadd.f32 0.0, %v8009
      %v8011 = vpop.f32.mrf.mxu0
      %8012 = vdwg.mxu0
      %v8013 = vadd.f32 %v7915, %v8010
      %s8014 = scalar_lea.vmem %s67, 8
      %v8015 = vld [vmem:[%s8014] sm:$0x1]
      %v8017 = vsel %vm7230, %v8015, 0
      %8019 = vmatpush.bf16.msra.mxu0 0
      %8020 = vmatpush.bf16.msra.mxu0 0
      %8021 = vmatpush.bf16.msra.mxu0 0
      %8022 = vmatpush.bf16.msra.mxu0 0
      %8023 = vmatpush.bf16.msra.mxu0 0
      %8024 = vmatpush.bf16.msra.mxu0 0
      %8025 = vmatpush.bf16.msra.mxu0 0
      %8026 = vmatpush.bf16.msra.mxu0 %v7236
      %8027 = vmatmul.bf16.gmra.mxu0 %v8017
      %v8028 = vpop.f32.mrf.mxu0
      %v8029 = vadd.f32 0.0, %v8028
      %v8030 = vpop.f32.mrf.mxu0
      %8031 = vdwg.mxu0
      %v8032 = vpack.c.bf16 %v8029, %v8029
      %s8033 = scalar_lea.vmem %s69, 512
      %v8034 = vld [vmem:[%s8033] sm:$0xf]
      %v8035 = vld [vmem:[%s8033 + $0x4] sm:$0xf]
      %v8036 = vld [vmem:[%s8033 + $0x8] sm:$0xf]
      %v8037 = vld [vmem:[%s8033 + $0xc] sm:$0xf]
      %v8038 = vld [vmem:[%s8033 + $0x10] sm:$0xf]
      %v8039 = vld [vmem:[%s8033 + $0x14] sm:$0xf]
      %v8040 = vld [vmem:[%s8033 + $0x18] sm:$0xf]
      %v8041 = vld [vmem:[%s8033 + $0x1c] sm:$0xf]
      %v8042 = vld [vmem:[%s8033 + $0x20] sm:$0xf]
      %v8043 = vld [vmem:[%s8033 + $0x24] sm:$0xf]
      %v8044 = vld [vmem:[%s8033 + $0x28] sm:$0xf]
      %v8045 = vld [vmem:[%s8033 + $0x2c] sm:$0xf]
      %v8046 = vld [vmem:[%s8033 + $0x30] sm:$0xf]
      %v8047 = vld [vmem:[%s8033 + $0x34] sm:$0xf]
      %v8048 = vld [vmem:[%s8033 + $0x38] sm:$0xf]
      %v8049 = vld [vmem:[%s8033 + $0x3c] sm:$0xf]
      %v8066 = vunpack.c.l.b16 %v8034
      %v8067 = vunpack.c.l.b16 %v8035
      %v8068 = vunpack.c.l.b16 %v8036
      %v8069 = vunpack.c.l.b16 %v8037
      %v8070 = vunpack.c.l.b16 %v8038
      %v8071 = vunpack.c.l.b16 %v8039
      %v8072 = vunpack.c.l.b16 %v8040
      %v8073 = vunpack.c.l.b16 %v8041
      %v8074 = vunpack.c.l.b16 %v8042
      %v8075 = vunpack.c.l.b16 %v8043
      %v8076 = vunpack.c.l.b16 %v8044
      %v8077 = vunpack.c.l.b16 %v8045
      %v8078 = vunpack.c.l.b16 %v8046
      %v8079 = vunpack.c.l.b16 %v8047
      %v8080 = vunpack.c.l.b16 %v8048
      %v8081 = vunpack.c.l.b16 %v8049
      %v8082 = vpack.c.b16 %v8067, %v8066
      %v8083 = vpack.c.b16 %v8069, %v8068
      %v8084 = vpack.c.b16 %v8071, %v8070
      %v8085 = vpack.c.b16 %v8073, %v8072
      %v8086 = vpack.c.b16 %v8075, %v8074
      %v8087 = vpack.c.b16 %v8077, %v8076
      %v8088 = vpack.c.b16 %v8079, %v8078
      %v8089 = vpack.c.b16 %v8081, %v8080
      %8098 = vmatpush.bf16.msra.mxu0 %v8089
      %8099 = vmatpush.bf16.msra.mxu0 %v8088
      %8100 = vmatpush.bf16.msra.mxu0 %v8087
      %8101 = vmatpush.bf16.msra.mxu0 %v8086
      %8102 = vmatpush.bf16.msra.mxu0 %v8085
      %8103 = vmatpush.bf16.msra.mxu0 %v8084
      %8104 = vmatpush.bf16.msra.mxu0 %v8083
      %8105 = vmatpush.bf16.msra.mxu0 %v8082
      %8106 = vmatmul.bf16.gmra.mxu0 %v8032
      %v8107 = vpop.f32.mrf.mxu0
      %v8108 = vadd.f32 0.0, %v8107
      %v8109 = vpop.f32.mrf.mxu0
      %8110 = vdwg.mxu0
      %v8111 = vadd.f32 %v8013, %v8108
      %v8112 = vld [vmem:[%s71] sm:$0x1]
      %v8113 = vadd.f32 %v8111, %v8112
      %v8114 = vmax.f32 %v8113, 0.0
      %v8115 = vpack.c.bf16 %v8114, %v8114
      %v8117 = vsel %vm7234, %v7145, 0
      %8119 = vmatpush.bf16.msra.mxu0 0
      %8120 = vmatpush.bf16.msra.mxu0 0
      %8121 = vmatpush.bf16.msra.mxu0 0
      %8122 = vmatpush.bf16.msra.mxu0 0
      %8123 = vmatpush.bf16.msra.mxu0 0
      %8124 = vmatpush.bf16.msra.mxu0 0
      %8125 = vmatpush.bf16.msra.mxu0 0
      %8126 = vmatpush.bf16.msra.mxu0 %v8117
      %8127 = vmatmul.bf16.gmra.mxu0 %v7625
      %v8128 = vpop.f32.mrf.mxu0
      %v8129 = vadd.f32 0.0, %v8128
      %v8130 = vpop.f32.mrf.mxu0
      %8131 = vdwg.mxu0
      %v8132 = vpack.c.bf16 %v8129, %v8129
      %v8133 = vld [vmem:[%s77] sm:$0xff]
      %v8134 = vld [vmem:[%s77 + $0x8] sm:$0xff]
      %v8135 = vld [vmem:[%s77 + $0x10] sm:$0xff]
      %v8136 = vld [vmem:[%s77 + $0x18] sm:$0xff]
      %v8137 = vld [vmem:[%s77 + $0x20] sm:$0xff]
      %v8138 = vld [vmem:[%s77 + $0x28] sm:$0xff]
      %v8139 = vld [vmem:[%s77 + $0x30] sm:$0xff]
      %v8140 = vld [vmem:[%s77 + $0x38] sm:$0xff]
      %v8141 = vld [vmem:[%s77 + $0x40] sm:$0xff]
      %v8142 = vld [vmem:[%s77 + $0x48] sm:$0xff]
      %v8143 = vld [vmem:[%s77 + $0x50] sm:$0xff]
      %v8144 = vld [vmem:[%s77 + $0x58] sm:$0xff]
      %v8145 = vld [vmem:[%s77 + $0x60] sm:$0xff]
      %v8146 = vld [vmem:[%s77 + $0x68] sm:$0xff]
      %v8147 = vld [vmem:[%s77 + $0x70] sm:$0xff]
      %v8148 = vld [vmem:[%s77 + $0x78] sm:$0xff]
      %v8149 = vld [vmem:[%s79] sm:$0x3]
      %v8166 = vunpack.c.l.b16 %v8133
      %v8167 = vunpack.c.h.b16 %v8133
      %v8168 = vunpack.c.l.b16 %v8134
      %v8169 = vunpack.c.h.b16 %v8134
      %v8170 = vunpack.c.l.b16 %v8135
      %v8171 = vunpack.c.h.b16 %v8135
      %v8172 = vunpack.c.l.b16 %v8136
      %v8173 = vunpack.c.h.b16 %v8136
      %v8174 = vunpack.c.l.b16 %v8137
      %v8175 = vunpack.c.h.b16 %v8137
      %v8176 = vunpack.c.l.b16 %v8138
      %v8177 = vunpack.c.h.b16 %v8138
      %v8178 = vunpack.c.l.b16 %v8139
      %v8179 = vunpack.c.h.b16 %v8139
      %v8180 = vunpack.c.l.b16 %v8140
      %v8181 = vunpack.c.h.b16 %v8140
      %v8182 = vunpack.c.l.b16 %v8141
      %v8183 = vunpack.c.h.b16 %v8141
      %v8184 = vunpack.c.l.b16 %v8142
      %v8185 = vunpack.c.h.b16 %v8142
      %v8186 = vunpack.c.l.b16 %v8143
      %v8187 = vunpack.c.h.b16 %v8143
      %v8188 = vunpack.c.l.b16 %v8144
      %v8189 = vunpack.c.h.b16 %v8144
      %v8190 = vunpack.c.l.b16 %v8145
      %v8191 = vunpack.c.h.b16 %v8145
      %v8192 = vunpack.c.l.b16 %v8146
      %v8193 = vunpack.c.h.b16 %v8146
      %v8194 = vunpack.c.l.b16 %v8147
      %v8195 = vunpack.c.h.b16 %v8147
      %v8196 = vunpack.c.l.b16 %v8148
      %v8197 = vunpack.c.h.b16 %v8148
      %v8198 = vpack.c.b16 %v8168, %v8166
      %v8199 = vpack.c.b16 %v8169, %v8167
      %v8200 = vpack.c.b16 %v8172, %v8170
      %v8201 = vpack.c.b16 %v8173, %v8171
      %v8202 = vpack.c.b16 %v8176, %v8174
      %v8203 = vpack.c.b16 %v8177, %v8175
      %v8204 = vpack.c.b16 %v8180, %v8178
      %v8205 = vpack.c.b16 %v8181, %v8179
      %v8206 = vpack.c.b16 %v8184, %v8182
      %v8207 = vpack.c.b16 %v8185, %v8183
      %v8208 = vpack.c.b16 %v8188, %v8186
      %v8209 = vpack.c.b16 %v8189, %v8187
      %v8210 = vpack.c.b16 %v8192, %v8190
      %v8211 = vpack.c.b16 %v8193, %v8191
      %v8212 = vpack.c.b16 %v8196, %v8194
      %v8213 = vpack.c.b16 %v8197, %v8195
      %v8231 = vperm.slane %v8149, 0
      %v8232 = vperm.slane %v8149, 1
      %8235 = vmatpush.bf16.msra.mxu0 %v8212
      %8236 = vmatpush.bf16.msra.mxu0 %v8210
      %8237 = vmatpush.bf16.msra.mxu0 %v8208
      %8238 = vmatpush.bf16.msra.mxu0 %v8206
      %8239 = vmatpush.bf16.msra.mxu0 %v8204
      %8240 = vmatpush.bf16.msra.mxu0 %v8202
      %8241 = vmatpush.bf16.msra.mxu0 %v8200
      %8242 = vmatpush.bf16.msra.mxu0 %v8198
      %8243 = vmatmul.bf16.gmra.mxu0 %v8132
      %v8244 = vpop.f32.mrf.mxu0
      %v8245 = vadd.f32 %v8231, %v8244
      %v8246 = vpop.f32.mrf.mxu0
      %8247 = vdwg.mxu0
      %8248 = vmatpush.bf16.msra.mxu0 %v8213
      %8249 = vmatpush.bf16.msra.mxu0 %v8211
      %8250 = vmatpush.bf16.msra.mxu0 %v8209
      %8251 = vmatpush.bf16.msra.mxu0 %v8207
      %8252 = vmatpush.bf16.msra.mxu0 %v8205
      %8253 = vmatpush.bf16.msra.mxu0 %v8203
      %8254 = vmatpush.bf16.msra.mxu0 %v8201
      %8255 = vmatpush.bf16.msra.mxu0 %v8199
      %8256 = vmatmul.bf16.gmra.mxu0 %v8132
      %v8257 = vpop.f32.mrf.mxu0
      %v8258 = vadd.f32 %v8232, %v8257
      %v8259 = vpop.f32.mrf.mxu0
      %8260 = vdwg.mxu0
      %v8261 = vld [vmem:[%s73] sm:$0xff]
      %v8262 = vld [vmem:[%s73 + $0x8] sm:$0xff]
      %v8263 = vld [vmem:[%s73 + $0x10] sm:$0xff]
      %v8264 = vld [vmem:[%s73 + $0x18] sm:$0xff]
      %v8265 = vld [vmem:[%s73 + $0x20] sm:$0xff]
      %v8266 = vld [vmem:[%s73 + $0x28] sm:$0xff]
      %v8267 = vld [vmem:[%s73 + $0x30] sm:$0xff]
      %v8268 = vld [vmem:[%s73 + $0x38] sm:$0xff]
      %v8269 = vld [vmem:[%s73 + $0x40] sm:$0xff]
      %v8270 = vld [vmem:[%s73 + $0x48] sm:$0xff]
      %v8271 = vld [vmem:[%s73 + $0x50] sm:$0xff]
      %v8272 = vld [vmem:[%s73 + $0x58] sm:$0xff]
      %v8273 = vld [vmem:[%s73 + $0x60] sm:$0xff]
      %v8274 = vld [vmem:[%s73 + $0x68] sm:$0xff]
      %v8275 = vld [vmem:[%s73 + $0x70] sm:$0xff]
      %v8276 = vld [vmem:[%s73 + $0x78] sm:$0xff]
      %v8277 = vld [vmem:[%s75] sm:$0x3]
      %v8294 = vunpack.c.l.b16 %v8261
      %v8295 = vunpack.c.h.b16 %v8261
      %v8296 = vunpack.c.l.b16 %v8262
      %v8297 = vunpack.c.h.b16 %v8262
      %v8298 = vunpack.c.l.b16 %v8263
      %v8299 = vunpack.c.h.b16 %v8263
      %v8300 = vunpack.c.l.b16 %v8264
      %v8301 = vunpack.c.h.b16 %v8264
      %v8302 = vunpack.c.l.b16 %v8265
      %v8303 = vunpack.c.h.b16 %v8265
      %v8304 = vunpack.c.l.b16 %v8266
      %v8305 = vunpack.c.h.b16 %v8266
      %v8306 = vunpack.c.l.b16 %v8267
      %v8307 = vunpack.c.h.b16 %v8267
      %v8308 = vunpack.c.l.b16 %v8268
      %v8309 = vunpack.c.h.b16 %v8268
      %v8310 = vunpack.c.l.b16 %v8269
      %v8311 = vunpack.c.h.b16 %v8269
      %v8312 = vunpack.c.l.b16 %v8270
      %v8313 = vunpack.c.h.b16 %v8270
      %v8314 = vunpack.c.l.b16 %v8271
      %v8315 = vunpack.c.h.b16 %v8271
      %v8316 = vunpack.c.l.b16 %v8272
      %v8317 = vunpack.c.h.b16 %v8272
      %v8318 = vunpack.c.l.b16 %v8273
      %v8319 = vunpack.c.h.b16 %v8273
      %v8320 = vunpack.c.l.b16 %v8274
      %v8321 = vunpack.c.h.b16 %v8274
      %v8322 = vunpack.c.l.b16 %v8275
      %v8323 = vunpack.c.h.b16 %v8275
      %v8324 = vunpack.c.l.b16 %v8276
      %v8325 = vunpack.c.h.b16 %v8276
      %v8326 = vpack.c.b16 %v8296, %v8294
      %v8327 = vpack.c.b16 %v8297, %v8295
      %v8328 = vpack.c.b16 %v8300, %v8298
      %v8329 = vpack.c.b16 %v8301, %v8299
      %v8330 = vpack.c.b16 %v8304, %v8302
      %v8331 = vpack.c.b16 %v8305, %v8303
      %v8332 = vpack.c.b16 %v8308, %v8306
      %v8333 = vpack.c.b16 %v8309, %v8307
      %v8334 = vpack.c.b16 %v8312, %v8310
      %v8335 = vpack.c.b16 %v8313, %v8311
      %v8336 = vpack.c.b16 %v8316, %v8314
      %v8337 = vpack.c.b16 %v8317, %v8315
      %v8338 = vpack.c.b16 %v8320, %v8318
      %v8339 = vpack.c.b16 %v8321, %v8319
      %v8340 = vpack.c.b16 %v8324, %v8322
      %v8341 = vpack.c.b16 %v8325, %v8323
      %v8359 = vperm.slane %v8277, 0
      %v8360 = vperm.slane %v8277, 1
      %8363 = vmatpush.bf16.msra.mxu0 %v8340
      %8364 = vmatpush.bf16.msra.mxu0 %v8338
      %8365 = vmatpush.bf16.msra.mxu0 %v8336
      %8366 = vmatpush.bf16.msra.mxu0 %v8334
      %8367 = vmatpush.bf16.msra.mxu0 %v8332
      %8368 = vmatpush.bf16.msra.mxu0 %v8330
      %8369 = vmatpush.bf16.msra.mxu0 %v8328
      %8370 = vmatpush.bf16.msra.mxu0 %v8326
      %8371 = vmatmul.bf16.gmra.mxu0 %v8115
      %v8372 = vpop.f32.mrf.mxu0
      %v8373 = vadd.f32 %v8359, %v8372
      %v8374 = vpop.f32.mrf.mxu0
      %8375 = vdwg.mxu0
      %8376 = vmatpush.bf16.msra.mxu0 %v8341
      %8377 = vmatpush.bf16.msra.mxu0 %v8339
      %8378 = vmatpush.bf16.msra.mxu0 %v8337
      %8379 = vmatpush.bf16.msra.mxu0 %v8335
      %8380 = vmatpush.bf16.msra.mxu0 %v8333
      %8381 = vmatpush.bf16.msra.mxu0 %v8331
      %8382 = vmatpush.bf16.msra.mxu0 %v8329
      %8383 = vmatpush.bf16.msra.mxu0 %v8327
      %8384 = vmatmul.bf16.gmra.mxu0 %v8115
      %v8385 = vpop.f32.mrf.mxu0
      %v8386 = vadd.f32 %v8360, %v8385
      %v8387 = vpop.f32.mrf.mxu0
      %8388 = vdwg.mxu0
      %v8389 = vadd.f32 %v8373, %v8245
      %v8390 = vadd.f32 %v8386, %v8258
      %v8391 = vmax.f32 %v8389, 0.0
      %v8392 = vmax.f32 %v8390, 0.0
      %v8393 = vadd.f32 %v8391, 0.0
      %v8394 = vadd.f32 %v8392, 0.0
      %v8397 = vrot.slane %v8394, 7
      %vm8398 = vcmask 1040384
      %v8399 = vsel %vm8398, %v8393, %v8397
      %v8401 = vlaneseq
      %vm8402 = vcmp.ge.s32.totalorder %v8401, 0
      %vm8403 = vcmp.lt.s32.totalorder %v8401, 256
      %vm8404 = vmand %vm8402, %vm8403
      %8405 = vst.msk [vmem:[%s1208] sm:$0x3] %vm8404, %v8399
      %p8406 = scmp.lt.s32.totalorder %s92, 1
      %s8407 = scalar_select %p8406, %s92, 1
      %s8408 = smul.addr %s8407, 2
      %s8409 = scalar_lea.vmem %s81, %s8408
      // Predicated region
      $region181: #{resnet_forward_pallas.1} parent=179 // pred_check
        %p8410 = pneg %p955
      $region182: #{resnet_forward_pallas.1} parent=179 // pred_check_branch
        %8412 = sbr.rel (%p8410) target = $region184
      $region183: #{resnet_forward_pallas.1} parent=179 // pred_region
        _
      $region184: #{resnet_forward_pallas.1} parent=179 // pred_fallthru
        _
    $region180: #{resnet_forward_pallas.1} parent=5 // pred_fallthru
      _
    %p8413 = scmp.le.s32.totalorder 2, %s87
    // Predicated region
    $region185: #{resnet_forward_pallas.1} parent=5 // pred_check
      %p8414 = pneg %p8413
    $region186: #{resnet_forward_pallas.1} parent=5 // pred_check_branch
      %8416 = sbr.rel (%p8414) target = $region188
    $region187: #{resnet_forward_pallas.1} parent=5 // pred_region
      %s8417 = ssub.s32 %s87, 2
      // Predicated region
      $region189: #{resnet_forward_pallas.1} parent=187 // pred_check
        %p8418 = pneg %p961
      $region190: #{resnet_forward_pallas.1} parent=187 // pred_check_branch
        %8420 = sbr.rel (%p8418) target = $region192
      $region191: #{resnet_forward_pallas.1} parent=187 // pred_region
        %p8421 = scmp.lt.s32.totalorder %s93, 1
        %s8422 = scalar_select %p8421, %s93, 1
        %s8423 = smul.addr %s8422, 2
        %s8424 = scalar_lea.vmem %s81, %s8423
      $region192: #{resnet_forward_pallas.1} parent=187 // pred_fallthru
        _
    $region188: #{resnet_forward_pallas.1} parent=5 // pred_fallthru
      _
  $region6: #{resnet_forward_pallas.1} parent=0 // loop_footer
    %s91 = sadd.s32 1, %s87
  $region7: #{resnet_forward_pallas.1} parent=0 // loop_footer_branch
    %86 = sbr.rel target = $region3
  $region8: #{resnet_forward_pallas.1} parent=0 // loop_exit
    _

</llo_original>
